<compile_context>
chip_gen: v6e
topology: v6e:2x2x1
jax: 0.10.0
libtpu: 0.0.40
codegen_flags: <defaults>
</compile_context>

<pallas_src>
import functools
import math

import jax
import jax.numpy as jnp
import numpy as np
from jax import lax
from jax.experimental import pallas as pl
from jax.experimental.pallas import tpu as pltpu

EPS = 1e-5  # InstanceNorm3d eps


def _round_up(a, b):
    return (a + b - 1) // b * b


def _pad_rows(H):
    # Halo rows of the flat row-padded conv scratch: >= H+1 (largest |row shift| of
    # a 3x3x3 tap), rounded to a bf16 (16,128) tile so the interior store is aligned.
    return _round_up(H + 1, 16)


def _block_q_kernel(x_ref, band0_ref, b0_ref, band1_ref, b1_ref,
                    sw1_ref, sb1_ref, sw2_ref, sb2_ref, w2_ref,
                    g0_ref, g1_ref, masks_ref, o_ref, pad0_ref, pad1_ref,
                    *, D, H, W, Nb):
    R = D * H                  # rows per sample (sublane axis)
    F = Nb * R                 # rows per grid step
    S = R * W                  # voxels per sample
    PAD = _pad_rows(H)
    inv_S = 1.0 / float(S)

    masks = masks_ref[...]     # (F, 9) bf16 0/1 validity per (kz, ky) tap

    # ---- zero only the halo rows of the flat conv scratch (O(rows), aligned) ----
    # (done unconditionally every grid step: scratch is per-core under megacore)
    def zero_halo(pad_ref):
        zs = jnp.zeros((PAD, pad_ref.shape[-1]), jnp.bfloat16)
        pad_ref[0:PAD, :] = zs
        pad_ref[PAD + F:2 * PAD + F, :] = zs

    zero_halo(pad0_ref)
    zero_halo(pad1_ref)

    def inorm_silu(v, g_ref):
        # v: (F, W*C) f32. Per-sample, per-channel InstanceNorm (two-pass: mean then
        # centered second moment, avoids E[x^2]-E[x]^2 cancellation) + SiLU.
        # g_ref: 0/1 matrix summing each channel across the W lane groups and
        # broadcasting it back across the groups (one MXU op).
        g = g_ref[...]
        outs = []
        for i in range(Nb):
            vi = v[i * R:(i + 1) * R]
            mean = jnp.dot(jnp.sum(vi, axis=0, keepdims=True), g,
                           preferred_element_type=jnp.float32) * inv_S
            c = vi - mean
            var = jnp.dot(jnp.sum(c * c, axis=0, keepdims=True), g,
                          preferred_element_type=jnp.float32) * inv_S
            vn = c * lax.rsqrt(var + EPS)
            outs.append(vn * jax.nn.sigmoid(vn))
        return outs[0] if Nb == 1 else jnp.concatenate(outs, axis=0)

    def conv3x3x3(v, pad_ref, band_ref, b_ref):
        # v: (F, W*Cin) f32 -> (F, W*Cout) f32.
        # One aligned bf16 interior store (single f32->bf16 convert), 9 row-shifted
        # tap reads masked for 'same' padding in z/y, then one K-concatenated bf16
        # MXU matmul (K = 9*W*Cin) with f32 accumulation, plus the bias.
        pad_ref[PAD:PAD + F, :] = v.astype(jnp.bfloat16)
        patches = []
        for k in range(9):
            kz, ky = divmod(k, 3)
            delta = (kz - 1) * H + (ky - 1)
            tap = pad_ref[PAD + delta:PAD + delta + F, :]
            if delta != 0:
                tap = tap * masks[:, k:k + 1]
            patches.append(tap)
        slab = jnp.concatenate(patches, axis=1)              # (F, 9*W*Cin) bf16
        y = jnp.dot(slab, band_ref[...], preferred_element_type=jnp.float32)
        return y + b_ref[...]

    x2 = x_ref[...].reshape(F, x_ref.shape[-1]).astype(jnp.float32)

    # bn_0 -> act_0 -> conv_0 ; bn_1 -> act_1 -> conv_1
    h = conv3x3x3(inorm_silu(x2, g0_ref), pad0_ref, band0_ref, b0_ref)
    h = conv3x3x3(inorm_silu(h, g1_ref), pad1_ref, band1_ref, b1_ref)

    # SE: per-sample global mean -> FC1 -> ReLU -> FC2 -> sigmoid -> channel scale.
    g1m = g1_ref[...]
    sw1 = sw1_ref[...]
    sb1 = sb1_ref[...]
    sw2 = sw2_ref[...]
    sb2 = sb2_ref[...]
    gates = []
    for i in range(Nb):
        s_i = jnp.dot(jnp.sum(h[i * R:(i + 1) * R], axis=0, keepdims=True), g1m,
                      preferred_element_type=jnp.float32)     # per-channel total sum
        hh = jnp.maximum(jnp.dot(s_i, sw1, preferred_element_type=jnp.float32) + sb1,
                         0.0)                                 # (1, Cr); 1/(W*S) in sw1
        gate = jax.nn.sigmoid(jnp.dot(hh, sw2, preferred_element_type=jnp.float32)
                              + sb2)                          # (1, W*Ch)
        gates.append(jnp.broadcast_to(gate, (R, gate.shape[-1])))
    h = h * (gates[0] if Nb == 1 else jnp.concatenate(gates, axis=0))

    # last_conv: 1x1x1, no bias == block-diagonal fused matmul, lane-padded output.
    y = jnp.dot(h.astype(jnp.bfloat16), w2_ref[...],
                preferred_element_type=jnp.float32)           # (F, W*n_out_pad)
    o_ref[...] = y.reshape(o_ref.shape).astype(o_ref.dtype)


def _band_weights(w, W):
    """(3,3,3,Cin,Cout) DHWIO conv weight -> (9*W*Cin, W*Cout) K-concatenated bands.

    For each (kz, ky) tap: band[xi*Cin+ci, xo*Cout+co] = w[kz, ky, xi-xo+1, ci, co]
    when the x tap is in range, else 0 (the W x-taps + channel contraction fused
    into one lane-dense block; 'same' zero padding in x is implicit). The 9 blocks
    are stacked along K so the whole conv is a single matmul.
    """
    Cin, Cout = w.shape[3], w.shape[4]
    xi = jnp.arange(W)[:, None]
    xo = jnp.arange(W)[None, :]
    kx = xi - xo + 1                                          # (W, W)
    valid = ((kx >= 0) & (kx < 3)).astype(w.dtype)
    band = w[:, :, jnp.clip(kx, 0, 2)] * valid[None, None, :, :, None, None]
    band = band.transpose(0, 1, 2, 4, 3, 5).reshape(9 * W * Cin, W * Cout)
    return band


def _group_sum_matrix(C, W):
    # (W*C, W*C) 0/1 matrix: sums each channel across the W lane groups and leaves
    # the result broadcast across all groups.
    return jnp.tile(jnp.eye(C, dtype=jnp.float32), (W, W))


def _tap_masks(D, H, Nb):
    # (Nb*D*H, 9) 0/1 validity of each (kz, ky) tap per output row: 'same' padding
    # in z and y, and kills cross-sample bleed when Nb > 1.
    R = D * H
    r = np.arange(R)
    z, y = r // H, r % H
    m = np.zeros((R, 9), np.float32)
    for k in range(9):
        kz, ky = divmod(k, 3)
        m[:, k] = ((z + kz - 1 >= 0) & (z + kz - 1 < D) &
                   (y + ky - 1 >= 0) & (y + ky - 1 < H)).astype(np.float32)
    return jnp.asarray(np.tile(m, (Nb, 1))).astype(jnp.bfloat16)


def block_q(x_ncdhw, p, samples_per_step=None):
    """BlockQ forward. x_ncdhw: (N, C, D, H, W) like PyTorch."""
    N, C_in, D, H, W = x_ncdhw.shape
    C_hid = p['w0'].shape[-1]
    n_out = p['w2'].shape[-1]
    R, S = D * H, D * H * W
    WC0, WC1 = W * C_in, W * C_hid
    PAD = _pad_rows(H)

    # Output channels padded so the store lane width (W*no_pad) is a multiple of 128.
    no_pad = _round_up(n_out, 128 // math.gcd(W, 128))
    WNO = W * no_pad

    # Samples per grid step: raise matmul M (target ~256 rows) while dividing N.
    if samples_per_step is None:
        Nb = 1
        for cand in range(min(N, max(1, 256 // R)), 0, -1):
            if N % cand == 0:
                Nb = cand
                break
    else:
        Nb = samples_per_step
    assert N % Nb == 0
    F = Nb * R

    # NCDHW -> NDHWC -> lane-dense fused (N, D*H, W*C).
    x = jnp.transpose(x_ncdhw, (0, 2, 3, 4, 1)).astype(jnp.float32).reshape(N, R, WC0)

    band0 = _band_weights(p['w0'].astype(jnp.float32), W).astype(jnp.bfloat16)
    band1 = _band_weights(p['w1'].astype(jnp.float32), W).astype(jnp.bfloat16)
    b0f = jnp.tile(p['b0'].astype(jnp.float32), (1, W))               # (1, W*C_hid)
    b1f = jnp.tile(p['b1'].astype(jnp.float32), (1, W))
    # SE weights in the fused layout; 1/(W*S) folds the global mean into FC1.
    sw1f = jnp.tile(p['sw1'].astype(jnp.float32), (W, 1)) / (W * S)   # (W*C_hid, Cr)
    sb1 = p['sb1'].astype(jnp.float32)                                # (1, Cr)
    sw2f = jnp.tile(p['sw2'].astype(jnp.float32), (1, W))             # (Cr, W*C_hid)
    sb2f = jnp.tile(p['sb2'].astype(jnp.float32), (1, W))             # (1, W*C_hid)
    # 1x1x1 conv (no bias) as a block-diagonal fused matmul, lane-padded output.
    w2p = jnp.pad(p['w2'].astype(jnp.float32), ((0, 0), (0, no_pad - n_out)))
    w2f = jnp.einsum('ij,co->icjo', jnp.eye(W, dtype=jnp.float32), w2p)
    w2f = w2f.reshape(WC1, WNO).astype(jnp.bfloat16)
    g0 = _group_sum_matrix(C_in, W)
    g1 = _group_sum_matrix(C_hid, W)
    masks = _tap_masks(D, H, Nb)                                      # (F, 9) bf16

    weights = (band0, b0f, band1, b1f, sw1f, sb1, sw2f, sb2f, w2f, g0, g1, masks)

    def full_spec(a):
        nd = a.ndim
        return pl.BlockSpec(a.shape, lambda n, _nd=nd: (0,) * _nd)
    # TODO(synk): at scale mark these constant-index weight specs single-buffered
    #             (pipeline_mode=pl.Buffered(1)); the duplicate buffers dominate
    #             VMEM on v7x once the band weights reach multi-MB sizes.

    kernel = functools.partial(_block_q_kernel, D=D, H=H, W=W, Nb=Nb)

    # VMEM budget derived from the actual buffers (double-buffered IO and weights,
    # bf16 pad scratch, in-kernel temporaries) instead of a hard-coded value.
    io_bytes = 2 * F * (WC0 + WNO) * 4
    w_bytes = 2 * sum(int(a.size) * a.dtype.itemsize for a in weights)
    scratch_bytes = (F + 2 * PAD) * (WC0 + WC1) * 2
    tmp_bytes = F * 9 * max(WC0, WC1) * 2 + 8 * F * max(WC0, WC1, WNO) * 4
    vmem_limit = int(min(max((io_bytes + w_bytes + scratch_bytes + tmp_bytes) * 3 // 2,
                             32 * 1024 * 1024), 56 * 1024 * 1024))

    out = pl.pallas_call(
        kernel,
        out_shape=jax.ShapeDtypeStruct((N, R, WNO), jnp.float32),
        grid=(N // Nb,),
        in_specs=[pl.BlockSpec((Nb, R, WC0), lambda n: (n, 0, 0))]
                 + [full_spec(a) for a in weights],
        out_specs=pl.BlockSpec((Nb, R, WNO), lambda n: (n, 0, 0)),
        scratch_shapes=[pltpu.VMEM((F + 2 * PAD, WC0), jnp.bfloat16),
                        pltpu.VMEM((F + 2 * PAD, WC1), jnp.bfloat16)],
        compiler_params=pltpu.CompilerParams(
            dimension_semantics=("parallel",),
            vmem_limit_bytes=vmem_limit),
    )(x, *weights)

    out = out.reshape(N, D, H, W, no_pad)[..., :n_out]
    return jnp.transpose(out, (0, 4, 1, 2, 3))                        # back to NCDHW


def init_params(key, n_channels, n_hidden, n_out, reduction_ratio=4):
    Cr = max(1, n_hidden // reduction_ratio)
    ks = jax.random.split(key, 7)

    def w(k, shape, fan_in):
        return (jax.random.normal(k, shape, jnp.float32) / np.sqrt(fan_in)).astype(jnp.float32)

    return {
        'w0': w(ks[0], (3, 3, 3, n_channels, n_hidden), 27 * n_channels),  # DHWIO
        'b0': w(ks[1], (1, n_hidden), n_channels),
        'w1': w(ks[2], (3, 3, 3, n_hidden, n_hidden), 27 * n_hidden),
        'b1': w(ks[3], (1, n_hidden), n_hidden),
        'sw1': w(ks[4], (n_hidden, Cr), n_hidden),
        'sb1': jnp.zeros((1, Cr), jnp.float32),
        'sw2': w(ks[5], (Cr, n_hidden), Cr),
        'sb2': jnp.zeros((1, n_hidden), jnp.float32),
        'w2': w(ks[6], (n_hidden, n_out), n_hidden),                       # last_conv, no bias
    }


def block_q_ref(x_ncdhw, p):
    """Pure-JAX reference (mirrors the PyTorch BlockQ forward)."""
    x = jnp.transpose(x_ncdhw, (0, 2, 3, 4, 1)).astype(jnp.float32)        # NDHWC

    def inorm_silu(v):
        m = jnp.mean(v, axis=(1, 2, 3), keepdims=True)
        var = jnp.mean((v - m) ** 2, axis=(1, 2, 3), keepdims=True)
        vn = (v - m) * lax.rsqrt(var + EPS)
        return vn * jax.nn.sigmoid(vn)

    def conv3(v, w, b):
        y = lax.conv_general_dilated(v, w, (1, 1, 1), 'SAME',
                                     dimension_numbers=('NDHWC', 'DHWIO', 'NDHWC'))
        return y + b

    out = conv3(inorm_silu(x), p['w0'], p['b0'])
    out = conv3(inorm_silu(out), p['w1'], p['b1'])
    s = jnp.mean(out, axis=(1, 2, 3))                                      # (N, Ch)
    h = jnp.maximum(s @ p['sw1'] + p['sb1'], 0.0)
    g = jax.nn.sigmoid(h @ p['sw2'] + p['sb2'])
    out = out * g[:, None, None, None, :]
    out = jnp.einsum('ndhwc,co->ndhwo', out, p['w2'])                      # 1x1x1, no bias
    return jnp.transpose(out, (0, 4, 1, 2, 3))


if __name__ == "__main__":
    key = jax.random.PRNGKey(0)
    kx, kp = jax.random.split(key)
    N, C, Ch, n_out, D, H, W = 2, 16, 16, 8, 8, 8, 8
    x = jax.random.normal(kx, (N, C, D, H, W), jnp.float32)    # PyTorch-style NCDHW
    params = init_params(kp, C, Ch, n_out)

    out = jax.block_until_ready(block_q(x, params))
    ref = jax.block_until_ready(block_q_ref(x, params))

    assert out.shape == (N, n_out, D, H, W), out.shape
    np.testing.assert_allclose(np.asarray(out), np.asarray(ref), rtol=2e-2, atol=2e-2)
    print("KERNEL_OK")
</pallas_src>

<mosaic_0001>
module attributes {stable_mosaic.version = 11 : i64} {
  func.func @_block_q_kernel(%arg0: i32, %arg1: memref<2x64x128xf32, #tpu.memory_space<vmem>>, %arg2: memref<1152x128xbf16, #tpu.memory_space<vmem>>, %arg3: memref<1x128xf32, #tpu.memory_space<vmem>>, %arg4: memref<1152x128xbf16, #tpu.memory_space<vmem>>, %arg5: memref<1x128xf32, #tpu.memory_space<vmem>>, %arg6: memref<128x4xf32, #tpu.memory_space<vmem>>, %arg7: memref<1x4xf32, #tpu.memory_space<vmem>>, %arg8: memref<4x128xf32, #tpu.memory_space<vmem>>, %arg9: memref<1x128xf32, #tpu.memory_space<vmem>>, %arg10: memref<128x128xbf16, #tpu.memory_space<vmem>>, %arg11: memref<128x128xf32, #tpu.memory_space<vmem>>, %arg12: memref<128x128xf32, #tpu.memory_space<vmem>>, %arg13: memref<128x9xbf16, #tpu.memory_space<vmem>>, %arg14: memref<2x64x128xf32, #tpu.memory_space<vmem>>, %arg15: memref<160x128xbf16, #tpu.memory_space<vmem>>, %arg16: memref<160x128xbf16, #tpu.memory_space<vmem>>) attributes {dimension_semantics = [#tpu.dimension_semantics<parallel>], iteration_bounds = array<i64: 1>, scalar_prefetch = 0 : i64, scratch_operands = 2 : i64, tpu.core_type = #tpu.core_type<tc>, window_params = [{transform_indices = @transform_0, window_bounds = array<i64: 2, 64, 128>}, {pipeline_mode = #tpu.pipeline_mode<synchronous>, transform_indices = @transform_1, window_bounds = array<i64: 1152, 128>}, {pipeline_mode = #tpu.pipeline_mode<synchronous>, transform_indices = @transform_2, window_bounds = array<i64: 1, 128>}, {pipeline_mode = #tpu.pipeline_mode<synchronous>, transform_indices = @transform_3, window_bounds = array<i64: 1152, 128>}, {pipeline_mode = #tpu.pipeline_mode<synchronous>, transform_indices = @transform_4, window_bounds = array<i64: 1, 128>}, {pipeline_mode = #tpu.pipeline_mode<synchronous>, transform_indices = @transform_5, window_bounds = array<i64: 128, 4>}, {pipeline_mode = #tpu.pipeline_mode<synchronous>, transform_indices = @transform_6, window_bounds = array<i64: 1, 4>}, {pipeline_mode = #tpu.pipeline_mode<synchronous>, transform_indices = @transform_7, window_bounds = array<i64: 4, 128>}, {pipeline_mode = #tpu.pipeline_mode<synchronous>, transform_indices = @transform_8, window_bounds = array<i64: 1, 128>}, {pipeline_mode = #tpu.pipeline_mode<synchronous>, transform_indices = @transform_9, window_bounds = array<i64: 128, 128>}, {pipeline_mode = #tpu.pipeline_mode<synchronous>, transform_indices = @transform_10, window_bounds = array<i64: 128, 128>}, {pipeline_mode = #tpu.pipeline_mode<synchronous>, transform_indices = @transform_11, window_bounds = array<i64: 128, 128>}, {pipeline_mode = #tpu.pipeline_mode<synchronous>, transform_indices = @transform_12, window_bounds = array<i64: 128, 9>}, {transform_indices = @transform_13, window_bounds = array<i64: 2, 64, 128>}]} {
    %c0 = arith.constant 0 : index
    %c0_0 = arith.constant 0 : index
    %0 = vector.load %arg13[%c0, %c0_0] : memref<128x9xbf16, #tpu.memory_space<vmem>>, vector<128x9xbf16>
    %cst = arith.constant 0.000000e+00 : bf16
    %1 = vector.broadcast %cst : bf16 to vector<16x128xbf16>
    %c0_1 = arith.constant 0 : index
    %c0_2 = arith.constant 0 : index
    %2 = vector.load %arg15[%c0_1, %c0_2] : memref<160x128xbf16, #tpu.memory_space<vmem>>, vector<16x128xbf16>
    tpu.vector_store %arg15[%c0_1, %c0_2], %1 {strides = array<i32>} : memref<160x128xbf16, #tpu.memory_space<vmem>>, vector<16x128xbf16>,
    %c144 = arith.constant 144 : index
    %c0_3 = arith.constant 0 : index
    %3 = vector.load %arg15[%c144, %c0_3] : memref<160x128xbf16, #tpu.memory_space<vmem>>, vector<16x128xbf16>
    tpu.vector_store %arg15[%c144, %c0_3], %1 {strides = array<i32>} : memref<160x128xbf16, #tpu.memory_space<vmem>>, vector<16x128xbf16>,
    %cst_4 = arith.constant 0.000000e+00 : bf16
    %4 = vector.broadcast %cst_4 : bf16 to vector<16x128xbf16>
    %c0_5 = arith.constant 0 : index
    %c0_6 = arith.constant 0 : index
    %5 = vector.load %arg16[%c0_5, %c0_6] : memref<160x128xbf16, #tpu.memory_space<vmem>>, vector<16x128xbf16>
    tpu.vector_store %arg16[%c0_5, %c0_6], %4 {strides = array<i32>} : memref<160x128xbf16, #tpu.memory_space<vmem>>, vector<16x128xbf16>,
    %c144_7 = arith.constant 144 : index
    %c0_8 = arith.constant 0 : index
    %6 = vector.load %arg16[%c144_7, %c0_8] : memref<160x128xbf16, #tpu.memory_space<vmem>>, vector<16x128xbf16>
    tpu.vector_store %arg16[%c144_7, %c0_8], %4 {strides = array<i32>} : memref<160x128xbf16, #tpu.memory_space<vmem>>, vector<16x128xbf16>,
    %c0_9 = arith.constant 0 : index
    %c0_10 = arith.constant 0 : index
    %c0_11 = arith.constant 0 : index
    %7 = vector.load %arg1[%c0_9, %c0_10, %c0_11] : memref<2x64x128xf32, #tpu.memory_space<vmem>>, vector<2x64x128xf32>
    %8 = vector.shape_cast %7 : vector<2x64x128xf32> to vector<128x128xf32>
    %c0_12 = arith.constant 0 : index
    %c0_13 = arith.constant 0 : index
    %9 = vector.load %arg11[%c0_12, %c0_13] : memref<128x128xf32, #tpu.memory_space<vmem>>, vector<128x128xf32>
    %10 = vector.extract_strided_slice %8 {offsets = [0, 0], sizes = [64, 128], strides = [1, 1]} : vector<128x128xf32> to vector<64x128xf32>
    %cst_14 = arith.constant dense<0.000000e+00> : vector<128xf32>
    %11 = vector.multi_reduction <add>, %10, %cst_14 [0] : vector<64x128xf32> to vector<128xf32>
    %12 = vector.shape_cast %11 : vector<128xf32> to vector<1x128xf32>
    %cst_15 = arith.constant dense<0.000000e+00> : vector<1x128xf32>
    %13 = tpu.matmul %12, %9, %cst_15 {dimension_numbers = #tpu.dot_dimension_numbers<[1], [0], [0], [1], [0, 0, 1, 1], [], []>} : vector<1x128xf32>, vector<128x128xf32>, vector<1x128xf32> -> vector<1x128xf32>
    %cst_16 = arith.constant 0.001953125 : f32
    %14 = vector.broadcast %cst_16 : f32 to vector<1x128xf32>
    %15 = arith.mulf %13, %14 : vector<1x128xf32>
    %16 = vector.broadcast %15 : vector<1x128xf32> to vector<64x128xf32>
    %17 = arith.subf %10, %16 : vector<64x128xf32>
    %18 = arith.mulf %17, %17 : vector<64x128xf32>
    %cst_17 = arith.constant dense<0.000000e+00> : vector<128xf32>
    %19 = vector.multi_reduction <add>, %18, %cst_17 [0] : vector<64x128xf32> to vector<128xf32>
    %20 = vector.shape_cast %19 : vector<128xf32> to vector<1x128xf32>
    %cst_18 = arith.constant dense<0.000000e+00> : vector<1x128xf32>
    %21 = tpu.matmul %20, %9, %cst_18 {dimension_numbers = #tpu.dot_dimension_numbers<[1], [0], [0], [1], [0, 0, 1, 1], [], []>} : vector<1x128xf32>, vector<128x128xf32>, vector<1x128xf32> -> vector<1x128xf32>
    %cst_19 = arith.constant 0.001953125 : f32
    %22 = vector.broadcast %cst_19 : f32 to vector<1x128xf32>
    %23 = arith.mulf %21, %22 : vector<1x128xf32>
    %cst_20 = arith.constant 9.99999974E-6 : f32
    %24 = vector.broadcast %cst_20 : f32 to vector<1x128xf32>
    %25 = arith.addf %23, %24 : vector<1x128xf32>
    %26 = math.rsqrt %25 : vector<1x128xf32>
    %27 = vector.broadcast %26 : vector<1x128xf32> to vector<64x128xf32>
    %28 = arith.mulf %17, %27 : vector<64x128xf32>
    %29 = arith.negf %28 : vector<64x128xf32>
    %30 = math.exp %29 : vector<64x128xf32>
    %cst_21 = arith.constant 1.000000e+00 : f32
    %31 = vector.broadcast %cst_21 : f32 to vector<64x128xf32>
    %32 = arith.addf %31, %30 : vector<64x128xf32>
    %33 = arith.divf %31, %32 : vector<64x128xf32>
    %34 = arith.mulf %28, %33 : vector<64x128xf32>
    %35 = vector.extract_strided_slice %8 {offsets = [64, 0], sizes = [64, 128], strides = [1, 1]} : vector<128x128xf32> to vector<64x128xf32>
    %cst_22 = arith.constant dense<0.000000e+00> : vector<128xf32>
    %36 = vector.multi_reduction <add>, %35, %cst_22 [0] : vector<64x128xf32> to vector<128xf32>
    %37 = vector.shape_cast %36 : vector<128xf32> to vector<1x128xf32>
    %cst_23 = arith.constant dense<0.000000e+00> : vector<1x128xf32>
    %38 = tpu.matmul %37, %9, %cst_23 {dimension_numbers = #tpu.dot_dimension_numbers<[1], [0], [0], [1], [0, 0, 1, 1], [], []>} : vector<1x128xf32>, vector<128x128xf32>, vector<1x128xf32> -> vector<1x128xf32>
    %cst_24 = arith.constant 0.001953125 : f32
    %39 = vector.broadcast %cst_24 : f32 to vector<1x128xf32>
    %40 = arith.mulf %38, %39 : vector<1x128xf32>
    %41 = vector.broadcast %40 : vector<1x128xf32> to vector<64x128xf32>
    %42 = arith.subf %35, %41 : vector<64x128xf32>
    %43 = arith.mulf %42, %42 : vector<64x128xf32>
    %cst_25 = arith.constant dense<0.000000e+00> : vector<128xf32>
    %44 = vector.multi_reduction <add>, %43, %cst_25 [0] : vector<64x128xf32> to vector<128xf32>
    %45 = vector.shape_cast %44 : vector<128xf32> to vector<1x128xf32>
    %cst_26 = arith.constant dense<0.000000e+00> : vector<1x128xf32>
    %46 = tpu.matmul %45, %9, %cst_26 {dimension_numbers = #tpu.dot_dimension_numbers<[1], [0], [0], [1], [0, 0, 1, 1], [], []>} : vector<1x128xf32>, vector<128x128xf32>, vector<1x128xf32> -> vector<1x128xf32>
    %cst_27 = arith.constant 0.001953125 : f32
    %47 = vector.broadcast %cst_27 : f32 to vector<1x128xf32>
    %48 = arith.mulf %46, %47 : vector<1x128xf32>
    %cst_28 = arith.constant 9.99999974E-6 : f32
    %49 = vector.broadcast %cst_28 : f32 to vector<1x128xf32>
    %50 = arith.addf %48, %49 : vector<1x128xf32>
    %51 = math.rsqrt %50 : vector<1x128xf32>
    %52 = vector.broadcast %51 : vector<1x128xf32> to vector<64x128xf32>
    %53 = arith.mulf %42, %52 : vector<64x128xf32>
    %54 = arith.negf %53 : vector<64x128xf32>
    %55 = math.exp %54 : vector<64x128xf32>
    %cst_29 = arith.constant 1.000000e+00 : f32
    %56 = vector.broadcast %cst_29 : f32 to vector<64x128xf32>
    %57 = arith.addf %56, %55 : vector<64x128xf32>
    %58 = arith.divf %56, %57 : vector<64x128xf32>
    %59 = arith.mulf %53, %58 : vector<64x128xf32>
    %60 = tpu.concatenate %34, %59 in 0 : vector<64x128xf32>, vector<64x128xf32> -> vector<128x128xf32>
    %61 = arith.truncf %60 : vector<128x128xf32> to vector<128x128xbf16>
    %c16 = arith.constant 16 : index
    %c0_30 = arith.constant 0 : index
    %62 = vector.load %arg15[%c16, %c0_30] : memref<160x128xbf16, #tpu.memory_space<vmem>>, vector<128x128xbf16>
    tpu.vector_store %arg15[%c16, %c0_30], %61 {strides = array<i32>} : memref<160x128xbf16, #tpu.memory_space<vmem>>, vector<128x128xbf16>,
    %c7 = arith.constant 7 : index
    %c0_31 = arith.constant 0 : index
    %63 = vector.load %arg15[%c7, %c0_31] : memref<160x128xbf16, #tpu.memory_space<vmem>>, vector<128x128xbf16>
    %64 = vector.extract_strided_slice %0 {offsets = [0, 0], sizes = [128, 1], strides = [1, 1]} : vector<128x9xbf16> to vector<128x1xbf16>
    %65 = vector.broadcast %64 : vector<128x1xbf16> to vector<128x128xbf16>
    %66 = arith.mulf %63, %65 : vector<128x128xbf16>
    %c8 = arith.constant 8 : index
    %c0_32 = arith.constant 0 : index
    %67 = vector.load %arg15[%c8, %c0_32] : memref<160x128xbf16, #tpu.memory_space<vmem>>, vector<128x128xbf16>
    %68 = vector.extract_strided_slice %0 {offsets = [0, 1], sizes = [128, 1], strides = [1, 1]} : vector<128x9xbf16> to vector<128x1xbf16>
    %69 = vector.broadcast %68 : vector<128x1xbf16> to vector<128x128xbf16>
    %70 = arith.mulf %67, %69 : vector<128x128xbf16>
    %c9 = arith.constant 9 : index
    %c0_33 = arith.constant 0 : index
    %71 = vector.load %arg15[%c9, %c0_33] : memref<160x128xbf16, #tpu.memory_space<vmem>>, vector<128x128xbf16>
    %72 = vector.extract_strided_slice %0 {offsets = [0, 2], sizes = [128, 1], strides = [1, 1]} : vector<128x9xbf16> to vector<128x1xbf16>
    %73 = vector.broadcast %72 : vector<128x1xbf16> to vector<128x128xbf16>
    %74 = arith.mulf %71, %73 : vector<128x128xbf16>
    %c15 = arith.constant 15 : index
    %c0_34 = arith.constant 0 : index
    %75 = vector.load %arg15[%c15, %c0_34] : memref<160x128xbf16, #tpu.memory_space<vmem>>, vector<128x128xbf16>
    %76 = vector.extract_strided_slice %0 {offsets = [0, 3], sizes = [128, 1], strides = [1, 1]} : vector<128x9xbf16> to vector<128x1xbf16>
    %77 = vector.broadcast %76 : vector<128x1xbf16> to vector<128x128xbf16>
    %78 = arith.mulf %75, %77 : vector<128x128xbf16>
    %c16_35 = arith.constant 16 : index
    %c0_36 = arith.constant 0 : index
    %79 = vector.load %arg15[%c16_35, %c0_36] : memref<160x128xbf16, #tpu.memory_space<vmem>>, vector<128x128xbf16>
    %c17 = arith.constant 17 : index
    %c0_37 = arith.constant 0 : index
    %80 = vector.load %arg15[%c17, %c0_37] : memref<160x128xbf16, #tpu.memory_space<vmem>>, vector<128x128xbf16>
    %81 = vector.extract_strided_slice %0 {offsets = [0, 5], sizes = [128, 1], strides = [1, 1]} : vector<128x9xbf16> to vector<128x1xbf16>
    %82 = vector.broadcast %81 : vector<128x1xbf16> to vector<128x128xbf16>
    %83 = arith.mulf %80, %82 : vector<128x128xbf16>
    %c23 = arith.constant 23 : index
    %c0_38 = arith.constant 0 : index
    %84 = vector.load %arg15[%c23, %c0_38] : memref<160x128xbf16, #tpu.memory_space<vmem>>, vector<128x128xbf16>
    %85 = vector.extract_strided_slice %0 {offsets = [0, 6], sizes = [128, 1], strides = [1, 1]} : vector<128x9xbf16> to vector<128x1xbf16>
    %86 = vector.broadcast %85 : vector<128x1xbf16> to vector<128x128xbf16>
    %87 = arith.mulf %84, %86 : vector<128x128xbf16>
    %c24 = arith.constant 24 : index
    %c0_39 = arith.constant 0 : index
    %88 = vector.load %arg15[%c24, %c0_39] : memref<160x128xbf16, #tpu.memory_space<vmem>>, vector<128x128xbf16>
    %89 = vector.extract_strided_slice %0 {offsets = [0, 7], sizes = [128, 1], strides = [1, 1]} : vector<128x9xbf16> to vector<128x1xbf16>
    %90 = vector.broadcast %89 : vector<128x1xbf16> to vector<128x128xbf16>
    %91 = arith.mulf %88, %90 : vector<128x128xbf16>
    %c25 = arith.constant 25 : index
    %c0_40 = arith.constant 0 : index
    %92 = vector.load %arg15[%c25, %c0_40] : memref<160x128xbf16, #tpu.memory_space<vmem>>, vector<128x128xbf16>
    %93 = vector.extract_strided_slice %0 {offsets = [0, 8], sizes = [128, 1], strides = [1, 1]} : vector<128x9xbf16> to vector<128x1xbf16>
    %94 = vector.broadcast %93 : vector<128x1xbf16> to vector<128x128xbf16>
    %95 = arith.mulf %92, %94 : vector<128x128xbf16>
    %96 = tpu.concatenate %66, %70, %74, %78, %79, %83, %87, %91, %95 in 1 : vector<128x128xbf16>, vector<128x128xbf16>, vector<128x128xbf16>, vector<128x128xbf16>, vector<128x128xbf16>, vector<128x128xbf16>, vector<128x128xbf16>, vector<128x128xbf16>, vector<128x128xbf16> -> vector<128x1152xbf16>
    %c0_41 = arith.constant 0 : index
    %c0_42 = arith.constant 0 : index
    %97 = vector.load %arg2[%c0_41, %c0_42] : memref<1152x128xbf16, #tpu.memory_space<vmem>>, vector<1152x128xbf16>
    %cst_43 = arith.constant dense<0.000000e+00> : vector<128x128xf32>
    %98 = tpu.matmul %96, %97, %cst_43 {dimension_numbers = #tpu.dot_dimension_numbers<[1], [0], [0], [1], [0, 0, 1, 1], [], []>} : vector<128x1152xbf16>, vector<1152x128xbf16>, vector<128x128xf32> -> vector<128x128xf32>
    %c0_44 = arith.constant 0 : index
    %c0_45 = arith.constant 0 : index
    %99 = vector.load %arg3[%c0_44, %c0_45] : memref<1x128xf32, #tpu.memory_space<vmem>>, vector<1x128xf32>
    %100 = vector.broadcast %99 : vector<1x128xf32> to vector<128x128xf32>
    %101 = arith.addf %98, %100 : vector<128x128xf32>
    %c0_46 = arith.constant 0 : index
    %c0_47 = arith.constant 0 : index
    %102 = vector.load %arg12[%c0_46, %c0_47] : memref<128x128xf32, #tpu.memory_space<vmem>>, vector<128x128xf32>
    %103 = vector.extract_strided_slice %101 {offsets = [0, 0], sizes = [64, 128], strides = [1, 1]} : vector<128x128xf32> to vector<64x128xf32>
    %cst_48 = arith.constant dense<0.000000e+00> : vector<128xf32>
    %104 = vector.multi_reduction <add>, %103, %cst_48 [0] : vector<64x128xf32> to vector<128xf32>
    %105 = vector.shape_cast %104 : vector<128xf32> to vector<1x128xf32>
    %cst_49 = arith.constant dense<0.000000e+00> : vector<1x128xf32>
    %106 = tpu.matmul %105, %102, %cst_49 {dimension_numbers = #tpu.dot_dimension_numbers<[1], [0], [0], [1], [0, 0, 1, 1], [], []>} : vector<1x128xf32>, vector<128x128xf32>, vector<1x128xf32> -> vector<1x128xf32>
    %cst_50 = arith.constant 0.001953125 : f32
    %107 = vector.broadcast %cst_50 : f32 to vector<1x128xf32>
    %108 = arith.mulf %106, %107 : vector<1x128xf32>
    %109 = vector.broadcast %108 : vector<1x128xf32> to vector<64x128xf32>
    %110 = arith.subf %103, %109 : vector<64x128xf32>
    %111 = arith.mulf %110, %110 : vector<64x128xf32>
    %cst_51 = arith.constant dense<0.000000e+00> : vector<128xf32>
    %112 = vector.multi_reduction <add>, %111, %cst_51 [0] : vector<64x128xf32> to vector<128xf32>
    %113 = vector.shape_cast %112 : vector<128xf32> to vector<1x128xf32>
    %cst_52 = arith.constant dense<0.000000e+00> : vector<1x128xf32>
    %114 = tpu.matmul %113, %102, %cst_52 {dimension_numbers = #tpu.dot_dimension_numbers<[1], [0], [0], [1], [0, 0, 1, 1], [], []>} : vector<1x128xf32>, vector<128x128xf32>, vector<1x128xf32> -> vector<1x128xf32>
    %cst_53 = arith.constant 0.001953125 : f32
    %115 = vector.broadcast %cst_53 : f32 to vector<1x128xf32>
    %116 = arith.mulf %114, %115 : vector<1x128xf32>
    %cst_54 = arith.constant 9.99999974E-6 : f32
    %117 = vector.broadcast %cst_54 : f32 to vector<1x128xf32>
    %118 = arith.addf %116, %117 : vector<1x128xf32>
    %119 = math.rsqrt %118 : vector<1x128xf32>
    %120 = vector.broadcast %119 : vector<1x128xf32> to vector<64x128xf32>
    %121 = arith.mulf %110, %120 : vector<64x128xf32>
    %122 = arith.negf %121 : vector<64x128xf32>
    %123 = math.exp %122 : vector<64x128xf32>
    %cst_55 = arith.constant 1.000000e+00 : f32
    %124 = vector.broadcast %cst_55 : f32 to vector<64x128xf32>
    %125 = arith.addf %124, %123 : vector<64x128xf32>
    %126 = arith.divf %124, %125 : vector<64x128xf32>
    %127 = arith.mulf %121, %126 : vector<64x128xf32>
    %128 = vector.extract_strided_slice %101 {offsets = [64, 0], sizes = [64, 128], strides = [1, 1]} : vector<128x128xf32> to vector<64x128xf32>
    %cst_56 = arith.constant dense<0.000000e+00> : vector<128xf32>
    %129 = vector.multi_reduction <add>, %128, %cst_56 [0] : vector<64x128xf32> to vector<128xf32>
    %130 = vector.shape_cast %129 : vector<128xf32> to vector<1x128xf32>
    %cst_57 = arith.constant dense<0.000000e+00> : vector<1x128xf32>
    %131 = tpu.matmul %130, %102, %cst_57 {dimension_numbers = #tpu.dot_dimension_numbers<[1], [0], [0], [1], [0, 0, 1, 1], [], []>} : vector<1x128xf32>, vector<128x128xf32>, vector<1x128xf32> -> vector<1x128xf32>
    %cst_58 = arith.constant 0.001953125 : f32
    %132 = vector.broadcast %cst_58 : f32 to vector<1x128xf32>
    %133 = arith.mulf %131, %132 : vector<1x128xf32>
    %134 = vector.broadcast %133 : vector<1x128xf32> to vector<64x128xf32>
    %135 = arith.subf %128, %134 : vector<64x128xf32>
    %136 = arith.mulf %135, %135 : vector<64x128xf32>
    %cst_59 = arith.constant dense<0.000000e+00> : vector<128xf32>
    %137 = vector.multi_reduction <add>, %136, %cst_59 [0] : vector<64x128xf32> to vector<128xf32>
    %138 = vector.shape_cast %137 : vector<128xf32> to vector<1x128xf32>
    %cst_60 = arith.constant dense<0.000000e+00> : vector<1x128xf32>
    %139 = tpu.matmul %138, %102, %cst_60 {dimension_numbers = #tpu.dot_dimension_numbers<[1], [0], [0], [1], [0, 0, 1, 1], [], []>} : vector<1x128xf32>, vector<128x128xf32>, vector<1x128xf32> -> vector<1x128xf32>
    %cst_61 = arith.constant 0.001953125 : f32
    %140 = vector.broadcast %cst_61 : f32 to vector<1x128xf32>
    %141 = arith.mulf %139, %140 : vector<1x128xf32>
    %cst_62 = arith.constant 9.99999974E-6 : f32
    %142 = vector.broadcast %cst_62 : f32 to vector<1x128xf32>
    %143 = arith.addf %141, %142 : vector<1x128xf32>
    %144 = math.rsqrt %143 : vector<1x128xf32>
    %145 = vector.broadcast %144 : vector<1x128xf32> to vector<64x128xf32>
    %146 = arith.mulf %135, %145 : vector<64x128xf32>
    %147 = arith.negf %146 : vector<64x128xf32>
    %148 = math.exp %147 : vector<64x128xf32>
    %cst_63 = arith.constant 1.000000e+00 : f32
    %149 = vector.broadcast %cst_63 : f32 to vector<64x128xf32>
    %150 = arith.addf %149, %148 : vector<64x128xf32>
    %151 = arith.divf %149, %150 : vector<64x128xf32>
    %152 = arith.mulf %146, %151 : vector<64x128xf32>
    %153 = tpu.concatenate %127, %152 in 0 : vector<64x128xf32>, vector<64x128xf32> -> vector<128x128xf32>
    %154 = arith.truncf %153 : vector<128x128xf32> to vector<128x128xbf16>
    %c16_64 = arith.constant 16 : index
    %c0_65 = arith.constant 0 : index
    %155 = vector.load %arg16[%c16_64, %c0_65] : memref<160x128xbf16, #tpu.memory_space<vmem>>, vector<128x128xbf16>
    tpu.vector_store %arg16[%c16_64, %c0_65], %154 {strides = array<i32>} : memref<160x128xbf16, #tpu.memory_space<vmem>>, vector<128x128xbf16>,
    %c7_66 = arith.constant 7 : index
    %c0_67 = arith.constant 0 : index
    %156 = vector.load %arg16[%c7_66, %c0_67] : memref<160x128xbf16, #tpu.memory_space<vmem>>, vector<128x128xbf16>
    %157 = vector.extract_strided_slice %0 {offsets = [0, 0], sizes = [128, 1], strides = [1, 1]} : vector<128x9xbf16> to vector<128x1xbf16>
    %158 = vector.broadcast %157 : vector<128x1xbf16> to vector<128x128xbf16>
    %159 = arith.mulf %156, %158 : vector<128x128xbf16>
    %c8_68 = arith.constant 8 : index
    %c0_69 = arith.constant 0 : index
    %160 = vector.load %arg16[%c8_68, %c0_69] : memref<160x128xbf16, #tpu.memory_space<vmem>>, vector<128x128xbf16>
    %161 = vector.extract_strided_slice %0 {offsets = [0, 1], sizes = [128, 1], strides = [1, 1]} : vector<128x9xbf16> to vector<128x1xbf16>
    %162 = vector.broadcast %161 : vector<128x1xbf16> to vector<128x128xbf16>
    %163 = arith.mulf %160, %162 : vector<128x128xbf16>
    %c9_70 = arith.constant 9 : index
    %c0_71 = arith.constant 0 : index
    %164 = vector.load %arg16[%c9_70, %c0_71] : memref<160x128xbf16, #tpu.memory_space<vmem>>, vector<128x128xbf16>
    %165 = vector.extract_strided_slice %0 {offsets = [0, 2], sizes = [128, 1], strides = [1, 1]} : vector<128x9xbf16> to vector<128x1xbf16>
    %166 = vector.broadcast %165 : vector<128x1xbf16> to vector<128x128xbf16>
    %167 = arith.mulf %164, %166 : vector<128x128xbf16>
    %c15_72 = arith.constant 15 : index
    %c0_73 = arith.constant 0 : index
    %168 = vector.load %arg16[%c15_72, %c0_73] : memref<160x128xbf16, #tpu.memory_space<vmem>>, vector<128x128xbf16>
    %169 = vector.extract_strided_slice %0 {offsets = [0, 3], sizes = [128, 1], strides = [1, 1]} : vector<128x9xbf16> to vector<128x1xbf16>
    %170 = vector.broadcast %169 : vector<128x1xbf16> to vector<128x128xbf16>
    %171 = arith.mulf %168, %170 : vector<128x128xbf16>
    %c16_74 = arith.constant 16 : index
    %c0_75 = arith.constant 0 : index
    %172 = vector.load %arg16[%c16_74, %c0_75] : memref<160x128xbf16, #tpu.memory_space<vmem>>, vector<128x128xbf16>
    %c17_76 = arith.constant 17 : index
    %c0_77 = arith.constant 0 : index
    %173 = vector.load %arg16[%c17_76, %c0_77] : memref<160x128xbf16, #tpu.memory_space<vmem>>, vector<128x128xbf16>
    %174 = vector.extract_strided_slice %0 {offsets = [0, 5], sizes = [128, 1], strides = [1, 1]} : vector<128x9xbf16> to vector<128x1xbf16>
    %175 = vector.broadcast %174 : vector<128x1xbf16> to vector<128x128xbf16>
    %176 = arith.mulf %173, %175 : vector<128x128xbf16>
    %c23_78 = arith.constant 23 : index
    %c0_79 = arith.constant 0 : index
    %177 = vector.load %arg16[%c23_78, %c0_79] : memref<160x128xbf16, #tpu.memory_space<vmem>>, vector<128x128xbf16>
    %178 = vector.extract_strided_slice %0 {offsets = [0, 6], sizes = [128, 1], strides = [1, 1]} : vector<128x9xbf16> to vector<128x1xbf16>
    %179 = vector.broadcast %178 : vector<128x1xbf16> to vector<128x128xbf16>
    %180 = arith.mulf %177, %179 : vector<128x128xbf16>
    %c24_80 = arith.constant 24 : index
    %c0_81 = arith.constant 0 : index
    %181 = vector.load %arg16[%c24_80, %c0_81] : memref<160x128xbf16, #tpu.memory_space<vmem>>, vector<128x128xbf16>
    %182 = vector.extract_strided_slice %0 {offsets = [0, 7], sizes = [128, 1], strides = [1, 1]} : vector<128x9xbf16> to vector<128x1xbf16>
    %183 = vector.broadcast %182 : vector<128x1xbf16> to vector<128x128xbf16>
    %184 = arith.mulf %181, %183 : vector<128x128xbf16>
    %c25_82 = arith.constant 25 : index
    %c0_83 = arith.constant 0 : index
    %185 = vector.load %arg16[%c25_82, %c0_83] : memref<160x128xbf16, #tpu.memory_space<vmem>>, vector<128x128xbf16>
    %186 = vector.extract_strided_slice %0 {offsets = [0, 8], sizes = [128, 1], strides = [1, 1]} : vector<128x9xbf16> to vector<128x1xbf16>
    %187 = vector.broadcast %186 : vector<128x1xbf16> to vector<128x128xbf16>
    %188 = arith.mulf %185, %187 : vector<128x128xbf16>
    %189 = tpu.concatenate %159, %163, %167, %171, %172, %176, %180, %184, %188 in 1 : vector<128x128xbf16>, vector<128x128xbf16>, vector<128x128xbf16>, vector<128x128xbf16>, vector<128x128xbf16>, vector<128x128xbf16>, vector<128x128xbf16>, vector<128x128xbf16>, vector<128x128xbf16> -> vector<128x1152xbf16>
    %c0_84 = arith.constant 0 : index
    %c0_85 = arith.constant 0 : index
    %190 = vector.load %arg4[%c0_84, %c0_85] : memref<1152x128xbf16, #tpu.memory_space<vmem>>, vector<1152x128xbf16>
    %cst_86 = arith.constant dense<0.000000e+00> : vector<128x128xf32>
    %191 = tpu.matmul %189, %190, %cst_86 {dimension_numbers = #tpu.dot_dimension_numbers<[1], [0], [0], [1], [0, 0, 1, 1], [], []>} : vector<128x1152xbf16>, vector<1152x128xbf16>, vector<128x128xf32> -> vector<128x128xf32>
    %c0_87 = arith.constant 0 : index
    %c0_88 = arith.constant 0 : index
    %192 = vector.load %arg5[%c0_87, %c0_88] : memref<1x128xf32, #tpu.memory_space<vmem>>, vector<1x128xf32>
    %193 = vector.broadcast %192 : vector<1x128xf32> to vector<128x128xf32>
    %194 = arith.addf %191, %193 : vector<128x128xf32>
    %c0_89 = arith.constant 0 : index
    %c0_90 = arith.constant 0 : index
    %195 = vector.load %arg12[%c0_89, %c0_90] : memref<128x128xf32, #tpu.memory_space<vmem>>, vector<128x128xf32>
    %c0_91 = arith.constant 0 : index
    %c0_92 = arith.constant 0 : index
    %196 = vector.load %arg6[%c0_91, %c0_92] : memref<128x4xf32, #tpu.memory_space<vmem>>, vector<128x4xf32>
    %c0_93 = arith.constant 0 : index
    %c0_94 = arith.constant 0 : index
    %197 = vector.load %arg7[%c0_93, %c0_94] : memref<1x4xf32, #tpu.memory_space<vmem>>, vector<1x4xf32>
    %c0_95 = arith.constant 0 : index
    %c0_96 = arith.constant 0 : index
    %198 = vector.load %arg8[%c0_95, %c0_96] : memref<4x128xf32, #tpu.memory_space<vmem>>, vector<4x128xf32>
    %c0_97 = arith.constant 0 : index
    %c0_98 = arith.constant 0 : index
    %199 = vector.load %arg9[%c0_97, %c0_98] : memref<1x128xf32, #tpu.memory_space<vmem>>, vector<1x128xf32>
    %200 = vector.extract_strided_slice %194 {offsets = [0, 0], sizes = [64, 128], strides = [1, 1]} : vector<128x128xf32> to vector<64x128xf32>
    %cst_99 = arith.constant dense<0.000000e+00> : vector<128xf32>
    %201 = vector.multi_reduction <add>, %200, %cst_99 [0] : vector<64x128xf32> to vector<128xf32>
    %202 = vector.shape_cast %201 : vector<128xf32> to vector<1x128xf32>
    %cst_100 = arith.constant dense<0.000000e+00> : vector<1x128xf32>
    %203 = tpu.matmul %202, %195, %cst_100 {dimension_numbers = #tpu.dot_dimension_numbers<[1], [0], [0], [1], [0, 0, 1, 1], [], []>} : vector<1x128xf32>, vector<128x128xf32>, vector<1x128xf32> -> vector<1x128xf32>
    %cst_101 = arith.constant dense<0.000000e+00> : vector<1x4xf32>
    %204 = tpu.matmul %203, %196, %cst_101 {dimension_numbers = #tpu.dot_dimension_numbers<[1], [0], [0], [1], [0, 0, 1, 1], [], []>} : vector<1x128xf32>, vector<128x4xf32>, vector<1x4xf32> -> vector<1x4xf32>
    %205 = arith.addf %204, %197 : vector<1x4xf32>
    %cst_102 = arith.constant 0.000000e+00 : f32
    %206 = vector.broadcast %cst_102 : f32 to vector<1x4xf32>
    %207 = arith.maximumf %205, %206 : vector<1x4xf32>
    %cst_103 = arith.constant dense<0.000000e+00> : vector<1x128xf32>
    %208 = tpu.matmul %207, %198, %cst_103 {dimension_numbers = #tpu.dot_dimension_numbers<[1], [0], [0], [1], [0, 0, 1, 1], [], []>} : vector<1x4xf32>, vector<4x128xf32>, vector<1x128xf32> -> vector<1x128xf32>
    %209 = arith.addf %208, %199 : vector<1x128xf32>
    %210 = arith.negf %209 : vector<1x128xf32>
    %211 = math.exp %210 : vector<1x128xf32>
    %cst_104 = arith.constant 1.000000e+00 : f32
    %212 = vector.broadcast %cst_104 : f32 to vector<1x128xf32>
    %213 = arith.addf %212, %211 : vector<1x128xf32>
    %214 = arith.divf %212, %213 : vector<1x128xf32>
    %215 = vector.shape_cast %214 : vector<1x128xf32> to vector<1x128xf32>
    %216 = vector.broadcast %215 : vector<1x128xf32> to vector<64x128xf32>
    %217 = vector.extract_strided_slice %194 {offsets = [64, 0], sizes = [64, 128], strides = [1, 1]} : vector<128x128xf32> to vector<64x128xf32>
    %cst_105 = arith.constant dense<0.000000e+00> : vector<128xf32>
    %218 = vector.multi_reduction <add>, %217, %cst_105 [0] : vector<64x128xf32> to vector<128xf32>
    %219 = vector.shape_cast %218 : vector<128xf32> to vector<1x128xf32>
    %cst_106 = arith.constant dense<0.000000e+00> : vector<1x128xf32>
    %220 = tpu.matmul %219, %195, %cst_106 {dimension_numbers = #tpu.dot_dimension_numbers<[1], [0], [0], [1], [0, 0, 1, 1], [], []>} : vector<1x128xf32>, vector<128x128xf32>, vector<1x128xf32> -> vector<1x128xf32>
    %cst_107 = arith.constant dense<0.000000e+00> : vector<1x4xf32>
    %221 = tpu.matmul %220, %196, %cst_107 {dimension_numbers = #tpu.dot_dimension_numbers<[1], [0], [0], [1], [0, 0, 1, 1], [], []>} : vector<1x128xf32>, vector<128x4xf32>, vector<1x4xf32> -> vector<1x4xf32>
    %222 = arith.addf %221, %197 : vector<1x4xf32>
    %cst_108 = arith.constant 0.000000e+00 : f32
    %223 = vector.broadcast %cst_108 : f32 to vector<1x4xf32>
    %224 = arith.maximumf %222, %223 : vector<1x4xf32>
    %cst_109 = arith.constant dense<0.000000e+00> : vector<1x128xf32>
    %225 = tpu.matmul %224, %198, %cst_109 {dimension_numbers = #tpu.dot_dimension_numbers<[1], [0], [0], [1], [0, 0, 1, 1], [], []>} : vector<1x4xf32>, vector<4x128xf32>, vector<1x128xf32> -> vector<1x128xf32>
    %226 = arith.addf %225, %199 : vector<1x128xf32>
    %227 = arith.negf %226 : vector<1x128xf32>
    %228 = math.exp %227 : vector<1x128xf32>
    %cst_110 = arith.constant 1.000000e+00 : f32
    %229 = vector.broadcast %cst_110 : f32 to vector<1x128xf32>
    %230 = arith.addf %229, %228 : vector<1x128xf32>
    %231 = arith.divf %229, %230 : vector<1x128xf32>
    %232 = vector.shape_cast %231 : vector<1x128xf32> to vector<1x128xf32>
    %233 = vector.broadcast %232 : vector<1x128xf32> to vector<64x128xf32>
    %234 = tpu.concatenate %216, %233 in 0 : vector<64x128xf32>, vector<64x128xf32> -> vector<128x128xf32>
    %235 = arith.mulf %194, %234 : vector<128x128xf32>
    %236 = arith.truncf %235 : vector<128x128xf32> to vector<128x128xbf16>
    %c0_111 = arith.constant 0 : index
    %c0_112 = arith.constant 0 : index
    %237 = vector.load %arg10[%c0_111, %c0_112] : memref<128x128xbf16, #tpu.memory_space<vmem>>, vector<128x128xbf16>
    %cst_113 = arith.constant dense<0.000000e+00> : vector<128x128xf32>
    %238 = tpu.matmul %236, %237, %cst_113 {dimension_numbers = #tpu.dot_dimension_numbers<[1], [0], [0], [1], [0, 0, 1, 1], [], []>} : vector<128x128xbf16>, vector<128x128xbf16>, vector<128x128xf32> -> vector<128x128xf32>
    %239 = vector.shape_cast %238 : vector<128x128xf32> to vector<2x64x128xf32>
    %c0_114 = arith.constant 0 : index
    %c0_115 = arith.constant 0 : index
    %c0_116 = arith.constant 0 : index
    %240 = vector.load %arg14[%c0_114, %c0_115, %c0_116] : memref<2x64x128xf32, #tpu.memory_space<vmem>>, vector<2x64x128xf32>
    tpu.vector_store %arg14[%c0_114, %c0_115, %c0_116], %239 {strides = array<i32>} : memref<2x64x128xf32, #tpu.memory_space<vmem>>, vector<2x64x128xf32>,
    return
  }
  func.func @transform_0(%arg0: i32) -> (i32, i32, i32) {
    %c0_i32 = arith.constant 0 : i32
    %c0_i32_0 = arith.constant 0 : i32
    %c0_i32_1 = arith.constant 0 : i32
    return %arg0, %c0_i32, %c0_i32_0 : i32, i32, i32
  }
  func.func @transform_1(%arg0: i32) -> (i32, i32) {
    %c0_i32 = arith.constant 0 : i32
    %c0_i32_0 = arith.constant 0 : i32
    %c0_i32_1 = arith.constant 0 : i32
    return %c0_i32, %c0_i32_0 : i32, i32
  }
  func.func @transform_2(%arg0: i32) -> (i32, i32) {
    %c0_i32 = arith.constant 0 : i32
    %c0_i32_0 = arith.constant 0 : i32
    %c0_i32_1 = arith.constant 0 : i32
    return %c0_i32, %c0_i32_0 : i32, i32
  }
  func.func @transform_3(%arg0: i32) -> (i32, i32) {
    %c0_i32 = arith.constant 0 : i32
    %c0_i32_0 = arith.constant 0 : i32
    %c0_i32_1 = arith.constant 0 : i32
    return %c0_i32, %c0_i32_0 : i32, i32
  }
  func.func @transform_4(%arg0: i32) -> (i32, i32) {
    %c0_i32 = arith.constant 0 : i32
    %c0_i32_0 = arith.constant 0 : i32
    %c0_i32_1 = arith.constant 0 : i32
    return %c0_i32, %c0_i32_0 : i32, i32
  }
  func.func @transform_5(%arg0: i32) -> (i32, i32) {
    %c0_i32 = arith.constant 0 : i32
    %c0_i32_0 = arith.constant 0 : i32
    %c0_i32_1 = arith.constant 0 : i32
    return %c0_i32, %c0_i32_0 : i32, i32
  }
  func.func @transform_6(%arg0: i32) -> (i32, i32) {
    %c0_i32 = arith.constant 0 : i32
    %c0_i32_0 = arith.constant 0 : i32
    %c0_i32_1 = arith.constant 0 : i32
    return %c0_i32, %c0_i32_0 : i32, i32
  }
  func.func @transform_7(%arg0: i32) -> (i32, i32) {
    %c0_i32 = arith.constant 0 : i32
    %c0_i32_0 = arith.constant 0 : i32
    %c0_i32_1 = arith.constant 0 : i32
    return %c0_i32, %c0_i32_0 : i32, i32
  }
  func.func @transform_8(%arg0: i32) -> (i32, i32) {
    %c0_i32 = arith.constant 0 : i32
    %c0_i32_0 = arith.constant 0 : i32
    %c0_i32_1 = arith.constant 0 : i32
    return %c0_i32, %c0_i32_0 : i32, i32
  }
  func.func @transform_9(%arg0: i32) -> (i32, i32) {
    %c0_i32 = arith.constant 0 : i32
    %c0_i32_0 = arith.constant 0 : i32
    %c0_i32_1 = arith.constant 0 : i32
    return %c0_i32, %c0_i32_0 : i32, i32
  }
  func.func @transform_10(%arg0: i32) -> (i32, i32) {
    %c0_i32 = arith.constant 0 : i32
    %c0_i32_0 = arith.constant 0 : i32
    %c0_i32_1 = arith.constant 0 : i32
    return %c0_i32, %c0_i32_0 : i32, i32
  }
  func.func @transform_11(%arg0: i32) -> (i32, i32) {
    %c0_i32 = arith.constant 0 : i32
    %c0_i32_0 = arith.constant 0 : i32
    %c0_i32_1 = arith.constant 0 : i32
    return %c0_i32, %c0_i32_0 : i32, i32
  }
  func.func @transform_12(%arg0: i32) -> (i32, i32) {
    %c0_i32 = arith.constant 0 : i32
    %c0_i32_0 = arith.constant 0 : i32
    %c0_i32_1 = arith.constant 0 : i32
    return %c0_i32, %c0_i32_0 : i32, i32
  }
  func.func @transform_13(%arg0: i32) -> (i32, i32, i32) {
    %c0_i32 = arith.constant 0 : i32
    %c0_i32_0 = arith.constant 0 : i32
    %c0_i32_1 = arith.constant 0 : i32
    return %arg0, %c0_i32, %c0_i32_0 : i32, i32, i32
  }
}

</mosaic_0001>

<llo_original>
// kernel: tpu_custom_call.1
$region0: #{tpu_custom_call.1}
  #allocation0 [shape = 'u32[]', space=smem, size = 0x4, offset = 0x4, fixed_abs, tag = 'smem constant byte address 0x4 - core index']
  #allocation1 [shape = 'u32[144,128]{1,0:T(1,128)}', space=vmem, size = 0x12000, scoped, tag = 'internal scratch']
  #allocation2 [shape = 'bf16[160,128]{1,0:T(8,128)(2,1)}', space=vmem, size = 0xa000, scoped, tag = 'scratch operand']
  #allocation3 [shape = 'bf16[160,128]{1,0:T(8,128)(2,1)}', space=vmem, size = 0xa000, scoped, tag = 'scratch operand']
  %s0 = inlined_call_operand.vmem [shape: f32[2,64,128], index: 0, kind: input, shape index: {}]
  %s1 = inlined_call_operand.hbm [shape: bf16[1152,128], index: 1, kind: input, shape index: {}]
  %s2 = inlined_call_operand.vmem [shape: f32[1,128], index: 2, kind: input, shape index: {}]
  %s3 = inlined_call_operand.hbm [shape: bf16[1152,128], index: 3, kind: input, shape index: {}]
  %s4 = inlined_call_operand.vmem [shape: f32[1,128], index: 4, kind: input, shape index: {}]
  %s5 = inlined_call_operand.vmem [shape: f32[128,4], index: 5, kind: input, shape index: {}]
  %s6 = inlined_call_operand.vmem [shape: f32[1,4], index: 6, kind: input, shape index: {}]
  %s7 = inlined_call_operand.vmem [shape: f32[4,128], index: 7, kind: input, shape index: {}]
  %s8 = inlined_call_operand.vmem [shape: f32[1,128], index: 8, kind: input, shape index: {}]
  %s9 = inlined_call_operand.vmem [shape: bf16[128,128], index: 9, kind: input, shape index: {}]
  %s10 = inlined_call_operand.hbm [shape: f32[128,128], index: 10, kind: input, shape index: {}]
  %s11 = inlined_call_operand.hbm [shape: f32[128,128], index: 11, kind: input, shape index: {}]
  %s12 = inlined_call_operand.vmem [shape: bf16[128,9], index: 12, kind: input, shape index: {}]
  %s13 = inlined_call_operand.hbm [shape: f32[2,64,128], index: 13, kind: output, shape index: {}]
  %s14 = sld [smem:[#allocation0]]
  $region78: #{tpu_custom_call.1} parent=0
    _
  %s16 = ssub.s32 1, %s14
  %s17 = scalar_select 0, %s16, %s14
  $region1: #{tpu_custom_call.1} parent=0
    #allocation4 [shape = 'u8[294912]{0}', space=vmem, size = 0x48000, scoped, tag = 'input window, operand 1, single buffered']
    #allocation5 [shape = 's32[1]{0}', space=sflag, size = 0x4, scoped, tag = 'scoped memory for tpu_custom_call.1']
    #allocation6 [shape = 's32[1]{0}', space=sflag, size = 0x4, scoped, tag = 'scoped memory for tpu_custom_call.1']
    #allocation7 [shape = 'u8[294912]{0}', space=vmem, size = 0x48000, scoped, tag = 'input window, operand 3, single buffered']
    #allocation8 [shape = 's32[1]{0}', space=sflag, size = 0x4, scoped, tag = 'scoped memory for tpu_custom_call.1']
    #allocation9 [shape = 'u8[65536]{0}', space=vmem, size = 0x10000, scoped, tag = 'input window, operand 10, single buffered']
    #allocation10 [shape = 'u8[65536]{0}', space=vmem, size = 0x10000, scoped, tag = 'input window, operand 11, single buffered']
    #allocation11 [shape = 's32[1]{0}', space=sflag, size = 0x4, scoped, tag = 'scoped memory for tpu_custom_call.1']
    #allocation12 [shape = 'u8[65536]{0}', space=vmem, size = 0x10000, scoped, tag = 'output window, operand 0, single buffered']
    %18 = vsyncpa [#allocation5], 0
    %19 = vsyncpa [#allocation8], 0
    %20 = vsyncpa [#allocation11], 0
    %21 = vsyncpa [#allocation6], 0
    // Predicated region
    $region2: #{tpu_custom_call.1} parent=1 // pred_check
      _
    $region3: #{tpu_custom_call.1} parent=1 // pred_check_branch
      %23 = sbr.rel (0) target = $region5
    $region4: #{tpu_custom_call.1} parent=1 // pred_region
      _
    $region5: #{tpu_custom_call.1} parent=1 // pred_fallthru
      _
    // Predicated region
    $region6: #{tpu_custom_call.1} parent=1 // pred_check
      _
    $region7: #{tpu_custom_call.1} parent=1 // pred_check_branch
      %25 = sbr.rel (0) target = $region9
    $region8: #{tpu_custom_call.1} parent=1 // pred_region
      %s27 = ssub.s32 9216, 9216
      %28 = vsyncadd [#allocation5], %s27
      %s29 = sshll.u32 [#allocation4], 4
      %s30 = int_to_ptr.vmem [resolvable:$true] %s29
      %35 = dma.hbm_to_vmem [thread:$0]  %s1, 9216, %s30, [#allocation5], 64, 64, 4
    $region9: #{tpu_custom_call.1} parent=1 // pred_fallthru
      _
    // Predicated region
    $region10: #{tpu_custom_call.1} parent=1 // pred_check
      _
    $region11: #{tpu_custom_call.1} parent=1 // pred_check_branch
      %37 = sbr.rel (0) target = $region13
    $region12: #{tpu_custom_call.1} parent=1 // pred_region
      _
    $region13: #{tpu_custom_call.1} parent=1 // pred_fallthru
      _
    // Predicated region
    $region14: #{tpu_custom_call.1} parent=1 // pred_check
      _
    $region15: #{tpu_custom_call.1} parent=1 // pred_check_branch
      %39 = sbr.rel (0) target = $region17
    $region16: #{tpu_custom_call.1} parent=1 // pred_region
      %s41 = ssub.s32 9216, 9216
      %42 = vsyncadd [#allocation8], %s41
      %s43 = sshll.u32 [#allocation7], 4
      %s44 = int_to_ptr.vmem [resolvable:$true] %s43
      %49 = dma.hbm_to_vmem [thread:$0]  %s3, 9216, %s44, [#allocation8], 64, 64, 4
    $region17: #{tpu_custom_call.1} parent=1 // pred_fallthru
      _
    // Predicated region
    $region18: #{tpu_custom_call.1} parent=1 // pred_check
      _
    $region19: #{tpu_custom_call.1} parent=1 // pred_check_branch
      %51 = sbr.rel (0) target = $region21
    $region20: #{tpu_custom_call.1} parent=1 // pred_region
      _
    $region21: #{tpu_custom_call.1} parent=1 // pred_fallthru
      _
    // Predicated region
    $region22: #{tpu_custom_call.1} parent=1 // pred_check
      _
    $region23: #{tpu_custom_call.1} parent=1 // pred_check_branch
      %53 = sbr.rel (0) target = $region25
    $region24: #{tpu_custom_call.1} parent=1 // pred_region
      _
    $region25: #{tpu_custom_call.1} parent=1 // pred_fallthru
      _
    // Predicated region
    $region26: #{tpu_custom_call.1} parent=1 // pred_check
      _
    $region27: #{tpu_custom_call.1} parent=1 // pred_check_branch
      %55 = sbr.rel (0) target = $region29
    $region28: #{tpu_custom_call.1} parent=1 // pred_region
      _
    $region29: #{tpu_custom_call.1} parent=1 // pred_fallthru
      _
    // Predicated region
    $region30: #{tpu_custom_call.1} parent=1 // pred_check
      _
    $region31: #{tpu_custom_call.1} parent=1 // pred_check_branch
      %57 = sbr.rel (0) target = $region33
    $region32: #{tpu_custom_call.1} parent=1 // pred_region
      _
    $region33: #{tpu_custom_call.1} parent=1 // pred_fallthru
      _
    // Predicated region
    $region34: #{tpu_custom_call.1} parent=1 // pred_check
      _
    $region35: #{tpu_custom_call.1} parent=1 // pred_check_branch
      %59 = sbr.rel (0) target = $region37
    $region36: #{tpu_custom_call.1} parent=1 // pred_region
      _
    $region37: #{tpu_custom_call.1} parent=1 // pred_fallthru
      _
    // Predicated region
    $region38: #{tpu_custom_call.1} parent=1 // pred_check
      _
    $region39: #{tpu_custom_call.1} parent=1 // pred_check_branch
      %61 = sbr.rel (0) target = $region41
    $region40: #{tpu_custom_call.1} parent=1 // pred_region
      _
    $region41: #{tpu_custom_call.1} parent=1 // pred_fallthru
      _
    // Predicated region
    $region42: #{tpu_custom_call.1} parent=1 // pred_check
      _
    $region43: #{tpu_custom_call.1} parent=1 // pred_check_branch
      %63 = sbr.rel (0) target = $region45
    $region44: #{tpu_custom_call.1} parent=1 // pred_region
      %s65 = ssub.s32 2048, 2048
      %66 = vsyncadd [#allocation8], %s65
      %s67 = sshll.u32 [#allocation9], 4
      %s68 = int_to_ptr.vmem [resolvable:$true] %s67
      %73 = dma.hbm_to_vmem [thread:$0]  %s10, 2048, %s68, [#allocation8], 128, 128, 8
    $region45: #{tpu_custom_call.1} parent=1 // pred_fallthru
      _
    // Predicated region
    $region46: #{tpu_custom_call.1} parent=1 // pred_check
      _
    $region47: #{tpu_custom_call.1} parent=1 // pred_check_branch
      %75 = sbr.rel (0) target = $region49
    $region48: #{tpu_custom_call.1} parent=1 // pred_region
      %s77 = ssub.s32 2048, 2048
      %78 = vsyncadd [#allocation11], %s77
      %s79 = sshll.u32 [#allocation10], 4
      %s80 = int_to_ptr.vmem [resolvable:$true] %s79
      %85 = dma.hbm_to_vmem [thread:$0]  %s11, 2048, %s80, [#allocation11], 128, 128, 8
    $region49: #{tpu_custom_call.1} parent=1 // pred_fallthru
      _
    // Predicated region
    $region50: #{tpu_custom_call.1} parent=1 // pred_check
      _
    $region51: #{tpu_custom_call.1} parent=1 // pred_check_branch
      %87 = sbr.rel (0) target = $region53
    $region52: #{tpu_custom_call.1} parent=1 // pred_region
      _
    $region53: #{tpu_custom_call.1} parent=1 // pred_fallthru
      _
    // Predicated region
    $region54: #{tpu_custom_call.1} parent=1 // pred_check
      _
    $region55: #{tpu_custom_call.1} parent=1 // pred_check_branch
      %89 = sbr.rel (0) target = $region57
    $region56: #{tpu_custom_call.1} parent=1 // pred_region
      %90 = dma.done [#allocation5], 9216
    $region57: #{tpu_custom_call.1} parent=1 // pred_fallthru
      _
    // Predicated region
    $region58: #{tpu_custom_call.1} parent=1 // pred_check
      _
    $region59: #{tpu_custom_call.1} parent=1 // pred_check_branch
      %92 = sbr.rel (0) target = $region61
    $region60: #{tpu_custom_call.1} parent=1 // pred_region
      %93 = dma.done [#allocation8], 9216
    $region61: #{tpu_custom_call.1} parent=1 // pred_fallthru
      _
    // Predicated region
    $region62: #{tpu_custom_call.1} parent=1 // pred_check
      _
    $region63: #{tpu_custom_call.1} parent=1 // pred_check_branch
      %95 = sbr.rel (0) target = $region65
    $region64: #{tpu_custom_call.1} parent=1 // pred_region
      %96 = dma.done [#allocation8], 2048
    $region65: #{tpu_custom_call.1} parent=1 // pred_fallthru
      _
    // Predicated region
    $region66: #{tpu_custom_call.1} parent=1 // pred_check
      _
    $region67: #{tpu_custom_call.1} parent=1 // pred_check_branch
      %98 = sbr.rel (0) target = $region69
    $region68: #{tpu_custom_call.1} parent=1 // pred_region
      %99 = dma.done [#allocation11], 2048
    $region69: #{tpu_custom_call.1} parent=1 // pred_fallthru
      _
    %v101 = vld [vmem:[%s12] sm:$0xf]
    %v102 = vld [vmem:[%s12 + $0x4] sm:$0xf]
    %v103 = vld [vmem:[%s12 + $0x8] sm:$0xf]
    %v104 = vld [vmem:[%s12 + $0xc] sm:$0xf]
    %v105 = vld [vmem:[%s12 + $0x10] sm:$0xf]
    %v106 = vld [vmem:[%s12 + $0x14] sm:$0xf]
    %v107 = vld [vmem:[%s12 + $0x18] sm:$0xf]
    %v108 = vld [vmem:[%s12 + $0x1c] sm:$0xf]
    %v109 = vld [vmem:[%s12 + $0x20] sm:$0xf]
    %v110 = vld [vmem:[%s12 + $0x24] sm:$0xf]
    %v111 = vld [vmem:[%s12 + $0x28] sm:$0xf]
    %v112 = vld [vmem:[%s12 + $0x2c] sm:$0xf]
    %v113 = vld [vmem:[%s12 + $0x30] sm:$0xf]
    %v114 = vld [vmem:[%s12 + $0x34] sm:$0xf]
    %v115 = vld [vmem:[%s12 + $0x38] sm:$0xf]
    %v116 = vld [vmem:[%s12 + $0x3c] sm:$0xf]
    %117 = vst [vmem:[#allocation2] sm:$0xf] 0
    %118 = vst [vmem:[#allocation2 + $0x4] sm:$0xf] 0
    %119 = vst [vmem:[#allocation2 + $0x48] sm:$0xf] 0
    %120 = vst [vmem:[#allocation2 + $0x4c] sm:$0xf] 0
    %121 = vst [vmem:[#allocation3] sm:$0xf] 0
    %122 = vst [vmem:[#allocation3 + $0x4] sm:$0xf] 0
    %123 = vst [vmem:[#allocation3 + $0x48] sm:$0xf] 0
    %124 = vst [vmem:[#allocation3 + $0x4c] sm:$0xf] 0
    %v125 = vld [vmem:[%s0] sm:$0xff]
    %v126 = vld [vmem:[%s0 + $0x8] sm:$0xff]
    %v127 = vld [vmem:[%s0 + $0x10] sm:$0xff]
    %v128 = vld [vmem:[%s0 + $0x18] sm:$0xff]
    %v129 = vld [vmem:[%s0 + $0x20] sm:$0xff]
    %v130 = vld [vmem:[%s0 + $0x28] sm:$0xff]
    %v131 = vld [vmem:[%s0 + $0x30] sm:$0xff]
    %v132 = vld [vmem:[%s0 + $0x38] sm:$0xff]
    %v133 = vld [vmem:[%s0 + $0x40] sm:$0xff]
    %v134 = vld [vmem:[%s0 + $0x48] sm:$0xff]
    %v135 = vld [vmem:[%s0 + $0x50] sm:$0xff]
    %v136 = vld [vmem:[%s0 + $0x58] sm:$0xff]
    %v137 = vld [vmem:[%s0 + $0x60] sm:$0xff]
    %v138 = vld [vmem:[%s0 + $0x68] sm:$0xff]
    %v139 = vld [vmem:[%s0 + $0x70] sm:$0xff]
    %v140 = vld [vmem:[%s0 + $0x78] sm:$0xff]
    %v141 = vld [vmem:[#allocation9] sm:$0xff]
    %v142 = vld [vmem:[#allocation9 + $0x8] sm:$0xff]
    %v143 = vld [vmem:[#allocation9 + $0x10] sm:$0xff]
    %v144 = vld [vmem:[#allocation9 + $0x18] sm:$0xff]
    %v145 = vld [vmem:[#allocation9 + $0x20] sm:$0xff]
    %v146 = vld [vmem:[#allocation9 + $0x28] sm:$0xff]
    %v147 = vld [vmem:[#allocation9 + $0x30] sm:$0xff]
    %v148 = vld [vmem:[#allocation9 + $0x38] sm:$0xff]
    %v149 = vld [vmem:[#allocation9 + $0x40] sm:$0xff]
    %v150 = vld [vmem:[#allocation9 + $0x48] sm:$0xff]
    %v151 = vld [vmem:[#allocation9 + $0x50] sm:$0xff]
    %v152 = vld [vmem:[#allocation9 + $0x58] sm:$0xff]
    %v153 = vld [vmem:[#allocation9 + $0x60] sm:$0xff]
    %v154 = vld [vmem:[#allocation9 + $0x68] sm:$0xff]
    %v155 = vld [vmem:[#allocation9 + $0x70] sm:$0xff]
    %v156 = vld [vmem:[#allocation9 + $0x78] sm:$0xff]
    %v157 = vadd.f32 %v125, %v126
    %v158 = vadd.f32 %v157, %v127
    %v159 = vadd.f32 %v158, %v128
    %v160 = vadd.f32 %v159, %v129
    %v161 = vadd.f32 %v160, %v130
    %v162 = vadd.f32 %v161, %v131
    %v163 = vadd.f32 %v162, %v132
    %v164 = vrot.slane %v163, 4
    %v165 = vadd.f32 %v163, %v164
    %v166 = vrot.slane %v165, 2
    %v167 = vadd.f32 %v165, %v166
    %v168 = vrot.slane %v167, 1
    %v169 = vadd.f32 %v167, %v168
    %170 = vmatprep.subr.mxu0 0.0
    %171 = vmatpush1.msra.mxu0 %v156
    %172 = vmatprep.subr.mxu0 0.0
    %173 = vmatpush1.msra.mxu0 %v155
    %174 = vmatprep.subr.mxu0 0.0
    %175 = vmatpush1.msra.mxu0 %v154
    %176 = vmatprep.subr.mxu0 0.0
    %177 = vmatpush1.msra.mxu0 %v153
    %178 = vmatprep.subr.mxu0 0.0
    %179 = vmatpush1.msra.mxu0 %v152
    %180 = vmatprep.subr.mxu0 0.0
    %181 = vmatpush1.msra.mxu0 %v151
    %182 = vmatprep.subr.mxu0 0.0
    %183 = vmatpush1.msra.mxu0 %v150
    %184 = vmatprep.subr.mxu0 0.0
    %185 = vmatpush1.msra.mxu0 %v149
    %186 = vmatprep.subr.mxu0 0.0
    %187 = vmatpush1.msra.mxu0 %v148
    %188 = vmatprep.subr.mxu0 0.0
    %189 = vmatpush1.msra.mxu0 %v147
    %190 = vmatprep.subr.mxu0 0.0
    %191 = vmatpush1.msra.mxu0 %v146
    %192 = vmatprep.subr.mxu0 0.0
    %193 = vmatpush1.msra.mxu0 %v145
    %194 = vmatprep.subr.mxu0 0.0
    %195 = vmatpush1.msra.mxu0 %v144
    %196 = vmatprep.subr.mxu0 0.0
    %197 = vmatpush1.msra.mxu0 %v143
    %198 = vmatprep.subr.mxu0 0.0
    %199 = vmatpush1.msra.mxu0 %v142
    %200 = vmatprep.subr.mxu0 0.0
    %201 = vmatpush1.msra.mxu0 %v141
    %202 = vmatprep.subr.mxu0 0.0
    %203 = vmatpush2.msra.mxu0 0.0
    %204 = vmatprep.subr.mxu0 0.0
    %205 = vmatpush2.msra.mxu0 0.0
    %206 = vmatprep.subr.mxu0 0.0
    %207 = vmatpush2.msra.mxu0 0.0
    %208 = vmatprep.subr.mxu0 0.0
    %209 = vmatpush2.msra.mxu0 0.0
    %210 = vmatprep.subr.mxu0 0.0
    %211 = vmatpush2.msra.mxu0 0.0
    %212 = vmatprep.subr.mxu0 0.0
    %213 = vmatpush2.msra.mxu0 0.0
    %214 = vmatprep.subr.mxu0 0.0
    %215 = vmatpush2.msra.mxu0 0.0
    %216 = vmatprep.subr.mxu0 0.0
    %217 = vmatpush2.msra.mxu0 0.0
    %218 = vmatprep.subr.mxu0 0.0
    %219 = vmatpush2.msra.mxu0 0.0
    %220 = vmatprep.subr.mxu0 0.0
    %221 = vmatpush2.msra.mxu0 0.0
    %222 = vmatprep.subr.mxu0 0.0
    %223 = vmatpush2.msra.mxu0 0.0
    %224 = vmatprep.subr.mxu0 0.0
    %225 = vmatpush2.msra.mxu0 0.0
    %226 = vmatprep.subr.mxu0 0.0
    %227 = vmatpush2.msra.mxu0 0.0
    %228 = vmatprep.subr.mxu0 0.0
    %229 = vmatpush2.msra.mxu0 0.0
    %230 = vmatprep.subr.mxu0 0.0
    %231 = vmatpush2.msra.mxu0 0.0
    %232 = vmatprep.subr.mxu0 0.0
    %233 = vmatpush2.msra.mxu0 0.0
    %234 = vmatprep.mubr.f32.mxu0 0.0
    %235 = vmatmul.mubr.f32.gmra.mxu0 %v169
    %v236 = vpop.f32.mrf.mxu0
    %v237 = vadd.f32 0.0, %v236
    %v238 = vpop.f32.mrf.mxu0
    %239 = vdwg.mxu0
    %v240 = vmul.f32 %v237, 0.001953125
    %v241 = vlaneseq
    %v242 = vshrl.u32 %v241, 7
    %v243 = vsub.s32 0, %v242
    %v244 = vrot.slane %v240, %v243
    %v245 = vsub.f32 %v125, %v244
    %v246 = vsub.f32 %v126, %v244
    %v247 = vsub.f32 %v127, %v244
    %v248 = vsub.f32 %v128, %v244
    %v249 = vsub.f32 %v129, %v244
    %v250 = vsub.f32 %v130, %v244
    %v251 = vsub.f32 %v131, %v244
    %v252 = vsub.f32 %v132, %v244
    %v253 = vmul.f32 %v245, %v245
    %v254 = vmul.f32 %v246, %v246
    %v255 = vmul.f32 %v247, %v247
    %v256 = vmul.f32 %v248, %v248
    %v257 = vmul.f32 %v249, %v249
    %v258 = vmul.f32 %v250, %v250
    %v259 = vmul.f32 %v251, %v251
    %v260 = vmul.f32 %v252, %v252
    %v261 = vadd.f32 %v253, %v254
    %v262 = vadd.f32 %v261, %v255
    %v263 = vadd.f32 %v262, %v256
    %v264 = vadd.f32 %v263, %v257
    %v265 = vadd.f32 %v264, %v258
    %v266 = vadd.f32 %v265, %v259
    %v267 = vadd.f32 %v266, %v260
    %v268 = vrot.slane %v267, 4
    %v269 = vadd.f32 %v267, %v268
    %v270 = vrot.slane %v269, 2
    %v271 = vadd.f32 %v269, %v270
    %v272 = vrot.slane %v271, 1
    %v273 = vadd.f32 %v271, %v272
    %274 = vmatprep.subr.mxu0 0.0
    %275 = vmatpush1.msra.mxu0 %v156
    %276 = vmatprep.subr.mxu0 0.0
    %277 = vmatpush1.msra.mxu0 %v155
    %278 = vmatprep.subr.mxu0 0.0
    %279 = vmatpush1.msra.mxu0 %v154
    %280 = vmatprep.subr.mxu0 0.0
    %281 = vmatpush1.msra.mxu0 %v153
    %282 = vmatprep.subr.mxu0 0.0
    %283 = vmatpush1.msra.mxu0 %v152
    %284 = vmatprep.subr.mxu0 0.0
    %285 = vmatpush1.msra.mxu0 %v151
    %286 = vmatprep.subr.mxu0 0.0
    %287 = vmatpush1.msra.mxu0 %v150
    %288 = vmatprep.subr.mxu0 0.0
    %289 = vmatpush1.msra.mxu0 %v149
    %290 = vmatprep.subr.mxu0 0.0
    %291 = vmatpush1.msra.mxu0 %v148
    %292 = vmatprep.subr.mxu0 0.0
    %293 = vmatpush1.msra.mxu0 %v147
    %294 = vmatprep.subr.mxu0 0.0
    %295 = vmatpush1.msra.mxu0 %v146
    %296 = vmatprep.subr.mxu0 0.0
    %297 = vmatpush1.msra.mxu0 %v145
    %298 = vmatprep.subr.mxu0 0.0
    %299 = vmatpush1.msra.mxu0 %v144
    %300 = vmatprep.subr.mxu0 0.0
    %301 = vmatpush1.msra.mxu0 %v143
    %302 = vmatprep.subr.mxu0 0.0
    %303 = vmatpush1.msra.mxu0 %v142
    %304 = vmatprep.subr.mxu0 0.0
    %305 = vmatpush1.msra.mxu0 %v141
    %306 = vmatprep.subr.mxu0 0.0
    %307 = vmatpush2.msra.mxu0 0.0
    %308 = vmatprep.subr.mxu0 0.0
    %309 = vmatpush2.msra.mxu0 0.0
    %310 = vmatprep.subr.mxu0 0.0
    %311 = vmatpush2.msra.mxu0 0.0
    %312 = vmatprep.subr.mxu0 0.0
    %313 = vmatpush2.msra.mxu0 0.0
    %314 = vmatprep.subr.mxu0 0.0
    %315 = vmatpush2.msra.mxu0 0.0
    %316 = vmatprep.subr.mxu0 0.0
    %317 = vmatpush2.msra.mxu0 0.0
    %318 = vmatprep.subr.mxu0 0.0
    %319 = vmatpush2.msra.mxu0 0.0
    %320 = vmatprep.subr.mxu0 0.0
    %321 = vmatpush2.msra.mxu0 0.0
    %322 = vmatprep.subr.mxu0 0.0
    %323 = vmatpush2.msra.mxu0 0.0
    %324 = vmatprep.subr.mxu0 0.0
    %325 = vmatpush2.msra.mxu0 0.0
    %326 = vmatprep.subr.mxu0 0.0
    %327 = vmatpush2.msra.mxu0 0.0
    %328 = vmatprep.subr.mxu0 0.0
    %329 = vmatpush2.msra.mxu0 0.0
    %330 = vmatprep.subr.mxu0 0.0
    %331 = vmatpush2.msra.mxu0 0.0
    %332 = vmatprep.subr.mxu0 0.0
    %333 = vmatpush2.msra.mxu0 0.0
    %334 = vmatprep.subr.mxu0 0.0
    %335 = vmatpush2.msra.mxu0 0.0
    %336 = vmatprep.subr.mxu0 0.0
    %337 = vmatpush2.msra.mxu0 0.0
    %338 = vmatprep.mubr.f32.mxu0 0.0
    %339 = vmatmul.mubr.f32.gmra.mxu0 %v273
    %v340 = vpop.f32.mrf.mxu0
    %v341 = vadd.f32 0.0, %v340
    %v342 = vpop.f32.mrf.mxu0
    %343 = vdwg.mxu0
    %v344 = vmul.f32 %v341, 0.001953125
    %v345 = vadd.f32 %v344, 1e-05
    %v346 = vrsqrt.pop %v345
    %v347 = vlaneseq
    %v348 = vshrl.u32 %v347, 7
    %v349 = vsub.s32 0, %v348
    %v350 = vrot.slane %v346, %v349
    %v351 = vmul.f32 %v245, %v350
    %v352 = vmul.f32 %v246, %v350
    %v353 = vmul.f32 %v247, %v350
    %v354 = vmul.f32 %v248, %v350
    %v355 = vmul.f32 %v249, %v350
    %v356 = vmul.f32 %v250, %v350
    %v357 = vmul.f32 %v251, %v350
    %v358 = vmul.f32 %v252, %v350
    %v359 = vxor.u32 %v351, 2147483648
    %v360 = vxor.u32 %v352, 2147483648
    %v361 = vxor.u32 %v353, 2147483648
    %v362 = vxor.u32 %v354, 2147483648
    %v363 = vxor.u32 %v355, 2147483648
    %v364 = vxor.u32 %v356, 2147483648
    %v365 = vxor.u32 %v357, 2147483648
    %v366 = vxor.u32 %v358, 2147483648
    %v367 = vmul.f32 %v359, 1.442695
    %v368 = vpow.pop %v367
    %v369 = vmul.f32 %v360, 1.442695
    %v370 = vpow.pop %v369
    %v371 = vmul.f32 %v361, 1.442695
    %v372 = vpow.pop %v371
    %v373 = vmul.f32 %v362, 1.442695
    %v374 = vpow.pop %v373
    %v375 = vmul.f32 %v363, 1.442695
    %v376 = vpow.pop %v375
    %v377 = vmul.f32 %v364, 1.442695
    %v378 = vpow.pop %v377
    %v379 = vmul.f32 %v365, 1.442695
    %v380 = vpow.pop %v379
    %v381 = vmul.f32 %v366, 1.442695
    %v382 = vpow.pop %v381
    %v383 = vadd.f32 %v368, 1.0
    %v384 = vadd.f32 %v370, 1.0
    %v385 = vadd.f32 %v372, 1.0
    %v386 = vadd.f32 %v374, 1.0
    %v387 = vadd.f32 %v376, 1.0
    %v388 = vadd.f32 %v378, 1.0
    %v389 = vadd.f32 %v380, 1.0
    %v390 = vadd.f32 %v382, 1.0
    %v391 = vrcp.pop %v383
    %v392 = vmul.f32 1.0, %v391
    %v393 = vrcp.pop %v384
    %v394 = vmul.f32 1.0, %v393
    %v395 = vrcp.pop %v385
    %v396 = vmul.f32 1.0, %v395
    %v397 = vrcp.pop %v386
    %v398 = vmul.f32 1.0, %v397
    %v399 = vrcp.pop %v387
    %v400 = vmul.f32 1.0, %v399
    %v401 = vrcp.pop %v388
    %v402 = vmul.f32 1.0, %v401
    %v403 = vrcp.pop %v389
    %v404 = vmul.f32 1.0, %v403
    %v405 = vrcp.pop %v390
    %v406 = vmul.f32 1.0, %v405
    %v407 = vmul.f32 %v351, %v392
    %v408 = vmul.f32 %v352, %v394
    %v409 = vmul.f32 %v353, %v396
    %v410 = vmul.f32 %v354, %v398
    %v411 = vmul.f32 %v355, %v400
    %v412 = vmul.f32 %v356, %v402
    %v413 = vmul.f32 %v357, %v404
    %v414 = vmul.f32 %v358, %v406
    %v415 = vadd.f32 %v133, %v134
    %v416 = vadd.f32 %v415, %v135
    %v417 = vadd.f32 %v416, %v136
    %v418 = vadd.f32 %v417, %v137
    %v419 = vadd.f32 %v418, %v138
    %v420 = vadd.f32 %v419, %v139
    %v421 = vadd.f32 %v420, %v140
    %v422 = vrot.slane %v421, 4
    %v423 = vadd.f32 %v421, %v422
    %v424 = vrot.slane %v423, 2
    %v425 = vadd.f32 %v423, %v424
    %v426 = vrot.slane %v425, 1
    %v427 = vadd.f32 %v425, %v426
    %428 = vmatprep.subr.mxu0 0.0
    %429 = vmatpush1.msra.mxu0 %v156
    %430 = vmatprep.subr.mxu0 0.0
    %431 = vmatpush1.msra.mxu0 %v155
    %432 = vmatprep.subr.mxu0 0.0
    %433 = vmatpush1.msra.mxu0 %v154
    %434 = vmatprep.subr.mxu0 0.0
    %435 = vmatpush1.msra.mxu0 %v153
    %436 = vmatprep.subr.mxu0 0.0
    %437 = vmatpush1.msra.mxu0 %v152
    %438 = vmatprep.subr.mxu0 0.0
    %439 = vmatpush1.msra.mxu0 %v151
    %440 = vmatprep.subr.mxu0 0.0
    %441 = vmatpush1.msra.mxu0 %v150
    %442 = vmatprep.subr.mxu0 0.0
    %443 = vmatpush1.msra.mxu0 %v149
    %444 = vmatprep.subr.mxu0 0.0
    %445 = vmatpush1.msra.mxu0 %v148
    %446 = vmatprep.subr.mxu0 0.0
    %447 = vmatpush1.msra.mxu0 %v147
    %448 = vmatprep.subr.mxu0 0.0
    %449 = vmatpush1.msra.mxu0 %v146
    %450 = vmatprep.subr.mxu0 0.0
    %451 = vmatpush1.msra.mxu0 %v145
    %452 = vmatprep.subr.mxu0 0.0
    %453 = vmatpush1.msra.mxu0 %v144
    %454 = vmatprep.subr.mxu0 0.0
    %455 = vmatpush1.msra.mxu0 %v143
    %456 = vmatprep.subr.mxu0 0.0
    %457 = vmatpush1.msra.mxu0 %v142
    %458 = vmatprep.subr.mxu0 0.0
    %459 = vmatpush1.msra.mxu0 %v141
    %460 = vmatprep.subr.mxu0 0.0
    %461 = vmatpush2.msra.mxu0 0.0
    %462 = vmatprep.subr.mxu0 0.0
    %463 = vmatpush2.msra.mxu0 0.0
    %464 = vmatprep.subr.mxu0 0.0
    %465 = vmatpush2.msra.mxu0 0.0
    %466 = vmatprep.subr.mxu0 0.0
    %467 = vmatpush2.msra.mxu0 0.0
    %468 = vmatprep.subr.mxu0 0.0
    %469 = vmatpush2.msra.mxu0 0.0
    %470 = vmatprep.subr.mxu0 0.0
    %471 = vmatpush2.msra.mxu0 0.0
    %472 = vmatprep.subr.mxu0 0.0
    %473 = vmatpush2.msra.mxu0 0.0
    %474 = vmatprep.subr.mxu0 0.0
    %475 = vmatpush2.msra.mxu0 0.0
    %476 = vmatprep.subr.mxu0 0.0
    %477 = vmatpush2.msra.mxu0 0.0
    %478 = vmatprep.subr.mxu0 0.0
    %479 = vmatpush2.msra.mxu0 0.0
    %480 = vmatprep.subr.mxu0 0.0
    %481 = vmatpush2.msra.mxu0 0.0
    %482 = vmatprep.subr.mxu0 0.0
    %483 = vmatpush2.msra.mxu0 0.0
    %484 = vmatprep.subr.mxu0 0.0
    %485 = vmatpush2.msra.mxu0 0.0
    %486 = vmatprep.subr.mxu0 0.0
    %487 = vmatpush2.msra.mxu0 0.0
    %488 = vmatprep.subr.mxu0 0.0
    %489 = vmatpush2.msra.mxu0 0.0
    %490 = vmatprep.subr.mxu0 0.0
    %491 = vmatpush2.msra.mxu0 0.0
    %492 = vmatprep.mubr.f32.mxu0 0.0
    %493 = vmatmul.mubr.f32.gmra.mxu0 %v427
    %v494 = vpop.f32.mrf.mxu0
    %v495 = vadd.f32 0.0, %v494
    %v496 = vpop.f32.mrf.mxu0
    %497 = vdwg.mxu0
    %v498 = vmul.f32 %v495, 0.001953125
    %v499 = vlaneseq
    %v500 = vshrl.u32 %v499, 7
    %v501 = vsub.s32 0, %v500
    %v502 = vrot.slane %v498, %v501
    %v503 = vsub.f32 %v133, %v502
    %v504 = vsub.f32 %v134, %v502
    %v505 = vsub.f32 %v135, %v502
    %v506 = vsub.f32 %v136, %v502
    %v507 = vsub.f32 %v137, %v502
    %v508 = vsub.f32 %v138, %v502
    %v509 = vsub.f32 %v139, %v502
    %v510 = vsub.f32 %v140, %v502
    %v511 = vmul.f32 %v503, %v503
    %v512 = vmul.f32 %v504, %v504
    %v513 = vmul.f32 %v505, %v505
    %v514 = vmul.f32 %v506, %v506
    %v515 = vmul.f32 %v507, %v507
    %v516 = vmul.f32 %v508, %v508
    %v517 = vmul.f32 %v509, %v509
    %v518 = vmul.f32 %v510, %v510
    %v519 = vadd.f32 %v511, %v512
    %v520 = vadd.f32 %v519, %v513
    %v521 = vadd.f32 %v520, %v514
    %v522 = vadd.f32 %v521, %v515
    %v523 = vadd.f32 %v522, %v516
    %v524 = vadd.f32 %v523, %v517
    %v525 = vadd.f32 %v524, %v518
    %v526 = vrot.slane %v525, 4
    %v527 = vadd.f32 %v525, %v526
    %v528 = vrot.slane %v527, 2
    %v529 = vadd.f32 %v527, %v528
    %v530 = vrot.slane %v529, 1
    %v531 = vadd.f32 %v529, %v530
    %532 = vmatprep.subr.mxu0 0.0
    %533 = vmatpush1.msra.mxu0 %v156
    %534 = vmatprep.subr.mxu0 0.0
    %535 = vmatpush1.msra.mxu0 %v155
    %536 = vmatprep.subr.mxu0 0.0
    %537 = vmatpush1.msra.mxu0 %v154
    %538 = vmatprep.subr.mxu0 0.0
    %539 = vmatpush1.msra.mxu0 %v153
    %540 = vmatprep.subr.mxu0 0.0
    %541 = vmatpush1.msra.mxu0 %v152
    %542 = vmatprep.subr.mxu0 0.0
    %543 = vmatpush1.msra.mxu0 %v151
    %544 = vmatprep.subr.mxu0 0.0
    %545 = vmatpush1.msra.mxu0 %v150
    %546 = vmatprep.subr.mxu0 0.0
    %547 = vmatpush1.msra.mxu0 %v149
    %548 = vmatprep.subr.mxu0 0.0
    %549 = vmatpush1.msra.mxu0 %v148
    %550 = vmatprep.subr.mxu0 0.0
    %551 = vmatpush1.msra.mxu0 %v147
    %552 = vmatprep.subr.mxu0 0.0
    %553 = vmatpush1.msra.mxu0 %v146
    %554 = vmatprep.subr.mxu0 0.0
    %555 = vmatpush1.msra.mxu0 %v145
    %556 = vmatprep.subr.mxu0 0.0
    %557 = vmatpush1.msra.mxu0 %v144
    %558 = vmatprep.subr.mxu0 0.0
    %559 = vmatpush1.msra.mxu0 %v143
    %560 = vmatprep.subr.mxu0 0.0
    %561 = vmatpush1.msra.mxu0 %v142
    %562 = vmatprep.subr.mxu0 0.0
    %563 = vmatpush1.msra.mxu0 %v141
    %564 = vmatprep.subr.mxu0 0.0
    %565 = vmatpush2.msra.mxu0 0.0
    %566 = vmatprep.subr.mxu0 0.0
    %567 = vmatpush2.msra.mxu0 0.0
    %568 = vmatprep.subr.mxu0 0.0
    %569 = vmatpush2.msra.mxu0 0.0
    %570 = vmatprep.subr.mxu0 0.0
    %571 = vmatpush2.msra.mxu0 0.0
    %572 = vmatprep.subr.mxu0 0.0
    %573 = vmatpush2.msra.mxu0 0.0
    %574 = vmatprep.subr.mxu0 0.0
    %575 = vmatpush2.msra.mxu0 0.0
    %576 = vmatprep.subr.mxu0 0.0
    %577 = vmatpush2.msra.mxu0 0.0
    %578 = vmatprep.subr.mxu0 0.0
    %579 = vmatpush2.msra.mxu0 0.0
    %580 = vmatprep.subr.mxu0 0.0
    %581 = vmatpush2.msra.mxu0 0.0
    %582 = vmatprep.subr.mxu0 0.0
    %583 = vmatpush2.msra.mxu0 0.0
    %584 = vmatprep.subr.mxu0 0.0
    %585 = vmatpush2.msra.mxu0 0.0
    %586 = vmatprep.subr.mxu0 0.0
    %587 = vmatpush2.msra.mxu0 0.0
    %588 = vmatprep.subr.mxu0 0.0
    %589 = vmatpush2.msra.mxu0 0.0
    %590 = vmatprep.subr.mxu0 0.0
    %591 = vmatpush2.msra.mxu0 0.0
    %592 = vmatprep.subr.mxu0 0.0
    %593 = vmatpush2.msra.mxu0 0.0
    %594 = vmatprep.subr.mxu0 0.0
    %595 = vmatpush2.msra.mxu0 0.0
    %596 = vmatprep.mubr.f32.mxu0 0.0
    %597 = vmatmul.mubr.f32.gmra.mxu0 %v531
    %v598 = vpop.f32.mrf.mxu0
    %v599 = vadd.f32 0.0, %v598
    %v600 = vpop.f32.mrf.mxu0
    %601 = vdwg.mxu0
    %v602 = vmul.f32 %v599, 0.001953125
    %v603 = vadd.f32 %v602, 1e-05
    %v604 = vrsqrt.pop %v603
    %v605 = vlaneseq
    %v606 = vshrl.u32 %v605, 7
    %v607 = vsub.s32 0, %v606
    %v608 = vrot.slane %v604, %v607
    %v609 = vmul.f32 %v503, %v608
    %v610 = vmul.f32 %v504, %v608
    %v611 = vmul.f32 %v505, %v608
    %v612 = vmul.f32 %v506, %v608
    %v613 = vmul.f32 %v507, %v608
    %v614 = vmul.f32 %v508, %v608
    %v615 = vmul.f32 %v509, %v608
    %v616 = vmul.f32 %v510, %v608
    %v617 = vxor.u32 %v609, 2147483648
    %v618 = vxor.u32 %v610, 2147483648
    %v619 = vxor.u32 %v611, 2147483648
    %v620 = vxor.u32 %v612, 2147483648
    %v621 = vxor.u32 %v613, 2147483648
    %v622 = vxor.u32 %v614, 2147483648
    %v623 = vxor.u32 %v615, 2147483648
    %v624 = vxor.u32 %v616, 2147483648
    %v625 = vmul.f32 %v617, 1.442695
    %v626 = vpow.pop %v625
    %v627 = vmul.f32 %v618, 1.442695
    %v628 = vpow.pop %v627
    %v629 = vmul.f32 %v619, 1.442695
    %v630 = vpow.pop %v629
    %v631 = vmul.f32 %v620, 1.442695
    %v632 = vpow.pop %v631
    %v633 = vmul.f32 %v621, 1.442695
    %v634 = vpow.pop %v633
    %v635 = vmul.f32 %v622, 1.442695
    %v636 = vpow.pop %v635
    %v637 = vmul.f32 %v623, 1.442695
    %v638 = vpow.pop %v637
    %v639 = vmul.f32 %v624, 1.442695
    %v640 = vpow.pop %v639
    %v641 = vadd.f32 %v626, 1.0
    %v642 = vadd.f32 %v628, 1.0
    %v643 = vadd.f32 %v630, 1.0
    %v644 = vadd.f32 %v632, 1.0
    %v645 = vadd.f32 %v634, 1.0
    %v646 = vadd.f32 %v636, 1.0
    %v647 = vadd.f32 %v638, 1.0
    %v648 = vadd.f32 %v640, 1.0
    %v649 = vrcp.pop %v641
    %v650 = vmul.f32 1.0, %v649
    %v651 = vrcp.pop %v642
    %v652 = vmul.f32 1.0, %v651
    %v653 = vrcp.pop %v643
    %v654 = vmul.f32 1.0, %v653
    %v655 = vrcp.pop %v644
    %v656 = vmul.f32 1.0, %v655
    %v657 = vrcp.pop %v645
    %v658 = vmul.f32 1.0, %v657
    %v659 = vrcp.pop %v646
    %v660 = vmul.f32 1.0, %v659
    %v661 = vrcp.pop %v647
    %v662 = vmul.f32 1.0, %v661
    %v663 = vrcp.pop %v648
    %v664 = vmul.f32 1.0, %v663
    %v665 = vmul.f32 %v609, %v650
    %v666 = vmul.f32 %v610, %v652
    %v667 = vmul.f32 %v611, %v654
    %v668 = vmul.f32 %v612, %v656
    %v669 = vmul.f32 %v613, %v658
    %v670 = vmul.f32 %v614, %v660
    %v671 = vmul.f32 %v615, %v662
    %v672 = vmul.f32 %v616, %v664
    %v673 = vpack.c.bf16 %v408, %v407
    %v674 = vpack.c.bf16 %v410, %v409
    %v675 = vpack.c.bf16 %v412, %v411
    %v676 = vpack.c.bf16 %v414, %v413
    %v677 = vpack.c.bf16 %v666, %v665
    %v678 = vpack.c.bf16 %v668, %v667
    %v679 = vpack.c.bf16 %v670, %v669
    %v680 = vpack.c.bf16 %v672, %v671
    %v689 = vunpack.c.l.b16 %v673
    %v690 = vunpack.c.h.b16 %v673
    %v691 = vunpack.c.l.b16 %v674
    %v692 = vunpack.c.h.b16 %v674
    %v693 = vunpack.c.l.b16 %v675
    %v694 = vunpack.c.h.b16 %v675
    %v695 = vunpack.c.l.b16 %v676
    %v696 = vunpack.c.h.b16 %v676
    %v697 = vunpack.c.l.b16 %v677
    %v698 = vunpack.c.h.b16 %v677
    %v699 = vunpack.c.l.b16 %v678
    %v700 = vunpack.c.h.b16 %v678
    %v701 = vunpack.c.l.b16 %v679
    %v702 = vunpack.c.h.b16 %v679
    %v703 = vunpack.c.l.b16 %v680
    %v704 = vunpack.c.h.b16 %v680
    %v705 = vpack.c.b16 %v689, %v689
    %v706 = vpack.c.b16 %v690, %v690
    %v707 = vpack.c.b16 %v691, %v691
    %v708 = vpack.c.b16 %v692, %v692
    %v709 = vpack.c.b16 %v693, %v693
    %v710 = vpack.c.b16 %v694, %v694
    %v711 = vpack.c.b16 %v695, %v695
    %v712 = vpack.c.b16 %v696, %v696
    %v713 = vpack.c.b16 %v697, %v697
    %v714 = vpack.c.b16 %v698, %v698
    %v715 = vpack.c.b16 %v699, %v699
    %v716 = vpack.c.b16 %v700, %v700
    %v717 = vpack.c.b16 %v701, %v701
    %v718 = vpack.c.b16 %v702, %v702
    %v719 = vpack.c.b16 %v703, %v703
    %v720 = vpack.c.b16 %v704, %v704
    %737 = vst [vmem:[#allocation2 + $0x8] sm:$0xf] %v705
    %738 = vst [vmem:[#allocation2 + $0xc] sm:$0xf] %v706
    %739 = vst [vmem:[#allocation2 + $0x10] sm:$0xf] %v707
    %740 = vst [vmem:[#allocation2 + $0x14] sm:$0xf] %v708
    %741 = vst [vmem:[#allocation2 + $0x18] sm:$0xf] %v709
    %742 = vst [vmem:[#allocation2 + $0x1c] sm:$0xf] %v710
    %743 = vst [vmem:[#allocation2 + $0x20] sm:$0xf] %v711
    %744 = vst [vmem:[#allocation2 + $0x24] sm:$0xf] %v712
    %745 = vst [vmem:[#allocation2 + $0x28] sm:$0xf] %v713
    %746 = vst [vmem:[#allocation2 + $0x2c] sm:$0xf] %v714
    %747 = vst [vmem:[#allocation2 + $0x30] sm:$0xf] %v715
    %748 = vst [vmem:[#allocation2 + $0x34] sm:$0xf] %v716
    %749 = vst [vmem:[#allocation2 + $0x38] sm:$0xf] %v717
    %750 = vst [vmem:[#allocation2 + $0x3c] sm:$0xf] %v718
    %751 = vst [vmem:[#allocation2 + $0x40] sm:$0xf] %v719
    %752 = vst [vmem:[#allocation2 + $0x44] sm:$0xf] %v720
    %v753 = vld [vmem:[#allocation2] sm:$0x8]
    %v754 = vld [vmem:[#allocation2 + $0x4] sm:$0xf]
    %v755 = vld [vmem:[#allocation2 + $0x8] sm:$0xf]
    %v756 = vld [vmem:[#allocation2 + $0xc] sm:$0xf]
    %v757 = vld [vmem:[#allocation2 + $0x10] sm:$0xf]
    %v758 = vld [vmem:[#allocation2 + $0x14] sm:$0xf]
    %v759 = vld [vmem:[#allocation2 + $0x18] sm:$0xf]
    %v760 = vld [vmem:[#allocation2 + $0x1c] sm:$0xf]
    %v761 = vld [vmem:[#allocation2 + $0x20] sm:$0xf]
    %v762 = vld [vmem:[#allocation2 + $0x24] sm:$0xf]
    %v763 = vld [vmem:[#allocation2 + $0x28] sm:$0xf]
    %v764 = vld [vmem:[#allocation2 + $0x2c] sm:$0xf]
    %v765 = vld [vmem:[#allocation2 + $0x30] sm:$0xf]
    %v766 = vld [vmem:[#allocation2 + $0x34] sm:$0xf]
    %v767 = vld [vmem:[#allocation2 + $0x38] sm:$0xf]
    %v768 = vld [vmem:[#allocation2 + $0x3c] sm:$0xf]
    %v769 = vld [vmem:[#allocation2 + $0x40] sm:$0xf]
    %771 = vset.pattern.permute.xlu0 0
    %772 = vperm.xlu0 %771, %v101
    %v773 = vpop.permute.xlu0 %772
    %v776 = vunpack.c.l.s4 839922192
    %v777 = vunpack.c.0.s8 %v776
    %v778 = vlaneseq
    %v779 = vshrl.u32 %v778, 7
    %v780 = vsub.s32 %v777, %v779
    %v781 = vrot.slane %v773, %v780
    %783 = vset.pattern.permute.xlu0 0
    %784 = vperm.xlu0 %783, %v102
    %v785 = vpop.permute.xlu0 %784
    %v788 = vunpack.c.l.s4 839922192
    %v789 = vunpack.c.0.s8 %v788
    %v790 = vlaneseq
    %v791 = vshrl.u32 %v790, 7
    %v792 = vsub.s32 %v789, %v791
    %v793 = vrot.slane %v785, %v792
    %795 = vset.pattern.permute.xlu0 0
    %796 = vperm.xlu0 %795, %v103
    %v797 = vpop.permute.xlu0 %796
    %v800 = vunpack.c.l.s4 839922192
    %v801 = vunpack.c.0.s8 %v800
    %v802 = vlaneseq
    %v803 = vshrl.u32 %v802, 7
    %v804 = vsub.s32 %v801, %v803
    %v805 = vrot.slane %v797, %v804
    %807 = vset.pattern.permute.xlu0 0
    %808 = vperm.xlu0 %807, %v104
    %v809 = vpop.permute.xlu0 %808
    %v812 = vunpack.c.l.s4 839922192
    %v813 = vunpack.c.0.s8 %v812
    %v814 = vlaneseq
    %v815 = vshrl.u32 %v814, 7
    %v816 = vsub.s32 %v813, %v815
    %v817 = vrot.slane %v809, %v816
    %819 = vset.pattern.permute.xlu0 0
    %820 = vperm.xlu0 %819, %v105
    %v821 = vpop.permute.xlu0 %820
    %v824 = vunpack.c.l.s4 839922192
    %v825 = vunpack.c.0.s8 %v824
    %v826 = vlaneseq
    %v827 = vshrl.u32 %v826, 7
    %v828 = vsub.s32 %v825, %v827
    %v829 = vrot.slane %v821, %v828
    %831 = vset.pattern.permute.xlu0 0
    %832 = vperm.xlu0 %831, %v106
    %v833 = vpop.permute.xlu0 %832
    %v836 = vunpack.c.l.s4 839922192
    %v837 = vunpack.c.0.s8 %v836
    %v838 = vlaneseq
    %v839 = vshrl.u32 %v838, 7
    %v840 = vsub.s32 %v837, %v839
    %v841 = vrot.slane %v833, %v840
    %843 = vset.pattern.permute.xlu0 0
    %844 = vperm.xlu0 %843, %v107
    %v845 = vpop.permute.xlu0 %844
    %v848 = vunpack.c.l.s4 839922192
    %v849 = vunpack.c.0.s8 %v848
    %v850 = vlaneseq
    %v851 = vshrl.u32 %v850, 7
    %v852 = vsub.s32 %v849, %v851
    %v853 = vrot.slane %v845, %v852
    %855 = vset.pattern.permute.xlu0 0
    %856 = vperm.xlu0 %855, %v108
    %v857 = vpop.permute.xlu0 %856
    %v860 = vunpack.c.l.s4 839922192
    %v861 = vunpack.c.0.s8 %v860
    %v862 = vlaneseq
    %v863 = vshrl.u32 %v862, 7
    %v864 = vsub.s32 %v861, %v863
    %v865 = vrot.slane %v857, %v864
    %867 = vset.pattern.permute.xlu0 0
    %868 = vperm.xlu0 %867, %v109
    %v869 = vpop.permute.xlu0 %868
    %v872 = vunpack.c.l.s4 839922192
    %v873 = vunpack.c.0.s8 %v872
    %v874 = vlaneseq
    %v875 = vshrl.u32 %v874, 7
    %v876 = vsub.s32 %v873, %v875
    %v877 = vrot.slane %v869, %v876
    %879 = vset.pattern.permute.xlu0 0
    %880 = vperm.xlu0 %879, %v110
    %v881 = vpop.permute.xlu0 %880
    %v884 = vunpack.c.l.s4 839922192
    %v885 = vunpack.c.0.s8 %v884
    %v886 = vlaneseq
    %v887 = vshrl.u32 %v886, 7
    %v888 = vsub.s32 %v885, %v887
    %v889 = vrot.slane %v881, %v888
    %891 = vset.pattern.permute.xlu0 0
    %892 = vperm.xlu0 %891, %v111
    %v893 = vpop.permute.xlu0 %892
    %v896 = vunpack.c.l.s4 839922192
    %v897 = vunpack.c.0.s8 %v896
    %v898 = vlaneseq
    %v899 = vshrl.u32 %v898, 7
    %v900 = vsub.s32 %v897, %v899
    %v901 = vrot.slane %v893, %v900
    %903 = vset.pattern.permute.xlu0 0
    %904 = vperm.xlu0 %903, %v112
    %v905 = vpop.permute.xlu0 %904
    %v908 = vunpack.c.l.s4 839922192
    %v909 = vunpack.c.0.s8 %v908
    %v910 = vlaneseq
    %v911 = vshrl.u32 %v910, 7
    %v912 = vsub.s32 %v909, %v911
    %v913 = vrot.slane %v905, %v912
    %915 = vset.pattern.permute.xlu0 0
    %916 = vperm.xlu0 %915, %v113
    %v917 = vpop.permute.xlu0 %916
    %v920 = vunpack.c.l.s4 839922192
    %v921 = vunpack.c.0.s8 %v920
    %v922 = vlaneseq
    %v923 = vshrl.u32 %v922, 7
    %v924 = vsub.s32 %v921, %v923
    %v925 = vrot.slane %v917, %v924
    %927 = vset.pattern.permute.xlu0 0
    %928 = vperm.xlu0 %927, %v114
    %v929 = vpop.permute.xlu0 %928
    %v932 = vunpack.c.l.s4 839922192
    %v933 = vunpack.c.0.s8 %v932
    %v934 = vlaneseq
    %v935 = vshrl.u32 %v934, 7
    %v936 = vsub.s32 %v933, %v935
    %v937 = vrot.slane %v929, %v936
    %939 = vset.pattern.permute.xlu0 0
    %940 = vperm.xlu0 %939, %v115
    %v941 = vpop.permute.xlu0 %940
    %v944 = vunpack.c.l.s4 839922192
    %v945 = vunpack.c.0.s8 %v944
    %v946 = vlaneseq
    %v947 = vshrl.u32 %v946, 7
    %v948 = vsub.s32 %v945, %v947
    %v949 = vrot.slane %v941, %v948
    %951 = vset.pattern.permute.xlu0 0
    %952 = vperm.xlu0 %951, %v116
    %v953 = vpop.permute.xlu0 %952
    %v956 = vunpack.c.l.s4 839922192
    %v957 = vunpack.c.0.s8 %v956
    %v958 = vlaneseq
    %v959 = vshrl.u32 %v958, 7
    %v960 = vsub.s32 %v957, %v959
    %v961 = vrot.slane %v953, %v960
    %vm962 = vsmask.f32 3328
    %vm963 = vsmask.f32 7440
    %vm964 = vmor %vm962, %vm963
    %v966 = vshll.u32 %v781, 16
    %v968 = vrot.slane %v966, 5
    %v969 = vshrl.u32 %v781, 16
    %v971 = vrot.slane %v969, 4
    %v972 = vor.u32 %v971, %v968
    %v973 = vrot.slane %v972, 4
    %v975 = vshll.u32 %v793, 16
    %v977 = vrot.slane %v975, 5
    %v978 = vsel %vm964, %v973, %v977
    %v979 = vshrl.u32 %v793, 16
    %v981 = vrot.slane %v979, 4
    %v982 = vor.u32 %v981, %v977
    %v983 = vrot.slane %v982, 4
    %v985 = vshll.u32 %v805, 16
    %v987 = vrot.slane %v985, 5
    %v988 = vsel %vm964, %v983, %v987
    %v989 = vshrl.u32 %v805, 16
    %v991 = vrot.slane %v989, 4
    %v992 = vor.u32 %v991, %v987
    %v993 = vrot.slane %v992, 4
    %v995 = vshll.u32 %v817, 16
    %v997 = vrot.slane %v995, 5
    %v998 = vsel %vm964, %v993, %v997
    %v999 = vshrl.u32 %v817, 16
    %v1001 = vrot.slane %v999, 4
    %v1002 = vor.u32 %v1001, %v997
    %v1003 = vrot.slane %v1002, 4
    %v1005 = vshll.u32 %v829, 16
    %v1007 = vrot.slane %v1005, 5
    %v1008 = vsel %vm964, %v1003, %v1007
    %v1009 = vshrl.u32 %v829, 16
    %v1011 = vrot.slane %v1009, 4
    %v1012 = vor.u32 %v1011, %v1007
    %v1013 = vrot.slane %v1012, 4
    %v1015 = vshll.u32 %v841, 16
    %v1017 = vrot.slane %v1015, 5
    %v1018 = vsel %vm964, %v1013, %v1017
    %v1019 = vshrl.u32 %v841, 16
    %v1021 = vrot.slane %v1019, 4
    %v1022 = vor.u32 %v1021, %v1017
    %v1023 = vrot.slane %v1022, 4
    %v1025 = vshll.u32 %v853, 16
    %v1027 = vrot.slane %v1025, 5
    %v1028 = vsel %vm964, %v1023, %v1027
    %v1029 = vshrl.u32 %v853, 16
    %v1031 = vrot.slane %v1029, 4
    %v1032 = vor.u32 %v1031, %v1027
    %v1033 = vrot.slane %v1032, 4
    %v1035 = vshll.u32 %v865, 16
    %v1037 = vrot.slane %v1035, 5
    %v1038 = vsel %vm964, %v1033, %v1037
    %v1039 = vshrl.u32 %v865, 16
    %v1041 = vrot.slane %v1039, 4
    %v1042 = vor.u32 %v1041, %v1037
    %v1043 = vrot.slane %v1042, 4
    %v1045 = vshll.u32 %v877, 16
    %v1047 = vrot.slane %v1045, 5
    %v1048 = vsel %vm964, %v1043, %v1047
    %v1049 = vshrl.u32 %v877, 16
    %v1051 = vrot.slane %v1049, 4
    %v1052 = vor.u32 %v1051, %v1047
    %v1053 = vrot.slane %v1052, 4
    %v1055 = vshll.u32 %v889, 16
    %v1057 = vrot.slane %v1055, 5
    %v1058 = vsel %vm964, %v1053, %v1057
    %v1059 = vshrl.u32 %v889, 16
    %v1061 = vrot.slane %v1059, 4
    %v1062 = vor.u32 %v1061, %v1057
    %v1063 = vrot.slane %v1062, 4
    %v1065 = vshll.u32 %v901, 16
    %v1067 = vrot.slane %v1065, 5
    %v1068 = vsel %vm964, %v1063, %v1067
    %v1069 = vshrl.u32 %v901, 16
    %v1071 = vrot.slane %v1069, 4
    %v1072 = vor.u32 %v1071, %v1067
    %v1073 = vrot.slane %v1072, 4
    %v1075 = vshll.u32 %v913, 16
    %v1077 = vrot.slane %v1075, 5
    %v1078 = vsel %vm964, %v1073, %v1077
    %v1079 = vshrl.u32 %v913, 16
    %v1081 = vrot.slane %v1079, 4
    %v1082 = vor.u32 %v1081, %v1077
    %v1083 = vrot.slane %v1082, 4
    %v1085 = vshll.u32 %v925, 16
    %v1087 = vrot.slane %v1085, 5
    %v1088 = vsel %vm964, %v1083, %v1087
    %v1089 = vshrl.u32 %v925, 16
    %v1091 = vrot.slane %v1089, 4
    %v1092 = vor.u32 %v1091, %v1087
    %v1093 = vrot.slane %v1092, 4
    %v1095 = vshll.u32 %v937, 16
    %v1097 = vrot.slane %v1095, 5
    %v1098 = vsel %vm964, %v1093, %v1097
    %v1099 = vshrl.u32 %v937, 16
    %v1101 = vrot.slane %v1099, 4
    %v1102 = vor.u32 %v1101, %v1097
    %v1103 = vrot.slane %v1102, 4
    %v1105 = vshll.u32 %v949, 16
    %v1107 = vrot.slane %v1105, 5
    %v1108 = vsel %vm964, %v1103, %v1107
    %v1109 = vshrl.u32 %v949, 16
    %v1111 = vrot.slane %v1109, 4
    %v1112 = vor.u32 %v1111, %v1107
    %v1113 = vrot.slane %v1112, 4
    %v1115 = vshll.u32 %v961, 16
    %v1117 = vrot.slane %v1115, 5
    %v1118 = vsel %vm964, %v1113, %v1117
    %v1119 = vshrl.u32 %v961, 16
    %v1121 = vrot.slane %v1119, 4
    %v1122 = vor.u32 %v1121, %v1117
    %v1123 = vrot.slane %v1122, 4
    %v1141 = vmul.bf16 %v753, %v968
    %v1142 = vmul.bf16 %v754, %v978
    %v1143 = vmul.bf16 %v755, %v988
    %v1144 = vmul.bf16 %v756, %v998
    %v1145 = vmul.bf16 %v757, %v1008
    %v1146 = vmul.bf16 %v758, %v1018
    %v1147 = vmul.bf16 %v759, %v1028
    %v1148 = vmul.bf16 %v760, %v1038
    %v1149 = vmul.bf16 %v761, %v1048
    %v1150 = vmul.bf16 %v762, %v1058
    %v1151 = vmul.bf16 %v763, %v1068
    %v1152 = vmul.bf16 %v764, %v1078
    %v1153 = vmul.bf16 %v765, %v1088
    %v1154 = vmul.bf16 %v766, %v1098
    %v1155 = vmul.bf16 %v767, %v1108
    %v1156 = vmul.bf16 %v768, %v1118
    %v1157 = vmul.bf16 %v769, %v1123
    %1158 = vset.pattern.permute.xlu0 1
    %1159 = vperm.xlu0 %1158, %v101
    %v1160 = vpop.permute.xlu0 %1159
    %v1163 = vunpack.c.l.s4 839922192
    %v1164 = vunpack.c.0.s8 %v1163
    %v1165 = vlaneseq
    %v1166 = vshrl.u32 %v1165, 7
    %v1167 = vsub.s32 %v1164, %v1166
    %v1168 = vrot.slane %v1160, %v1167
    %1169 = vset.pattern.permute.xlu0 1
    %1170 = vperm.xlu0 %1169, %v102
    %v1171 = vpop.permute.xlu0 %1170
    %v1174 = vunpack.c.l.s4 839922192
    %v1175 = vunpack.c.0.s8 %v1174
    %v1176 = vlaneseq
    %v1177 = vshrl.u32 %v1176, 7
    %v1178 = vsub.s32 %v1175, %v1177
    %v1179 = vrot.slane %v1171, %v1178
    %1180 = vset.pattern.permute.xlu0 1
    %1181 = vperm.xlu0 %1180, %v103
    %v1182 = vpop.permute.xlu0 %1181
    %v1185 = vunpack.c.l.s4 839922192
    %v1186 = vunpack.c.0.s8 %v1185
    %v1187 = vlaneseq
    %v1188 = vshrl.u32 %v1187, 7
    %v1189 = vsub.s32 %v1186, %v1188
    %v1190 = vrot.slane %v1182, %v1189
    %1191 = vset.pattern.permute.xlu0 1
    %1192 = vperm.xlu0 %1191, %v104
    %v1193 = vpop.permute.xlu0 %1192
    %v1196 = vunpack.c.l.s4 839922192
    %v1197 = vunpack.c.0.s8 %v1196
    %v1198 = vlaneseq
    %v1199 = vshrl.u32 %v1198, 7
    %v1200 = vsub.s32 %v1197, %v1199
    %v1201 = vrot.slane %v1193, %v1200
    %1202 = vset.pattern.permute.xlu0 1
    %1203 = vperm.xlu0 %1202, %v105
    %v1204 = vpop.permute.xlu0 %1203
    %v1207 = vunpack.c.l.s4 839922192
    %v1208 = vunpack.c.0.s8 %v1207
    %v1209 = vlaneseq
    %v1210 = vshrl.u32 %v1209, 7
    %v1211 = vsub.s32 %v1208, %v1210
    %v1212 = vrot.slane %v1204, %v1211
    %1213 = vset.pattern.permute.xlu0 1
    %1214 = vperm.xlu0 %1213, %v106
    %v1215 = vpop.permute.xlu0 %1214
    %v1218 = vunpack.c.l.s4 839922192
    %v1219 = vunpack.c.0.s8 %v1218
    %v1220 = vlaneseq
    %v1221 = vshrl.u32 %v1220, 7
    %v1222 = vsub.s32 %v1219, %v1221
    %v1223 = vrot.slane %v1215, %v1222
    %1224 = vset.pattern.permute.xlu0 1
    %1225 = vperm.xlu0 %1224, %v107
    %v1226 = vpop.permute.xlu0 %1225
    %v1229 = vunpack.c.l.s4 839922192
    %v1230 = vunpack.c.0.s8 %v1229
    %v1231 = vlaneseq
    %v1232 = vshrl.u32 %v1231, 7
    %v1233 = vsub.s32 %v1230, %v1232
    %v1234 = vrot.slane %v1226, %v1233
    %1235 = vset.pattern.permute.xlu0 1
    %1236 = vperm.xlu0 %1235, %v108
    %v1237 = vpop.permute.xlu0 %1236
    %v1240 = vunpack.c.l.s4 839922192
    %v1241 = vunpack.c.0.s8 %v1240
    %v1242 = vlaneseq
    %v1243 = vshrl.u32 %v1242, 7
    %v1244 = vsub.s32 %v1241, %v1243
    %v1245 = vrot.slane %v1237, %v1244
    %1246 = vset.pattern.permute.xlu0 1
    %1247 = vperm.xlu0 %1246, %v109
    %v1248 = vpop.permute.xlu0 %1247
    %v1251 = vunpack.c.l.s4 839922192
    %v1252 = vunpack.c.0.s8 %v1251
    %v1253 = vlaneseq
    %v1254 = vshrl.u32 %v1253, 7
    %v1255 = vsub.s32 %v1252, %v1254
    %v1256 = vrot.slane %v1248, %v1255
    %1257 = vset.pattern.permute.xlu0 1
    %1258 = vperm.xlu0 %1257, %v110
    %v1259 = vpop.permute.xlu0 %1258
    %v1262 = vunpack.c.l.s4 839922192
    %v1263 = vunpack.c.0.s8 %v1262
    %v1264 = vlaneseq
    %v1265 = vshrl.u32 %v1264, 7
    %v1266 = vsub.s32 %v1263, %v1265
    %v1267 = vrot.slane %v1259, %v1266
    %1268 = vset.pattern.permute.xlu0 1
    %1269 = vperm.xlu0 %1268, %v111
    %v1270 = vpop.permute.xlu0 %1269
    %v1273 = vunpack.c.l.s4 839922192
    %v1274 = vunpack.c.0.s8 %v1273
    %v1275 = vlaneseq
    %v1276 = vshrl.u32 %v1275, 7
    %v1277 = vsub.s32 %v1274, %v1276
    %v1278 = vrot.slane %v1270, %v1277
    %1279 = vset.pattern.permute.xlu0 1
    %1280 = vperm.xlu0 %1279, %v112
    %v1281 = vpop.permute.xlu0 %1280
    %v1284 = vunpack.c.l.s4 839922192
    %v1285 = vunpack.c.0.s8 %v1284
    %v1286 = vlaneseq
    %v1287 = vshrl.u32 %v1286, 7
    %v1288 = vsub.s32 %v1285, %v1287
    %v1289 = vrot.slane %v1281, %v1288
    %1290 = vset.pattern.permute.xlu0 1
    %1291 = vperm.xlu0 %1290, %v113
    %v1292 = vpop.permute.xlu0 %1291
    %v1295 = vunpack.c.l.s4 839922192
    %v1296 = vunpack.c.0.s8 %v1295
    %v1297 = vlaneseq
    %v1298 = vshrl.u32 %v1297, 7
    %v1299 = vsub.s32 %v1296, %v1298
    %v1300 = vrot.slane %v1292, %v1299
    %1301 = vset.pattern.permute.xlu0 1
    %1302 = vperm.xlu0 %1301, %v114
    %v1303 = vpop.permute.xlu0 %1302
    %v1306 = vunpack.c.l.s4 839922192
    %v1307 = vunpack.c.0.s8 %v1306
    %v1308 = vlaneseq
    %v1309 = vshrl.u32 %v1308, 7
    %v1310 = vsub.s32 %v1307, %v1309
    %v1311 = vrot.slane %v1303, %v1310
    %1312 = vset.pattern.permute.xlu0 1
    %1313 = vperm.xlu0 %1312, %v115
    %v1314 = vpop.permute.xlu0 %1313
    %v1317 = vunpack.c.l.s4 839922192
    %v1318 = vunpack.c.0.s8 %v1317
    %v1319 = vlaneseq
    %v1320 = vshrl.u32 %v1319, 7
    %v1321 = vsub.s32 %v1318, %v1320
    %v1322 = vrot.slane %v1314, %v1321
    %1323 = vset.pattern.permute.xlu0 1
    %1324 = vperm.xlu0 %1323, %v116
    %v1325 = vpop.permute.xlu0 %1324
    %v1328 = vunpack.c.l.s4 839922192
    %v1329 = vunpack.c.0.s8 %v1328
    %v1330 = vlaneseq
    %v1331 = vshrl.u32 %v1330, 7
    %v1332 = vsub.s32 %v1329, %v1331
    %v1333 = vrot.slane %v1325, %v1332
    %v1334 = vmul.bf16 %v754, %v1168
    %v1335 = vmul.bf16 %v755, %v1179
    %v1336 = vmul.bf16 %v756, %v1190
    %v1337 = vmul.bf16 %v757, %v1201
    %v1338 = vmul.bf16 %v758, %v1212
    %v1339 = vmul.bf16 %v759, %v1223
    %v1340 = vmul.bf16 %v760, %v1234
    %v1341 = vmul.bf16 %v761, %v1245
    %v1342 = vmul.bf16 %v762, %v1256
    %v1343 = vmul.bf16 %v763, %v1267
    %v1344 = vmul.bf16 %v764, %v1278
    %v1345 = vmul.bf16 %v765, %v1289
    %v1346 = vmul.bf16 %v766, %v1300
    %v1347 = vmul.bf16 %v767, %v1311
    %v1348 = vmul.bf16 %v768, %v1322
    %v1349 = vmul.bf16 %v769, %v1333
    %v1350 = vld [vmem:[#allocation2 + $0x4] sm:$0xf]
    %v1351 = vld [vmem:[#allocation2 + $0x8] sm:$0xf]
    %v1352 = vld [vmem:[#allocation2 + $0xc] sm:$0xf]
    %v1353 = vld [vmem:[#allocation2 + $0x10] sm:$0xf]
    %v1354 = vld [vmem:[#allocation2 + $0x14] sm:$0xf]
    %v1355 = vld [vmem:[#allocation2 + $0x18] sm:$0xf]
    %v1356 = vld [vmem:[#allocation2 + $0x1c] sm:$0xf]
    %v1357 = vld [vmem:[#allocation2 + $0x20] sm:$0xf]
    %v1358 = vld [vmem:[#allocation2 + $0x24] sm:$0xf]
    %v1359 = vld [vmem:[#allocation2 + $0x28] sm:$0xf]
    %v1360 = vld [vmem:[#allocation2 + $0x2c] sm:$0xf]
    %v1361 = vld [vmem:[#allocation2 + $0x30] sm:$0xf]
    %v1362 = vld [vmem:[#allocation2 + $0x34] sm:$0xf]
    %v1363 = vld [vmem:[#allocation2 + $0x38] sm:$0xf]
    %v1364 = vld [vmem:[#allocation2 + $0x3c] sm:$0xf]
    %v1365 = vld [vmem:[#allocation2 + $0x40] sm:$0xf]
    %v1366 = vld [vmem:[#allocation2 + $0x44] sm:$0x1]
    %1367 = vset.pattern.permute.xlu0 2
    %1368 = vperm.xlu0 %1367, %v101
    %v1369 = vpop.permute.xlu0 %1368
    %v1372 = vunpack.c.l.s4 839922192
    %v1373 = vunpack.c.0.s8 %v1372
    %v1374 = vlaneseq
    %v1375 = vshrl.u32 %v1374, 7
    %v1376 = vsub.s32 %v1373, %v1375
    %v1377 = vrot.slane %v1369, %v1376
    %1378 = vset.pattern.permute.xlu0 2
    %1379 = vperm.xlu0 %1378, %v102
    %v1380 = vpop.permute.xlu0 %1379
    %v1383 = vunpack.c.l.s4 839922192
    %v1384 = vunpack.c.0.s8 %v1383
    %v1385 = vlaneseq
    %v1386 = vshrl.u32 %v1385, 7
    %v1387 = vsub.s32 %v1384, %v1386
    %v1388 = vrot.slane %v1380, %v1387
    %1389 = vset.pattern.permute.xlu0 2
    %1390 = vperm.xlu0 %1389, %v103
    %v1391 = vpop.permute.xlu0 %1390
    %v1394 = vunpack.c.l.s4 839922192
    %v1395 = vunpack.c.0.s8 %v1394
    %v1396 = vlaneseq
    %v1397 = vshrl.u32 %v1396, 7
    %v1398 = vsub.s32 %v1395, %v1397
    %v1399 = vrot.slane %v1391, %v1398
    %1400 = vset.pattern.permute.xlu0 2
    %1401 = vperm.xlu0 %1400, %v104
    %v1402 = vpop.permute.xlu0 %1401
    %v1405 = vunpack.c.l.s4 839922192
    %v1406 = vunpack.c.0.s8 %v1405
    %v1407 = vlaneseq
    %v1408 = vshrl.u32 %v1407, 7
    %v1409 = vsub.s32 %v1406, %v1408
    %v1410 = vrot.slane %v1402, %v1409
    %1411 = vset.pattern.permute.xlu0 2
    %1412 = vperm.xlu0 %1411, %v105
    %v1413 = vpop.permute.xlu0 %1412
    %v1416 = vunpack.c.l.s4 839922192
    %v1417 = vunpack.c.0.s8 %v1416
    %v1418 = vlaneseq
    %v1419 = vshrl.u32 %v1418, 7
    %v1420 = vsub.s32 %v1417, %v1419
    %v1421 = vrot.slane %v1413, %v1420
    %1422 = vset.pattern.permute.xlu0 2
    %1423 = vperm.xlu0 %1422, %v106
    %v1424 = vpop.permute.xlu0 %1423
    %v1427 = vunpack.c.l.s4 839922192
    %v1428 = vunpack.c.0.s8 %v1427
    %v1429 = vlaneseq
    %v1430 = vshrl.u32 %v1429, 7
    %v1431 = vsub.s32 %v1428, %v1430
    %v1432 = vrot.slane %v1424, %v1431
    %1433 = vset.pattern.permute.xlu0 2
    %1434 = vperm.xlu0 %1433, %v107
    %v1435 = vpop.permute.xlu0 %1434
    %v1438 = vunpack.c.l.s4 839922192
    %v1439 = vunpack.c.0.s8 %v1438
    %v1440 = vlaneseq
    %v1441 = vshrl.u32 %v1440, 7
    %v1442 = vsub.s32 %v1439, %v1441
    %v1443 = vrot.slane %v1435, %v1442
    %1444 = vset.pattern.permute.xlu0 2
    %1445 = vperm.xlu0 %1444, %v108
    %v1446 = vpop.permute.xlu0 %1445
    %v1449 = vunpack.c.l.s4 839922192
    %v1450 = vunpack.c.0.s8 %v1449
    %v1451 = vlaneseq
    %v1452 = vshrl.u32 %v1451, 7
    %v1453 = vsub.s32 %v1450, %v1452
    %v1454 = vrot.slane %v1446, %v1453
    %1455 = vset.pattern.permute.xlu0 2
    %1456 = vperm.xlu0 %1455, %v109
    %v1457 = vpop.permute.xlu0 %1456
    %v1460 = vunpack.c.l.s4 839922192
    %v1461 = vunpack.c.0.s8 %v1460
    %v1462 = vlaneseq
    %v1463 = vshrl.u32 %v1462, 7
    %v1464 = vsub.s32 %v1461, %v1463
    %v1465 = vrot.slane %v1457, %v1464
    %1466 = vset.pattern.permute.xlu0 2
    %1467 = vperm.xlu0 %1466, %v110
    %v1468 = vpop.permute.xlu0 %1467
    %v1471 = vunpack.c.l.s4 839922192
    %v1472 = vunpack.c.0.s8 %v1471
    %v1473 = vlaneseq
    %v1474 = vshrl.u32 %v1473, 7
    %v1475 = vsub.s32 %v1472, %v1474
    %v1476 = vrot.slane %v1468, %v1475
    %1477 = vset.pattern.permute.xlu0 2
    %1478 = vperm.xlu0 %1477, %v111
    %v1479 = vpop.permute.xlu0 %1478
    %v1482 = vunpack.c.l.s4 839922192
    %v1483 = vunpack.c.0.s8 %v1482
    %v1484 = vlaneseq
    %v1485 = vshrl.u32 %v1484, 7
    %v1486 = vsub.s32 %v1483, %v1485
    %v1487 = vrot.slane %v1479, %v1486
    %1488 = vset.pattern.permute.xlu0 2
    %1489 = vperm.xlu0 %1488, %v112
    %v1490 = vpop.permute.xlu0 %1489
    %v1493 = vunpack.c.l.s4 839922192
    %v1494 = vunpack.c.0.s8 %v1493
    %v1495 = vlaneseq
    %v1496 = vshrl.u32 %v1495, 7
    %v1497 = vsub.s32 %v1494, %v1496
    %v1498 = vrot.slane %v1490, %v1497
    %1499 = vset.pattern.permute.xlu0 2
    %1500 = vperm.xlu0 %1499, %v113
    %v1501 = vpop.permute.xlu0 %1500
    %v1504 = vunpack.c.l.s4 839922192
    %v1505 = vunpack.c.0.s8 %v1504
    %v1506 = vlaneseq
    %v1507 = vshrl.u32 %v1506, 7
    %v1508 = vsub.s32 %v1505, %v1507
    %v1509 = vrot.slane %v1501, %v1508
    %1510 = vset.pattern.permute.xlu0 2
    %1511 = vperm.xlu0 %1510, %v114
    %v1512 = vpop.permute.xlu0 %1511
    %v1515 = vunpack.c.l.s4 839922192
    %v1516 = vunpack.c.0.s8 %v1515
    %v1517 = vlaneseq
    %v1518 = vshrl.u32 %v1517, 7
    %v1519 = vsub.s32 %v1516, %v1518
    %v1520 = vrot.slane %v1512, %v1519
    %1521 = vset.pattern.permute.xlu0 2
    %1522 = vperm.xlu0 %1521, %v115
    %v1523 = vpop.permute.xlu0 %1522
    %v1526 = vunpack.c.l.s4 839922192
    %v1527 = vunpack.c.0.s8 %v1526
    %v1528 = vlaneseq
    %v1529 = vshrl.u32 %v1528, 7
    %v1530 = vsub.s32 %v1527, %v1529
    %v1531 = vrot.slane %v1523, %v1530
    %1532 = vset.pattern.permute.xlu0 2
    %1533 = vperm.xlu0 %1532, %v116
    %v1534 = vpop.permute.xlu0 %1533
    %v1537 = vunpack.c.l.s4 839922192
    %v1538 = vunpack.c.0.s8 %v1537
    %v1539 = vlaneseq
    %v1540 = vshrl.u32 %v1539, 7
    %v1541 = vsub.s32 %v1538, %v1540
    %v1542 = vrot.slane %v1534, %v1541
    %vm1543 = vsmask.f32 256
    %vm1544 = vsmask.f32 4368
    %vm1545 = vmor %vm1543, %vm1544
    %v1547 = vshrl.u32 %v1377, 16
    %v1549 = vrot.slane %v1547, 7
    %v1550 = vshll.u32 %v1377, 16
    %v1552 = vor.u32 %v1549, %v1550
    %v1553 = vrot.slane %v1549, 4
    %v1555 = vshrl.u32 %v1388, 16
    %v1557 = vrot.slane %v1555, 7
    %v1558 = vshll.u32 %v1388, 16
    %v1560 = vor.u32 %v1557, %v1558
    %v1561 = vsel %vm1545, %v1553, %v1560
    %v1562 = vrot.slane %v1557, 4
    %v1564 = vshrl.u32 %v1399, 16
    %v1566 = vrot.slane %v1564, 7
    %v1567 = vshll.u32 %v1399, 16
    %v1569 = vor.u32 %v1566, %v1567
    %v1570 = vsel %vm1545, %v1562, %v1569
    %v1571 = vrot.slane %v1566, 4
    %v1573 = vshrl.u32 %v1410, 16
    %v1575 = vrot.slane %v1573, 7
    %v1576 = vshll.u32 %v1410, 16
    %v1578 = vor.u32 %v1575, %v1576
    %v1579 = vsel %vm1545, %v1571, %v1578
    %v1580 = vrot.slane %v1575, 4
    %v1582 = vshrl.u32 %v1421, 16
    %v1584 = vrot.slane %v1582, 7
    %v1585 = vshll.u32 %v1421, 16
    %v1587 = vor.u32 %v1584, %v1585
    %v1588 = vsel %vm1545, %v1580, %v1587
    %v1589 = vrot.slane %v1584, 4
    %v1591 = vshrl.u32 %v1432, 16
    %v1593 = vrot.slane %v1591, 7
    %v1594 = vshll.u32 %v1432, 16
    %v1596 = vor.u32 %v1593, %v1594
    %v1597 = vsel %vm1545, %v1589, %v1596
    %v1598 = vrot.slane %v1593, 4
    %v1600 = vshrl.u32 %v1443, 16
    %v1602 = vrot.slane %v1600, 7
    %v1603 = vshll.u32 %v1443, 16
    %v1605 = vor.u32 %v1602, %v1603
    %v1606 = vsel %vm1545, %v1598, %v1605
    %v1607 = vrot.slane %v1602, 4
    %v1609 = vshrl.u32 %v1454, 16
    %v1611 = vrot.slane %v1609, 7
    %v1612 = vshll.u32 %v1454, 16
    %v1614 = vor.u32 %v1611, %v1612
    %v1615 = vsel %vm1545, %v1607, %v1614
    %v1616 = vrot.slane %v1611, 4
    %v1618 = vshrl.u32 %v1465, 16
    %v1620 = vrot.slane %v1618, 7
    %v1621 = vshll.u32 %v1465, 16
    %v1623 = vor.u32 %v1620, %v1621
    %v1624 = vsel %vm1545, %v1616, %v1623
    %v1625 = vrot.slane %v1620, 4
    %v1627 = vshrl.u32 %v1476, 16
    %v1629 = vrot.slane %v1627, 7
    %v1630 = vshll.u32 %v1476, 16
    %v1632 = vor.u32 %v1629, %v1630
    %v1633 = vsel %vm1545, %v1625, %v1632
    %v1634 = vrot.slane %v1629, 4
    %v1636 = vshrl.u32 %v1487, 16
    %v1638 = vrot.slane %v1636, 7
    %v1639 = vshll.u32 %v1487, 16
    %v1641 = vor.u32 %v1638, %v1639
    %v1642 = vsel %vm1545, %v1634, %v1641
    %v1643 = vrot.slane %v1638, 4
    %v1645 = vshrl.u32 %v1498, 16
    %v1647 = vrot.slane %v1645, 7
    %v1648 = vshll.u32 %v1498, 16
    %v1650 = vor.u32 %v1647, %v1648
    %v1651 = vsel %vm1545, %v1643, %v1650
    %v1652 = vrot.slane %v1647, 4
    %v1654 = vshrl.u32 %v1509, 16
    %v1656 = vrot.slane %v1654, 7
    %v1657 = vshll.u32 %v1509, 16
    %v1659 = vor.u32 %v1656, %v1657
    %v1660 = vsel %vm1545, %v1652, %v1659
    %v1661 = vrot.slane %v1656, 4
    %v1663 = vshrl.u32 %v1520, 16
    %v1665 = vrot.slane %v1663, 7
    %v1666 = vshll.u32 %v1520, 16
    %v1668 = vor.u32 %v1665, %v1666
    %v1669 = vsel %vm1545, %v1661, %v1668
    %v1670 = vrot.slane %v1665, 4
    %v1672 = vshrl.u32 %v1531, 16
    %v1674 = vrot.slane %v1672, 7
    %v1675 = vshll.u32 %v1531, 16
    %v1677 = vor.u32 %v1674, %v1675
    %v1678 = vsel %vm1545, %v1670, %v1677
    %v1679 = vrot.slane %v1674, 4
    %v1681 = vshrl.u32 %v1542, 16
    %v1683 = vrot.slane %v1681, 7
    %v1684 = vshll.u32 %v1542, 16
    %v1686 = vor.u32 %v1683, %v1684
    %v1687 = vsel %vm1545, %v1679, %v1686
    %v1688 = vrot.slane %v1683, 4
    %v1706 = vmul.bf16 %v1350, %v1552
    %v1707 = vmul.bf16 %v1351, %v1561
    %v1708 = vmul.bf16 %v1352, %v1570
    %v1709 = vmul.bf16 %v1353, %v1579
    %v1710 = vmul.bf16 %v1354, %v1588
    %v1711 = vmul.bf16 %v1355, %v1597
    %v1712 = vmul.bf16 %v1356, %v1606
    %v1713 = vmul.bf16 %v1357, %v1615
    %v1714 = vmul.bf16 %v1358, %v1624
    %v1715 = vmul.bf16 %v1359, %v1633
    %v1716 = vmul.bf16 %v1360, %v1642
    %v1717 = vmul.bf16 %v1361, %v1651
    %v1718 = vmul.bf16 %v1362, %v1660
    %v1719 = vmul.bf16 %v1363, %v1669
    %v1720 = vmul.bf16 %v1364, %v1678
    %v1721 = vmul.bf16 %v1365, %v1687
    %v1722 = vmul.bf16 %v1366, %v1688
    %v1723 = vld [vmem:[#allocation2 + $0x4] sm:$0x8]
    %v1724 = vld [vmem:[#allocation2 + $0x44] sm:$0xf]
    %1725 = vset.pattern.permute.xlu0 3
    %1726 = vperm.xlu0 %1725, %v101
    %v1727 = vpop.permute.xlu0 %1726
    %v1730 = vunpack.c.l.s4 839922192
    %v1731 = vunpack.c.0.s8 %v1730
    %v1732 = vlaneseq
    %v1733 = vshrl.u32 %v1732, 7
    %v1734 = vsub.s32 %v1731, %v1733
    %v1735 = vrot.slane %v1727, %v1734
    %1736 = vset.pattern.permute.xlu0 3
    %1737 = vperm.xlu0 %1736, %v102
    %v1738 = vpop.permute.xlu0 %1737
    %v1741 = vunpack.c.l.s4 839922192
    %v1742 = vunpack.c.0.s8 %v1741
    %v1743 = vlaneseq
    %v1744 = vshrl.u32 %v1743, 7
    %v1745 = vsub.s32 %v1742, %v1744
    %v1746 = vrot.slane %v1738, %v1745
    %1747 = vset.pattern.permute.xlu0 3
    %1748 = vperm.xlu0 %1747, %v103
    %v1749 = vpop.permute.xlu0 %1748
    %v1752 = vunpack.c.l.s4 839922192
    %v1753 = vunpack.c.0.s8 %v1752
    %v1754 = vlaneseq
    %v1755 = vshrl.u32 %v1754, 7
    %v1756 = vsub.s32 %v1753, %v1755
    %v1757 = vrot.slane %v1749, %v1756
    %1758 = vset.pattern.permute.xlu0 3
    %1759 = vperm.xlu0 %1758, %v104
    %v1760 = vpop.permute.xlu0 %1759
    %v1763 = vunpack.c.l.s4 839922192
    %v1764 = vunpack.c.0.s8 %v1763
    %v1765 = vlaneseq
    %v1766 = vshrl.u32 %v1765, 7
    %v1767 = vsub.s32 %v1764, %v1766
    %v1768 = vrot.slane %v1760, %v1767
    %1769 = vset.pattern.permute.xlu0 3
    %1770 = vperm.xlu0 %1769, %v105
    %v1771 = vpop.permute.xlu0 %1770
    %v1774 = vunpack.c.l.s4 839922192
    %v1775 = vunpack.c.0.s8 %v1774
    %v1776 = vlaneseq
    %v1777 = vshrl.u32 %v1776, 7
    %v1778 = vsub.s32 %v1775, %v1777
    %v1779 = vrot.slane %v1771, %v1778
    %1780 = vset.pattern.permute.xlu0 3
    %1781 = vperm.xlu0 %1780, %v106
    %v1782 = vpop.permute.xlu0 %1781
    %v1785 = vunpack.c.l.s4 839922192
    %v1786 = vunpack.c.0.s8 %v1785
    %v1787 = vlaneseq
    %v1788 = vshrl.u32 %v1787, 7
    %v1789 = vsub.s32 %v1786, %v1788
    %v1790 = vrot.slane %v1782, %v1789
    %1791 = vset.pattern.permute.xlu0 3
    %1792 = vperm.xlu0 %1791, %v107
    %v1793 = vpop.permute.xlu0 %1792
    %v1796 = vunpack.c.l.s4 839922192
    %v1797 = vunpack.c.0.s8 %v1796
    %v1798 = vlaneseq
    %v1799 = vshrl.u32 %v1798, 7
    %v1800 = vsub.s32 %v1797, %v1799
    %v1801 = vrot.slane %v1793, %v1800
    %1802 = vset.pattern.permute.xlu0 3
    %1803 = vperm.xlu0 %1802, %v108
    %v1804 = vpop.permute.xlu0 %1803
    %v1807 = vunpack.c.l.s4 839922192
    %v1808 = vunpack.c.0.s8 %v1807
    %v1809 = vlaneseq
    %v1810 = vshrl.u32 %v1809, 7
    %v1811 = vsub.s32 %v1808, %v1810
    %v1812 = vrot.slane %v1804, %v1811
    %1813 = vset.pattern.permute.xlu0 3
    %1814 = vperm.xlu0 %1813, %v109
    %v1815 = vpop.permute.xlu0 %1814
    %v1818 = vunpack.c.l.s4 839922192
    %v1819 = vunpack.c.0.s8 %v1818
    %v1820 = vlaneseq
    %v1821 = vshrl.u32 %v1820, 7
    %v1822 = vsub.s32 %v1819, %v1821
    %v1823 = vrot.slane %v1815, %v1822
    %1824 = vset.pattern.permute.xlu0 3
    %1825 = vperm.xlu0 %1824, %v110
    %v1826 = vpop.permute.xlu0 %1825
    %v1829 = vunpack.c.l.s4 839922192
    %v1830 = vunpack.c.0.s8 %v1829
    %v1831 = vlaneseq
    %v1832 = vshrl.u32 %v1831, 7
    %v1833 = vsub.s32 %v1830, %v1832
    %v1834 = vrot.slane %v1826, %v1833
    %1835 = vset.pattern.permute.xlu0 3
    %1836 = vperm.xlu0 %1835, %v111
    %v1837 = vpop.permute.xlu0 %1836
    %v1840 = vunpack.c.l.s4 839922192
    %v1841 = vunpack.c.0.s8 %v1840
    %v1842 = vlaneseq
    %v1843 = vshrl.u32 %v1842, 7
    %v1844 = vsub.s32 %v1841, %v1843
    %v1845 = vrot.slane %v1837, %v1844
    %1846 = vset.pattern.permute.xlu0 3
    %1847 = vperm.xlu0 %1846, %v112
    %v1848 = vpop.permute.xlu0 %1847
    %v1851 = vunpack.c.l.s4 839922192
    %v1852 = vunpack.c.0.s8 %v1851
    %v1853 = vlaneseq
    %v1854 = vshrl.u32 %v1853, 7
    %v1855 = vsub.s32 %v1852, %v1854
    %v1856 = vrot.slane %v1848, %v1855
    %1857 = vset.pattern.permute.xlu0 3
    %1858 = vperm.xlu0 %1857, %v113
    %v1859 = vpop.permute.xlu0 %1858
    %v1862 = vunpack.c.l.s4 839922192
    %v1863 = vunpack.c.0.s8 %v1862
    %v1864 = vlaneseq
    %v1865 = vshrl.u32 %v1864, 7
    %v1866 = vsub.s32 %v1863, %v1865
    %v1867 = vrot.slane %v1859, %v1866
    %1868 = vset.pattern.permute.xlu0 3
    %1869 = vperm.xlu0 %1868, %v114
    %v1870 = vpop.permute.xlu0 %1869
    %v1873 = vunpack.c.l.s4 839922192
    %v1874 = vunpack.c.0.s8 %v1873
    %v1875 = vlaneseq
    %v1876 = vshrl.u32 %v1875, 7
    %v1877 = vsub.s32 %v1874, %v1876
    %v1878 = vrot.slane %v1870, %v1877
    %1879 = vset.pattern.permute.xlu0 3
    %1880 = vperm.xlu0 %1879, %v115
    %v1881 = vpop.permute.xlu0 %1880
    %v1884 = vunpack.c.l.s4 839922192
    %v1885 = vunpack.c.0.s8 %v1884
    %v1886 = vlaneseq
    %v1887 = vshrl.u32 %v1886, 7
    %v1888 = vsub.s32 %v1885, %v1887
    %v1889 = vrot.slane %v1881, %v1888
    %1890 = vset.pattern.permute.xlu0 3
    %1891 = vperm.xlu0 %1890, %v116
    %v1892 = vpop.permute.xlu0 %1891
    %v1895 = vunpack.c.l.s4 839922192
    %v1896 = vunpack.c.0.s8 %v1895
    %v1897 = vlaneseq
    %v1898 = vshrl.u32 %v1897, 7
    %v1899 = vsub.s32 %v1896, %v1898
    %v1900 = vrot.slane %v1892, %v1899
    %v1902 = vshll.u32 %v1735, 16
    %v1904 = vrot.slane %v1902, 5
    %v1905 = vshrl.u32 %v1735, 16
    %v1907 = vrot.slane %v1905, 4
    %v1908 = vor.u32 %v1907, %v1904
    %v1909 = vrot.slane %v1908, 4
    %v1911 = vshll.u32 %v1746, 16
    %v1913 = vrot.slane %v1911, 5
    %v1914 = vsel %vm964, %v1909, %v1913
    %v1915 = vshrl.u32 %v1746, 16
    %v1917 = vrot.slane %v1915, 4
    %v1918 = vor.u32 %v1917, %v1913
    %v1919 = vrot.slane %v1918, 4
    %v1921 = vshll.u32 %v1757, 16
    %v1923 = vrot.slane %v1921, 5
    %v1924 = vsel %vm964, %v1919, %v1923
    %v1925 = vshrl.u32 %v1757, 16
    %v1927 = vrot.slane %v1925, 4
    %v1928 = vor.u32 %v1927, %v1923
    %v1929 = vrot.slane %v1928, 4
    %v1931 = vshll.u32 %v1768, 16
    %v1933 = vrot.slane %v1931, 5
    %v1934 = vsel %vm964, %v1929, %v1933
    %v1935 = vshrl.u32 %v1768, 16
    %v1937 = vrot.slane %v1935, 4
    %v1938 = vor.u32 %v1937, %v1933
    %v1939 = vrot.slane %v1938, 4
    %v1941 = vshll.u32 %v1779, 16
    %v1943 = vrot.slane %v1941, 5
    %v1944 = vsel %vm964, %v1939, %v1943
    %v1945 = vshrl.u32 %v1779, 16
    %v1947 = vrot.slane %v1945, 4
    %v1948 = vor.u32 %v1947, %v1943
    %v1949 = vrot.slane %v1948, 4
    %v1951 = vshll.u32 %v1790, 16
    %v1953 = vrot.slane %v1951, 5
    %v1954 = vsel %vm964, %v1949, %v1953
    %v1955 = vshrl.u32 %v1790, 16
    %v1957 = vrot.slane %v1955, 4
    %v1958 = vor.u32 %v1957, %v1953
    %v1959 = vrot.slane %v1958, 4
    %v1961 = vshll.u32 %v1801, 16
    %v1963 = vrot.slane %v1961, 5
    %v1964 = vsel %vm964, %v1959, %v1963
    %v1965 = vshrl.u32 %v1801, 16
    %v1967 = vrot.slane %v1965, 4
    %v1968 = vor.u32 %v1967, %v1963
    %v1969 = vrot.slane %v1968, 4
    %v1971 = vshll.u32 %v1812, 16
    %v1973 = vrot.slane %v1971, 5
    %v1974 = vsel %vm964, %v1969, %v1973
    %v1975 = vshrl.u32 %v1812, 16
    %v1977 = vrot.slane %v1975, 4
    %v1978 = vor.u32 %v1977, %v1973
    %v1979 = vrot.slane %v1978, 4
    %v1981 = vshll.u32 %v1823, 16
    %v1983 = vrot.slane %v1981, 5
    %v1984 = vsel %vm964, %v1979, %v1983
    %v1985 = vshrl.u32 %v1823, 16
    %v1987 = vrot.slane %v1985, 4
    %v1988 = vor.u32 %v1987, %v1983
    %v1989 = vrot.slane %v1988, 4
    %v1991 = vshll.u32 %v1834, 16
    %v1993 = vrot.slane %v1991, 5
    %v1994 = vsel %vm964, %v1989, %v1993
    %v1995 = vshrl.u32 %v1834, 16
    %v1997 = vrot.slane %v1995, 4
    %v1998 = vor.u32 %v1997, %v1993
    %v1999 = vrot.slane %v1998, 4
    %v2001 = vshll.u32 %v1845, 16
    %v2003 = vrot.slane %v2001, 5
    %v2004 = vsel %vm964, %v1999, %v2003
    %v2005 = vshrl.u32 %v1845, 16
    %v2007 = vrot.slane %v2005, 4
    %v2008 = vor.u32 %v2007, %v2003
    %v2009 = vrot.slane %v2008, 4
    %v2011 = vshll.u32 %v1856, 16
    %v2013 = vrot.slane %v2011, 5
    %v2014 = vsel %vm964, %v2009, %v2013
    %v2015 = vshrl.u32 %v1856, 16
    %v2017 = vrot.slane %v2015, 4
    %v2018 = vor.u32 %v2017, %v2013
    %v2019 = vrot.slane %v2018, 4
    %v2021 = vshll.u32 %v1867, 16
    %v2023 = vrot.slane %v2021, 5
    %v2024 = vsel %vm964, %v2019, %v2023
    %v2025 = vshrl.u32 %v1867, 16
    %v2027 = vrot.slane %v2025, 4
    %v2028 = vor.u32 %v2027, %v2023
    %v2029 = vrot.slane %v2028, 4
    %v2031 = vshll.u32 %v1878, 16
    %v2033 = vrot.slane %v2031, 5
    %v2034 = vsel %vm964, %v2029, %v2033
    %v2035 = vshrl.u32 %v1878, 16
    %v2037 = vrot.slane %v2035, 4
    %v2038 = vor.u32 %v2037, %v2033
    %v2039 = vrot.slane %v2038, 4
    %v2041 = vshll.u32 %v1889, 16
    %v2043 = vrot.slane %v2041, 5
    %v2044 = vsel %vm964, %v2039, %v2043
    %v2045 = vshrl.u32 %v1889, 16
    %v2047 = vrot.slane %v2045, 4
    %v2048 = vor.u32 %v2047, %v2043
    %v2049 = vrot.slane %v2048, 4
    %v2051 = vshll.u32 %v1900, 16
    %v2053 = vrot.slane %v2051, 5
    %v2054 = vsel %vm964, %v2049, %v2053
    %v2055 = vshrl.u32 %v1900, 16
    %v2057 = vrot.slane %v2055, 4
    %v2058 = vor.u32 %v2057, %v2053
    %v2059 = vrot.slane %v2058, 4
    %v2077 = vmul.bf16 %v1723, %v1904
    %v2078 = vmul.bf16 %v1351, %v1914
    %v2079 = vmul.bf16 %v1352, %v1924
    %v2080 = vmul.bf16 %v1353, %v1934
    %v2081 = vmul.bf16 %v1354, %v1944
    %v2082 = vmul.bf16 %v1355, %v1954
    %v2083 = vmul.bf16 %v1356, %v1964
    %v2084 = vmul.bf16 %v1357, %v1974
    %v2085 = vmul.bf16 %v1358, %v1984
    %v2086 = vmul.bf16 %v1359, %v1994
    %v2087 = vmul.bf16 %v1360, %v2004
    %v2088 = vmul.bf16 %v1361, %v2014
    %v2089 = vmul.bf16 %v1362, %v2024
    %v2090 = vmul.bf16 %v1363, %v2034
    %v2091 = vmul.bf16 %v1364, %v2044
    %v2092 = vmul.bf16 %v1365, %v2054
    %v2093 = vmul.bf16 %v1724, %v2059
    %v2094 = vld [vmem:[#allocation2 + $0x8] sm:$0xf]
    %v2095 = vld [vmem:[#allocation2 + $0xc] sm:$0xf]
    %v2096 = vld [vmem:[#allocation2 + $0x10] sm:$0xf]
    %v2097 = vld [vmem:[#allocation2 + $0x14] sm:$0xf]
    %v2098 = vld [vmem:[#allocation2 + $0x18] sm:$0xf]
    %v2099 = vld [vmem:[#allocation2 + $0x1c] sm:$0xf]
    %v2100 = vld [vmem:[#allocation2 + $0x20] sm:$0xf]
    %v2101 = vld [vmem:[#allocation2 + $0x24] sm:$0xf]
    %v2102 = vld [vmem:[#allocation2 + $0x28] sm:$0xf]
    %v2103 = vld [vmem:[#allocation2 + $0x2c] sm:$0xf]
    %v2104 = vld [vmem:[#allocation2 + $0x30] sm:$0xf]
    %v2105 = vld [vmem:[#allocation2 + $0x34] sm:$0xf]
    %v2106 = vld [vmem:[#allocation2 + $0x38] sm:$0xf]
    %v2107 = vld [vmem:[#allocation2 + $0x3c] sm:$0xf]
    %v2108 = vld [vmem:[#allocation2 + $0x40] sm:$0xf]
    %v2109 = vld [vmem:[#allocation2 + $0x44] sm:$0xf]
    %v2110 = vld [vmem:[#allocation2 + $0x48] sm:$0x1]
    %2111 = vset.pattern.permute.xlu0 5
    %2112 = vperm.xlu0 %2111, %v101
    %v2113 = vpop.permute.xlu0 %2112
    %v2116 = vunpack.c.l.s4 839922192
    %v2117 = vunpack.c.0.s8 %v2116
    %v2118 = vlaneseq
    %v2119 = vshrl.u32 %v2118, 7
    %v2120 = vsub.s32 %v2117, %v2119
    %v2121 = vrot.slane %v2113, %v2120
    %2122 = vset.pattern.permute.xlu0 5
    %2123 = vperm.xlu0 %2122, %v102
    %v2124 = vpop.permute.xlu0 %2123
    %v2127 = vunpack.c.l.s4 839922192
    %v2128 = vunpack.c.0.s8 %v2127
    %v2129 = vlaneseq
    %v2130 = vshrl.u32 %v2129, 7
    %v2131 = vsub.s32 %v2128, %v2130
    %v2132 = vrot.slane %v2124, %v2131
    %2133 = vset.pattern.permute.xlu0 5
    %2134 = vperm.xlu0 %2133, %v103
    %v2135 = vpop.permute.xlu0 %2134
    %v2138 = vunpack.c.l.s4 839922192
    %v2139 = vunpack.c.0.s8 %v2138
    %v2140 = vlaneseq
    %v2141 = vshrl.u32 %v2140, 7
    %v2142 = vsub.s32 %v2139, %v2141
    %v2143 = vrot.slane %v2135, %v2142
    %2144 = vset.pattern.permute.xlu0 5
    %2145 = vperm.xlu0 %2144, %v104
    %v2146 = vpop.permute.xlu0 %2145
    %v2149 = vunpack.c.l.s4 839922192
    %v2150 = vunpack.c.0.s8 %v2149
    %v2151 = vlaneseq
    %v2152 = vshrl.u32 %v2151, 7
    %v2153 = vsub.s32 %v2150, %v2152
    %v2154 = vrot.slane %v2146, %v2153
    %2155 = vset.pattern.permute.xlu0 5
    %2156 = vperm.xlu0 %2155, %v105
    %v2157 = vpop.permute.xlu0 %2156
    %v2160 = vunpack.c.l.s4 839922192
    %v2161 = vunpack.c.0.s8 %v2160
    %v2162 = vlaneseq
    %v2163 = vshrl.u32 %v2162, 7
    %v2164 = vsub.s32 %v2161, %v2163
    %v2165 = vrot.slane %v2157, %v2164
    %2166 = vset.pattern.permute.xlu0 5
    %2167 = vperm.xlu0 %2166, %v106
    %v2168 = vpop.permute.xlu0 %2167
    %v2171 = vunpack.c.l.s4 839922192
    %v2172 = vunpack.c.0.s8 %v2171
    %v2173 = vlaneseq
    %v2174 = vshrl.u32 %v2173, 7
    %v2175 = vsub.s32 %v2172, %v2174
    %v2176 = vrot.slane %v2168, %v2175
    %2177 = vset.pattern.permute.xlu0 5
    %2178 = vperm.xlu0 %2177, %v107
    %v2179 = vpop.permute.xlu0 %2178
    %v2182 = vunpack.c.l.s4 839922192
    %v2183 = vunpack.c.0.s8 %v2182
    %v2184 = vlaneseq
    %v2185 = vshrl.u32 %v2184, 7
    %v2186 = vsub.s32 %v2183, %v2185
    %v2187 = vrot.slane %v2179, %v2186
    %2188 = vset.pattern.permute.xlu0 5
    %2189 = vperm.xlu0 %2188, %v108
    %v2190 = vpop.permute.xlu0 %2189
    %v2193 = vunpack.c.l.s4 839922192
    %v2194 = vunpack.c.0.s8 %v2193
    %v2195 = vlaneseq
    %v2196 = vshrl.u32 %v2195, 7
    %v2197 = vsub.s32 %v2194, %v2196
    %v2198 = vrot.slane %v2190, %v2197
    %2199 = vset.pattern.permute.xlu0 5
    %2200 = vperm.xlu0 %2199, %v109
    %v2201 = vpop.permute.xlu0 %2200
    %v2204 = vunpack.c.l.s4 839922192
    %v2205 = vunpack.c.0.s8 %v2204
    %v2206 = vlaneseq
    %v2207 = vshrl.u32 %v2206, 7
    %v2208 = vsub.s32 %v2205, %v2207
    %v2209 = vrot.slane %v2201, %v2208
    %2210 = vset.pattern.permute.xlu0 5
    %2211 = vperm.xlu0 %2210, %v110
    %v2212 = vpop.permute.xlu0 %2211
    %v2215 = vunpack.c.l.s4 839922192
    %v2216 = vunpack.c.0.s8 %v2215
    %v2217 = vlaneseq
    %v2218 = vshrl.u32 %v2217, 7
    %v2219 = vsub.s32 %v2216, %v2218
    %v2220 = vrot.slane %v2212, %v2219
    %2221 = vset.pattern.permute.xlu0 5
    %2222 = vperm.xlu0 %2221, %v111
    %v2223 = vpop.permute.xlu0 %2222
    %v2226 = vunpack.c.l.s4 839922192
    %v2227 = vunpack.c.0.s8 %v2226
    %v2228 = vlaneseq
    %v2229 = vshrl.u32 %v2228, 7
    %v2230 = vsub.s32 %v2227, %v2229
    %v2231 = vrot.slane %v2223, %v2230
    %2232 = vset.pattern.permute.xlu0 5
    %2233 = vperm.xlu0 %2232, %v112
    %v2234 = vpop.permute.xlu0 %2233
    %v2237 = vunpack.c.l.s4 839922192
    %v2238 = vunpack.c.0.s8 %v2237
    %v2239 = vlaneseq
    %v2240 = vshrl.u32 %v2239, 7
    %v2241 = vsub.s32 %v2238, %v2240
    %v2242 = vrot.slane %v2234, %v2241
    %2243 = vset.pattern.permute.xlu0 5
    %2244 = vperm.xlu0 %2243, %v113
    %v2245 = vpop.permute.xlu0 %2244
    %v2248 = vunpack.c.l.s4 839922192
    %v2249 = vunpack.c.0.s8 %v2248
    %v2250 = vlaneseq
    %v2251 = vshrl.u32 %v2250, 7
    %v2252 = vsub.s32 %v2249, %v2251
    %v2253 = vrot.slane %v2245, %v2252
    %2254 = vset.pattern.permute.xlu0 5
    %2255 = vperm.xlu0 %2254, %v114
    %v2256 = vpop.permute.xlu0 %2255
    %v2259 = vunpack.c.l.s4 839922192
    %v2260 = vunpack.c.0.s8 %v2259
    %v2261 = vlaneseq
    %v2262 = vshrl.u32 %v2261, 7
    %v2263 = vsub.s32 %v2260, %v2262
    %v2264 = vrot.slane %v2256, %v2263
    %2265 = vset.pattern.permute.xlu0 5
    %2266 = vperm.xlu0 %2265, %v115
    %v2267 = vpop.permute.xlu0 %2266
    %v2270 = vunpack.c.l.s4 839922192
    %v2271 = vunpack.c.0.s8 %v2270
    %v2272 = vlaneseq
    %v2273 = vshrl.u32 %v2272, 7
    %v2274 = vsub.s32 %v2271, %v2273
    %v2275 = vrot.slane %v2267, %v2274
    %2276 = vset.pattern.permute.xlu0 5
    %2277 = vperm.xlu0 %2276, %v116
    %v2278 = vpop.permute.xlu0 %2277
    %v2281 = vunpack.c.l.s4 839922192
    %v2282 = vunpack.c.0.s8 %v2281
    %v2283 = vlaneseq
    %v2284 = vshrl.u32 %v2283, 7
    %v2285 = vsub.s32 %v2282, %v2284
    %v2286 = vrot.slane %v2278, %v2285
    %v2288 = vshrl.u32 %v2121, 16
    %v2290 = vrot.slane %v2288, 7
    %v2291 = vshll.u32 %v2121, 16
    %v2293 = vor.u32 %v2290, %v2291
    %v2294 = vrot.slane %v2290, 4
    %v2296 = vshrl.u32 %v2132, 16
    %v2298 = vrot.slane %v2296, 7
    %v2299 = vshll.u32 %v2132, 16
    %v2301 = vor.u32 %v2298, %v2299
    %v2302 = vsel %vm1545, %v2294, %v2301
    %v2303 = vrot.slane %v2298, 4
    %v2305 = vshrl.u32 %v2143, 16
    %v2307 = vrot.slane %v2305, 7
    %v2308 = vshll.u32 %v2143, 16
    %v2310 = vor.u32 %v2307, %v2308
    %v2311 = vsel %vm1545, %v2303, %v2310
    %v2312 = vrot.slane %v2307, 4
    %v2314 = vshrl.u32 %v2154, 16
    %v2316 = vrot.slane %v2314, 7
    %v2317 = vshll.u32 %v2154, 16
    %v2319 = vor.u32 %v2316, %v2317
    %v2320 = vsel %vm1545, %v2312, %v2319
    %v2321 = vrot.slane %v2316, 4
    %v2323 = vshrl.u32 %v2165, 16
    %v2325 = vrot.slane %v2323, 7
    %v2326 = vshll.u32 %v2165, 16
    %v2328 = vor.u32 %v2325, %v2326
    %v2329 = vsel %vm1545, %v2321, %v2328
    %v2330 = vrot.slane %v2325, 4
    %v2332 = vshrl.u32 %v2176, 16
    %v2334 = vrot.slane %v2332, 7
    %v2335 = vshll.u32 %v2176, 16
    %v2337 = vor.u32 %v2334, %v2335
    %v2338 = vsel %vm1545, %v2330, %v2337
    %v2339 = vrot.slane %v2334, 4
    %v2341 = vshrl.u32 %v2187, 16
    %v2343 = vrot.slane %v2341, 7
    %v2344 = vshll.u32 %v2187, 16
    %v2346 = vor.u32 %v2343, %v2344
    %v2347 = vsel %vm1545, %v2339, %v2346
    %v2348 = vrot.slane %v2343, 4
    %v2350 = vshrl.u32 %v2198, 16
    %v2352 = vrot.slane %v2350, 7
    %v2353 = vshll.u32 %v2198, 16
    %v2355 = vor.u32 %v2352, %v2353
    %v2356 = vsel %vm1545, %v2348, %v2355
    %v2357 = vrot.slane %v2352, 4
    %v2359 = vshrl.u32 %v2209, 16
    %v2361 = vrot.slane %v2359, 7
    %v2362 = vshll.u32 %v2209, 16
    %v2364 = vor.u32 %v2361, %v2362
    %v2365 = vsel %vm1545, %v2357, %v2364
    %v2366 = vrot.slane %v2361, 4
    %v2368 = vshrl.u32 %v2220, 16
    %v2370 = vrot.slane %v2368, 7
    %v2371 = vshll.u32 %v2220, 16
    %v2373 = vor.u32 %v2370, %v2371
    %v2374 = vsel %vm1545, %v2366, %v2373
    %v2375 = vrot.slane %v2370, 4
    %v2377 = vshrl.u32 %v2231, 16
    %v2379 = vrot.slane %v2377, 7
    %v2380 = vshll.u32 %v2231, 16
    %v2382 = vor.u32 %v2379, %v2380
    %v2383 = vsel %vm1545, %v2375, %v2382
    %v2384 = vrot.slane %v2379, 4
    %v2386 = vshrl.u32 %v2242, 16
    %v2388 = vrot.slane %v2386, 7
    %v2389 = vshll.u32 %v2242, 16
    %v2391 = vor.u32 %v2388, %v2389
    %v2392 = vsel %vm1545, %v2384, %v2391
    %v2393 = vrot.slane %v2388, 4
    %v2395 = vshrl.u32 %v2253, 16
    %v2397 = vrot.slane %v2395, 7
    %v2398 = vshll.u32 %v2253, 16
    %v2400 = vor.u32 %v2397, %v2398
    %v2401 = vsel %vm1545, %v2393, %v2400
    %v2402 = vrot.slane %v2397, 4
    %v2404 = vshrl.u32 %v2264, 16
    %v2406 = vrot.slane %v2404, 7
    %v2407 = vshll.u32 %v2264, 16
    %v2409 = vor.u32 %v2406, %v2407
    %v2410 = vsel %vm1545, %v2402, %v2409
    %v2411 = vrot.slane %v2406, 4
    %v2413 = vshrl.u32 %v2275, 16
    %v2415 = vrot.slane %v2413, 7
    %v2416 = vshll.u32 %v2275, 16
    %v2418 = vor.u32 %v2415, %v2416
    %v2419 = vsel %vm1545, %v2411, %v2418
    %v2420 = vrot.slane %v2415, 4
    %v2422 = vshrl.u32 %v2286, 16
    %v2424 = vrot.slane %v2422, 7
    %v2425 = vshll.u32 %v2286, 16
    %v2427 = vor.u32 %v2424, %v2425
    %v2428 = vsel %vm1545, %v2420, %v2427
    %v2429 = vrot.slane %v2424, 4
    %v2447 = vmul.bf16 %v2094, %v2293
    %v2448 = vmul.bf16 %v2095, %v2302
    %v2449 = vmul.bf16 %v2096, %v2311
    %v2450 = vmul.bf16 %v2097, %v2320
    %v2451 = vmul.bf16 %v2098, %v2329
    %v2452 = vmul.bf16 %v2099, %v2338
    %v2453 = vmul.bf16 %v2100, %v2347
    %v2454 = vmul.bf16 %v2101, %v2356
    %v2455 = vmul.bf16 %v2102, %v2365
    %v2456 = vmul.bf16 %v2103, %v2374
    %v2457 = vmul.bf16 %v2104, %v2383
    %v2458 = vmul.bf16 %v2105, %v2392
    %v2459 = vmul.bf16 %v2106, %v2401
    %v2460 = vmul.bf16 %v2107, %v2410
    %v2461 = vmul.bf16 %v2108, %v2419
    %v2462 = vmul.bf16 %v2109, %v2428
    %v2463 = vmul.bf16 %v2110, %v2429
    %v2464 = vld [vmem:[#allocation2 + $0x8] sm:$0x8]
    %v2465 = vld [vmem:[#allocation2 + $0x48] sm:$0xf]
    %2466 = vset.pattern.permute.xlu0 6
    %2467 = vperm.xlu0 %2466, %v101
    %v2468 = vpop.permute.xlu0 %2467
    %v2471 = vunpack.c.l.s4 839922192
    %v2472 = vunpack.c.0.s8 %v2471
    %v2473 = vlaneseq
    %v2474 = vshrl.u32 %v2473, 7
    %v2475 = vsub.s32 %v2472, %v2474
    %v2476 = vrot.slane %v2468, %v2475
    %2477 = vset.pattern.permute.xlu0 6
    %2478 = vperm.xlu0 %2477, %v102
    %v2479 = vpop.permute.xlu0 %2478
    %v2482 = vunpack.c.l.s4 839922192
    %v2483 = vunpack.c.0.s8 %v2482
    %v2484 = vlaneseq
    %v2485 = vshrl.u32 %v2484, 7
    %v2486 = vsub.s32 %v2483, %v2485
    %v2487 = vrot.slane %v2479, %v2486
    %2488 = vset.pattern.permute.xlu0 6
    %2489 = vperm.xlu0 %2488, %v103
    %v2490 = vpop.permute.xlu0 %2489
    %v2493 = vunpack.c.l.s4 839922192
    %v2494 = vunpack.c.0.s8 %v2493
    %v2495 = vlaneseq
    %v2496 = vshrl.u32 %v2495, 7
    %v2497 = vsub.s32 %v2494, %v2496
    %v2498 = vrot.slane %v2490, %v2497
    %2499 = vset.pattern.permute.xlu0 6
    %2500 = vperm.xlu0 %2499, %v104
    %v2501 = vpop.permute.xlu0 %2500
    %v2504 = vunpack.c.l.s4 839922192
    %v2505 = vunpack.c.0.s8 %v2504
    %v2506 = vlaneseq
    %v2507 = vshrl.u32 %v2506, 7
    %v2508 = vsub.s32 %v2505, %v2507
    %v2509 = vrot.slane %v2501, %v2508
    %2510 = vset.pattern.permute.xlu0 6
    %2511 = vperm.xlu0 %2510, %v105
    %v2512 = vpop.permute.xlu0 %2511
    %v2515 = vunpack.c.l.s4 839922192
    %v2516 = vunpack.c.0.s8 %v2515
    %v2517 = vlaneseq
    %v2518 = vshrl.u32 %v2517, 7
    %v2519 = vsub.s32 %v2516, %v2518
    %v2520 = vrot.slane %v2512, %v2519
    %2521 = vset.pattern.permute.xlu0 6
    %2522 = vperm.xlu0 %2521, %v106
    %v2523 = vpop.permute.xlu0 %2522
    %v2526 = vunpack.c.l.s4 839922192
    %v2527 = vunpack.c.0.s8 %v2526
    %v2528 = vlaneseq
    %v2529 = vshrl.u32 %v2528, 7
    %v2530 = vsub.s32 %v2527, %v2529
    %v2531 = vrot.slane %v2523, %v2530
    %2532 = vset.pattern.permute.xlu0 6
    %2533 = vperm.xlu0 %2532, %v107
    %v2534 = vpop.permute.xlu0 %2533
    %v2537 = vunpack.c.l.s4 839922192
    %v2538 = vunpack.c.0.s8 %v2537
    %v2539 = vlaneseq
    %v2540 = vshrl.u32 %v2539, 7
    %v2541 = vsub.s32 %v2538, %v2540
    %v2542 = vrot.slane %v2534, %v2541
    %2543 = vset.pattern.permute.xlu0 6
    %2544 = vperm.xlu0 %2543, %v108
    %v2545 = vpop.permute.xlu0 %2544
    %v2548 = vunpack.c.l.s4 839922192
    %v2549 = vunpack.c.0.s8 %v2548
    %v2550 = vlaneseq
    %v2551 = vshrl.u32 %v2550, 7
    %v2552 = vsub.s32 %v2549, %v2551
    %v2553 = vrot.slane %v2545, %v2552
    %2554 = vset.pattern.permute.xlu0 6
    %2555 = vperm.xlu0 %2554, %v109
    %v2556 = vpop.permute.xlu0 %2555
    %v2559 = vunpack.c.l.s4 839922192
    %v2560 = vunpack.c.0.s8 %v2559
    %v2561 = vlaneseq
    %v2562 = vshrl.u32 %v2561, 7
    %v2563 = vsub.s32 %v2560, %v2562
    %v2564 = vrot.slane %v2556, %v2563
    %2565 = vset.pattern.permute.xlu0 6
    %2566 = vperm.xlu0 %2565, %v110
    %v2567 = vpop.permute.xlu0 %2566
    %v2570 = vunpack.c.l.s4 839922192
    %v2571 = vunpack.c.0.s8 %v2570
    %v2572 = vlaneseq
    %v2573 = vshrl.u32 %v2572, 7
    %v2574 = vsub.s32 %v2571, %v2573
    %v2575 = vrot.slane %v2567, %v2574
    %2576 = vset.pattern.permute.xlu0 6
    %2577 = vperm.xlu0 %2576, %v111
    %v2578 = vpop.permute.xlu0 %2577
    %v2581 = vunpack.c.l.s4 839922192
    %v2582 = vunpack.c.0.s8 %v2581
    %v2583 = vlaneseq
    %v2584 = vshrl.u32 %v2583, 7
    %v2585 = vsub.s32 %v2582, %v2584
    %v2586 = vrot.slane %v2578, %v2585
    %2587 = vset.pattern.permute.xlu0 6
    %2588 = vperm.xlu0 %2587, %v112
    %v2589 = vpop.permute.xlu0 %2588
    %v2592 = vunpack.c.l.s4 839922192
    %v2593 = vunpack.c.0.s8 %v2592
    %v2594 = vlaneseq
    %v2595 = vshrl.u32 %v2594, 7
    %v2596 = vsub.s32 %v2593, %v2595
    %v2597 = vrot.slane %v2589, %v2596
    %2598 = vset.pattern.permute.xlu0 6
    %2599 = vperm.xlu0 %2598, %v113
    %v2600 = vpop.permute.xlu0 %2599
    %v2603 = vunpack.c.l.s4 839922192
    %v2604 = vunpack.c.0.s8 %v2603
    %v2605 = vlaneseq
    %v2606 = vshrl.u32 %v2605, 7
    %v2607 = vsub.s32 %v2604, %v2606
    %v2608 = vrot.slane %v2600, %v2607
    %2609 = vset.pattern.permute.xlu0 6
    %2610 = vperm.xlu0 %2609, %v114
    %v2611 = vpop.permute.xlu0 %2610
    %v2614 = vunpack.c.l.s4 839922192
    %v2615 = vunpack.c.0.s8 %v2614
    %v2616 = vlaneseq
    %v2617 = vshrl.u32 %v2616, 7
    %v2618 = vsub.s32 %v2615, %v2617
    %v2619 = vrot.slane %v2611, %v2618
    %2620 = vset.pattern.permute.xlu0 6
    %2621 = vperm.xlu0 %2620, %v115
    %v2622 = vpop.permute.xlu0 %2621
    %v2625 = vunpack.c.l.s4 839922192
    %v2626 = vunpack.c.0.s8 %v2625
    %v2627 = vlaneseq
    %v2628 = vshrl.u32 %v2627, 7
    %v2629 = vsub.s32 %v2626, %v2628
    %v2630 = vrot.slane %v2622, %v2629
    %2631 = vset.pattern.permute.xlu0 6
    %2632 = vperm.xlu0 %2631, %v116
    %v2633 = vpop.permute.xlu0 %2632
    %v2636 = vunpack.c.l.s4 839922192
    %v2637 = vunpack.c.0.s8 %v2636
    %v2638 = vlaneseq
    %v2639 = vshrl.u32 %v2638, 7
    %v2640 = vsub.s32 %v2637, %v2639
    %v2641 = vrot.slane %v2633, %v2640
    %v2643 = vshll.u32 %v2476, 16
    %v2645 = vrot.slane %v2643, 5
    %v2646 = vshrl.u32 %v2476, 16
    %v2648 = vrot.slane %v2646, 4
    %v2649 = vor.u32 %v2648, %v2645
    %v2650 = vrot.slane %v2649, 4
    %v2652 = vshll.u32 %v2487, 16
    %v2654 = vrot.slane %v2652, 5
    %v2655 = vsel %vm964, %v2650, %v2654
    %v2656 = vshrl.u32 %v2487, 16
    %v2658 = vrot.slane %v2656, 4
    %v2659 = vor.u32 %v2658, %v2654
    %v2660 = vrot.slane %v2659, 4
    %v2662 = vshll.u32 %v2498, 16
    %v2664 = vrot.slane %v2662, 5
    %v2665 = vsel %vm964, %v2660, %v2664
    %v2666 = vshrl.u32 %v2498, 16
    %v2668 = vrot.slane %v2666, 4
    %v2669 = vor.u32 %v2668, %v2664
    %v2670 = vrot.slane %v2669, 4
    %v2672 = vshll.u32 %v2509, 16
    %v2674 = vrot.slane %v2672, 5
    %v2675 = vsel %vm964, %v2670, %v2674
    %v2676 = vshrl.u32 %v2509, 16
    %v2678 = vrot.slane %v2676, 4
    %v2679 = vor.u32 %v2678, %v2674
    %v2680 = vrot.slane %v2679, 4
    %v2682 = vshll.u32 %v2520, 16
    %v2684 = vrot.slane %v2682, 5
    %v2685 = vsel %vm964, %v2680, %v2684
    %v2686 = vshrl.u32 %v2520, 16
    %v2688 = vrot.slane %v2686, 4
    %v2689 = vor.u32 %v2688, %v2684
    %v2690 = vrot.slane %v2689, 4
    %v2692 = vshll.u32 %v2531, 16
    %v2694 = vrot.slane %v2692, 5
    %v2695 = vsel %vm964, %v2690, %v2694
    %v2696 = vshrl.u32 %v2531, 16
    %v2698 = vrot.slane %v2696, 4
    %v2699 = vor.u32 %v2698, %v2694
    %v2700 = vrot.slane %v2699, 4
    %v2702 = vshll.u32 %v2542, 16
    %v2704 = vrot.slane %v2702, 5
    %v2705 = vsel %vm964, %v2700, %v2704
    %v2706 = vshrl.u32 %v2542, 16
    %v2708 = vrot.slane %v2706, 4
    %v2709 = vor.u32 %v2708, %v2704
    %v2710 = vrot.slane %v2709, 4
    %v2712 = vshll.u32 %v2553, 16
    %v2714 = vrot.slane %v2712, 5
    %v2715 = vsel %vm964, %v2710, %v2714
    %v2716 = vshrl.u32 %v2553, 16
    %v2718 = vrot.slane %v2716, 4
    %v2719 = vor.u32 %v2718, %v2714
    %v2720 = vrot.slane %v2719, 4
    %v2722 = vshll.u32 %v2564, 16
    %v2724 = vrot.slane %v2722, 5
    %v2725 = vsel %vm964, %v2720, %v2724
    %v2726 = vshrl.u32 %v2564, 16
    %v2728 = vrot.slane %v2726, 4
    %v2729 = vor.u32 %v2728, %v2724
    %v2730 = vrot.slane %v2729, 4
    %v2732 = vshll.u32 %v2575, 16
    %v2734 = vrot.slane %v2732, 5
    %v2735 = vsel %vm964, %v2730, %v2734
    %v2736 = vshrl.u32 %v2575, 16
    %v2738 = vrot.slane %v2736, 4
    %v2739 = vor.u32 %v2738, %v2734
    %v2740 = vrot.slane %v2739, 4
    %v2742 = vshll.u32 %v2586, 16
    %v2744 = vrot.slane %v2742, 5
    %v2745 = vsel %vm964, %v2740, %v2744
    %v2746 = vshrl.u32 %v2586, 16
    %v2748 = vrot.slane %v2746, 4
    %v2749 = vor.u32 %v2748, %v2744
    %v2750 = vrot.slane %v2749, 4
    %v2752 = vshll.u32 %v2597, 16
    %v2754 = vrot.slane %v2752, 5
    %v2755 = vsel %vm964, %v2750, %v2754
    %v2756 = vshrl.u32 %v2597, 16
    %v2758 = vrot.slane %v2756, 4
    %v2759 = vor.u32 %v2758, %v2754
    %v2760 = vrot.slane %v2759, 4
    %v2762 = vshll.u32 %v2608, 16
    %v2764 = vrot.slane %v2762, 5
    %v2765 = vsel %vm964, %v2760, %v2764
    %v2766 = vshrl.u32 %v2608, 16
    %v2768 = vrot.slane %v2766, 4
    %v2769 = vor.u32 %v2768, %v2764
    %v2770 = vrot.slane %v2769, 4
    %v2772 = vshll.u32 %v2619, 16
    %v2774 = vrot.slane %v2772, 5
    %v2775 = vsel %vm964, %v2770, %v2774
    %v2776 = vshrl.u32 %v2619, 16
    %v2778 = vrot.slane %v2776, 4
    %v2779 = vor.u32 %v2778, %v2774
    %v2780 = vrot.slane %v2779, 4
    %v2782 = vshll.u32 %v2630, 16
    %v2784 = vrot.slane %v2782, 5
    %v2785 = vsel %vm964, %v2780, %v2784
    %v2786 = vshrl.u32 %v2630, 16
    %v2788 = vrot.slane %v2786, 4
    %v2789 = vor.u32 %v2788, %v2784
    %v2790 = vrot.slane %v2789, 4
    %v2792 = vshll.u32 %v2641, 16
    %v2794 = vrot.slane %v2792, 5
    %v2795 = vsel %vm964, %v2790, %v2794
    %v2796 = vshrl.u32 %v2641, 16
    %v2798 = vrot.slane %v2796, 4
    %v2799 = vor.u32 %v2798, %v2794
    %v2800 = vrot.slane %v2799, 4
    %v2818 = vmul.bf16 %v2464, %v2645
    %v2819 = vmul.bf16 %v2095, %v2655
    %v2820 = vmul.bf16 %v2096, %v2665
    %v2821 = vmul.bf16 %v2097, %v2675
    %v2822 = vmul.bf16 %v2098, %v2685
    %v2823 = vmul.bf16 %v2099, %v2695
    %v2824 = vmul.bf16 %v2100, %v2705
    %v2825 = vmul.bf16 %v2101, %v2715
    %v2826 = vmul.bf16 %v2102, %v2725
    %v2827 = vmul.bf16 %v2103, %v2735
    %v2828 = vmul.bf16 %v2104, %v2745
    %v2829 = vmul.bf16 %v2105, %v2755
    %v2830 = vmul.bf16 %v2106, %v2765
    %v2831 = vmul.bf16 %v2107, %v2775
    %v2832 = vmul.bf16 %v2108, %v2785
    %v2833 = vmul.bf16 %v2109, %v2795
    %v2834 = vmul.bf16 %v2465, %v2800
    %2835 = vset.pattern.permute.xlu0 7
    %2836 = vperm.xlu0 %2835, %v101
    %v2837 = vpop.permute.xlu0 %2836
    %v2840 = vunpack.c.l.s4 839922192
    %v2841 = vunpack.c.0.s8 %v2840
    %v2842 = vlaneseq
    %v2843 = vshrl.u32 %v2842, 7
    %v2844 = vsub.s32 %v2841, %v2843
    %v2845 = vrot.slane %v2837, %v2844
    %2846 = vset.pattern.permute.xlu0 7
    %2847 = vperm.xlu0 %2846, %v102
    %v2848 = vpop.permute.xlu0 %2847
    %v2851 = vunpack.c.l.s4 839922192
    %v2852 = vunpack.c.0.s8 %v2851
    %v2853 = vlaneseq
    %v2854 = vshrl.u32 %v2853, 7
    %v2855 = vsub.s32 %v2852, %v2854
    %v2856 = vrot.slane %v2848, %v2855
    %2857 = vset.pattern.permute.xlu0 7
    %2858 = vperm.xlu0 %2857, %v103
    %v2859 = vpop.permute.xlu0 %2858
    %v2862 = vunpack.c.l.s4 839922192
    %v2863 = vunpack.c.0.s8 %v2862
    %v2864 = vlaneseq
    %v2865 = vshrl.u32 %v2864, 7
    %v2866 = vsub.s32 %v2863, %v2865
    %v2867 = vrot.slane %v2859, %v2866
    %2868 = vset.pattern.permute.xlu0 7
    %2869 = vperm.xlu0 %2868, %v104
    %v2870 = vpop.permute.xlu0 %2869
    %v2873 = vunpack.c.l.s4 839922192
    %v2874 = vunpack.c.0.s8 %v2873
    %v2875 = vlaneseq
    %v2876 = vshrl.u32 %v2875, 7
    %v2877 = vsub.s32 %v2874, %v2876
    %v2878 = vrot.slane %v2870, %v2877
    %2879 = vset.pattern.permute.xlu0 7
    %2880 = vperm.xlu0 %2879, %v105
    %v2881 = vpop.permute.xlu0 %2880
    %v2884 = vunpack.c.l.s4 839922192
    %v2885 = vunpack.c.0.s8 %v2884
    %v2886 = vlaneseq
    %v2887 = vshrl.u32 %v2886, 7
    %v2888 = vsub.s32 %v2885, %v2887
    %v2889 = vrot.slane %v2881, %v2888
    %2890 = vset.pattern.permute.xlu0 7
    %2891 = vperm.xlu0 %2890, %v106
    %v2892 = vpop.permute.xlu0 %2891
    %v2895 = vunpack.c.l.s4 839922192
    %v2896 = vunpack.c.0.s8 %v2895
    %v2897 = vlaneseq
    %v2898 = vshrl.u32 %v2897, 7
    %v2899 = vsub.s32 %v2896, %v2898
    %v2900 = vrot.slane %v2892, %v2899
    %2901 = vset.pattern.permute.xlu0 7
    %2902 = vperm.xlu0 %2901, %v107
    %v2903 = vpop.permute.xlu0 %2902
    %v2906 = vunpack.c.l.s4 839922192
    %v2907 = vunpack.c.0.s8 %v2906
    %v2908 = vlaneseq
    %v2909 = vshrl.u32 %v2908, 7
    %v2910 = vsub.s32 %v2907, %v2909
    %v2911 = vrot.slane %v2903, %v2910
    %2912 = vset.pattern.permute.xlu0 7
    %2913 = vperm.xlu0 %2912, %v108
    %v2914 = vpop.permute.xlu0 %2913
    %v2917 = vunpack.c.l.s4 839922192
    %v2918 = vunpack.c.0.s8 %v2917
    %v2919 = vlaneseq
    %v2920 = vshrl.u32 %v2919, 7
    %v2921 = vsub.s32 %v2918, %v2920
    %v2922 = vrot.slane %v2914, %v2921
    %2923 = vset.pattern.permute.xlu0 7
    %2924 = vperm.xlu0 %2923, %v109
    %v2925 = vpop.permute.xlu0 %2924
    %v2928 = vunpack.c.l.s4 839922192
    %v2929 = vunpack.c.0.s8 %v2928
    %v2930 = vlaneseq
    %v2931 = vshrl.u32 %v2930, 7
    %v2932 = vsub.s32 %v2929, %v2931
    %v2933 = vrot.slane %v2925, %v2932
    %2934 = vset.pattern.permute.xlu0 7
    %2935 = vperm.xlu0 %2934, %v110
    %v2936 = vpop.permute.xlu0 %2935
    %v2939 = vunpack.c.l.s4 839922192
    %v2940 = vunpack.c.0.s8 %v2939
    %v2941 = vlaneseq
    %v2942 = vshrl.u32 %v2941, 7
    %v2943 = vsub.s32 %v2940, %v2942
    %v2944 = vrot.slane %v2936, %v2943
    %2945 = vset.pattern.permute.xlu0 7
    %2946 = vperm.xlu0 %2945, %v111
    %v2947 = vpop.permute.xlu0 %2946
    %v2950 = vunpack.c.l.s4 839922192
    %v2951 = vunpack.c.0.s8 %v2950
    %v2952 = vlaneseq
    %v2953 = vshrl.u32 %v2952, 7
    %v2954 = vsub.s32 %v2951, %v2953
    %v2955 = vrot.slane %v2947, %v2954
    %2956 = vset.pattern.permute.xlu0 7
    %2957 = vperm.xlu0 %2956, %v112
    %v2958 = vpop.permute.xlu0 %2957
    %v2961 = vunpack.c.l.s4 839922192
    %v2962 = vunpack.c.0.s8 %v2961
    %v2963 = vlaneseq
    %v2964 = vshrl.u32 %v2963, 7
    %v2965 = vsub.s32 %v2962, %v2964
    %v2966 = vrot.slane %v2958, %v2965
    %2967 = vset.pattern.permute.xlu0 7
    %2968 = vperm.xlu0 %2967, %v113
    %v2969 = vpop.permute.xlu0 %2968
    %v2972 = vunpack.c.l.s4 839922192
    %v2973 = vunpack.c.0.s8 %v2972
    %v2974 = vlaneseq
    %v2975 = vshrl.u32 %v2974, 7
    %v2976 = vsub.s32 %v2973, %v2975
    %v2977 = vrot.slane %v2969, %v2976
    %2978 = vset.pattern.permute.xlu0 7
    %2979 = vperm.xlu0 %2978, %v114
    %v2980 = vpop.permute.xlu0 %2979
    %v2983 = vunpack.c.l.s4 839922192
    %v2984 = vunpack.c.0.s8 %v2983
    %v2985 = vlaneseq
    %v2986 = vshrl.u32 %v2985, 7
    %v2987 = vsub.s32 %v2984, %v2986
    %v2988 = vrot.slane %v2980, %v2987
    %2989 = vset.pattern.permute.xlu0 7
    %2990 = vperm.xlu0 %2989, %v115
    %v2991 = vpop.permute.xlu0 %2990
    %v2994 = vunpack.c.l.s4 839922192
    %v2995 = vunpack.c.0.s8 %v2994
    %v2996 = vlaneseq
    %v2997 = vshrl.u32 %v2996, 7
    %v2998 = vsub.s32 %v2995, %v2997
    %v2999 = vrot.slane %v2991, %v2998
    %3000 = vset.pattern.permute.xlu0 7
    %3001 = vperm.xlu0 %3000, %v116
    %v3002 = vpop.permute.xlu0 %3001
    %v3005 = vunpack.c.l.s4 839922192
    %v3006 = vunpack.c.0.s8 %v3005
    %v3007 = vlaneseq
    %v3008 = vshrl.u32 %v3007, 7
    %v3009 = vsub.s32 %v3006, %v3008
    %v3010 = vrot.slane %v3002, %v3009
    %v3011 = vmul.bf16 %v2095, %v2845
    %v3012 = vmul.bf16 %v2096, %v2856
    %v3013 = vmul.bf16 %v2097, %v2867
    %v3014 = vmul.bf16 %v2098, %v2878
    %v3015 = vmul.bf16 %v2099, %v2889
    %v3016 = vmul.bf16 %v2100, %v2900
    %v3017 = vmul.bf16 %v2101, %v2911
    %v3018 = vmul.bf16 %v2102, %v2922
    %v3019 = vmul.bf16 %v2103, %v2933
    %v3020 = vmul.bf16 %v2104, %v2944
    %v3021 = vmul.bf16 %v2105, %v2955
    %v3022 = vmul.bf16 %v2106, %v2966
    %v3023 = vmul.bf16 %v2107, %v2977
    %v3024 = vmul.bf16 %v2108, %v2988
    %v3025 = vmul.bf16 %v2109, %v2999
    %v3026 = vmul.bf16 %v2465, %v3010
    %v3027 = vld [vmem:[#allocation2 + $0xc] sm:$0xf]
    %v3028 = vld [vmem:[#allocation2 + $0x10] sm:$0xf]
    %v3029 = vld [vmem:[#allocation2 + $0x14] sm:$0xf]
    %v3030 = vld [vmem:[#allocation2 + $0x18] sm:$0xf]
    %v3031 = vld [vmem:[#allocation2 + $0x1c] sm:$0xf]
    %v3032 = vld [vmem:[#allocation2 + $0x20] sm:$0xf]
    %v3033 = vld [vmem:[#allocation2 + $0x24] sm:$0xf]
    %v3034 = vld [vmem:[#allocation2 + $0x28] sm:$0xf]
    %v3035 = vld [vmem:[#allocation2 + $0x2c] sm:$0xf]
    %v3036 = vld [vmem:[#allocation2 + $0x30] sm:$0xf]
    %v3037 = vld [vmem:[#allocation2 + $0x34] sm:$0xf]
    %v3038 = vld [vmem:[#allocation2 + $0x38] sm:$0xf]
    %v3039 = vld [vmem:[#allocation2 + $0x3c] sm:$0xf]
    %v3040 = vld [vmem:[#allocation2 + $0x40] sm:$0xf]
    %v3041 = vld [vmem:[#allocation2 + $0x44] sm:$0xf]
    %v3042 = vld [vmem:[#allocation2 + $0x48] sm:$0xf]
    %v3043 = vld [vmem:[#allocation2 + $0x4c] sm:$0x1]
    %3044 = vset.pattern.permute.xlu0 8
    %3045 = vperm.xlu0 %3044, %v101
    %v3046 = vpop.permute.xlu0 %3045
    %v3049 = vunpack.c.l.s4 839922192
    %v3050 = vunpack.c.0.s8 %v3049
    %v3051 = vlaneseq
    %v3052 = vshrl.u32 %v3051, 7
    %v3053 = vsub.s32 %v3050, %v3052
    %v3054 = vrot.slane %v3046, %v3053
    %3055 = vset.pattern.permute.xlu0 8
    %3056 = vperm.xlu0 %3055, %v102
    %v3057 = vpop.permute.xlu0 %3056
    %v3060 = vunpack.c.l.s4 839922192
    %v3061 = vunpack.c.0.s8 %v3060
    %v3062 = vlaneseq
    %v3063 = vshrl.u32 %v3062, 7
    %v3064 = vsub.s32 %v3061, %v3063
    %v3065 = vrot.slane %v3057, %v3064
    %3066 = vset.pattern.permute.xlu0 8
    %3067 = vperm.xlu0 %3066, %v103
    %v3068 = vpop.permute.xlu0 %3067
    %v3071 = vunpack.c.l.s4 839922192
    %v3072 = vunpack.c.0.s8 %v3071
    %v3073 = vlaneseq
    %v3074 = vshrl.u32 %v3073, 7
    %v3075 = vsub.s32 %v3072, %v3074
    %v3076 = vrot.slane %v3068, %v3075
    %3077 = vset.pattern.permute.xlu0 8
    %3078 = vperm.xlu0 %3077, %v104
    %v3079 = vpop.permute.xlu0 %3078
    %v3082 = vunpack.c.l.s4 839922192
    %v3083 = vunpack.c.0.s8 %v3082
    %v3084 = vlaneseq
    %v3085 = vshrl.u32 %v3084, 7
    %v3086 = vsub.s32 %v3083, %v3085
    %v3087 = vrot.slane %v3079, %v3086
    %3088 = vset.pattern.permute.xlu0 8
    %3089 = vperm.xlu0 %3088, %v105
    %v3090 = vpop.permute.xlu0 %3089
    %v3093 = vunpack.c.l.s4 839922192
    %v3094 = vunpack.c.0.s8 %v3093
    %v3095 = vlaneseq
    %v3096 = vshrl.u32 %v3095, 7
    %v3097 = vsub.s32 %v3094, %v3096
    %v3098 = vrot.slane %v3090, %v3097
    %3099 = vset.pattern.permute.xlu0 8
    %3100 = vperm.xlu0 %3099, %v106
    %v3101 = vpop.permute.xlu0 %3100
    %v3104 = vunpack.c.l.s4 839922192
    %v3105 = vunpack.c.0.s8 %v3104
    %v3106 = vlaneseq
    %v3107 = vshrl.u32 %v3106, 7
    %v3108 = vsub.s32 %v3105, %v3107
    %v3109 = vrot.slane %v3101, %v3108
    %3110 = vset.pattern.permute.xlu0 8
    %3111 = vperm.xlu0 %3110, %v107
    %v3112 = vpop.permute.xlu0 %3111
    %v3115 = vunpack.c.l.s4 839922192
    %v3116 = vunpack.c.0.s8 %v3115
    %v3117 = vlaneseq
    %v3118 = vshrl.u32 %v3117, 7
    %v3119 = vsub.s32 %v3116, %v3118
    %v3120 = vrot.slane %v3112, %v3119
    %3121 = vset.pattern.permute.xlu0 8
    %3122 = vperm.xlu0 %3121, %v108
    %v3123 = vpop.permute.xlu0 %3122
    %v3126 = vunpack.c.l.s4 839922192
    %v3127 = vunpack.c.0.s8 %v3126
    %v3128 = vlaneseq
    %v3129 = vshrl.u32 %v3128, 7
    %v3130 = vsub.s32 %v3127, %v3129
    %v3131 = vrot.slane %v3123, %v3130
    %3132 = vset.pattern.permute.xlu0 8
    %3133 = vperm.xlu0 %3132, %v109
    %v3134 = vpop.permute.xlu0 %3133
    %v3137 = vunpack.c.l.s4 839922192
    %v3138 = vunpack.c.0.s8 %v3137
    %v3139 = vlaneseq
    %v3140 = vshrl.u32 %v3139, 7
    %v3141 = vsub.s32 %v3138, %v3140
    %v3142 = vrot.slane %v3134, %v3141
    %3143 = vset.pattern.permute.xlu0 8
    %3144 = vperm.xlu0 %3143, %v110
    %v3145 = vpop.permute.xlu0 %3144
    %v3148 = vunpack.c.l.s4 839922192
    %v3149 = vunpack.c.0.s8 %v3148
    %v3150 = vlaneseq
    %v3151 = vshrl.u32 %v3150, 7
    %v3152 = vsub.s32 %v3149, %v3151
    %v3153 = vrot.slane %v3145, %v3152
    %3154 = vset.pattern.permute.xlu0 8
    %3155 = vperm.xlu0 %3154, %v111
    %v3156 = vpop.permute.xlu0 %3155
    %v3159 = vunpack.c.l.s4 839922192
    %v3160 = vunpack.c.0.s8 %v3159
    %v3161 = vlaneseq
    %v3162 = vshrl.u32 %v3161, 7
    %v3163 = vsub.s32 %v3160, %v3162
    %v3164 = vrot.slane %v3156, %v3163
    %3165 = vset.pattern.permute.xlu0 8
    %3166 = vperm.xlu0 %3165, %v112
    %v3167 = vpop.permute.xlu0 %3166
    %v3170 = vunpack.c.l.s4 839922192
    %v3171 = vunpack.c.0.s8 %v3170
    %v3172 = vlaneseq
    %v3173 = vshrl.u32 %v3172, 7
    %v3174 = vsub.s32 %v3171, %v3173
    %v3175 = vrot.slane %v3167, %v3174
    %3176 = vset.pattern.permute.xlu0 8
    %3177 = vperm.xlu0 %3176, %v113
    %v3178 = vpop.permute.xlu0 %3177
    %v3181 = vunpack.c.l.s4 839922192
    %v3182 = vunpack.c.0.s8 %v3181
    %v3183 = vlaneseq
    %v3184 = vshrl.u32 %v3183, 7
    %v3185 = vsub.s32 %v3182, %v3184
    %v3186 = vrot.slane %v3178, %v3185
    %3187 = vset.pattern.permute.xlu0 8
    %3188 = vperm.xlu0 %3187, %v114
    %v3189 = vpop.permute.xlu0 %3188
    %v3192 = vunpack.c.l.s4 839922192
    %v3193 = vunpack.c.0.s8 %v3192
    %v3194 = vlaneseq
    %v3195 = vshrl.u32 %v3194, 7
    %v3196 = vsub.s32 %v3193, %v3195
    %v3197 = vrot.slane %v3189, %v3196
    %3198 = vset.pattern.permute.xlu0 8
    %3199 = vperm.xlu0 %3198, %v115
    %v3200 = vpop.permute.xlu0 %3199
    %v3203 = vunpack.c.l.s4 839922192
    %v3204 = vunpack.c.0.s8 %v3203
    %v3205 = vlaneseq
    %v3206 = vshrl.u32 %v3205, 7
    %v3207 = vsub.s32 %v3204, %v3206
    %v3208 = vrot.slane %v3200, %v3207
    %3209 = vset.pattern.permute.xlu0 8
    %3210 = vperm.xlu0 %3209, %v116
    %v3211 = vpop.permute.xlu0 %3210
    %v3214 = vunpack.c.l.s4 839922192
    %v3215 = vunpack.c.0.s8 %v3214
    %v3216 = vlaneseq
    %v3217 = vshrl.u32 %v3216, 7
    %v3218 = vsub.s32 %v3215, %v3217
    %v3219 = vrot.slane %v3211, %v3218
    %v3221 = vshrl.u32 %v3054, 16
    %v3223 = vrot.slane %v3221, 7
    %v3224 = vshll.u32 %v3054, 16
    %v3226 = vor.u32 %v3223, %v3224
    %v3227 = vrot.slane %v3223, 4
    %v3229 = vshrl.u32 %v3065, 16
    %v3231 = vrot.slane %v3229, 7
    %v3232 = vshll.u32 %v3065, 16
    %v3234 = vor.u32 %v3231, %v3232
    %v3235 = vsel %vm1545, %v3227, %v3234
    %v3236 = vrot.slane %v3231, 4
    %v3238 = vshrl.u32 %v3076, 16
    %v3240 = vrot.slane %v3238, 7
    %v3241 = vshll.u32 %v3076, 16
    %v3243 = vor.u32 %v3240, %v3241
    %v3244 = vsel %vm1545, %v3236, %v3243
    %v3245 = vrot.slane %v3240, 4
    %v3247 = vshrl.u32 %v3087, 16
    %v3249 = vrot.slane %v3247, 7
    %v3250 = vshll.u32 %v3087, 16
    %v3252 = vor.u32 %v3249, %v3250
    %v3253 = vsel %vm1545, %v3245, %v3252
    %v3254 = vrot.slane %v3249, 4
    %v3256 = vshrl.u32 %v3098, 16
    %v3258 = vrot.slane %v3256, 7
    %v3259 = vshll.u32 %v3098, 16
    %v3261 = vor.u32 %v3258, %v3259
    %v3262 = vsel %vm1545, %v3254, %v3261
    %v3263 = vrot.slane %v3258, 4
    %v3265 = vshrl.u32 %v3109, 16
    %v3267 = vrot.slane %v3265, 7
    %v3268 = vshll.u32 %v3109, 16
    %v3270 = vor.u32 %v3267, %v3268
    %v3271 = vsel %vm1545, %v3263, %v3270
    %v3272 = vrot.slane %v3267, 4
    %v3274 = vshrl.u32 %v3120, 16
    %v3276 = vrot.slane %v3274, 7
    %v3277 = vshll.u32 %v3120, 16
    %v3279 = vor.u32 %v3276, %v3277
    %v3280 = vsel %vm1545, %v3272, %v3279
    %v3281 = vrot.slane %v3276, 4
    %v3283 = vshrl.u32 %v3131, 16
    %v3285 = vrot.slane %v3283, 7
    %v3286 = vshll.u32 %v3131, 16
    %v3288 = vor.u32 %v3285, %v3286
    %v3289 = vsel %vm1545, %v3281, %v3288
    %v3290 = vrot.slane %v3285, 4
    %v3292 = vshrl.u32 %v3142, 16
    %v3294 = vrot.slane %v3292, 7
    %v3295 = vshll.u32 %v3142, 16
    %v3297 = vor.u32 %v3294, %v3295
    %v3298 = vsel %vm1545, %v3290, %v3297
    %v3299 = vrot.slane %v3294, 4
    %v3301 = vshrl.u32 %v3153, 16
    %v3303 = vrot.slane %v3301, 7
    %v3304 = vshll.u32 %v3153, 16
    %v3306 = vor.u32 %v3303, %v3304
    %v3307 = vsel %vm1545, %v3299, %v3306
    %v3308 = vrot.slane %v3303, 4
    %v3310 = vshrl.u32 %v3164, 16
    %v3312 = vrot.slane %v3310, 7
    %v3313 = vshll.u32 %v3164, 16
    %v3315 = vor.u32 %v3312, %v3313
    %v3316 = vsel %vm1545, %v3308, %v3315
    %v3317 = vrot.slane %v3312, 4
    %v3319 = vshrl.u32 %v3175, 16
    %v3321 = vrot.slane %v3319, 7
    %v3322 = vshll.u32 %v3175, 16
    %v3324 = vor.u32 %v3321, %v3322
    %v3325 = vsel %vm1545, %v3317, %v3324
    %v3326 = vrot.slane %v3321, 4
    %v3328 = vshrl.u32 %v3186, 16
    %v3330 = vrot.slane %v3328, 7
    %v3331 = vshll.u32 %v3186, 16
    %v3333 = vor.u32 %v3330, %v3331
    %v3334 = vsel %vm1545, %v3326, %v3333
    %v3335 = vrot.slane %v3330, 4
    %v3337 = vshrl.u32 %v3197, 16
    %v3339 = vrot.slane %v3337, 7
    %v3340 = vshll.u32 %v3197, 16
    %v3342 = vor.u32 %v3339, %v3340
    %v3343 = vsel %vm1545, %v3335, %v3342
    %v3344 = vrot.slane %v3339, 4
    %v3346 = vshrl.u32 %v3208, 16
    %v3348 = vrot.slane %v3346, 7
    %v3349 = vshll.u32 %v3208, 16
    %v3351 = vor.u32 %v3348, %v3349
    %v3352 = vsel %vm1545, %v3344, %v3351
    %v3353 = vrot.slane %v3348, 4
    %v3355 = vshrl.u32 %v3219, 16
    %v3357 = vrot.slane %v3355, 7
    %v3358 = vshll.u32 %v3219, 16
    %v3360 = vor.u32 %v3357, %v3358
    %v3361 = vsel %vm1545, %v3353, %v3360
    %v3362 = vrot.slane %v3357, 4
    %v3380 = vmul.bf16 %v3027, %v3226
    %v3381 = vmul.bf16 %v3028, %v3235
    %v3382 = vmul.bf16 %v3029, %v3244
    %v3383 = vmul.bf16 %v3030, %v3253
    %v3384 = vmul.bf16 %v3031, %v3262
    %v3385 = vmul.bf16 %v3032, %v3271
    %v3386 = vmul.bf16 %v3033, %v3280
    %v3387 = vmul.bf16 %v3034, %v3289
    %v3388 = vmul.bf16 %v3035, %v3298
    %v3389 = vmul.bf16 %v3036, %v3307
    %v3390 = vmul.bf16 %v3037, %v3316
    %v3391 = vmul.bf16 %v3038, %v3325
    %v3392 = vmul.bf16 %v3039, %v3334
    %v3393 = vmul.bf16 %v3040, %v3343
    %v3394 = vmul.bf16 %v3041, %v3352
    %v3395 = vmul.bf16 %v3042, %v3361
    %v3396 = vmul.bf16 %v3043, %v3362
    %v3414 = vunpack.c.l.b16 %v1141
    %v3415 = vunpack.c.l.b16 %v1142
    %v3416 = vunpack.c.l.b16 %v1143
    %v3417 = vunpack.c.l.b16 %v1144
    %v3418 = vunpack.c.l.b16 %v1145
    %v3419 = vunpack.c.l.b16 %v1146
    %v3420 = vunpack.c.l.b16 %v1147
    %v3421 = vunpack.c.l.b16 %v1148
    %v3422 = vunpack.c.l.b16 %v1149
    %v3423 = vunpack.c.l.b16 %v1150
    %v3424 = vunpack.c.l.b16 %v1151
    %v3425 = vunpack.c.l.b16 %v1152
    %v3426 = vunpack.c.l.b16 %v1153
    %v3427 = vunpack.c.l.b16 %v1154
    %v3428 = vunpack.c.l.b16 %v1155
    %v3429 = vunpack.c.l.b16 %v1156
    %v3430 = vunpack.c.l.b16 %v1157
    %v3431 = vpack.c.b16 %v3415, %v3414
    %v3432 = vpack.c.b16 %v3417, %v3416
    %v3433 = vpack.c.b16 %v3419, %v3418
    %v3434 = vpack.c.b16 %v3421, %v3420
    %v3435 = vpack.c.b16 %v3423, %v3422
    %v3436 = vpack.c.b16 %v3425, %v3424
    %v3437 = vpack.c.b16 %v3427, %v3426
    %v3438 = vpack.c.b16 %v3429, %v3428
    %v3439 = vpack.c.b16 %v3430, %v3430
    %v3456 = vunpack.c.l.b16 %v1334
    %v3457 = vunpack.c.l.b16 %v1335
    %v3458 = vunpack.c.l.b16 %v1336
    %v3459 = vunpack.c.l.b16 %v1337
    %v3460 = vunpack.c.l.b16 %v1338
    %v3461 = vunpack.c.l.b16 %v1339
    %v3462 = vunpack.c.l.b16 %v1340
    %v3463 = vunpack.c.l.b16 %v1341
    %v3464 = vunpack.c.l.b16 %v1342
    %v3465 = vunpack.c.l.b16 %v1343
    %v3466 = vunpack.c.l.b16 %v1344
    %v3467 = vunpack.c.l.b16 %v1345
    %v3468 = vunpack.c.l.b16 %v1346
    %v3469 = vunpack.c.l.b16 %v1347
    %v3470 = vunpack.c.l.b16 %v1348
    %v3471 = vunpack.c.l.b16 %v1349
    %v3472 = vpack.c.b16 %v3457, %v3456
    %v3473 = vpack.c.b16 %v3459, %v3458
    %v3474 = vpack.c.b16 %v3461, %v3460
    %v3475 = vpack.c.b16 %v3463, %v3462
    %v3476 = vpack.c.b16 %v3465, %v3464
    %v3477 = vpack.c.b16 %v3467, %v3466
    %v3478 = vpack.c.b16 %v3469, %v3468
    %v3479 = vpack.c.b16 %v3471, %v3470
    %v3481 = vshrl.u32 %v3472, 16
    %v3483 = vrot.slane %v3481, 4
    %v3484 = vshll.u32 %v3472, 16
    %v3486 = vrot.slane %v3484, 5
    %v3487 = vor.u32 %v3483, %v3486
    %v3489 = vshrl.u32 %v3473, 16
    %v3491 = vrot.slane %v3489, 4
    %v3492 = vshll.u32 %v3473, 16
    %v3494 = vrot.slane %v3492, 5
    %v3495 = vor.u32 %v3491, %v3494
    %v3496 = vsel %vm962, %v3487, %v3495
    %v3498 = vshrl.u32 %v3474, 16
    %v3500 = vrot.slane %v3498, 4
    %v3501 = vshll.u32 %v3474, 16
    %v3503 = vrot.slane %v3501, 5
    %v3504 = vor.u32 %v3500, %v3503
    %v3505 = vsel %vm962, %v3495, %v3504
    %v3507 = vshrl.u32 %v3475, 16
    %v3509 = vrot.slane %v3507, 4
    %v3510 = vshll.u32 %v3475, 16
    %v3512 = vrot.slane %v3510, 5
    %v3513 = vor.u32 %v3509, %v3512
    %v3514 = vsel %vm962, %v3504, %v3513
    %v3516 = vshrl.u32 %v3476, 16
    %v3518 = vrot.slane %v3516, 4
    %v3519 = vshll.u32 %v3476, 16
    %v3521 = vrot.slane %v3519, 5
    %v3522 = vor.u32 %v3518, %v3521
    %v3523 = vsel %vm962, %v3513, %v3522
    %v3525 = vshrl.u32 %v3477, 16
    %v3527 = vrot.slane %v3525, 4
    %v3528 = vshll.u32 %v3477, 16
    %v3530 = vrot.slane %v3528, 5
    %v3531 = vor.u32 %v3527, %v3530
    %v3532 = vsel %vm962, %v3522, %v3531
    %v3534 = vshrl.u32 %v3478, 16
    %v3536 = vrot.slane %v3534, 4
    %v3537 = vshll.u32 %v3478, 16
    %v3539 = vrot.slane %v3537, 5
    %v3540 = vor.u32 %v3536, %v3539
    %v3541 = vsel %vm962, %v3531, %v3540
    %v3543 = vshrl.u32 %v3479, 16
    %v3545 = vrot.slane %v3543, 4
    %v3546 = vshll.u32 %v3479, 16
    %v3548 = vrot.slane %v3546, 5
    %v3549 = vor.u32 %v3545, %v3548
    %v3550 = vsel %vm962, %v3540, %v3549
    %v3568 = vunpack.c.l.b16 %v1706
    %v3569 = vunpack.c.l.b16 %v1707
    %v3570 = vunpack.c.l.b16 %v1708
    %v3571 = vunpack.c.l.b16 %v1709
    %v3572 = vunpack.c.l.b16 %v1710
    %v3573 = vunpack.c.l.b16 %v1711
    %v3574 = vunpack.c.l.b16 %v1712
    %v3575 = vunpack.c.l.b16 %v1713
    %v3576 = vunpack.c.l.b16 %v1714
    %v3577 = vunpack.c.l.b16 %v1715
    %v3578 = vunpack.c.l.b16 %v1716
    %v3579 = vunpack.c.l.b16 %v1717
    %v3580 = vunpack.c.l.b16 %v1718
    %v3581 = vunpack.c.l.b16 %v1719
    %v3582 = vunpack.c.l.b16 %v1720
    %v3583 = vunpack.c.l.b16 %v1721
    %v3584 = vunpack.c.l.b16 %v1722
    %v3585 = vpack.c.b16 %v3569, %v3568
    %v3586 = vpack.c.b16 %v3571, %v3570
    %v3587 = vpack.c.b16 %v3573, %v3572
    %v3588 = vpack.c.b16 %v3575, %v3574
    %v3589 = vpack.c.b16 %v3577, %v3576
    %v3590 = vpack.c.b16 %v3579, %v3578
    %v3591 = vpack.c.b16 %v3581, %v3580
    %v3592 = vpack.c.b16 %v3583, %v3582
    %v3593 = vpack.c.b16 %v3584, %v3584
    %vm3594 = vcmask 1042432
    %v3595 = vrot.slane %v3585, 5
    %v3596 = vrot.slane %v3586, 5
    %v3597 = vsel %vm3594, %v3595, %v3596
    %v3598 = vrot.slane %v3587, 5
    %v3599 = vsel %vm3594, %v3596, %v3598
    %v3600 = vrot.slane %v3588, 5
    %v3601 = vsel %vm3594, %v3598, %v3600
    %v3602 = vrot.slane %v3589, 5
    %v3603 = vsel %vm3594, %v3600, %v3602
    %v3604 = vrot.slane %v3590, 5
    %v3605 = vsel %vm3594, %v3602, %v3604
    %v3606 = vrot.slane %v3591, 5
    %v3607 = vsel %vm3594, %v3604, %v3606
    %v3608 = vrot.slane %v3592, 5
    %v3609 = vsel %vm3594, %v3606, %v3608
    %v3610 = vrot.slane %v3593, 5
    %v3611 = vsel %vm3594, %v3608, %v3610
    %v3629 = vunpack.c.l.b16 %v2077
    %v3630 = vunpack.c.l.b16 %v2078
    %v3631 = vunpack.c.l.b16 %v2079
    %v3632 = vunpack.c.l.b16 %v2080
    %v3633 = vunpack.c.l.b16 %v2081
    %v3634 = vunpack.c.l.b16 %v2082
    %v3635 = vunpack.c.l.b16 %v2083
    %v3636 = vunpack.c.l.b16 %v2084
    %v3637 = vunpack.c.l.b16 %v2085
    %v3638 = vunpack.c.l.b16 %v2086
    %v3639 = vunpack.c.l.b16 %v2087
    %v3640 = vunpack.c.l.b16 %v2088
    %v3641 = vunpack.c.l.b16 %v2089
    %v3642 = vunpack.c.l.b16 %v2090
    %v3643 = vunpack.c.l.b16 %v2091
    %v3644 = vunpack.c.l.b16 %v2092
    %v3645 = vunpack.c.l.b16 %v2093
    %v3646 = vpack.c.b16 %v3630, %v3629
    %v3647 = vpack.c.b16 %v3632, %v3631
    %v3648 = vpack.c.b16 %v3634, %v3633
    %v3649 = vpack.c.b16 %v3636, %v3635
    %v3650 = vpack.c.b16 %v3638, %v3637
    %v3651 = vpack.c.b16 %v3640, %v3639
    %v3652 = vpack.c.b16 %v3642, %v3641
    %v3653 = vpack.c.b16 %v3644, %v3643
    %v3654 = vpack.c.b16 %v3645, %v3645
    %v3671 = vunpack.c.l.b16 %v1351
    %v3672 = vunpack.c.l.b16 %v1352
    %v3673 = vunpack.c.l.b16 %v1353
    %v3674 = vunpack.c.l.b16 %v1354
    %v3675 = vunpack.c.l.b16 %v1355
    %v3676 = vunpack.c.l.b16 %v1356
    %v3677 = vunpack.c.l.b16 %v1357
    %v3678 = vunpack.c.l.b16 %v1358
    %v3679 = vunpack.c.l.b16 %v1359
    %v3680 = vunpack.c.l.b16 %v1360
    %v3681 = vunpack.c.l.b16 %v1361
    %v3682 = vunpack.c.l.b16 %v1362
    %v3683 = vunpack.c.l.b16 %v1363
    %v3684 = vunpack.c.l.b16 %v1364
    %v3685 = vunpack.c.l.b16 %v1365
    %v3686 = vunpack.c.l.b16 %v1724
    %v3687 = vpack.c.b16 %v3672, %v3671
    %v3688 = vpack.c.b16 %v3674, %v3673
    %v3689 = vpack.c.b16 %v3676, %v3675
    %v3690 = vpack.c.b16 %v3678, %v3677
    %v3691 = vpack.c.b16 %v3680, %v3679
    %v3692 = vpack.c.b16 %v3682, %v3681
    %v3693 = vpack.c.b16 %v3684, %v3683
    %v3694 = vpack.c.b16 %v3686, %v3685
    %v3696 = vshrl.u32 %v3687, 16
    %v3698 = vrot.slane %v3696, 4
    %v3699 = vshll.u32 %v3687, 16
    %v3701 = vrot.slane %v3699, 5
    %v3702 = vor.u32 %v3698, %v3701
    %v3704 = vshrl.u32 %v3688, 16
    %v3706 = vrot.slane %v3704, 4
    %v3707 = vshll.u32 %v3688, 16
    %v3709 = vrot.slane %v3707, 5
    %v3710 = vor.u32 %v3706, %v3709
    %v3711 = vsel %vm962, %v3702, %v3710
    %v3713 = vshrl.u32 %v3689, 16
    %v3715 = vrot.slane %v3713, 4
    %v3716 = vshll.u32 %v3689, 16
    %v3718 = vrot.slane %v3716, 5
    %v3719 = vor.u32 %v3715, %v3718
    %v3720 = vsel %vm962, %v3710, %v3719
    %v3722 = vshrl.u32 %v3690, 16
    %v3724 = vrot.slane %v3722, 4
    %v3725 = vshll.u32 %v3690, 16
    %v3727 = vrot.slane %v3725, 5
    %v3728 = vor.u32 %v3724, %v3727
    %v3729 = vsel %vm962, %v3719, %v3728
    %v3731 = vshrl.u32 %v3691, 16
    %v3733 = vrot.slane %v3731, 4
    %v3734 = vshll.u32 %v3691, 16
    %v3736 = vrot.slane %v3734, 5
    %v3737 = vor.u32 %v3733, %v3736
    %v3738 = vsel %vm962, %v3728, %v3737
    %v3740 = vshrl.u32 %v3692, 16
    %v3742 = vrot.slane %v3740, 4
    %v3743 = vshll.u32 %v3692, 16
    %v3745 = vrot.slane %v3743, 5
    %v3746 = vor.u32 %v3742, %v3745
    %v3747 = vsel %vm962, %v3737, %v3746
    %v3749 = vshrl.u32 %v3693, 16
    %v3751 = vrot.slane %v3749, 4
    %v3752 = vshll.u32 %v3693, 16
    %v3754 = vrot.slane %v3752, 5
    %v3755 = vor.u32 %v3751, %v3754
    %v3756 = vsel %vm962, %v3746, %v3755
    %v3758 = vshrl.u32 %v3694, 16
    %v3760 = vrot.slane %v3758, 4
    %v3761 = vshll.u32 %v3694, 16
    %v3763 = vrot.slane %v3761, 5
    %v3764 = vor.u32 %v3760, %v3763
    %v3765 = vsel %vm962, %v3755, %v3764
    %v3783 = vunpack.c.l.b16 %v2447
    %v3784 = vunpack.c.l.b16 %v2448
    %v3785 = vunpack.c.l.b16 %v2449
    %v3786 = vunpack.c.l.b16 %v2450
    %v3787 = vunpack.c.l.b16 %v2451
    %v3788 = vunpack.c.l.b16 %v2452
    %v3789 = vunpack.c.l.b16 %v2453
    %v3790 = vunpack.c.l.b16 %v2454
    %v3791 = vunpack.c.l.b16 %v2455
    %v3792 = vunpack.c.l.b16 %v2456
    %v3793 = vunpack.c.l.b16 %v2457
    %v3794 = vunpack.c.l.b16 %v2458
    %v3795 = vunpack.c.l.b16 %v2459
    %v3796 = vunpack.c.l.b16 %v2460
    %v3797 = vunpack.c.l.b16 %v2461
    %v3798 = vunpack.c.l.b16 %v2462
    %v3799 = vunpack.c.l.b16 %v2463
    %v3800 = vpack.c.b16 %v3784, %v3783
    %v3801 = vpack.c.b16 %v3786, %v3785
    %v3802 = vpack.c.b16 %v3788, %v3787
    %v3803 = vpack.c.b16 %v3790, %v3789
    %v3804 = vpack.c.b16 %v3792, %v3791
    %v3805 = vpack.c.b16 %v3794, %v3793
    %v3806 = vpack.c.b16 %v3796, %v3795
    %v3807 = vpack.c.b16 %v3798, %v3797
    %v3808 = vpack.c.b16 %v3799, %v3799
    %v3809 = vrot.slane %v3800, 5
    %v3810 = vrot.slane %v3801, 5
    %v3811 = vsel %vm3594, %v3809, %v3810
    %v3812 = vrot.slane %v3802, 5
    %v3813 = vsel %vm3594, %v3810, %v3812
    %v3814 = vrot.slane %v3803, 5
    %v3815 = vsel %vm3594, %v3812, %v3814
    %v3816 = vrot.slane %v3804, 5
    %v3817 = vsel %vm3594, %v3814, %v3816
    %v3818 = vrot.slane %v3805, 5
    %v3819 = vsel %vm3594, %v3816, %v3818
    %v3820 = vrot.slane %v3806, 5
    %v3821 = vsel %vm3594, %v3818, %v3820
    %v3822 = vrot.slane %v3807, 5
    %v3823 = vsel %vm3594, %v3820, %v3822
    %v3824 = vrot.slane %v3808, 5
    %v3825 = vsel %vm3594, %v3822, %v3824
    %v3843 = vunpack.c.l.b16 %v2818
    %v3844 = vunpack.c.l.b16 %v2819
    %v3845 = vunpack.c.l.b16 %v2820
    %v3846 = vunpack.c.l.b16 %v2821
    %v3847 = vunpack.c.l.b16 %v2822
    %v3848 = vunpack.c.l.b16 %v2823
    %v3849 = vunpack.c.l.b16 %v2824
    %v3850 = vunpack.c.l.b16 %v2825
    %v3851 = vunpack.c.l.b16 %v2826
    %v3852 = vunpack.c.l.b16 %v2827
    %v3853 = vunpack.c.l.b16 %v2828
    %v3854 = vunpack.c.l.b16 %v2829
    %v3855 = vunpack.c.l.b16 %v2830
    %v3856 = vunpack.c.l.b16 %v2831
    %v3857 = vunpack.c.l.b16 %v2832
    %v3858 = vunpack.c.l.b16 %v2833
    %v3859 = vunpack.c.l.b16 %v2834
    %v3860 = vpack.c.b16 %v3844, %v3843
    %v3861 = vpack.c.b16 %v3846, %v3845
    %v3862 = vpack.c.b16 %v3848, %v3847
    %v3863 = vpack.c.b16 %v3850, %v3849
    %v3864 = vpack.c.b16 %v3852, %v3851
    %v3865 = vpack.c.b16 %v3854, %v3853
    %v3866 = vpack.c.b16 %v3856, %v3855
    %v3867 = vpack.c.b16 %v3858, %v3857
    %v3868 = vpack.c.b16 %v3859, %v3859
    %v3885 = vunpack.c.l.b16 %v3011
    %v3886 = vunpack.c.l.b16 %v3012
    %v3887 = vunpack.c.l.b16 %v3013
    %v3888 = vunpack.c.l.b16 %v3014
    %v3889 = vunpack.c.l.b16 %v3015
    %v3890 = vunpack.c.l.b16 %v3016
    %v3891 = vunpack.c.l.b16 %v3017
    %v3892 = vunpack.c.l.b16 %v3018
    %v3893 = vunpack.c.l.b16 %v3019
    %v3894 = vunpack.c.l.b16 %v3020
    %v3895 = vunpack.c.l.b16 %v3021
    %v3896 = vunpack.c.l.b16 %v3022
    %v3897 = vunpack.c.l.b16 %v3023
    %v3898 = vunpack.c.l.b16 %v3024
    %v3899 = vunpack.c.l.b16 %v3025
    %v3900 = vunpack.c.l.b16 %v3026
    %v3901 = vpack.c.b16 %v3886, %v3885
    %v3902 = vpack.c.b16 %v3888, %v3887
    %v3903 = vpack.c.b16 %v3890, %v3889
    %v3904 = vpack.c.b16 %v3892, %v3891
    %v3905 = vpack.c.b16 %v3894, %v3893
    %v3906 = vpack.c.b16 %v3896, %v3895
    %v3907 = vpack.c.b16 %v3898, %v3897
    %v3908 = vpack.c.b16 %v3900, %v3899
    %v3910 = vshrl.u32 %v3901, 16
    %v3912 = vrot.slane %v3910, 4
    %v3913 = vshll.u32 %v3901, 16
    %v3915 = vrot.slane %v3913, 5
    %v3916 = vor.u32 %v3912, %v3915
    %v3918 = vshrl.u32 %v3902, 16
    %v3920 = vrot.slane %v3918, 4
    %v3921 = vshll.u32 %v3902, 16
    %v3923 = vrot.slane %v3921, 5
    %v3924 = vor.u32 %v3920, %v3923
    %v3925 = vsel %vm962, %v3916, %v3924
    %v3927 = vshrl.u32 %v3903, 16
    %v3929 = vrot.slane %v3927, 4
    %v3930 = vshll.u32 %v3903, 16
    %v3932 = vrot.slane %v3930, 5
    %v3933 = vor.u32 %v3929, %v3932
    %v3934 = vsel %vm962, %v3924, %v3933
    %v3936 = vshrl.u32 %v3904, 16
    %v3938 = vrot.slane %v3936, 4
    %v3939 = vshll.u32 %v3904, 16
    %v3941 = vrot.slane %v3939, 5
    %v3942 = vor.u32 %v3938, %v3941
    %v3943 = vsel %vm962, %v3933, %v3942
    %v3945 = vshrl.u32 %v3905, 16
    %v3947 = vrot.slane %v3945, 4
    %v3948 = vshll.u32 %v3905, 16
    %v3950 = vrot.slane %v3948, 5
    %v3951 = vor.u32 %v3947, %v3950
    %v3952 = vsel %vm962, %v3942, %v3951
    %v3954 = vshrl.u32 %v3906, 16
    %v3956 = vrot.slane %v3954, 4
    %v3957 = vshll.u32 %v3906, 16
    %v3959 = vrot.slane %v3957, 5
    %v3960 = vor.u32 %v3956, %v3959
    %v3961 = vsel %vm962, %v3951, %v3960
    %v3963 = vshrl.u32 %v3907, 16
    %v3965 = vrot.slane %v3963, 4
    %v3966 = vshll.u32 %v3907, 16
    %v3968 = vrot.slane %v3966, 5
    %v3969 = vor.u32 %v3965, %v3968
    %v3970 = vsel %vm962, %v3960, %v3969
    %v3972 = vshrl.u32 %v3908, 16
    %v3974 = vrot.slane %v3972, 4
    %v3975 = vshll.u32 %v3908, 16
    %v3977 = vrot.slane %v3975, 5
    %v3978 = vor.u32 %v3974, %v3977
    %v3979 = vsel %vm962, %v3969, %v3978
    %v3997 = vunpack.c.l.b16 %v3380
    %v3998 = vunpack.c.l.b16 %v3381
    %v3999 = vunpack.c.l.b16 %v3382
    %v4000 = vunpack.c.l.b16 %v3383
    %v4001 = vunpack.c.l.b16 %v3384
    %v4002 = vunpack.c.l.b16 %v3385
    %v4003 = vunpack.c.l.b16 %v3386
    %v4004 = vunpack.c.l.b16 %v3387
    %v4005 = vunpack.c.l.b16 %v3388
    %v4006 = vunpack.c.l.b16 %v3389
    %v4007 = vunpack.c.l.b16 %v3390
    %v4008 = vunpack.c.l.b16 %v3391
    %v4009 = vunpack.c.l.b16 %v3392
    %v4010 = vunpack.c.l.b16 %v3393
    %v4011 = vunpack.c.l.b16 %v3394
    %v4012 = vunpack.c.l.b16 %v3395
    %v4013 = vunpack.c.l.b16 %v3396
    %v4014 = vpack.c.b16 %v3998, %v3997
    %v4015 = vpack.c.b16 %v4000, %v3999
    %v4016 = vpack.c.b16 %v4002, %v4001
    %v4017 = vpack.c.b16 %v4004, %v4003
    %v4018 = vpack.c.b16 %v4006, %v4005
    %v4019 = vpack.c.b16 %v4008, %v4007
    %v4020 = vpack.c.b16 %v4010, %v4009
    %v4021 = vpack.c.b16 %v4012, %v4011
    %v4022 = vpack.c.b16 %v4013, %v4013
    %v4023 = vrot.slane %v4014, 5
    %v4024 = vrot.slane %v4015, 5
    %v4025 = vsel %vm3594, %v4023, %v4024
    %v4026 = vrot.slane %v4016, 5
    %v4027 = vsel %vm3594, %v4024, %v4026
    %v4028 = vrot.slane %v4017, 5
    %v4029 = vsel %vm3594, %v4026, %v4028
    %v4030 = vrot.slane %v4018, 5
    %v4031 = vsel %vm3594, %v4028, %v4030
    %v4032 = vrot.slane %v4019, 5
    %v4033 = vsel %vm3594, %v4030, %v4032
    %v4034 = vrot.slane %v4020, 5
    %v4035 = vsel %vm3594, %v4032, %v4034
    %v4036 = vrot.slane %v4021, 5
    %v4037 = vsel %vm3594, %v4034, %v4036
    %v4038 = vrot.slane %v4022, 5
    %v4039 = vsel %vm3594, %v4036, %v4038
    %v4040 = vld [vmem:[#allocation4] sm:$0xf]
    %v4041 = vld [vmem:[#allocation4 + $0x4] sm:$0xf]
    %v4042 = vld [vmem:[#allocation4 + $0x8] sm:$0xf]
    %v4043 = vld [vmem:[#allocation4 + $0xc] sm:$0xf]
    %v4044 = vld [vmem:[#allocation4 + $0x10] sm:$0xf]
    %v4045 = vld [vmem:[#allocation4 + $0x14] sm:$0xf]
    %v4046 = vld [vmem:[#allocation4 + $0x18] sm:$0xf]
    %v4047 = vld [vmem:[#allocation4 + $0x1c] sm:$0xf]
    %v4048 = vld [vmem:[#allocation4 + $0x20] sm:$0xf]
    %v4049 = vld [vmem:[#allocation4 + $0x24] sm:$0xf]
    %v4050 = vld [vmem:[#allocation4 + $0x28] sm:$0xf]
    %v4051 = vld [vmem:[#allocation4 + $0x2c] sm:$0xf]
    %v4052 = vld [vmem:[#allocation4 + $0x30] sm:$0xf]
    %v4053 = vld [vmem:[#allocation4 + $0x34] sm:$0xf]
    %v4054 = vld [vmem:[#allocation4 + $0x38] sm:$0xf]
    %v4055 = vld [vmem:[#allocation4 + $0x3c] sm:$0xf]
    %v4056 = vld [vmem:[#allocation4 + $0x40] sm:$0xf]
    %v4057 = vld [vmem:[#allocation4 + $0x44] sm:$0xf]
    %v4058 = vld [vmem:[#allocation4 + $0x48] sm:$0xf]
    %v4059 = vld [vmem:[#allocation4 + $0x4c] sm:$0xf]
    %v4060 = vld [vmem:[#allocation4 + $0x50] sm:$0xf]
    %v4061 = vld [vmem:[#allocation4 + $0x54] sm:$0xf]
    %v4062 = vld [vmem:[#allocation4 + $0x58] sm:$0xf]
    %v4063 = vld [vmem:[#allocation4 + $0x5c] sm:$0xf]
    %v4064 = vld [vmem:[#allocation4 + $0x60] sm:$0xf]
    %v4065 = vld [vmem:[#allocation4 + $0x64] sm:$0xf]
    %v4066 = vld [vmem:[#allocation4 + $0x68] sm:$0xf]
    %v4067 = vld [vmem:[#allocation4 + $0x6c] sm:$0xf]
    %v4068 = vld [vmem:[#allocation4 + $0x70] sm:$0xf]
    %v4069 = vld [vmem:[#allocation4 + $0x74] sm:$0xf]
    %v4070 = vld [vmem:[#allocation4 + $0x78] sm:$0xf]
    %v4071 = vld [vmem:[#allocation4 + $0x7c] sm:$0xf]
    %v4072 = vld [vmem:[#allocation4 + $0x80] sm:$0xf]
    %v4073 = vld [vmem:[#allocation4 + $0x84] sm:$0xf]
    %v4074 = vld [vmem:[#allocation4 + $0x88] sm:$0xf]
    %v4075 = vld [vmem:[#allocation4 + $0x8c] sm:$0xf]
    %v4076 = vld [vmem:[#allocation4 + $0x90] sm:$0xf]
    %v4077 = vld [vmem:[#allocation4 + $0x94] sm:$0xf]
    %v4078 = vld [vmem:[#allocation4 + $0x98] sm:$0xf]
    %v4079 = vld [vmem:[#allocation4 + $0x9c] sm:$0xf]
    %v4080 = vld [vmem:[#allocation4 + $0xa0] sm:$0xf]
    %v4081 = vld [vmem:[#allocation4 + $0xa4] sm:$0xf]
    %v4082 = vld [vmem:[#allocation4 + $0xa8] sm:$0xf]
    %v4083 = vld [vmem:[#allocation4 + $0xac] sm:$0xf]
    %v4084 = vld [vmem:[#allocation4 + $0xb0] sm:$0xf]
    %v4085 = vld [vmem:[#allocation4 + $0xb4] sm:$0xf]
    %v4086 = vld [vmem:[#allocation4 + $0xb8] sm:$0xf]
    %v4087 = vld [vmem:[#allocation4 + $0xbc] sm:$0xf]
    %v4088 = vld [vmem:[#allocation4 + $0xc0] sm:$0xf]
    %v4089 = vld [vmem:[#allocation4 + $0xc4] sm:$0xf]
    %v4090 = vld [vmem:[#allocation4 + $0xc8] sm:$0xf]
    %v4091 = vld [vmem:[#allocation4 + $0xcc] sm:$0xf]
    %v4092 = vld [vmem:[#allocation4 + $0xd0] sm:$0xf]
    %v4093 = vld [vmem:[#allocation4 + $0xd4] sm:$0xf]
    %v4094 = vld [vmem:[#allocation4 + $0xd8] sm:$0xf]
    %v4095 = vld [vmem:[#allocation4 + $0xdc] sm:$0xf]
    %v4096 = vld [vmem:[#allocation4 + $0xe0] sm:$0xf]
    %v4097 = vld [vmem:[#allocation4 + $0xe4] sm:$0xf]
    %v4098 = vld [vmem:[#allocation4 + $0xe8] sm:$0xf]
    %v4099 = vld [vmem:[#allocation4 + $0xec] sm:$0xf]
    %v4100 = vld [vmem:[#allocation4 + $0xf0] sm:$0xf]
    %v4101 = vld [vmem:[#allocation4 + $0xf4] sm:$0xf]
    %v4102 = vld [vmem:[#allocation4 + $0xf8] sm:$0xf]
    %v4103 = vld [vmem:[#allocation4 + $0xfc] sm:$0xf]
    %v4104 = vld [vmem:[#allocation4 + $0x100] sm:$0xf]
    %v4105 = vld [vmem:[#allocation4 + $0x104] sm:$0xf]
    %v4106 = vld [vmem:[#allocation4 + $0x108] sm:$0xf]
    %v4107 = vld [vmem:[#allocation4 + $0x10c] sm:$0xf]
    %v4108 = vld [vmem:[#allocation4 + $0x110] sm:$0xf]
    %v4109 = vld [vmem:[#allocation4 + $0x114] sm:$0xf]
    %v4110 = vld [vmem:[#allocation4 + $0x118] sm:$0xf]
    %v4111 = vld [vmem:[#allocation4 + $0x11c] sm:$0xf]
    %v4112 = vld [vmem:[#allocation4 + $0x120] sm:$0xf]
    %v4113 = vld [vmem:[#allocation4 + $0x124] sm:$0xf]
    %v4114 = vld [vmem:[#allocation4 + $0x128] sm:$0xf]
    %v4115 = vld [vmem:[#allocation4 + $0x12c] sm:$0xf]
    %v4116 = vld [vmem:[#allocation4 + $0x130] sm:$0xf]
    %v4117 = vld [vmem:[#allocation4 + $0x134] sm:$0xf]
    %v4118 = vld [vmem:[#allocation4 + $0x138] sm:$0xf]
    %v4119 = vld [vmem:[#allocation4 + $0x13c] sm:$0xf]
    %v4120 = vld [vmem:[#allocation4 + $0x140] sm:$0xf]
    %v4121 = vld [vmem:[#allocation4 + $0x144] sm:$0xf]
    %v4122 = vld [vmem:[#allocation4 + $0x148] sm:$0xf]
    %v4123 = vld [vmem:[#allocation4 + $0x14c] sm:$0xf]
    %v4124 = vld [vmem:[#allocation4 + $0x150] sm:$0xf]
    %v4125 = vld [vmem:[#allocation4 + $0x154] sm:$0xf]
    %v4126 = vld [vmem:[#allocation4 + $0x158] sm:$0xf]
    %v4127 = vld [vmem:[#allocation4 + $0x15c] sm:$0xf]
    %v4128 = vld [vmem:[#allocation4 + $0x160] sm:$0xf]
    %v4129 = vld [vmem:[#allocation4 + $0x164] sm:$0xf]
    %v4130 = vld [vmem:[#allocation4 + $0x168] sm:$0xf]
    %v4131 = vld [vmem:[#allocation4 + $0x16c] sm:$0xf]
    %v4132 = vld [vmem:[#allocation4 + $0x170] sm:$0xf]
    %v4133 = vld [vmem:[#allocation4 + $0x174] sm:$0xf]
    %v4134 = vld [vmem:[#allocation4 + $0x178] sm:$0xf]
    %v4135 = vld [vmem:[#allocation4 + $0x17c] sm:$0xf]
    %v4136 = vld [vmem:[#allocation4 + $0x180] sm:$0xf]
    %v4137 = vld [vmem:[#allocation4 + $0x184] sm:$0xf]
    %v4138 = vld [vmem:[#allocation4 + $0x188] sm:$0xf]
    %v4139 = vld [vmem:[#allocation4 + $0x18c] sm:$0xf]
    %v4140 = vld [vmem:[#allocation4 + $0x190] sm:$0xf]
    %v4141 = vld [vmem:[#allocation4 + $0x194] sm:$0xf]
    %v4142 = vld [vmem:[#allocation4 + $0x198] sm:$0xf]
    %v4143 = vld [vmem:[#allocation4 + $0x19c] sm:$0xf]
    %v4144 = vld [vmem:[#allocation4 + $0x1a0] sm:$0xf]
    %v4145 = vld [vmem:[#allocation4 + $0x1a4] sm:$0xf]
    %v4146 = vld [vmem:[#allocation4 + $0x1a8] sm:$0xf]
    %v4147 = vld [vmem:[#allocation4 + $0x1ac] sm:$0xf]
    %v4148 = vld [vmem:[#allocation4 + $0x1b0] sm:$0xf]
    %v4149 = vld [vmem:[#allocation4 + $0x1b4] sm:$0xf]
    %v4150 = vld [vmem:[#allocation4 + $0x1b8] sm:$0xf]
    %v4151 = vld [vmem:[#allocation4 + $0x1bc] sm:$0xf]
    %v4152 = vld [vmem:[#allocation4 + $0x1c0] sm:$0xf]
    %v4153 = vld [vmem:[#allocation4 + $0x1c4] sm:$0xf]
    %v4154 = vld [vmem:[#allocation4 + $0x1c8] sm:$0xf]
    %v4155 = vld [vmem:[#allocation4 + $0x1cc] sm:$0xf]
    %v4156 = vld [vmem:[#allocation4 + $0x1d0] sm:$0xf]
    %v4157 = vld [vmem:[#allocation4 + $0x1d4] sm:$0xf]
    %v4158 = vld [vmem:[#allocation4 + $0x1d8] sm:$0xf]
    %v4159 = vld [vmem:[#allocation4 + $0x1dc] sm:$0xf]
    %v4160 = vld [vmem:[#allocation4 + $0x1e0] sm:$0xf]
    %v4161 = vld [vmem:[#allocation4 + $0x1e4] sm:$0xf]
    %v4162 = vld [vmem:[#allocation4 + $0x1e8] sm:$0xf]
    %v4163 = vld [vmem:[#allocation4 + $0x1ec] sm:$0xf]
    %v4164 = vld [vmem:[#allocation4 + $0x1f0] sm:$0xf]
    %v4165 = vld [vmem:[#allocation4 + $0x1f4] sm:$0xf]
    %v4166 = vld [vmem:[#allocation4 + $0x1f8] sm:$0xf]
    %v4167 = vld [vmem:[#allocation4 + $0x1fc] sm:$0xf]
    %v4168 = vld [vmem:[#allocation4 + $0x200] sm:$0xf]
    %v4169 = vld [vmem:[#allocation4 + $0x204] sm:$0xf]
    %v4170 = vld [vmem:[#allocation4 + $0x208] sm:$0xf]
    %v4171 = vld [vmem:[#allocation4 + $0x20c] sm:$0xf]
    %v4172 = vld [vmem:[#allocation4 + $0x210] sm:$0xf]
    %v4173 = vld [vmem:[#allocation4 + $0x214] sm:$0xf]
    %v4174 = vld [vmem:[#allocation4 + $0x218] sm:$0xf]
    %v4175 = vld [vmem:[#allocation4 + $0x21c] sm:$0xf]
    %v4176 = vld [vmem:[#allocation4 + $0x220] sm:$0xf]
    %v4177 = vld [vmem:[#allocation4 + $0x224] sm:$0xf]
    %v4178 = vld [vmem:[#allocation4 + $0x228] sm:$0xf]
    %v4179 = vld [vmem:[#allocation4 + $0x22c] sm:$0xf]
    %v4180 = vld [vmem:[#allocation4 + $0x230] sm:$0xf]
    %v4181 = vld [vmem:[#allocation4 + $0x234] sm:$0xf]
    %v4182 = vld [vmem:[#allocation4 + $0x238] sm:$0xf]
    %v4183 = vld [vmem:[#allocation4 + $0x23c] sm:$0xf]
    %v4184 = vld [vmem:[%s2] sm:$0x1]
    %v4186 = vlaneseq
    %v4187 = vshrl.u32 %v4186, 7
    %v4188 = vsub.s32 0, %v4187
    %v4189 = vrot.slane %v4184, %v4188
    %vm4191 = vsmask.f32 4352
    %v4193 = vshrl.u32 %v3431, 16
    %v4195 = vrot.slane %v4193, 3
    %v4196 = vshll.u32 %v3431, 16
    %v4198 = vrot.slane %v4196, 4
    %v4199 = vor.u32 %v4195, %v4198
    %v4201 = vshrl.u32 %v3432, 16
    %v4203 = vrot.slane %v4201, 3
    %v4204 = vshll.u32 %v3432, 16
    %v4206 = vrot.slane %v4204, 4
    %v4207 = vor.u32 %v4203, %v4206
    %v4208 = vsel %vm4191, %v4199, %v4207
    %v4210 = vshrl.u32 %v3487, 16
    %v4212 = vrot.slane %v4210, 3
    %v4213 = vshll.u32 %v3487, 16
    %v4215 = vrot.slane %v4213, 4
    %v4216 = vor.u32 %v4212, %v4215
    %v4218 = vshrl.u32 %v3496, 16
    %v4220 = vrot.slane %v4218, 3
    %v4221 = vshll.u32 %v3496, 16
    %v4223 = vrot.slane %v4221, 4
    %v4224 = vor.u32 %v4220, %v4223
    %v4225 = vsel %vm4191, %v4216, %v4224
    %v4227 = vshrl.u32 %v3595, 16
    %v4229 = vrot.slane %v4227, 3
    %v4230 = vshll.u32 %v3595, 16
    %v4232 = vrot.slane %v4230, 4
    %v4233 = vor.u32 %v4229, %v4232
    %v4235 = vshrl.u32 %v3597, 16
    %v4237 = vrot.slane %v4235, 3
    %v4238 = vshll.u32 %v3597, 16
    %v4240 = vrot.slane %v4238, 4
    %v4241 = vor.u32 %v4237, %v4240
    %v4242 = vsel %vm4191, %v4233, %v4241
    %v4244 = vshrl.u32 %v3646, 16
    %v4246 = vrot.slane %v4244, 3
    %v4247 = vshll.u32 %v3646, 16
    %v4249 = vrot.slane %v4247, 4
    %v4250 = vor.u32 %v4246, %v4249
    %v4252 = vshrl.u32 %v3647, 16
    %v4254 = vrot.slane %v4252, 3
    %v4255 = vshll.u32 %v3647, 16
    %v4257 = vrot.slane %v4255, 4
    %v4258 = vor.u32 %v4254, %v4257
    %v4259 = vsel %vm4191, %v4250, %v4258
    %v4261 = vshrl.u32 %v3702, 16
    %v4263 = vrot.slane %v4261, 3
    %v4264 = vshll.u32 %v3702, 16
    %v4266 = vrot.slane %v4264, 4
    %v4267 = vor.u32 %v4263, %v4266
    %v4269 = vshrl.u32 %v3711, 16
    %v4271 = vrot.slane %v4269, 3
    %v4272 = vshll.u32 %v3711, 16
    %v4274 = vrot.slane %v4272, 4
    %v4275 = vor.u32 %v4271, %v4274
    %v4276 = vsel %vm4191, %v4267, %v4275
    %v4278 = vshrl.u32 %v3809, 16
    %v4280 = vrot.slane %v4278, 3
    %v4281 = vshll.u32 %v3809, 16
    %v4283 = vrot.slane %v4281, 4
    %v4284 = vor.u32 %v4280, %v4283
    %v4286 = vshrl.u32 %v3811, 16
    %v4288 = vrot.slane %v4286, 3
    %v4289 = vshll.u32 %v3811, 16
    %v4291 = vrot.slane %v4289, 4
    %v4292 = vor.u32 %v4288, %v4291
    %v4293 = vsel %vm4191, %v4284, %v4292
    %v4295 = vshrl.u32 %v3860, 16
    %v4297 = vrot.slane %v4295, 3
    %v4298 = vshll.u32 %v3860, 16
    %v4300 = vrot.slane %v4298, 4
    %v4301 = vor.u32 %v4297, %v4300
    %v4303 = vshrl.u32 %v3861, 16
    %v4305 = vrot.slane %v4303, 3
    %v4306 = vshll.u32 %v3861, 16
    %v4308 = vrot.slane %v4306, 4
    %v4309 = vor.u32 %v4305, %v4308
    %v4310 = vsel %vm4191, %v4301, %v4309
    %v4312 = vshrl.u32 %v3916, 16
    %v4314 = vrot.slane %v4312, 3
    %v4315 = vshll.u32 %v3916, 16
    %v4317 = vrot.slane %v4315, 4
    %v4318 = vor.u32 %v4314, %v4317
    %v4320 = vshrl.u32 %v3925, 16
    %v4322 = vrot.slane %v4320, 3
    %v4323 = vshll.u32 %v3925, 16
    %v4325 = vrot.slane %v4323, 4
    %v4326 = vor.u32 %v4322, %v4325
    %v4327 = vsel %vm4191, %v4318, %v4326
    %v4329 = vshrl.u32 %v4023, 16
    %v4331 = vrot.slane %v4329, 3
    %v4332 = vshll.u32 %v4023, 16
    %v4334 = vrot.slane %v4332, 4
    %v4335 = vor.u32 %v4331, %v4334
    %v4337 = vshrl.u32 %v4025, 16
    %v4339 = vrot.slane %v4337, 3
    %v4340 = vshll.u32 %v4025, 16
    %v4342 = vrot.slane %v4340, 4
    %v4343 = vor.u32 %v4339, %v4342
    %v4344 = vsel %vm4191, %v4335, %v4343
    %v4346 = vshrl.u32 %v3433, 16
    %v4348 = vrot.slane %v4346, 3
    %v4349 = vshll.u32 %v3433, 16
    %v4351 = vrot.slane %v4349, 4
    %v4352 = vor.u32 %v4348, %v4351
    %v4353 = vsel %vm4191, %v4207, %v4352
    %v4355 = vshrl.u32 %v3505, 16
    %v4357 = vrot.slane %v4355, 3
    %v4358 = vshll.u32 %v3505, 16
    %v4360 = vrot.slane %v4358, 4
    %v4361 = vor.u32 %v4357, %v4360
    %v4362 = vsel %vm4191, %v4224, %v4361
    %v4364 = vshrl.u32 %v3599, 16
    %v4366 = vrot.slane %v4364, 3
    %v4367 = vshll.u32 %v3599, 16
    %v4369 = vrot.slane %v4367, 4
    %v4370 = vor.u32 %v4366, %v4369
    %v4371 = vsel %vm4191, %v4241, %v4370
    %v4373 = vshrl.u32 %v3648, 16
    %v4375 = vrot.slane %v4373, 3
    %v4376 = vshll.u32 %v3648, 16
    %v4378 = vrot.slane %v4376, 4
    %v4379 = vor.u32 %v4375, %v4378
    %v4380 = vsel %vm4191, %v4258, %v4379
    %v4382 = vshrl.u32 %v3720, 16
    %v4384 = vrot.slane %v4382, 3
    %v4385 = vshll.u32 %v3720, 16
    %v4387 = vrot.slane %v4385, 4
    %v4388 = vor.u32 %v4384, %v4387
    %v4389 = vsel %vm4191, %v4275, %v4388
    %v4391 = vshrl.u32 %v3813, 16
    %v4393 = vrot.slane %v4391, 3
    %v4394 = vshll.u32 %v3813, 16
    %v4396 = vrot.slane %v4394, 4
    %v4397 = vor.u32 %v4393, %v4396
    %v4398 = vsel %vm4191, %v4292, %v4397
    %v4400 = vshrl.u32 %v3862, 16
    %v4402 = vrot.slane %v4400, 3
    %v4403 = vshll.u32 %v3862, 16
    %v4405 = vrot.slane %v4403, 4
    %v4406 = vor.u32 %v4402, %v4405
    %v4407 = vsel %vm4191, %v4309, %v4406
    %v4409 = vshrl.u32 %v3934, 16
    %v4411 = vrot.slane %v4409, 3
    %v4412 = vshll.u32 %v3934, 16
    %v4414 = vrot.slane %v4412, 4
    %v4415 = vor.u32 %v4411, %v4414
    %v4416 = vsel %vm4191, %v4326, %v4415
    %v4418 = vshrl.u32 %v4027, 16
    %v4420 = vrot.slane %v4418, 3
    %v4421 = vshll.u32 %v4027, 16
    %v4423 = vrot.slane %v4421, 4
    %v4424 = vor.u32 %v4420, %v4423
    %v4425 = vsel %vm4191, %v4343, %v4424
    %v4427 = vshrl.u32 %v3434, 16
    %v4429 = vrot.slane %v4427, 3
    %v4430 = vshll.u32 %v3434, 16
    %v4432 = vrot.slane %v4430, 4
    %v4433 = vor.u32 %v4429, %v4432
    %v4434 = vsel %vm4191, %v4352, %v4433
    %v4436 = vshrl.u32 %v3514, 16
    %v4438 = vrot.slane %v4436, 3
    %v4439 = vshll.u32 %v3514, 16
    %v4441 = vrot.slane %v4439, 4
    %v4442 = vor.u32 %v4438, %v4441
    %v4443 = vsel %vm4191, %v4361, %v4442
    %v4445 = vshrl.u32 %v3601, 16
    %v4447 = vrot.slane %v4445, 3
    %v4448 = vshll.u32 %v3601, 16
    %v4450 = vrot.slane %v4448, 4
    %v4451 = vor.u32 %v4447, %v4450
    %v4452 = vsel %vm4191, %v4370, %v4451
    %v4454 = vshrl.u32 %v3649, 16
    %v4456 = vrot.slane %v4454, 3
    %v4457 = vshll.u32 %v3649, 16
    %v4459 = vrot.slane %v4457, 4
    %v4460 = vor.u32 %v4456, %v4459
    %v4461 = vsel %vm4191, %v4379, %v4460
    %v4463 = vshrl.u32 %v3729, 16
    %v4465 = vrot.slane %v4463, 3
    %v4466 = vshll.u32 %v3729, 16
    %v4468 = vrot.slane %v4466, 4
    %v4469 = vor.u32 %v4465, %v4468
    %v4470 = vsel %vm4191, %v4388, %v4469
    %v4472 = vshrl.u32 %v3815, 16
    %v4474 = vrot.slane %v4472, 3
    %v4475 = vshll.u32 %v3815, 16
    %v4477 = vrot.slane %v4475, 4
    %v4478 = vor.u32 %v4474, %v4477
    %v4479 = vsel %vm4191, %v4397, %v4478
    %v4481 = vshrl.u32 %v3863, 16
    %v4483 = vrot.slane %v4481, 3
    %v4484 = vshll.u32 %v3863, 16
    %v4486 = vrot.slane %v4484, 4
    %v4487 = vor.u32 %v4483, %v4486
    %v4488 = vsel %vm4191, %v4406, %v4487
    %v4490 = vshrl.u32 %v3943, 16
    %v4492 = vrot.slane %v4490, 3
    %v4493 = vshll.u32 %v3943, 16
    %v4495 = vrot.slane %v4493, 4
    %v4496 = vor.u32 %v4492, %v4495
    %v4497 = vsel %vm4191, %v4415, %v4496
    %v4499 = vshrl.u32 %v4029, 16
    %v4501 = vrot.slane %v4499, 3
    %v4502 = vshll.u32 %v4029, 16
    %v4504 = vrot.slane %v4502, 4
    %v4505 = vor.u32 %v4501, %v4504
    %v4506 = vsel %vm4191, %v4424, %v4505
    %v4508 = vshrl.u32 %v3435, 16
    %v4510 = vrot.slane %v4508, 3
    %v4511 = vshll.u32 %v3435, 16
    %v4513 = vrot.slane %v4511, 4
    %v4514 = vor.u32 %v4510, %v4513
    %v4515 = vsel %vm4191, %v4433, %v4514
    %v4517 = vshrl.u32 %v3523, 16
    %v4519 = vrot.slane %v4517, 3
    %v4520 = vshll.u32 %v3523, 16
    %v4522 = vrot.slane %v4520, 4
    %v4523 = vor.u32 %v4519, %v4522
    %v4524 = vsel %vm4191, %v4442, %v4523
    %v4526 = vshrl.u32 %v3603, 16
    %v4528 = vrot.slane %v4526, 3
    %v4529 = vshll.u32 %v3603, 16
    %v4531 = vrot.slane %v4529, 4
    %v4532 = vor.u32 %v4528, %v4531
    %v4533 = vsel %vm4191, %v4451, %v4532
    %v4535 = vshrl.u32 %v3650, 16
    %v4537 = vrot.slane %v4535, 3
    %v4538 = vshll.u32 %v3650, 16
    %v4540 = vrot.slane %v4538, 4
    %v4541 = vor.u32 %v4537, %v4540
    %v4542 = vsel %vm4191, %v4460, %v4541
    %v4544 = vshrl.u32 %v3738, 16
    %v4546 = vrot.slane %v4544, 3
    %v4547 = vshll.u32 %v3738, 16
    %v4549 = vrot.slane %v4547, 4
    %v4550 = vor.u32 %v4546, %v4549
    %v4551 = vsel %vm4191, %v4469, %v4550
    %v4553 = vshrl.u32 %v3817, 16
    %v4555 = vrot.slane %v4553, 3
    %v4556 = vshll.u32 %v3817, 16
    %v4558 = vrot.slane %v4556, 4
    %v4559 = vor.u32 %v4555, %v4558
    %v4560 = vsel %vm4191, %v4478, %v4559
    %v4562 = vshrl.u32 %v3864, 16
    %v4564 = vrot.slane %v4562, 3
    %v4565 = vshll.u32 %v3864, 16
    %v4567 = vrot.slane %v4565, 4
    %v4568 = vor.u32 %v4564, %v4567
    %v4569 = vsel %vm4191, %v4487, %v4568
    %v4571 = vshrl.u32 %v3952, 16
    %v4573 = vrot.slane %v4571, 3
    %v4574 = vshll.u32 %v3952, 16
    %v4576 = vrot.slane %v4574, 4
    %v4577 = vor.u32 %v4573, %v4576
    %v4578 = vsel %vm4191, %v4496, %v4577
    %v4580 = vshrl.u32 %v4031, 16
    %v4582 = vrot.slane %v4580, 3
    %v4583 = vshll.u32 %v4031, 16
    %v4585 = vrot.slane %v4583, 4
    %v4586 = vor.u32 %v4582, %v4585
    %v4587 = vsel %vm4191, %v4505, %v4586
    %v4589 = vshrl.u32 %v3436, 16
    %v4591 = vrot.slane %v4589, 3
    %v4592 = vshll.u32 %v3436, 16
    %v4594 = vrot.slane %v4592, 4
    %v4595 = vor.u32 %v4591, %v4594
    %v4596 = vsel %vm4191, %v4514, %v4595
    %v4598 = vshrl.u32 %v3532, 16
    %v4600 = vrot.slane %v4598, 3
    %v4601 = vshll.u32 %v3532, 16
    %v4603 = vrot.slane %v4601, 4
    %v4604 = vor.u32 %v4600, %v4603
    %v4605 = vsel %vm4191, %v4523, %v4604
    %v4607 = vshrl.u32 %v3605, 16
    %v4609 = vrot.slane %v4607, 3
    %v4610 = vshll.u32 %v3605, 16
    %v4612 = vrot.slane %v4610, 4
    %v4613 = vor.u32 %v4609, %v4612
    %v4614 = vsel %vm4191, %v4532, %v4613
    %v4616 = vshrl.u32 %v3651, 16
    %v4618 = vrot.slane %v4616, 3
    %v4619 = vshll.u32 %v3651, 16
    %v4621 = vrot.slane %v4619, 4
    %v4622 = vor.u32 %v4618, %v4621
    %v4623 = vsel %vm4191, %v4541, %v4622
    %v4625 = vshrl.u32 %v3747, 16
    %v4627 = vrot.slane %v4625, 3
    %v4628 = vshll.u32 %v3747, 16
    %v4630 = vrot.slane %v4628, 4
    %v4631 = vor.u32 %v4627, %v4630
    %v4632 = vsel %vm4191, %v4550, %v4631
    %v4634 = vshrl.u32 %v3819, 16
    %v4636 = vrot.slane %v4634, 3
    %v4637 = vshll.u32 %v3819, 16
    %v4639 = vrot.slane %v4637, 4
    %v4640 = vor.u32 %v4636, %v4639
    %v4641 = vsel %vm4191, %v4559, %v4640
    %v4643 = vshrl.u32 %v3865, 16
    %v4645 = vrot.slane %v4643, 3
    %v4646 = vshll.u32 %v3865, 16
    %v4648 = vrot.slane %v4646, 4
    %v4649 = vor.u32 %v4645, %v4648
    %v4650 = vsel %vm4191, %v4568, %v4649
    %v4652 = vshrl.u32 %v3961, 16
    %v4654 = vrot.slane %v4652, 3
    %v4655 = vshll.u32 %v3961, 16
    %v4657 = vrot.slane %v4655, 4
    %v4658 = vor.u32 %v4654, %v4657
    %v4659 = vsel %vm4191, %v4577, %v4658
    %v4661 = vshrl.u32 %v4033, 16
    %v4663 = vrot.slane %v4661, 3
    %v4664 = vshll.u32 %v4033, 16
    %v4666 = vrot.slane %v4664, 4
    %v4667 = vor.u32 %v4663, %v4666
    %v4668 = vsel %vm4191, %v4586, %v4667
    %v4670 = vshrl.u32 %v3437, 16
    %v4672 = vrot.slane %v4670, 3
    %v4673 = vshll.u32 %v3437, 16
    %v4675 = vrot.slane %v4673, 4
    %v4676 = vor.u32 %v4672, %v4675
    %v4677 = vsel %vm4191, %v4595, %v4676
    %v4679 = vshrl.u32 %v3541, 16
    %v4681 = vrot.slane %v4679, 3
    %v4682 = vshll.u32 %v3541, 16
    %v4684 = vrot.slane %v4682, 4
    %v4685 = vor.u32 %v4681, %v4684
    %v4686 = vsel %vm4191, %v4604, %v4685
    %v4688 = vshrl.u32 %v3607, 16
    %v4690 = vrot.slane %v4688, 3
    %v4691 = vshll.u32 %v3607, 16
    %v4693 = vrot.slane %v4691, 4
    %v4694 = vor.u32 %v4690, %v4693
    %v4695 = vsel %vm4191, %v4613, %v4694
    %v4697 = vshrl.u32 %v3652, 16
    %v4699 = vrot.slane %v4697, 3
    %v4700 = vshll.u32 %v3652, 16
    %v4702 = vrot.slane %v4700, 4
    %v4703 = vor.u32 %v4699, %v4702
    %v4704 = vsel %vm4191, %v4622, %v4703
    %v4706 = vshrl.u32 %v3756, 16
    %v4708 = vrot.slane %v4706, 3
    %v4709 = vshll.u32 %v3756, 16
    %v4711 = vrot.slane %v4709, 4
    %v4712 = vor.u32 %v4708, %v4711
    %v4713 = vsel %vm4191, %v4631, %v4712
    %v4715 = vshrl.u32 %v3821, 16
    %v4717 = vrot.slane %v4715, 3
    %v4718 = vshll.u32 %v3821, 16
    %v4720 = vrot.slane %v4718, 4
    %v4721 = vor.u32 %v4717, %v4720
    %v4722 = vsel %vm4191, %v4640, %v4721
    %v4724 = vshrl.u32 %v3866, 16
    %v4726 = vrot.slane %v4724, 3
    %v4727 = vshll.u32 %v3866, 16
    %v4729 = vrot.slane %v4727, 4
    %v4730 = vor.u32 %v4726, %v4729
    %v4731 = vsel %vm4191, %v4649, %v4730
    %v4733 = vshrl.u32 %v3970, 16
    %v4735 = vrot.slane %v4733, 3
    %v4736 = vshll.u32 %v3970, 16
    %v4738 = vrot.slane %v4736, 4
    %v4739 = vor.u32 %v4735, %v4738
    %v4740 = vsel %vm4191, %v4658, %v4739
    %v4742 = vshrl.u32 %v4035, 16
    %v4744 = vrot.slane %v4742, 3
    %v4745 = vshll.u32 %v4035, 16
    %v4747 = vrot.slane %v4745, 4
    %v4748 = vor.u32 %v4744, %v4747
    %v4749 = vsel %vm4191, %v4667, %v4748
    %v4751 = vshrl.u32 %v3438, 16
    %v4753 = vrot.slane %v4751, 3
    %v4754 = vshll.u32 %v3438, 16
    %v4756 = vrot.slane %v4754, 4
    %v4757 = vor.u32 %v4753, %v4756
    %v4758 = vsel %vm4191, %v4676, %v4757
    %v4760 = vshrl.u32 %v3550, 16
    %v4762 = vrot.slane %v4760, 3
    %v4763 = vshll.u32 %v3550, 16
    %v4765 = vrot.slane %v4763, 4
    %v4766 = vor.u32 %v4762, %v4765
    %v4767 = vsel %vm4191, %v4685, %v4766
    %v4769 = vshrl.u32 %v3609, 16
    %v4771 = vrot.slane %v4769, 3
    %v4772 = vshll.u32 %v3609, 16
    %v4774 = vrot.slane %v4772, 4
    %v4775 = vor.u32 %v4771, %v4774
    %v4776 = vsel %vm4191, %v4694, %v4775
    %v4778 = vshrl.u32 %v3653, 16
    %v4780 = vrot.slane %v4778, 3
    %v4781 = vshll.u32 %v3653, 16
    %v4783 = vrot.slane %v4781, 4
    %v4784 = vor.u32 %v4780, %v4783
    %v4785 = vsel %vm4191, %v4703, %v4784
    %v4787 = vshrl.u32 %v3765, 16
    %v4789 = vrot.slane %v4787, 3
    %v4790 = vshll.u32 %v3765, 16
    %v4792 = vrot.slane %v4790, 4
    %v4793 = vor.u32 %v4789, %v4792
    %v4794 = vsel %vm4191, %v4712, %v4793
    %v4796 = vshrl.u32 %v3823, 16
    %v4798 = vrot.slane %v4796, 3
    %v4799 = vshll.u32 %v3823, 16
    %v4801 = vrot.slane %v4799, 4
    %v4802 = vor.u32 %v4798, %v4801
    %v4803 = vsel %vm4191, %v4721, %v4802
    %v4805 = vshrl.u32 %v3867, 16
    %v4807 = vrot.slane %v4805, 3
    %v4808 = vshll.u32 %v3867, 16
    %v4810 = vrot.slane %v4808, 4
    %v4811 = vor.u32 %v4807, %v4810
    %v4812 = vsel %vm4191, %v4730, %v4811
    %v4814 = vshrl.u32 %v3979, 16
    %v4816 = vrot.slane %v4814, 3
    %v4817 = vshll.u32 %v3979, 16
    %v4819 = vrot.slane %v4817, 4
    %v4820 = vor.u32 %v4816, %v4819
    %v4821 = vsel %vm4191, %v4739, %v4820
    %v4823 = vshrl.u32 %v4037, 16
    %v4825 = vrot.slane %v4823, 3
    %v4826 = vshll.u32 %v4037, 16
    %v4828 = vrot.slane %v4826, 4
    %v4829 = vor.u32 %v4825, %v4828
    %v4830 = vsel %vm4191, %v4748, %v4829
    %v4832 = vshrl.u32 %v3439, 16
    %v4834 = vrot.slane %v4832, 3
    %v4835 = vshll.u32 %v3439, 16
    %v4837 = vrot.slane %v4835, 4
    %v4838 = vor.u32 %v4834, %v4837
    %v4839 = vsel %vm4191, %v4757, %v4838
    %v4841 = vshrl.u32 %v3549, 16
    %v4843 = vrot.slane %v4841, 3
    %v4844 = vshll.u32 %v3549, 16
    %v4846 = vrot.slane %v4844, 4
    %v4847 = vor.u32 %v4843, %v4846
    %v4848 = vsel %vm4191, %v4766, %v4847
    %v4850 = vshrl.u32 %v3611, 16
    %v4852 = vrot.slane %v4850, 3
    %v4853 = vshll.u32 %v3611, 16
    %v4855 = vrot.slane %v4853, 4
    %v4856 = vor.u32 %v4852, %v4855
    %v4857 = vsel %vm4191, %v4775, %v4856
    %v4859 = vshrl.u32 %v3654, 16
    %v4861 = vrot.slane %v4859, 3
    %v4862 = vshll.u32 %v3654, 16
    %v4864 = vrot.slane %v4862, 4
    %v4865 = vor.u32 %v4861, %v4864
    %v4866 = vsel %vm4191, %v4784, %v4865
    %v4868 = vshrl.u32 %v3764, 16
    %v4870 = vrot.slane %v4868, 3
    %v4871 = vshll.u32 %v3764, 16
    %v4873 = vrot.slane %v4871, 4
    %v4874 = vor.u32 %v4870, %v4873
    %v4875 = vsel %vm4191, %v4793, %v4874
    %v4877 = vshrl.u32 %v3825, 16
    %v4879 = vrot.slane %v4877, 3
    %v4880 = vshll.u32 %v3825, 16
    %v4882 = vrot.slane %v4880, 4
    %v4883 = vor.u32 %v4879, %v4882
    %v4884 = vsel %vm4191, %v4802, %v4883
    %v4886 = vshrl.u32 %v3868, 16
    %v4888 = vrot.slane %v4886, 3
    %v4889 = vshll.u32 %v3868, 16
    %v4891 = vrot.slane %v4889, 4
    %v4892 = vor.u32 %v4888, %v4891
    %v4893 = vsel %vm4191, %v4811, %v4892
    %v4895 = vshrl.u32 %v3978, 16
    %v4897 = vrot.slane %v4895, 3
    %v4898 = vshll.u32 %v3978, 16
    %v4900 = vrot.slane %v4898, 4
    %v4901 = vor.u32 %v4897, %v4900
    %v4902 = vsel %vm4191, %v4820, %v4901
    %v4904 = vshrl.u32 %v4039, 16
    %v4906 = vrot.slane %v4904, 3
    %v4907 = vshll.u32 %v4039, 16
    %v4909 = vrot.slane %v4907, 4
    %v4910 = vor.u32 %v4906, %v4909
    %v4911 = vsel %vm4191, %v4829, %v4910
    %v5128 = vunpack.c.l.b16 %v4040
    %v5129 = vunpack.c.l.b16 %v4041
    %v5130 = vunpack.c.l.b16 %v4042
    %v5131 = vunpack.c.l.b16 %v4043
    %v5132 = vunpack.c.l.b16 %v4044
    %v5133 = vunpack.c.l.b16 %v4045
    %v5134 = vunpack.c.l.b16 %v4046
    %v5135 = vunpack.c.l.b16 %v4047
    %v5136 = vunpack.c.l.b16 %v4048
    %v5137 = vunpack.c.l.b16 %v4049
    %v5138 = vunpack.c.l.b16 %v4050
    %v5139 = vunpack.c.l.b16 %v4051
    %v5140 = vunpack.c.l.b16 %v4052
    %v5141 = vunpack.c.l.b16 %v4053
    %v5142 = vunpack.c.l.b16 %v4054
    %v5143 = vunpack.c.l.b16 %v4055
    %v5144 = vunpack.c.l.b16 %v4056
    %v5145 = vunpack.c.l.b16 %v4057
    %v5146 = vunpack.c.l.b16 %v4058
    %v5147 = vunpack.c.l.b16 %v4059
    %v5148 = vunpack.c.l.b16 %v4060
    %v5149 = vunpack.c.l.b16 %v4061
    %v5150 = vunpack.c.l.b16 %v4062
    %v5151 = vunpack.c.l.b16 %v4063
    %v5152 = vunpack.c.l.b16 %v4064
    %v5153 = vunpack.c.l.b16 %v4065
    %v5154 = vunpack.c.l.b16 %v4066
    %v5155 = vunpack.c.l.b16 %v4067
    %v5156 = vunpack.c.l.b16 %v4068
    %v5157 = vunpack.c.l.b16 %v4069
    %v5158 = vunpack.c.l.b16 %v4070
    %v5159 = vunpack.c.l.b16 %v4071
    %v5160 = vunpack.c.l.b16 %v4072
    %v5161 = vunpack.c.l.b16 %v4073
    %v5162 = vunpack.c.l.b16 %v4074
    %v5163 = vunpack.c.l.b16 %v4075
    %v5164 = vunpack.c.l.b16 %v4076
    %v5165 = vunpack.c.l.b16 %v4077
    %v5166 = vunpack.c.l.b16 %v4078
    %v5167 = vunpack.c.l.b16 %v4079
    %v5168 = vunpack.c.l.b16 %v4080
    %v5169 = vunpack.c.l.b16 %v4081
    %v5170 = vunpack.c.l.b16 %v4082
    %v5171 = vunpack.c.l.b16 %v4083
    %v5172 = vunpack.c.l.b16 %v4084
    %v5173 = vunpack.c.l.b16 %v4085
    %v5174 = vunpack.c.l.b16 %v4086
    %v5175 = vunpack.c.l.b16 %v4087
    %v5176 = vunpack.c.l.b16 %v4088
    %v5177 = vunpack.c.l.b16 %v4089
    %v5178 = vunpack.c.l.b16 %v4090
    %v5179 = vunpack.c.l.b16 %v4091
    %v5180 = vunpack.c.l.b16 %v4092
    %v5181 = vunpack.c.l.b16 %v4093
    %v5182 = vunpack.c.l.b16 %v4094
    %v5183 = vunpack.c.l.b16 %v4095
    %v5184 = vunpack.c.l.b16 %v4096
    %v5185 = vunpack.c.l.b16 %v4097
    %v5186 = vunpack.c.l.b16 %v4098
    %v5187 = vunpack.c.l.b16 %v4099
    %v5188 = vunpack.c.l.b16 %v4100
    %v5189 = vunpack.c.l.b16 %v4101
    %v5190 = vunpack.c.l.b16 %v4102
    %v5191 = vunpack.c.l.b16 %v4103
    %v5192 = vunpack.c.l.b16 %v4104
    %v5193 = vunpack.c.l.b16 %v4105
    %v5194 = vunpack.c.l.b16 %v4106
    %v5195 = vunpack.c.l.b16 %v4107
    %v5196 = vunpack.c.l.b16 %v4108
    %v5197 = vunpack.c.l.b16 %v4109
    %v5198 = vunpack.c.l.b16 %v4110
    %v5199 = vunpack.c.l.b16 %v4111
    %v5200 = vunpack.c.l.b16 %v4112
    %v5201 = vunpack.c.l.b16 %v4113
    %v5202 = vunpack.c.l.b16 %v4114
    %v5203 = vunpack.c.l.b16 %v4115
    %v5204 = vunpack.c.l.b16 %v4116
    %v5205 = vunpack.c.l.b16 %v4117
    %v5206 = vunpack.c.l.b16 %v4118
    %v5207 = vunpack.c.l.b16 %v4119
    %v5208 = vunpack.c.l.b16 %v4120
    %v5209 = vunpack.c.l.b16 %v4121
    %v5210 = vunpack.c.l.b16 %v4122
    %v5211 = vunpack.c.l.b16 %v4123
    %v5212 = vunpack.c.l.b16 %v4124
    %v5213 = vunpack.c.l.b16 %v4125
    %v5214 = vunpack.c.l.b16 %v4126
    %v5215 = vunpack.c.l.b16 %v4127
    %v5216 = vunpack.c.l.b16 %v4128
    %v5217 = vunpack.c.l.b16 %v4129
    %v5218 = vunpack.c.l.b16 %v4130
    %v5219 = vunpack.c.l.b16 %v4131
    %v5220 = vunpack.c.l.b16 %v4132
    %v5221 = vunpack.c.l.b16 %v4133
    %v5222 = vunpack.c.l.b16 %v4134
    %v5223 = vunpack.c.l.b16 %v4135
    %v5224 = vunpack.c.l.b16 %v4136
    %v5225 = vunpack.c.l.b16 %v4137
    %v5226 = vunpack.c.l.b16 %v4138
    %v5227 = vunpack.c.l.b16 %v4139
    %v5228 = vunpack.c.l.b16 %v4140
    %v5229 = vunpack.c.l.b16 %v4141
    %v5230 = vunpack.c.l.b16 %v4142
    %v5231 = vunpack.c.l.b16 %v4143
    %v5232 = vunpack.c.l.b16 %v4144
    %v5233 = vunpack.c.l.b16 %v4145
    %v5234 = vunpack.c.l.b16 %v4146
    %v5235 = vunpack.c.l.b16 %v4147
    %v5236 = vunpack.c.l.b16 %v4148
    %v5237 = vunpack.c.l.b16 %v4149
    %v5238 = vunpack.c.l.b16 %v4150
    %v5239 = vunpack.c.l.b16 %v4151
    %v5240 = vunpack.c.l.b16 %v4152
    %v5241 = vunpack.c.l.b16 %v4153
    %v5242 = vunpack.c.l.b16 %v4154
    %v5243 = vunpack.c.l.b16 %v4155
    %v5244 = vunpack.c.l.b16 %v4156
    %v5245 = vunpack.c.l.b16 %v4157
    %v5246 = vunpack.c.l.b16 %v4158
    %v5247 = vunpack.c.l.b16 %v4159
    %v5248 = vunpack.c.l.b16 %v4160
    %v5249 = vunpack.c.l.b16 %v4161
    %v5250 = vunpack.c.l.b16 %v4162
    %v5251 = vunpack.c.l.b16 %v4163
    %v5252 = vunpack.c.l.b16 %v4164
    %v5253 = vunpack.c.l.b16 %v4165
    %v5254 = vunpack.c.l.b16 %v4166
    %v5255 = vunpack.c.l.b16 %v4167
    %v5256 = vunpack.c.l.b16 %v4168
    %v5257 = vunpack.c.l.b16 %v4169
    %v5258 = vunpack.c.l.b16 %v4170
    %v5259 = vunpack.c.l.b16 %v4171
    %v5260 = vunpack.c.l.b16 %v4172
    %v5261 = vunpack.c.l.b16 %v4173
    %v5262 = vunpack.c.l.b16 %v4174
    %v5263 = vunpack.c.l.b16 %v4175
    %v5264 = vunpack.c.l.b16 %v4176
    %v5265 = vunpack.c.l.b16 %v4177
    %v5266 = vunpack.c.l.b16 %v4178
    %v5267 = vunpack.c.l.b16 %v4179
    %v5268 = vunpack.c.l.b16 %v4180
    %v5269 = vunpack.c.l.b16 %v4181
    %v5270 = vunpack.c.l.b16 %v4182
    %v5271 = vunpack.c.l.b16 %v4183
    %v5272 = vpack.c.b16 %v5129, %v5128
    %v5273 = vpack.c.b16 %v5131, %v5130
    %v5274 = vpack.c.b16 %v5133, %v5132
    %v5275 = vpack.c.b16 %v5135, %v5134
    %v5276 = vpack.c.b16 %v5137, %v5136
    %v5277 = vpack.c.b16 %v5139, %v5138
    %v5278 = vpack.c.b16 %v5141, %v5140
    %v5279 = vpack.c.b16 %v5143, %v5142
    %v5280 = vpack.c.b16 %v5145, %v5144
    %v5281 = vpack.c.b16 %v5147, %v5146
    %v5282 = vpack.c.b16 %v5149, %v5148
    %v5283 = vpack.c.b16 %v5151, %v5150
    %v5284 = vpack.c.b16 %v5153, %v5152
    %v5285 = vpack.c.b16 %v5155, %v5154
    %v5286 = vpack.c.b16 %v5157, %v5156
    %v5287 = vpack.c.b16 %v5159, %v5158
    %v5288 = vpack.c.b16 %v5161, %v5160
    %v5289 = vpack.c.b16 %v5163, %v5162
    %v5290 = vpack.c.b16 %v5165, %v5164
    %v5291 = vpack.c.b16 %v5167, %v5166
    %v5292 = vpack.c.b16 %v5169, %v5168
    %v5293 = vpack.c.b16 %v5171, %v5170
    %v5294 = vpack.c.b16 %v5173, %v5172
    %v5295 = vpack.c.b16 %v5175, %v5174
    %v5296 = vpack.c.b16 %v5177, %v5176
    %v5297 = vpack.c.b16 %v5179, %v5178
    %v5298 = vpack.c.b16 %v5181, %v5180
    %v5299 = vpack.c.b16 %v5183, %v5182
    %v5300 = vpack.c.b16 %v5185, %v5184
    %v5301 = vpack.c.b16 %v5187, %v5186
    %v5302 = vpack.c.b16 %v5189, %v5188
    %v5303 = vpack.c.b16 %v5191, %v5190
    %v5304 = vpack.c.b16 %v5193, %v5192
    %v5305 = vpack.c.b16 %v5195, %v5194
    %v5306 = vpack.c.b16 %v5197, %v5196
    %v5307 = vpack.c.b16 %v5199, %v5198
    %v5308 = vpack.c.b16 %v5201, %v5200
    %v5309 = vpack.c.b16 %v5203, %v5202
    %v5310 = vpack.c.b16 %v5205, %v5204
    %v5311 = vpack.c.b16 %v5207, %v5206
    %v5312 = vpack.c.b16 %v5209, %v5208
    %v5313 = vpack.c.b16 %v5211, %v5210
    %v5314 = vpack.c.b16 %v5213, %v5212
    %v5315 = vpack.c.b16 %v5215, %v5214
    %v5316 = vpack.c.b16 %v5217, %v5216
    %v5317 = vpack.c.b16 %v5219, %v5218
    %v5318 = vpack.c.b16 %v5221, %v5220
    %v5319 = vpack.c.b16 %v5223, %v5222
    %v5320 = vpack.c.b16 %v5225, %v5224
    %v5321 = vpack.c.b16 %v5227, %v5226
    %v5322 = vpack.c.b16 %v5229, %v5228
    %v5323 = vpack.c.b16 %v5231, %v5230
    %v5324 = vpack.c.b16 %v5233, %v5232
    %v5325 = vpack.c.b16 %v5235, %v5234
    %v5326 = vpack.c.b16 %v5237, %v5236
    %v5327 = vpack.c.b16 %v5239, %v5238
    %v5328 = vpack.c.b16 %v5241, %v5240
    %v5329 = vpack.c.b16 %v5243, %v5242
    %v5330 = vpack.c.b16 %v5245, %v5244
    %v5331 = vpack.c.b16 %v5247, %v5246
    %v5332 = vpack.c.b16 %v5249, %v5248
    %v5333 = vpack.c.b16 %v5251, %v5250
    %v5334 = vpack.c.b16 %v5253, %v5252
    %v5335 = vpack.c.b16 %v5255, %v5254
    %v5336 = vpack.c.b16 %v5257, %v5256
    %v5337 = vpack.c.b16 %v5259, %v5258
    %v5338 = vpack.c.b16 %v5261, %v5260
    %v5339 = vpack.c.b16 %v5263, %v5262
    %v5340 = vpack.c.b16 %v5265, %v5264
    %v5341 = vpack.c.b16 %v5267, %v5266
    %v5342 = vpack.c.b16 %v5269, %v5268
    %v5343 = vpack.c.b16 %v5271, %v5270
    %5416 = vmatprep.subr.bf16.mxu0 0
    %5417 = vmatpush1.bf16.msra.mxu0 %v5279
    %5418 = vmatprep.subr.bf16.mxu0 0
    %5419 = vmatpush1.bf16.msra.mxu0 %v5278
    %5420 = vmatprep.subr.bf16.mxu0 0
    %5421 = vmatpush1.bf16.msra.mxu0 %v5277
    %5422 = vmatprep.subr.bf16.mxu0 0
    %5423 = vmatpush1.bf16.msra.mxu0 %v5276
    %5424 = vmatprep.subr.bf16.mxu0 0
    %5425 = vmatpush1.bf16.msra.mxu0 %v5275
    %5426 = vmatprep.subr.bf16.mxu0 0
    %5427 = vmatpush1.bf16.msra.mxu0 %v5274
    %5428 = vmatprep.subr.bf16.mxu0 0
    %5429 = vmatpush1.bf16.msra.mxu0 %v5273
    %5430 = vmatprep.subr.bf16.mxu0 0
    %5431 = vmatpush1.bf16.msra.mxu0 %v5272
    %5432 = vmatprep.subr.bf16.mxu0 0
    %5433 = vmatpush2.bf16.msra.mxu0 %v5287
    %5434 = vmatprep.subr.bf16.mxu0 0
    %5435 = vmatpush2.bf16.msra.mxu0 %v5286
    %5436 = vmatprep.subr.bf16.mxu0 0
    %5437 = vmatpush2.bf16.msra.mxu0 %v5285
    %5438 = vmatprep.subr.bf16.mxu0 0
    %5439 = vmatpush2.bf16.msra.mxu0 %v5284
    %5440 = vmatprep.subr.bf16.mxu0 0
    %5441 = vmatpush2.bf16.msra.mxu0 %v5283
    %5442 = vmatprep.subr.bf16.mxu0 0
    %5443 = vmatpush2.bf16.msra.mxu0 %v5282
    %5444 = vmatprep.subr.bf16.mxu0 0
    %5445 = vmatpush2.bf16.msra.mxu0 %v5281
    %5446 = vmatprep.subr.bf16.mxu0 0
    %5447 = vmatpush2.bf16.msra.mxu0 %v5280
    %5448 = vmatprep.mubr.bf16.mxu0 %v4225
    %5449 = vmatmul.mubr.bf16.gmra.mxu0 %v4208
    %v5450 = vpop.f32.mrf.mxu0
    %v5451 = vadd.f32 %v4189, %v5450
    %v5452 = vpop.f32.mrf.mxu0
    %v5453 = vpop.f32.mrf.mxu0
    %v5454 = vadd.f32 %v4189, %v5453
    %v5455 = vpop.f32.mrf.mxu0
    %5456 = vmatprep.mubr.bf16.mxu0 %v4362
    %5457 = vmatmul.mubr.bf16.gmra.mxu0 %v4353
    %v5458 = vpop.f32.mrf.mxu0
    %v5459 = vadd.f32 %v4189, %v5458
    %v5460 = vpop.f32.mrf.mxu0
    %v5461 = vpop.f32.mrf.mxu0
    %v5462 = vadd.f32 %v4189, %v5461
    %v5463 = vpop.f32.mrf.mxu0
    %5464 = vmatprep.mubr.bf16.mxu0 %v4443
    %5465 = vmatmul.mubr.bf16.gmra.mxu0 %v4434
    %v5466 = vpop.f32.mrf.mxu0
    %v5467 = vadd.f32 %v4189, %v5466
    %v5468 = vpop.f32.mrf.mxu0
    %v5469 = vpop.f32.mrf.mxu0
    %v5470 = vadd.f32 %v4189, %v5469
    %v5471 = vpop.f32.mrf.mxu0
    %5472 = vmatprep.mubr.bf16.mxu0 %v4524
    %5473 = vmatmul.mubr.bf16.gmra.mxu0 %v4515
    %v5474 = vpop.f32.mrf.mxu0
    %v5475 = vadd.f32 %v4189, %v5474
    %v5476 = vpop.f32.mrf.mxu0
    %v5477 = vpop.f32.mrf.mxu0
    %v5478 = vadd.f32 %v4189, %v5477
    %v5479 = vpop.f32.mrf.mxu0
    %5480 = vmatprep.mubr.bf16.mxu0 %v4605
    %5481 = vmatmul.mubr.bf16.gmra.mxu0 %v4596
    %v5482 = vpop.f32.mrf.mxu0
    %v5483 = vadd.f32 %v4189, %v5482
    %v5484 = vpop.f32.mrf.mxu0
    %v5485 = vpop.f32.mrf.mxu0
    %v5486 = vadd.f32 %v4189, %v5485
    %v5487 = vpop.f32.mrf.mxu0
    %5488 = vmatprep.mubr.bf16.mxu0 %v4686
    %5489 = vmatmul.mubr.bf16.gmra.mxu0 %v4677
    %v5490 = vpop.f32.mrf.mxu0
    %v5491 = vadd.f32 %v4189, %v5490
    %v5492 = vpop.f32.mrf.mxu0
    %v5493 = vpop.f32.mrf.mxu0
    %v5494 = vadd.f32 %v4189, %v5493
    %v5495 = vpop.f32.mrf.mxu0
    %5496 = vmatprep.mubr.bf16.mxu0 %v4767
    %5497 = vmatmul.mubr.bf16.gmra.mxu0 %v4758
    %v5498 = vpop.f32.mrf.mxu0
    %v5499 = vadd.f32 %v4189, %v5498
    %v5500 = vpop.f32.mrf.mxu0
    %v5501 = vpop.f32.mrf.mxu0
    %v5502 = vadd.f32 %v4189, %v5501
    %v5503 = vpop.f32.mrf.mxu0
    %5504 = vmatprep.mubr.bf16.mxu0 %v4848
    %5505 = vmatmul.mubr.bf16.gmra.mxu0 %v4839
    %v5506 = vpop.f32.mrf.mxu0
    %v5507 = vadd.f32 %v4189, %v5506
    %v5508 = vpop.f32.mrf.mxu0
    %v5509 = vpop.f32.mrf.mxu0
    %v5510 = vadd.f32 %v4189, %v5509
    %v5511 = vpop.f32.mrf.mxu0
    %5512 = vdwg.mxu0
    %5513 = vmatprep.subr.bf16.mxu0 0
    %5514 = vmatpush1.bf16.msra.mxu0 %v5295
    %5515 = vmatprep.subr.bf16.mxu0 0
    %5516 = vmatpush1.bf16.msra.mxu0 %v5294
    %5517 = vmatprep.subr.bf16.mxu0 0
    %5518 = vmatpush1.bf16.msra.mxu0 %v5293
    %5519 = vmatprep.subr.bf16.mxu0 0
    %5520 = vmatpush1.bf16.msra.mxu0 %v5292
    %5521 = vmatprep.subr.bf16.mxu0 0
    %5522 = vmatpush1.bf16.msra.mxu0 %v5291
    %5523 = vmatprep.subr.bf16.mxu0 0
    %5524 = vmatpush1.bf16.msra.mxu0 %v5290
    %5525 = vmatprep.subr.bf16.mxu0 0
    %5526 = vmatpush1.bf16.msra.mxu0 %v5289
    %5527 = vmatprep.subr.bf16.mxu0 0
    %5528 = vmatpush1.bf16.msra.mxu0 %v5288
    %5529 = vmatprep.subr.bf16.mxu0 0
    %5530 = vmatpush2.bf16.msra.mxu0 %v5303
    %5531 = vmatprep.subr.bf16.mxu0 0
    %5532 = vmatpush2.bf16.msra.mxu0 %v5302
    %5533 = vmatprep.subr.bf16.mxu0 0
    %5534 = vmatpush2.bf16.msra.mxu0 %v5301
    %5535 = vmatprep.subr.bf16.mxu0 0
    %5536 = vmatpush2.bf16.msra.mxu0 %v5300
    %5537 = vmatprep.subr.bf16.mxu0 0
    %5538 = vmatpush2.bf16.msra.mxu0 %v5299
    %5539 = vmatprep.subr.bf16.mxu0 0
    %5540 = vmatpush2.bf16.msra.mxu0 %v5298
    %5541 = vmatprep.subr.bf16.mxu0 0
    %5542 = vmatpush2.bf16.msra.mxu0 %v5297
    %5543 = vmatprep.subr.bf16.mxu0 0
    %5544 = vmatpush2.bf16.msra.mxu0 %v5296
    %5545 = vmatprep.mubr.bf16.mxu0 %v4259
    %5546 = vmatmul.mubr.bf16.gmra.mxu0 %v4242
    %v5547 = vpop.f32.mrf.mxu0
    %v5548 = vadd.f32 %v5451, %v5547
    %v5549 = vpop.f32.mrf.mxu0
    %v5550 = vpop.f32.mrf.mxu0
    %v5551 = vadd.f32 %v5454, %v5550
    %v5552 = vpop.f32.mrf.mxu0
    %5553 = vmatprep.mubr.bf16.mxu0 %v4380
    %5554 = vmatmul.mubr.bf16.gmra.mxu0 %v4371
    %v5555 = vpop.f32.mrf.mxu0
    %v5556 = vadd.f32 %v5459, %v5555
    %v5557 = vpop.f32.mrf.mxu0
    %v5558 = vpop.f32.mrf.mxu0
    %v5559 = vadd.f32 %v5462, %v5558
    %v5560 = vpop.f32.mrf.mxu0
    %5561 = vmatprep.mubr.bf16.mxu0 %v4461
    %5562 = vmatmul.mubr.bf16.gmra.mxu0 %v4452
    %v5563 = vpop.f32.mrf.mxu0
    %v5564 = vadd.f32 %v5467, %v5563
    %v5565 = vpop.f32.mrf.mxu0
    %v5566 = vpop.f32.mrf.mxu0
    %v5567 = vadd.f32 %v5470, %v5566
    %v5568 = vpop.f32.mrf.mxu0
    %5569 = vmatprep.mubr.bf16.mxu0 %v4542
    %5570 = vmatmul.mubr.bf16.gmra.mxu0 %v4533
    %v5571 = vpop.f32.mrf.mxu0
    %v5572 = vadd.f32 %v5475, %v5571
    %v5573 = vpop.f32.mrf.mxu0
    %v5574 = vpop.f32.mrf.mxu0
    %v5575 = vadd.f32 %v5478, %v5574
    %v5576 = vpop.f32.mrf.mxu0
    %5577 = vmatprep.mubr.bf16.mxu0 %v4623
    %5578 = vmatmul.mubr.bf16.gmra.mxu0 %v4614
    %v5579 = vpop.f32.mrf.mxu0
    %v5580 = vadd.f32 %v5483, %v5579
    %v5581 = vpop.f32.mrf.mxu0
    %v5582 = vpop.f32.mrf.mxu0
    %v5583 = vadd.f32 %v5486, %v5582
    %v5584 = vpop.f32.mrf.mxu0
    %5585 = vmatprep.mubr.bf16.mxu0 %v4704
    %5586 = vmatmul.mubr.bf16.gmra.mxu0 %v4695
    %v5587 = vpop.f32.mrf.mxu0
    %v5588 = vadd.f32 %v5491, %v5587
    %v5589 = vpop.f32.mrf.mxu0
    %v5590 = vpop.f32.mrf.mxu0
    %v5591 = vadd.f32 %v5494, %v5590
    %v5592 = vpop.f32.mrf.mxu0
    %5593 = vmatprep.mubr.bf16.mxu0 %v4785
    %5594 = vmatmul.mubr.bf16.gmra.mxu0 %v4776
    %v5595 = vpop.f32.mrf.mxu0
    %v5596 = vadd.f32 %v5499, %v5595
    %v5597 = vpop.f32.mrf.mxu0
    %v5598 = vpop.f32.mrf.mxu0
    %v5599 = vadd.f32 %v5502, %v5598
    %v5600 = vpop.f32.mrf.mxu0
    %5601 = vmatprep.mubr.bf16.mxu0 %v4866
    %5602 = vmatmul.mubr.bf16.gmra.mxu0 %v4857
    %v5603 = vpop.f32.mrf.mxu0
    %v5604 = vadd.f32 %v5507, %v5603
    %v5605 = vpop.f32.mrf.mxu0
    %v5606 = vpop.f32.mrf.mxu0
    %v5607 = vadd.f32 %v5510, %v5606
    %v5608 = vpop.f32.mrf.mxu0
    %5609 = vdwg.mxu0
    %5610 = vmatprep.subr.bf16.mxu0 0
    %5611 = vmatpush1.bf16.msra.mxu0 %v5311
    %5612 = vmatprep.subr.bf16.mxu0 0
    %5613 = vmatpush1.bf16.msra.mxu0 %v5310
    %5614 = vmatprep.subr.bf16.mxu0 0
    %5615 = vmatpush1.bf16.msra.mxu0 %v5309
    %5616 = vmatprep.subr.bf16.mxu0 0
    %5617 = vmatpush1.bf16.msra.mxu0 %v5308
    %5618 = vmatprep.subr.bf16.mxu0 0
    %5619 = vmatpush1.bf16.msra.mxu0 %v5307
    %5620 = vmatprep.subr.bf16.mxu0 0
    %5621 = vmatpush1.bf16.msra.mxu0 %v5306
    %5622 = vmatprep.subr.bf16.mxu0 0
    %5623 = vmatpush1.bf16.msra.mxu0 %v5305
    %5624 = vmatprep.subr.bf16.mxu0 0
    %5625 = vmatpush1.bf16.msra.mxu0 %v5304
    %5626 = vmatprep.subr.bf16.mxu0 0
    %5627 = vmatpush2.bf16.msra.mxu0 %v5319
    %5628 = vmatprep.subr.bf16.mxu0 0
    %5629 = vmatpush2.bf16.msra.mxu0 %v5318
    %5630 = vmatprep.subr.bf16.mxu0 0
    %5631 = vmatpush2.bf16.msra.mxu0 %v5317
    %5632 = vmatprep.subr.bf16.mxu0 0
    %5633 = vmatpush2.bf16.msra.mxu0 %v5316
    %5634 = vmatprep.subr.bf16.mxu0 0
    %5635 = vmatpush2.bf16.msra.mxu0 %v5315
    %5636 = vmatprep.subr.bf16.mxu0 0
    %5637 = vmatpush2.bf16.msra.mxu0 %v5314
    %5638 = vmatprep.subr.bf16.mxu0 0
    %5639 = vmatpush2.bf16.msra.mxu0 %v5313
    %5640 = vmatprep.subr.bf16.mxu0 0
    %5641 = vmatpush2.bf16.msra.mxu0 %v5312
    %5642 = vmatprep.mubr.bf16.mxu0 %v4293
    %5643 = vmatmul.mubr.bf16.gmra.mxu0 %v4276
    %v5644 = vpop.f32.mrf.mxu0
    %v5645 = vadd.f32 %v5548, %v5644
    %v5646 = vpop.f32.mrf.mxu0
    %v5647 = vpop.f32.mrf.mxu0
    %v5648 = vadd.f32 %v5551, %v5647
    %v5649 = vpop.f32.mrf.mxu0
    %5650 = vmatprep.mubr.bf16.mxu0 %v4398
    %5651 = vmatmul.mubr.bf16.gmra.mxu0 %v4389
    %v5652 = vpop.f32.mrf.mxu0
    %v5653 = vadd.f32 %v5556, %v5652
    %v5654 = vpop.f32.mrf.mxu0
    %v5655 = vpop.f32.mrf.mxu0
    %v5656 = vadd.f32 %v5559, %v5655
    %v5657 = vpop.f32.mrf.mxu0
    %5658 = vmatprep.mubr.bf16.mxu0 %v4479
    %5659 = vmatmul.mubr.bf16.gmra.mxu0 %v4470
    %v5660 = vpop.f32.mrf.mxu0
    %v5661 = vadd.f32 %v5564, %v5660
    %v5662 = vpop.f32.mrf.mxu0
    %v5663 = vpop.f32.mrf.mxu0
    %v5664 = vadd.f32 %v5567, %v5663
    %v5665 = vpop.f32.mrf.mxu0
    %5666 = vmatprep.mubr.bf16.mxu0 %v4560
    %5667 = vmatmul.mubr.bf16.gmra.mxu0 %v4551
    %v5668 = vpop.f32.mrf.mxu0
    %v5669 = vadd.f32 %v5572, %v5668
    %v5670 = vpop.f32.mrf.mxu0
    %v5671 = vpop.f32.mrf.mxu0
    %v5672 = vadd.f32 %v5575, %v5671
    %v5673 = vpop.f32.mrf.mxu0
    %5674 = vmatprep.mubr.bf16.mxu0 %v4641
    %5675 = vmatmul.mubr.bf16.gmra.mxu0 %v4632
    %v5676 = vpop.f32.mrf.mxu0
    %v5677 = vadd.f32 %v5580, %v5676
    %v5678 = vpop.f32.mrf.mxu0
    %v5679 = vpop.f32.mrf.mxu0
    %v5680 = vadd.f32 %v5583, %v5679
    %v5681 = vpop.f32.mrf.mxu0
    %5682 = vmatprep.mubr.bf16.mxu0 %v4722
    %5683 = vmatmul.mubr.bf16.gmra.mxu0 %v4713
    %v5684 = vpop.f32.mrf.mxu0
    %v5685 = vadd.f32 %v5588, %v5684
    %v5686 = vpop.f32.mrf.mxu0
    %v5687 = vpop.f32.mrf.mxu0
    %v5688 = vadd.f32 %v5591, %v5687
    %v5689 = vpop.f32.mrf.mxu0
    %5690 = vmatprep.mubr.bf16.mxu0 %v4803
    %5691 = vmatmul.mubr.bf16.gmra.mxu0 %v4794
    %v5692 = vpop.f32.mrf.mxu0
    %v5693 = vadd.f32 %v5596, %v5692
    %v5694 = vpop.f32.mrf.mxu0
    %v5695 = vpop.f32.mrf.mxu0
    %v5696 = vadd.f32 %v5599, %v5695
    %v5697 = vpop.f32.mrf.mxu0
    %5698 = vmatprep.mubr.bf16.mxu0 %v4884
    %5699 = vmatmul.mubr.bf16.gmra.mxu0 %v4875
    %v5700 = vpop.f32.mrf.mxu0
    %v5701 = vadd.f32 %v5604, %v5700
    %v5702 = vpop.f32.mrf.mxu0
    %v5703 = vpop.f32.mrf.mxu0
    %v5704 = vadd.f32 %v5607, %v5703
    %v5705 = vpop.f32.mrf.mxu0
    %5706 = vdwg.mxu0
    %5707 = vmatprep.subr.bf16.mxu0 0
    %5708 = vmatpush1.bf16.msra.mxu0 %v5327
    %5709 = vmatprep.subr.bf16.mxu0 0
    %5710 = vmatpush1.bf16.msra.mxu0 %v5326
    %5711 = vmatprep.subr.bf16.mxu0 0
    %5712 = vmatpush1.bf16.msra.mxu0 %v5325
    %5713 = vmatprep.subr.bf16.mxu0 0
    %5714 = vmatpush1.bf16.msra.mxu0 %v5324
    %5715 = vmatprep.subr.bf16.mxu0 0
    %5716 = vmatpush1.bf16.msra.mxu0 %v5323
    %5717 = vmatprep.subr.bf16.mxu0 0
    %5718 = vmatpush1.bf16.msra.mxu0 %v5322
    %5719 = vmatprep.subr.bf16.mxu0 0
    %5720 = vmatpush1.bf16.msra.mxu0 %v5321
    %5721 = vmatprep.subr.bf16.mxu0 0
    %5722 = vmatpush1.bf16.msra.mxu0 %v5320
    %5723 = vmatprep.subr.bf16.mxu0 0
    %5724 = vmatpush2.bf16.msra.mxu0 %v5335
    %5725 = vmatprep.subr.bf16.mxu0 0
    %5726 = vmatpush2.bf16.msra.mxu0 %v5334
    %5727 = vmatprep.subr.bf16.mxu0 0
    %5728 = vmatpush2.bf16.msra.mxu0 %v5333
    %5729 = vmatprep.subr.bf16.mxu0 0
    %5730 = vmatpush2.bf16.msra.mxu0 %v5332
    %5731 = vmatprep.subr.bf16.mxu0 0
    %5732 = vmatpush2.bf16.msra.mxu0 %v5331
    %5733 = vmatprep.subr.bf16.mxu0 0
    %5734 = vmatpush2.bf16.msra.mxu0 %v5330
    %5735 = vmatprep.subr.bf16.mxu0 0
    %5736 = vmatpush2.bf16.msra.mxu0 %v5329
    %5737 = vmatprep.subr.bf16.mxu0 0
    %5738 = vmatpush2.bf16.msra.mxu0 %v5328
    %5739 = vmatprep.mubr.bf16.mxu0 %v4327
    %5740 = vmatmul.mubr.bf16.gmra.mxu0 %v4310
    %v5741 = vpop.f32.mrf.mxu0
    %v5742 = vadd.f32 %v5645, %v5741
    %v5743 = vpop.f32.mrf.mxu0
    %v5744 = vpop.f32.mrf.mxu0
    %v5745 = vadd.f32 %v5648, %v5744
    %v5746 = vpop.f32.mrf.mxu0
    %5747 = vmatprep.mubr.bf16.mxu0 %v4416
    %5748 = vmatmul.mubr.bf16.gmra.mxu0 %v4407
    %v5749 = vpop.f32.mrf.mxu0
    %v5750 = vadd.f32 %v5653, %v5749
    %v5751 = vpop.f32.mrf.mxu0
    %v5752 = vpop.f32.mrf.mxu0
    %v5753 = vadd.f32 %v5656, %v5752
    %v5754 = vpop.f32.mrf.mxu0
    %5755 = vmatprep.mubr.bf16.mxu0 %v4497
    %5756 = vmatmul.mubr.bf16.gmra.mxu0 %v4488
    %v5757 = vpop.f32.mrf.mxu0
    %v5758 = vadd.f32 %v5661, %v5757
    %v5759 = vpop.f32.mrf.mxu0
    %v5760 = vpop.f32.mrf.mxu0
    %v5761 = vadd.f32 %v5664, %v5760
    %v5762 = vpop.f32.mrf.mxu0
    %5763 = vmatprep.mubr.bf16.mxu0 %v4578
    %5764 = vmatmul.mubr.bf16.gmra.mxu0 %v4569
    %v5765 = vpop.f32.mrf.mxu0
    %v5766 = vadd.f32 %v5669, %v5765
    %v5767 = vpop.f32.mrf.mxu0
    %v5768 = vpop.f32.mrf.mxu0
    %v5769 = vadd.f32 %v5672, %v5768
    %v5770 = vpop.f32.mrf.mxu0
    %5771 = vmatprep.mubr.bf16.mxu0 %v4659
    %5772 = vmatmul.mubr.bf16.gmra.mxu0 %v4650
    %v5773 = vpop.f32.mrf.mxu0
    %v5774 = vadd.f32 %v5677, %v5773
    %v5775 = vpop.f32.mrf.mxu0
    %v5776 = vpop.f32.mrf.mxu0
    %v5777 = vadd.f32 %v5680, %v5776
    %v5778 = vpop.f32.mrf.mxu0
    %5779 = vmatprep.mubr.bf16.mxu0 %v4740
    %5780 = vmatmul.mubr.bf16.gmra.mxu0 %v4731
    %v5781 = vpop.f32.mrf.mxu0
    %v5782 = vadd.f32 %v5685, %v5781
    %v5783 = vpop.f32.mrf.mxu0
    %v5784 = vpop.f32.mrf.mxu0
    %v5785 = vadd.f32 %v5688, %v5784
    %v5786 = vpop.f32.mrf.mxu0
    %5787 = vmatprep.mubr.bf16.mxu0 %v4821
    %5788 = vmatmul.mubr.bf16.gmra.mxu0 %v4812
    %v5789 = vpop.f32.mrf.mxu0
    %v5790 = vadd.f32 %v5693, %v5789
    %v5791 = vpop.f32.mrf.mxu0
    %v5792 = vpop.f32.mrf.mxu0
    %v5793 = vadd.f32 %v5696, %v5792
    %v5794 = vpop.f32.mrf.mxu0
    %5795 = vmatprep.mubr.bf16.mxu0 %v4902
    %5796 = vmatmul.mubr.bf16.gmra.mxu0 %v4893
    %v5797 = vpop.f32.mrf.mxu0
    %v5798 = vadd.f32 %v5701, %v5797
    %v5799 = vpop.f32.mrf.mxu0
    %v5800 = vpop.f32.mrf.mxu0
    %v5801 = vadd.f32 %v5704, %v5800
    %v5802 = vpop.f32.mrf.mxu0
    %5803 = vdwg.mxu0
    %5804 = vmatprep.subr.bf16.mxu0 0
    %5805 = vmatpush1.bf16.msra.mxu0 %v5343
    %5806 = vmatprep.subr.bf16.mxu0 0
    %5807 = vmatpush1.bf16.msra.mxu0 %v5342
    %5808 = vmatprep.subr.bf16.mxu0 0
    %5809 = vmatpush1.bf16.msra.mxu0 %v5341
    %5810 = vmatprep.subr.bf16.mxu0 0
    %5811 = vmatpush1.bf16.msra.mxu0 %v5340
    %5812 = vmatprep.subr.bf16.mxu0 0
    %5813 = vmatpush1.bf16.msra.mxu0 %v5339
    %5814 = vmatprep.subr.bf16.mxu0 0
    %5815 = vmatpush1.bf16.msra.mxu0 %v5338
    %5816 = vmatprep.subr.bf16.mxu0 0
    %5817 = vmatpush1.bf16.msra.mxu0 %v5337
    %5818 = vmatprep.subr.bf16.mxu0 0
    %5819 = vmatpush1.bf16.msra.mxu0 %v5336
    %5820 = vmatprep.subr.bf16.mxu0 0
    %5821 = vmatpush2.bf16.msra.mxu0 0
    %5822 = vmatprep.subr.bf16.mxu0 0
    %5823 = vmatpush2.bf16.msra.mxu0 0
    %5824 = vmatprep.subr.bf16.mxu0 0
    %5825 = vmatpush2.bf16.msra.mxu0 0
    %5826 = vmatprep.subr.bf16.mxu0 0
    %5827 = vmatpush2.bf16.msra.mxu0 0
    %5828 = vmatprep.subr.bf16.mxu0 0
    %5829 = vmatpush2.bf16.msra.mxu0 0
    %5830 = vmatprep.subr.bf16.mxu0 0
    %5831 = vmatpush2.bf16.msra.mxu0 0
    %5832 = vmatprep.subr.bf16.mxu0 0
    %5833 = vmatpush2.bf16.msra.mxu0 0
    %5834 = vmatprep.subr.bf16.mxu0 0
    %5835 = vmatpush2.bf16.msra.mxu0 0
    %5836 = vmatprep.mubr.bf16.mxu0 0
    %5837 = vmatmul.mubr.bf16.gmra.mxu0 %v4344
    %v5838 = vpop.f32.mrf.mxu0
    %v5839 = vadd.f32 %v5742, %v5838
    %v5840 = vpop.f32.mrf.mxu0
    %v5841 = vpop.f32.mrf.mxu0
    %v5842 = vadd.f32 %v5745, %v5841
    %v5843 = vpop.f32.mrf.mxu0
    %5844 = vmatprep.mubr.bf16.mxu0 0
    %5845 = vmatmul.mubr.bf16.gmra.mxu0 %v4425
    %v5846 = vpop.f32.mrf.mxu0
    %v5847 = vadd.f32 %v5750, %v5846
    %v5848 = vpop.f32.mrf.mxu0
    %v5849 = vpop.f32.mrf.mxu0
    %v5850 = vadd.f32 %v5753, %v5849
    %v5851 = vpop.f32.mrf.mxu0
    %5852 = vmatprep.mubr.bf16.mxu0 0
    %5853 = vmatmul.mubr.bf16.gmra.mxu0 %v4506
    %v5854 = vpop.f32.mrf.mxu0
    %v5855 = vadd.f32 %v5758, %v5854
    %v5856 = vpop.f32.mrf.mxu0
    %v5857 = vpop.f32.mrf.mxu0
    %v5858 = vadd.f32 %v5761, %v5857
    %v5859 = vpop.f32.mrf.mxu0
    %5860 = vmatprep.mubr.bf16.mxu0 0
    %5861 = vmatmul.mubr.bf16.gmra.mxu0 %v4587
    %v5862 = vpop.f32.mrf.mxu0
    %v5863 = vadd.f32 %v5766, %v5862
    %v5864 = vpop.f32.mrf.mxu0
    %v5865 = vpop.f32.mrf.mxu0
    %v5866 = vadd.f32 %v5769, %v5865
    %v5867 = vpop.f32.mrf.mxu0
    %5868 = vmatprep.mubr.bf16.mxu0 0
    %5869 = vmatmul.mubr.bf16.gmra.mxu0 %v4668
    %v5870 = vpop.f32.mrf.mxu0
    %v5871 = vadd.f32 %v5774, %v5870
    %v5872 = vpop.f32.mrf.mxu0
    %v5873 = vpop.f32.mrf.mxu0
    %v5874 = vadd.f32 %v5777, %v5873
    %v5875 = vpop.f32.mrf.mxu0
    %5876 = vmatprep.mubr.bf16.mxu0 0
    %5877 = vmatmul.mubr.bf16.gmra.mxu0 %v4749
    %v5878 = vpop.f32.mrf.mxu0
    %v5879 = vadd.f32 %v5782, %v5878
    %v5880 = vpop.f32.mrf.mxu0
    %v5881 = vpop.f32.mrf.mxu0
    %v5882 = vadd.f32 %v5785, %v5881
    %v5883 = vpop.f32.mrf.mxu0
    %5884 = vmatprep.mubr.bf16.mxu0 0
    %5885 = vmatmul.mubr.bf16.gmra.mxu0 %v4830
    %v5886 = vpop.f32.mrf.mxu0
    %v5887 = vadd.f32 %v5790, %v5886
    %v5888 = vpop.f32.mrf.mxu0
    %v5889 = vpop.f32.mrf.mxu0
    %v5890 = vadd.f32 %v5793, %v5889
    %v5891 = vpop.f32.mrf.mxu0
    %5892 = vmatprep.mubr.bf16.mxu0 0
    %5893 = vmatmul.mubr.bf16.gmra.mxu0 %v4911
    %v5894 = vpop.f32.mrf.mxu0
    %v5895 = vadd.f32 %v5798, %v5894
    %v5896 = vpop.f32.mrf.mxu0
    %v5897 = vpop.f32.mrf.mxu0
    %v5898 = vadd.f32 %v5801, %v5897
    %v5899 = vpop.f32.mrf.mxu0
    %5900 = vdwg.mxu0
    %v5901 = vld [vmem:[#allocation10] sm:$0xff]
    %v5902 = vld [vmem:[#allocation10 + $0x8] sm:$0xff]
    %v5903 = vld [vmem:[#allocation10 + $0x10] sm:$0xff]
    %v5904 = vld [vmem:[#allocation10 + $0x18] sm:$0xff]
    %v5905 = vld [vmem:[#allocation10 + $0x20] sm:$0xff]
    %v5906 = vld [vmem:[#allocation10 + $0x28] sm:$0xff]
    %v5907 = vld [vmem:[#allocation10 + $0x30] sm:$0xff]
    %v5908 = vld [vmem:[#allocation10 + $0x38] sm:$0xff]
    %v5909 = vld [vmem:[#allocation10 + $0x40] sm:$0xff]
    %v5910 = vld [vmem:[#allocation10 + $0x48] sm:$0xff]
    %v5911 = vld [vmem:[#allocation10 + $0x50] sm:$0xff]
    %v5912 = vld [vmem:[#allocation10 + $0x58] sm:$0xff]
    %v5913 = vld [vmem:[#allocation10 + $0x60] sm:$0xff]
    %v5914 = vld [vmem:[#allocation10 + $0x68] sm:$0xff]
    %v5915 = vld [vmem:[#allocation10 + $0x70] sm:$0xff]
    %v5916 = vld [vmem:[#allocation10 + $0x78] sm:$0xff]
    %v5917 = vadd.f32 %v5839, %v5842
    %v5918 = vadd.f32 %v5917, %v5847
    %v5919 = vadd.f32 %v5918, %v5850
    %v5920 = vadd.f32 %v5919, %v5855
    %v5921 = vadd.f32 %v5920, %v5858
    %v5922 = vadd.f32 %v5921, %v5863
    %v5923 = vadd.f32 %v5922, %v5866
    %v5924 = vrot.slane %v5923, 4
    %v5925 = vadd.f32 %v5923, %v5924
    %v5926 = vrot.slane %v5925, 2
    %v5927 = vadd.f32 %v5925, %v5926
    %v5928 = vrot.slane %v5927, 1
    %v5929 = vadd.f32 %v5927, %v5928
    %5930 = vmatprep.subr.mxu0 0.0
    %5931 = vmatpush1.msra.mxu0 %v5916
    %5932 = vmatprep.subr.mxu0 0.0
    %5933 = vmatpush1.msra.mxu0 %v5915
    %5934 = vmatprep.subr.mxu0 0.0
    %5935 = vmatpush1.msra.mxu0 %v5914
    %5936 = vmatprep.subr.mxu0 0.0
    %5937 = vmatpush1.msra.mxu0 %v5913
    %5938 = vmatprep.subr.mxu0 0.0
    %5939 = vmatpush1.msra.mxu0 %v5912
    %5940 = vmatprep.subr.mxu0 0.0
    %5941 = vmatpush1.msra.mxu0 %v5911
    %5942 = vmatprep.subr.mxu0 0.0
    %5943 = vmatpush1.msra.mxu0 %v5910
    %5944 = vmatprep.subr.mxu0 0.0
    %5945 = vmatpush1.msra.mxu0 %v5909
    %5946 = vmatprep.subr.mxu0 0.0
    %5947 = vmatpush1.msra.mxu0 %v5908
    %5948 = vmatprep.subr.mxu0 0.0
    %5949 = vmatpush1.msra.mxu0 %v5907
    %5950 = vmatprep.subr.mxu0 0.0
    %5951 = vmatpush1.msra.mxu0 %v5906
    %5952 = vmatprep.subr.mxu0 0.0
    %5953 = vmatpush1.msra.mxu0 %v5905
    %5954 = vmatprep.subr.mxu0 0.0
    %5955 = vmatpush1.msra.mxu0 %v5904
    %5956 = vmatprep.subr.mxu0 0.0
    %5957 = vmatpush1.msra.mxu0 %v5903
    %5958 = vmatprep.subr.mxu0 0.0
    %5959 = vmatpush1.msra.mxu0 %v5902
    %5960 = vmatprep.subr.mxu0 0.0
    %5961 = vmatpush1.msra.mxu0 %v5901
    %5962 = vmatprep.subr.mxu0 0.0
    %5963 = vmatpush2.msra.mxu0 0.0
    %5964 = vmatprep.subr.mxu0 0.0
    %5965 = vmatpush2.msra.mxu0 0.0
    %5966 = vmatprep.subr.mxu0 0.0
    %5967 = vmatpush2.msra.mxu0 0.0
    %5968 = vmatprep.subr.mxu0 0.0
    %5969 = vmatpush2.msra.mxu0 0.0
    %5970 = vmatprep.subr.mxu0 0.0
    %5971 = vmatpush2.msra.mxu0 0.0
    %5972 = vmatprep.subr.mxu0 0.0
    %5973 = vmatpush2.msra.mxu0 0.0
    %5974 = vmatprep.subr.mxu0 0.0
    %5975 = vmatpush2.msra.mxu0 0.0
    %5976 = vmatprep.subr.mxu0 0.0
    %5977 = vmatpush2.msra.mxu0 0.0
    %5978 = vmatprep.subr.mxu0 0.0
    %5979 = vmatpush2.msra.mxu0 0.0
    %5980 = vmatprep.subr.mxu0 0.0
    %5981 = vmatpush2.msra.mxu0 0.0
    %5982 = vmatprep.subr.mxu0 0.0
    %5983 = vmatpush2.msra.mxu0 0.0
    %5984 = vmatprep.subr.mxu0 0.0
    %5985 = vmatpush2.msra.mxu0 0.0
    %5986 = vmatprep.subr.mxu0 0.0
    %5987 = vmatpush2.msra.mxu0 0.0
    %5988 = vmatprep.subr.mxu0 0.0
    %5989 = vmatpush2.msra.mxu0 0.0
    %5990 = vmatprep.subr.mxu0 0.0
    %5991 = vmatpush2.msra.mxu0 0.0
    %5992 = vmatprep.subr.mxu0 0.0
    %5993 = vmatpush2.msra.mxu0 0.0
    %5994 = vmatprep.mubr.f32.mxu0 0.0
    %5995 = vmatmul.mubr.f32.gmra.mxu0 %v5929
    %v5996 = vpop.f32.mrf.mxu0
    %v5997 = vadd.f32 0.0, %v5996
    %v5998 = vpop.f32.mrf.mxu0
    %5999 = vdwg.mxu0
    %v6000 = vmul.f32 %v5997, 0.001953125
    %v6001 = vlaneseq
    %v6002 = vshrl.u32 %v6001, 7
    %v6003 = vsub.s32 0, %v6002
    %v6004 = vrot.slane %v6000, %v6003
    %v6005 = vsub.f32 %v5839, %v6004
    %v6006 = vsub.f32 %v5842, %v6004
    %v6007 = vsub.f32 %v5847, %v6004
    %v6008 = vsub.f32 %v5850, %v6004
    %v6009 = vsub.f32 %v5855, %v6004
    %v6010 = vsub.f32 %v5858, %v6004
    %v6011 = vsub.f32 %v5863, %v6004
    %v6012 = vsub.f32 %v5866, %v6004
    %v6013 = vmul.f32 %v6005, %v6005
    %v6014 = vmul.f32 %v6006, %v6006
    %v6015 = vmul.f32 %v6007, %v6007
    %v6016 = vmul.f32 %v6008, %v6008
    %v6017 = vmul.f32 %v6009, %v6009
    %v6018 = vmul.f32 %v6010, %v6010
    %v6019 = vmul.f32 %v6011, %v6011
    %v6020 = vmul.f32 %v6012, %v6012
    %v6021 = vadd.f32 %v6013, %v6014
    %v6022 = vadd.f32 %v6021, %v6015
    %v6023 = vadd.f32 %v6022, %v6016
    %v6024 = vadd.f32 %v6023, %v6017
    %v6025 = vadd.f32 %v6024, %v6018
    %v6026 = vadd.f32 %v6025, %v6019
    %v6027 = vadd.f32 %v6026, %v6020
    %v6028 = vrot.slane %v6027, 4
    %v6029 = vadd.f32 %v6027, %v6028
    %v6030 = vrot.slane %v6029, 2
    %v6031 = vadd.f32 %v6029, %v6030
    %v6032 = vrot.slane %v6031, 1
    %v6033 = vadd.f32 %v6031, %v6032
    %6034 = vmatprep.subr.mxu0 0.0
    %6035 = vmatpush1.msra.mxu0 %v5916
    %6036 = vmatprep.subr.mxu0 0.0
    %6037 = vmatpush1.msra.mxu0 %v5915
    %6038 = vmatprep.subr.mxu0 0.0
    %6039 = vmatpush1.msra.mxu0 %v5914
    %6040 = vmatprep.subr.mxu0 0.0
    %6041 = vmatpush1.msra.mxu0 %v5913
    %6042 = vmatprep.subr.mxu0 0.0
    %6043 = vmatpush1.msra.mxu0 %v5912
    %6044 = vmatprep.subr.mxu0 0.0
    %6045 = vmatpush1.msra.mxu0 %v5911
    %6046 = vmatprep.subr.mxu0 0.0
    %6047 = vmatpush1.msra.mxu0 %v5910
    %6048 = vmatprep.subr.mxu0 0.0
    %6049 = vmatpush1.msra.mxu0 %v5909
    %6050 = vmatprep.subr.mxu0 0.0
    %6051 = vmatpush1.msra.mxu0 %v5908
    %6052 = vmatprep.subr.mxu0 0.0
    %6053 = vmatpush1.msra.mxu0 %v5907
    %6054 = vmatprep.subr.mxu0 0.0
    %6055 = vmatpush1.msra.mxu0 %v5906
    %6056 = vmatprep.subr.mxu0 0.0
    %6057 = vmatpush1.msra.mxu0 %v5905
    %6058 = vmatprep.subr.mxu0 0.0
    %6059 = vmatpush1.msra.mxu0 %v5904
    %6060 = vmatprep.subr.mxu0 0.0
    %6061 = vmatpush1.msra.mxu0 %v5903
    %6062 = vmatprep.subr.mxu0 0.0
    %6063 = vmatpush1.msra.mxu0 %v5902
    %6064 = vmatprep.subr.mxu0 0.0
    %6065 = vmatpush1.msra.mxu0 %v5901
    %6066 = vmatprep.subr.mxu0 0.0
    %6067 = vmatpush2.msra.mxu0 0.0
    %6068 = vmatprep.subr.mxu0 0.0
    %6069 = vmatpush2.msra.mxu0 0.0
    %6070 = vmatprep.subr.mxu0 0.0
    %6071 = vmatpush2.msra.mxu0 0.0
    %6072 = vmatprep.subr.mxu0 0.0
    %6073 = vmatpush2.msra.mxu0 0.0
    %6074 = vmatprep.subr.mxu0 0.0
    %6075 = vmatpush2.msra.mxu0 0.0
    %6076 = vmatprep.subr.mxu0 0.0
    %6077 = vmatpush2.msra.mxu0 0.0
    %6078 = vmatprep.subr.mxu0 0.0
    %6079 = vmatpush2.msra.mxu0 0.0
    %6080 = vmatprep.subr.mxu0 0.0
    %6081 = vmatpush2.msra.mxu0 0.0
    %6082 = vmatprep.subr.mxu0 0.0
    %6083 = vmatpush2.msra.mxu0 0.0
    %6084 = vmatprep.subr.mxu0 0.0
    %6085 = vmatpush2.msra.mxu0 0.0
    %6086 = vmatprep.subr.mxu0 0.0
    %6087 = vmatpush2.msra.mxu0 0.0
    %6088 = vmatprep.subr.mxu0 0.0
    %6089 = vmatpush2.msra.mxu0 0.0
    %6090 = vmatprep.subr.mxu0 0.0
    %6091 = vmatpush2.msra.mxu0 0.0
    %6092 = vmatprep.subr.mxu0 0.0
    %6093 = vmatpush2.msra.mxu0 0.0
    %6094 = vmatprep.subr.mxu0 0.0
    %6095 = vmatpush2.msra.mxu0 0.0
    %6096 = vmatprep.subr.mxu0 0.0
    %6097 = vmatpush2.msra.mxu0 0.0
    %6098 = vmatprep.mubr.f32.mxu0 0.0
    %6099 = vmatmul.mubr.f32.gmra.mxu0 %v6033
    %v6100 = vpop.f32.mrf.mxu0
    %v6101 = vadd.f32 0.0, %v6100
    %v6102 = vpop.f32.mrf.mxu0
    %6103 = vdwg.mxu0
    %v6104 = vmul.f32 %v6101, 0.001953125
    %v6105 = vadd.f32 %v6104, 1e-05
    %v6106 = vrsqrt.pop %v6105
    %v6107 = vlaneseq
    %v6108 = vshrl.u32 %v6107, 7
    %v6109 = vsub.s32 0, %v6108
    %v6110 = vrot.slane %v6106, %v6109
    %v6111 = vmul.f32 %v6005, %v6110
    %v6112 = vmul.f32 %v6006, %v6110
    %v6113 = vmul.f32 %v6007, %v6110
    %v6114 = vmul.f32 %v6008, %v6110
    %v6115 = vmul.f32 %v6009, %v6110
    %v6116 = vmul.f32 %v6010, %v6110
    %v6117 = vmul.f32 %v6011, %v6110
    %v6118 = vmul.f32 %v6012, %v6110
    %v6119 = vxor.u32 %v6111, 2147483648
    %v6120 = vxor.u32 %v6112, 2147483648
    %v6121 = vxor.u32 %v6113, 2147483648
    %v6122 = vxor.u32 %v6114, 2147483648
    %v6123 = vxor.u32 %v6115, 2147483648
    %v6124 = vxor.u32 %v6116, 2147483648
    %v6125 = vxor.u32 %v6117, 2147483648
    %v6126 = vxor.u32 %v6118, 2147483648
    %v6127 = vmul.f32 %v6119, 1.442695
    %v6128 = vpow.pop %v6127
    %v6129 = vmul.f32 %v6120, 1.442695
    %v6130 = vpow.pop %v6129
    %v6131 = vmul.f32 %v6121, 1.442695
    %v6132 = vpow.pop %v6131
    %v6133 = vmul.f32 %v6122, 1.442695
    %v6134 = vpow.pop %v6133
    %v6135 = vmul.f32 %v6123, 1.442695
    %v6136 = vpow.pop %v6135
    %v6137 = vmul.f32 %v6124, 1.442695
    %v6138 = vpow.pop %v6137
    %v6139 = vmul.f32 %v6125, 1.442695
    %v6140 = vpow.pop %v6139
    %v6141 = vmul.f32 %v6126, 1.442695
    %v6142 = vpow.pop %v6141
    %v6143 = vadd.f32 %v6128, 1.0
    %v6144 = vadd.f32 %v6130, 1.0
    %v6145 = vadd.f32 %v6132, 1.0
    %v6146 = vadd.f32 %v6134, 1.0
    %v6147 = vadd.f32 %v6136, 1.0
    %v6148 = vadd.f32 %v6138, 1.0
    %v6149 = vadd.f32 %v6140, 1.0
    %v6150 = vadd.f32 %v6142, 1.0
    %v6151 = vrcp.pop %v6143
    %v6152 = vmul.f32 1.0, %v6151
    %v6153 = vrcp.pop %v6144
    %v6154 = vmul.f32 1.0, %v6153
    %v6155 = vrcp.pop %v6145
    %v6156 = vmul.f32 1.0, %v6155
    %v6157 = vrcp.pop %v6146
    %v6158 = vmul.f32 1.0, %v6157
    %v6159 = vrcp.pop %v6147
    %v6160 = vmul.f32 1.0, %v6159
    %v6161 = vrcp.pop %v6148
    %v6162 = vmul.f32 1.0, %v6161
    %v6163 = vrcp.pop %v6149
    %v6164 = vmul.f32 1.0, %v6163
    %v6165 = vrcp.pop %v6150
    %v6166 = vmul.f32 1.0, %v6165
    %v6167 = vmul.f32 %v6111, %v6152
    %v6168 = vmul.f32 %v6112, %v6154
    %v6169 = vmul.f32 %v6113, %v6156
    %v6170 = vmul.f32 %v6114, %v6158
    %v6171 = vmul.f32 %v6115, %v6160
    %v6172 = vmul.f32 %v6116, %v6162
    %v6173 = vmul.f32 %v6117, %v6164
    %v6174 = vmul.f32 %v6118, %v6166
    %v6175 = vadd.f32 %v5871, %v5874
    %v6176 = vadd.f32 %v6175, %v5879
    %v6177 = vadd.f32 %v6176, %v5882
    %v6178 = vadd.f32 %v6177, %v5887
    %v6179 = vadd.f32 %v6178, %v5890
    %v6180 = vadd.f32 %v6179, %v5895
    %v6181 = vadd.f32 %v6180, %v5898
    %v6182 = vrot.slane %v6181, 4
    %v6183 = vadd.f32 %v6181, %v6182
    %v6184 = vrot.slane %v6183, 2
    %v6185 = vadd.f32 %v6183, %v6184
    %v6186 = vrot.slane %v6185, 1
    %v6187 = vadd.f32 %v6185, %v6186
    %6188 = vmatprep.subr.mxu0 0.0
    %6189 = vmatpush1.msra.mxu0 %v5916
    %6190 = vmatprep.subr.mxu0 0.0
    %6191 = vmatpush1.msra.mxu0 %v5915
    %6192 = vmatprep.subr.mxu0 0.0
    %6193 = vmatpush1.msra.mxu0 %v5914
    %6194 = vmatprep.subr.mxu0 0.0
    %6195 = vmatpush1.msra.mxu0 %v5913
    %6196 = vmatprep.subr.mxu0 0.0
    %6197 = vmatpush1.msra.mxu0 %v5912
    %6198 = vmatprep.subr.mxu0 0.0
    %6199 = vmatpush1.msra.mxu0 %v5911
    %6200 = vmatprep.subr.mxu0 0.0
    %6201 = vmatpush1.msra.mxu0 %v5910
    %6202 = vmatprep.subr.mxu0 0.0
    %6203 = vmatpush1.msra.mxu0 %v5909
    %6204 = vmatprep.subr.mxu0 0.0
    %6205 = vmatpush1.msra.mxu0 %v5908
    %6206 = vmatprep.subr.mxu0 0.0
    %6207 = vmatpush1.msra.mxu0 %v5907
    %6208 = vmatprep.subr.mxu0 0.0
    %6209 = vmatpush1.msra.mxu0 %v5906
    %6210 = vmatprep.subr.mxu0 0.0
    %6211 = vmatpush1.msra.mxu0 %v5905
    %6212 = vmatprep.subr.mxu0 0.0
    %6213 = vmatpush1.msra.mxu0 %v5904
    %6214 = vmatprep.subr.mxu0 0.0
    %6215 = vmatpush1.msra.mxu0 %v5903
    %6216 = vmatprep.subr.mxu0 0.0
    %6217 = vmatpush1.msra.mxu0 %v5902
    %6218 = vmatprep.subr.mxu0 0.0
    %6219 = vmatpush1.msra.mxu0 %v5901
    %6220 = vmatprep.subr.mxu0 0.0
    %6221 = vmatpush2.msra.mxu0 0.0
    %6222 = vmatprep.subr.mxu0 0.0
    %6223 = vmatpush2.msra.mxu0 0.0
    %6224 = vmatprep.subr.mxu0 0.0
    %6225 = vmatpush2.msra.mxu0 0.0
    %6226 = vmatprep.subr.mxu0 0.0
    %6227 = vmatpush2.msra.mxu0 0.0
    %6228 = vmatprep.subr.mxu0 0.0
    %6229 = vmatpush2.msra.mxu0 0.0
    %6230 = vmatprep.subr.mxu0 0.0
    %6231 = vmatpush2.msra.mxu0 0.0
    %6232 = vmatprep.subr.mxu0 0.0
    %6233 = vmatpush2.msra.mxu0 0.0
    %6234 = vmatprep.subr.mxu0 0.0
    %6235 = vmatpush2.msra.mxu0 0.0
    %6236 = vmatprep.subr.mxu0 0.0
    %6237 = vmatpush2.msra.mxu0 0.0
    %6238 = vmatprep.subr.mxu0 0.0
    %6239 = vmatpush2.msra.mxu0 0.0
    %6240 = vmatprep.subr.mxu0 0.0
    %6241 = vmatpush2.msra.mxu0 0.0
    %6242 = vmatprep.subr.mxu0 0.0
    %6243 = vmatpush2.msra.mxu0 0.0
    %6244 = vmatprep.subr.mxu0 0.0
    %6245 = vmatpush2.msra.mxu0 0.0
    %6246 = vmatprep.subr.mxu0 0.0
    %6247 = vmatpush2.msra.mxu0 0.0
    %6248 = vmatprep.subr.mxu0 0.0
    %6249 = vmatpush2.msra.mxu0 0.0
    %6250 = vmatprep.subr.mxu0 0.0
    %6251 = vmatpush2.msra.mxu0 0.0
    %6252 = vmatprep.mubr.f32.mxu0 0.0
    %6253 = vmatmul.mubr.f32.gmra.mxu0 %v6187
    %v6254 = vpop.f32.mrf.mxu0
    %v6255 = vadd.f32 0.0, %v6254
    %v6256 = vpop.f32.mrf.mxu0
    %6257 = vdwg.mxu0
    %v6258 = vmul.f32 %v6255, 0.001953125
    %v6259 = vlaneseq
    %v6260 = vshrl.u32 %v6259, 7
    %v6261 = vsub.s32 0, %v6260
    %v6262 = vrot.slane %v6258, %v6261
    %v6263 = vsub.f32 %v5871, %v6262
    %v6264 = vsub.f32 %v5874, %v6262
    %v6265 = vsub.f32 %v5879, %v6262
    %v6266 = vsub.f32 %v5882, %v6262
    %v6267 = vsub.f32 %v5887, %v6262
    %v6268 = vsub.f32 %v5890, %v6262
    %v6269 = vsub.f32 %v5895, %v6262
    %v6270 = vsub.f32 %v5898, %v6262
    %v6271 = vmul.f32 %v6263, %v6263
    %v6272 = vmul.f32 %v6264, %v6264
    %v6273 = vmul.f32 %v6265, %v6265
    %v6274 = vmul.f32 %v6266, %v6266
    %v6275 = vmul.f32 %v6267, %v6267
    %v6276 = vmul.f32 %v6268, %v6268
    %v6277 = vmul.f32 %v6269, %v6269
    %v6278 = vmul.f32 %v6270, %v6270
    %v6279 = vadd.f32 %v6271, %v6272
    %v6280 = vadd.f32 %v6279, %v6273
    %v6281 = vadd.f32 %v6280, %v6274
    %v6282 = vadd.f32 %v6281, %v6275
    %v6283 = vadd.f32 %v6282, %v6276
    %v6284 = vadd.f32 %v6283, %v6277
    %v6285 = vadd.f32 %v6284, %v6278
    %v6286 = vrot.slane %v6285, 4
    %v6287 = vadd.f32 %v6285, %v6286
    %v6288 = vrot.slane %v6287, 2
    %v6289 = vadd.f32 %v6287, %v6288
    %v6290 = vrot.slane %v6289, 1
    %v6291 = vadd.f32 %v6289, %v6290
    %6292 = vmatprep.subr.mxu0 0.0
    %6293 = vmatpush1.msra.mxu0 %v5916
    %6294 = vmatprep.subr.mxu0 0.0
    %6295 = vmatpush1.msra.mxu0 %v5915
    %6296 = vmatprep.subr.mxu0 0.0
    %6297 = vmatpush1.msra.mxu0 %v5914
    %6298 = vmatprep.subr.mxu0 0.0
    %6299 = vmatpush1.msra.mxu0 %v5913
    %6300 = vmatprep.subr.mxu0 0.0
    %6301 = vmatpush1.msra.mxu0 %v5912
    %6302 = vmatprep.subr.mxu0 0.0
    %6303 = vmatpush1.msra.mxu0 %v5911
    %6304 = vmatprep.subr.mxu0 0.0
    %6305 = vmatpush1.msra.mxu0 %v5910
    %6306 = vmatprep.subr.mxu0 0.0
    %6307 = vmatpush1.msra.mxu0 %v5909
    %6308 = vmatprep.subr.mxu0 0.0
    %6309 = vmatpush1.msra.mxu0 %v5908
    %6310 = vmatprep.subr.mxu0 0.0
    %6311 = vmatpush1.msra.mxu0 %v5907
    %6312 = vmatprep.subr.mxu0 0.0
    %6313 = vmatpush1.msra.mxu0 %v5906
    %6314 = vmatprep.subr.mxu0 0.0
    %6315 = vmatpush1.msra.mxu0 %v5905
    %6316 = vmatprep.subr.mxu0 0.0
    %6317 = vmatpush1.msra.mxu0 %v5904
    %6318 = vmatprep.subr.mxu0 0.0
    %6319 = vmatpush1.msra.mxu0 %v5903
    %6320 = vmatprep.subr.mxu0 0.0
    %6321 = vmatpush1.msra.mxu0 %v5902
    %6322 = vmatprep.subr.mxu0 0.0
    %6323 = vmatpush1.msra.mxu0 %v5901
    %6324 = vmatprep.subr.mxu0 0.0
    %6325 = vmatpush2.msra.mxu0 0.0
    %6326 = vmatprep.subr.mxu0 0.0
    %6327 = vmatpush2.msra.mxu0 0.0
    %6328 = vmatprep.subr.mxu0 0.0
    %6329 = vmatpush2.msra.mxu0 0.0
    %6330 = vmatprep.subr.mxu0 0.0
    %6331 = vmatpush2.msra.mxu0 0.0
    %6332 = vmatprep.subr.mxu0 0.0
    %6333 = vmatpush2.msra.mxu0 0.0
    %6334 = vmatprep.subr.mxu0 0.0
    %6335 = vmatpush2.msra.mxu0 0.0
    %6336 = vmatprep.subr.mxu0 0.0
    %6337 = vmatpush2.msra.mxu0 0.0
    %6338 = vmatprep.subr.mxu0 0.0
    %6339 = vmatpush2.msra.mxu0 0.0
    %6340 = vmatprep.subr.mxu0 0.0
    %6341 = vmatpush2.msra.mxu0 0.0
    %6342 = vmatprep.subr.mxu0 0.0
    %6343 = vmatpush2.msra.mxu0 0.0
    %6344 = vmatprep.subr.mxu0 0.0
    %6345 = vmatpush2.msra.mxu0 0.0
    %6346 = vmatprep.subr.mxu0 0.0
    %6347 = vmatpush2.msra.mxu0 0.0
    %6348 = vmatprep.subr.mxu0 0.0
    %6349 = vmatpush2.msra.mxu0 0.0
    %6350 = vmatprep.subr.mxu0 0.0
    %6351 = vmatpush2.msra.mxu0 0.0
    %6352 = vmatprep.subr.mxu0 0.0
    %6353 = vmatpush2.msra.mxu0 0.0
    %6354 = vmatprep.subr.mxu0 0.0
    %6355 = vmatpush2.msra.mxu0 0.0
    %6356 = vmatprep.mubr.f32.mxu0 0.0
    %6357 = vmatmul.mubr.f32.gmra.mxu0 %v6291
    %v6358 = vpop.f32.mrf.mxu0
    %v6359 = vadd.f32 0.0, %v6358
    %v6360 = vpop.f32.mrf.mxu0
    %6361 = vdwg.mxu0
    %v6362 = vmul.f32 %v6359, 0.001953125
    %v6363 = vadd.f32 %v6362, 1e-05
    %v6364 = vrsqrt.pop %v6363
    %v6365 = vlaneseq
    %v6366 = vshrl.u32 %v6365, 7
    %v6367 = vsub.s32 0, %v6366
    %v6368 = vrot.slane %v6364, %v6367
    %v6369 = vmul.f32 %v6263, %v6368
    %v6370 = vmul.f32 %v6264, %v6368
    %v6371 = vmul.f32 %v6265, %v6368
    %v6372 = vmul.f32 %v6266, %v6368
    %v6373 = vmul.f32 %v6267, %v6368
    %v6374 = vmul.f32 %v6268, %v6368
    %v6375 = vmul.f32 %v6269, %v6368
    %v6376 = vmul.f32 %v6270, %v6368
    %v6377 = vxor.u32 %v6369, 2147483648
    %v6378 = vxor.u32 %v6370, 2147483648
    %v6379 = vxor.u32 %v6371, 2147483648
    %v6380 = vxor.u32 %v6372, 2147483648
    %v6381 = vxor.u32 %v6373, 2147483648
    %v6382 = vxor.u32 %v6374, 2147483648
    %v6383 = vxor.u32 %v6375, 2147483648
    %v6384 = vxor.u32 %v6376, 2147483648
    %v6385 = vmul.f32 %v6377, 1.442695
    %v6386 = vpow.pop %v6385
    %v6387 = vmul.f32 %v6378, 1.442695
    %v6388 = vpow.pop %v6387
    %v6389 = vmul.f32 %v6379, 1.442695
    %v6390 = vpow.pop %v6389
    %v6391 = vmul.f32 %v6380, 1.442695
    %v6392 = vpow.pop %v6391
    %v6393 = vmul.f32 %v6381, 1.442695
    %v6394 = vpow.pop %v6393
    %v6395 = vmul.f32 %v6382, 1.442695
    %v6396 = vpow.pop %v6395
    %v6397 = vmul.f32 %v6383, 1.442695
    %v6398 = vpow.pop %v6397
    %v6399 = vmul.f32 %v6384, 1.442695
    %v6400 = vpow.pop %v6399
    %v6401 = vadd.f32 %v6386, 1.0
    %v6402 = vadd.f32 %v6388, 1.0
    %v6403 = vadd.f32 %v6390, 1.0
    %v6404 = vadd.f32 %v6392, 1.0
    %v6405 = vadd.f32 %v6394, 1.0
    %v6406 = vadd.f32 %v6396, 1.0
    %v6407 = vadd.f32 %v6398, 1.0
    %v6408 = vadd.f32 %v6400, 1.0
    %v6409 = vrcp.pop %v6401
    %v6410 = vmul.f32 1.0, %v6409
    %v6411 = vrcp.pop %v6402
    %v6412 = vmul.f32 1.0, %v6411
    %v6413 = vrcp.pop %v6403
    %v6414 = vmul.f32 1.0, %v6413
    %v6415 = vrcp.pop %v6404
    %v6416 = vmul.f32 1.0, %v6415
    %v6417 = vrcp.pop %v6405
    %v6418 = vmul.f32 1.0, %v6417
    %v6419 = vrcp.pop %v6406
    %v6420 = vmul.f32 1.0, %v6419
    %v6421 = vrcp.pop %v6407
    %v6422 = vmul.f32 1.0, %v6421
    %v6423 = vrcp.pop %v6408
    %v6424 = vmul.f32 1.0, %v6423
    %v6425 = vmul.f32 %v6369, %v6410
    %v6426 = vmul.f32 %v6370, %v6412
    %v6427 = vmul.f32 %v6371, %v6414
    %v6428 = vmul.f32 %v6372, %v6416
    %v6429 = vmul.f32 %v6373, %v6418
    %v6430 = vmul.f32 %v6374, %v6420
    %v6431 = vmul.f32 %v6375, %v6422
    %v6432 = vmul.f32 %v6376, %v6424
    %v6433 = vpack.c.bf16 %v6168, %v6167
    %v6434 = vpack.c.bf16 %v6170, %v6169
    %v6435 = vpack.c.bf16 %v6172, %v6171
    %v6436 = vpack.c.bf16 %v6174, %v6173
    %v6437 = vpack.c.bf16 %v6426, %v6425
    %v6438 = vpack.c.bf16 %v6428, %v6427
    %v6439 = vpack.c.bf16 %v6430, %v6429
    %v6440 = vpack.c.bf16 %v6432, %v6431
    %v6449 = vunpack.c.l.b16 %v6433
    %v6450 = vunpack.c.h.b16 %v6433
    %v6451 = vunpack.c.l.b16 %v6434
    %v6452 = vunpack.c.h.b16 %v6434
    %v6453 = vunpack.c.l.b16 %v6435
    %v6454 = vunpack.c.h.b16 %v6435
    %v6455 = vunpack.c.l.b16 %v6436
    %v6456 = vunpack.c.h.b16 %v6436
    %v6457 = vunpack.c.l.b16 %v6437
    %v6458 = vunpack.c.h.b16 %v6437
    %v6459 = vunpack.c.l.b16 %v6438
    %v6460 = vunpack.c.h.b16 %v6438
    %v6461 = vunpack.c.l.b16 %v6439
    %v6462 = vunpack.c.h.b16 %v6439
    %v6463 = vunpack.c.l.b16 %v6440
    %v6464 = vunpack.c.h.b16 %v6440
    %v6465 = vpack.c.b16 %v6449, %v6449
    %v6466 = vpack.c.b16 %v6450, %v6450
    %v6467 = vpack.c.b16 %v6451, %v6451
    %v6468 = vpack.c.b16 %v6452, %v6452
    %v6469 = vpack.c.b16 %v6453, %v6453
    %v6470 = vpack.c.b16 %v6454, %v6454
    %v6471 = vpack.c.b16 %v6455, %v6455
    %v6472 = vpack.c.b16 %v6456, %v6456
    %v6473 = vpack.c.b16 %v6457, %v6457
    %v6474 = vpack.c.b16 %v6458, %v6458
    %v6475 = vpack.c.b16 %v6459, %v6459
    %v6476 = vpack.c.b16 %v6460, %v6460
    %v6477 = vpack.c.b16 %v6461, %v6461
    %v6478 = vpack.c.b16 %v6462, %v6462
    %v6479 = vpack.c.b16 %v6463, %v6463
    %v6480 = vpack.c.b16 %v6464, %v6464
    %6497 = vst [vmem:[#allocation3 + $0x8] sm:$0xf] %v6465
    %6498 = vst [vmem:[#allocation3 + $0xc] sm:$0xf] %v6466
    %6499 = vst [vmem:[#allocation3 + $0x10] sm:$0xf] %v6467
    %6500 = vst [vmem:[#allocation3 + $0x14] sm:$0xf] %v6468
    %6501 = vst [vmem:[#allocation3 + $0x18] sm:$0xf] %v6469
    %6502 = vst [vmem:[#allocation3 + $0x1c] sm:$0xf] %v6470
    %6503 = vst [vmem:[#allocation3 + $0x20] sm:$0xf] %v6471
    %6504 = vst [vmem:[#allocation3 + $0x24] sm:$0xf] %v6472
    %6505 = vst [vmem:[#allocation3 + $0x28] sm:$0xf] %v6473
    %6506 = vst [vmem:[#allocation3 + $0x2c] sm:$0xf] %v6474
    %6507 = vst [vmem:[#allocation3 + $0x30] sm:$0xf] %v6475
    %6508 = vst [vmem:[#allocation3 + $0x34] sm:$0xf] %v6476
    %6509 = vst [vmem:[#allocation3 + $0x38] sm:$0xf] %v6477
    %6510 = vst [vmem:[#allocation3 + $0x3c] sm:$0xf] %v6478
    %6511 = vst [vmem:[#allocation3 + $0x40] sm:$0xf] %v6479
    %6512 = vst [vmem:[#allocation3 + $0x44] sm:$0xf] %v6480
    %v6513 = vld [vmem:[#allocation3] sm:$0x8]
    %v6514 = vld [vmem:[#allocation3 + $0x4] sm:$0xf]
    %v6515 = vld [vmem:[#allocation3 + $0x8] sm:$0xf]
    %v6516 = vld [vmem:[#allocation3 + $0xc] sm:$0xf]
    %v6517 = vld [vmem:[#allocation3 + $0x10] sm:$0xf]
    %v6518 = vld [vmem:[#allocation3 + $0x14] sm:$0xf]
    %v6519 = vld [vmem:[#allocation3 + $0x18] sm:$0xf]
    %v6520 = vld [vmem:[#allocation3 + $0x1c] sm:$0xf]
    %v6521 = vld [vmem:[#allocation3 + $0x20] sm:$0xf]
    %v6522 = vld [vmem:[#allocation3 + $0x24] sm:$0xf]
    %v6523 = vld [vmem:[#allocation3 + $0x28] sm:$0xf]
    %v6524 = vld [vmem:[#allocation3 + $0x2c] sm:$0xf]
    %v6525 = vld [vmem:[#allocation3 + $0x30] sm:$0xf]
    %v6526 = vld [vmem:[#allocation3 + $0x34] sm:$0xf]
    %v6527 = vld [vmem:[#allocation3 + $0x38] sm:$0xf]
    %v6528 = vld [vmem:[#allocation3 + $0x3c] sm:$0xf]
    %v6529 = vld [vmem:[#allocation3 + $0x40] sm:$0xf]
    %v6530 = vmul.bf16 %v6513, %v968
    %v6531 = vmul.bf16 %v6514, %v978
    %v6532 = vmul.bf16 %v6515, %v988
    %v6533 = vmul.bf16 %v6516, %v998
    %v6534 = vmul.bf16 %v6517, %v1008
    %v6535 = vmul.bf16 %v6518, %v1018
    %v6536 = vmul.bf16 %v6519, %v1028
    %v6537 = vmul.bf16 %v6520, %v1038
    %v6538 = vmul.bf16 %v6521, %v1048
    %v6539 = vmul.bf16 %v6522, %v1058
    %v6540 = vmul.bf16 %v6523, %v1068
    %v6541 = vmul.bf16 %v6524, %v1078
    %v6542 = vmul.bf16 %v6525, %v1088
    %v6543 = vmul.bf16 %v6526, %v1098
    %v6544 = vmul.bf16 %v6527, %v1108
    %v6545 = vmul.bf16 %v6528, %v1118
    %v6546 = vmul.bf16 %v6529, %v1123
    %v6547 = vmul.bf16 %v6514, %v1168
    %v6548 = vmul.bf16 %v6515, %v1179
    %v6549 = vmul.bf16 %v6516, %v1190
    %v6550 = vmul.bf16 %v6517, %v1201
    %v6551 = vmul.bf16 %v6518, %v1212
    %v6552 = vmul.bf16 %v6519, %v1223
    %v6553 = vmul.bf16 %v6520, %v1234
    %v6554 = vmul.bf16 %v6521, %v1245
    %v6555 = vmul.bf16 %v6522, %v1256
    %v6556 = vmul.bf16 %v6523, %v1267
    %v6557 = vmul.bf16 %v6524, %v1278
    %v6558 = vmul.bf16 %v6525, %v1289
    %v6559 = vmul.bf16 %v6526, %v1300
    %v6560 = vmul.bf16 %v6527, %v1311
    %v6561 = vmul.bf16 %v6528, %v1322
    %v6562 = vmul.bf16 %v6529, %v1333
    %v6563 = vld [vmem:[#allocation3 + $0x44] sm:$0x1]
    %v6564 = vmul.bf16 %v6514, %v1552
    %v6565 = vmul.bf16 %v6515, %v1561
    %v6566 = vmul.bf16 %v6516, %v1570
    %v6567 = vmul.bf16 %v6517, %v1579
    %v6568 = vmul.bf16 %v6518, %v1588
    %v6569 = vmul.bf16 %v6519, %v1597
    %v6570 = vmul.bf16 %v6520, %v1606
    %v6571 = vmul.bf16 %v6521, %v1615
    %v6572 = vmul.bf16 %v6522, %v1624
    %v6573 = vmul.bf16 %v6523, %v1633
    %v6574 = vmul.bf16 %v6524, %v1642
    %v6575 = vmul.bf16 %v6525, %v1651
    %v6576 = vmul.bf16 %v6526, %v1660
    %v6577 = vmul.bf16 %v6527, %v1669
    %v6578 = vmul.bf16 %v6528, %v1678
    %v6579 = vmul.bf16 %v6529, %v1687
    %v6580 = vmul.bf16 %v6563, %v1688
    %v6581 = vld [vmem:[#allocation3 + $0x4] sm:$0x8]
    %v6582 = vld [vmem:[#allocation3 + $0x44] sm:$0xf]
    %v6583 = vmul.bf16 %v6581, %v1904
    %v6584 = vmul.bf16 %v6515, %v1914
    %v6585 = vmul.bf16 %v6516, %v1924
    %v6586 = vmul.bf16 %v6517, %v1934
    %v6587 = vmul.bf16 %v6518, %v1944
    %v6588 = vmul.bf16 %v6519, %v1954
    %v6589 = vmul.bf16 %v6520, %v1964
    %v6590 = vmul.bf16 %v6521, %v1974
    %v6591 = vmul.bf16 %v6522, %v1984
    %v6592 = vmul.bf16 %v6523, %v1994
    %v6593 = vmul.bf16 %v6524, %v2004
    %v6594 = vmul.bf16 %v6525, %v2014
    %v6595 = vmul.bf16 %v6526, %v2024
    %v6596 = vmul.bf16 %v6527, %v2034
    %v6597 = vmul.bf16 %v6528, %v2044
    %v6598 = vmul.bf16 %v6529, %v2054
    %v6599 = vmul.bf16 %v6582, %v2059
    %v6600 = vld [vmem:[#allocation3 + $0x48] sm:$0x1]
    %v6601 = vmul.bf16 %v6515, %v2293
    %v6602 = vmul.bf16 %v6516, %v2302
    %v6603 = vmul.bf16 %v6517, %v2311
    %v6604 = vmul.bf16 %v6518, %v2320
    %v6605 = vmul.bf16 %v6519, %v2329
    %v6606 = vmul.bf16 %v6520, %v2338
    %v6607 = vmul.bf16 %v6521, %v2347
    %v6608 = vmul.bf16 %v6522, %v2356
    %v6609 = vmul.bf16 %v6523, %v2365
    %v6610 = vmul.bf16 %v6524, %v2374
    %v6611 = vmul.bf16 %v6525, %v2383
    %v6612 = vmul.bf16 %v6526, %v2392
    %v6613 = vmul.bf16 %v6527, %v2401
    %v6614 = vmul.bf16 %v6528, %v2410
    %v6615 = vmul.bf16 %v6529, %v2419
    %v6616 = vmul.bf16 %v6582, %v2428
    %v6617 = vmul.bf16 %v6600, %v2429
    %v6618 = vld [vmem:[#allocation3 + $0x8] sm:$0x8]
    %v6619 = vld [vmem:[#allocation3 + $0x48] sm:$0xf]
    %v6620 = vmul.bf16 %v6618, %v2645
    %v6621 = vmul.bf16 %v6516, %v2655
    %v6622 = vmul.bf16 %v6517, %v2665
    %v6623 = vmul.bf16 %v6518, %v2675
    %v6624 = vmul.bf16 %v6519, %v2685
    %v6625 = vmul.bf16 %v6520, %v2695
    %v6626 = vmul.bf16 %v6521, %v2705
    %v6627 = vmul.bf16 %v6522, %v2715
    %v6628 = vmul.bf16 %v6523, %v2725
    %v6629 = vmul.bf16 %v6524, %v2735
    %v6630 = vmul.bf16 %v6525, %v2745
    %v6631 = vmul.bf16 %v6526, %v2755
    %v6632 = vmul.bf16 %v6527, %v2765
    %v6633 = vmul.bf16 %v6528, %v2775
    %v6634 = vmul.bf16 %v6529, %v2785
    %v6635 = vmul.bf16 %v6582, %v2795
    %v6636 = vmul.bf16 %v6619, %v2800
    %v6637 = vmul.bf16 %v6516, %v2845
    %v6638 = vmul.bf16 %v6517, %v2856
    %v6639 = vmul.bf16 %v6518, %v2867
    %v6640 = vmul.bf16 %v6519, %v2878
    %v6641 = vmul.bf16 %v6520, %v2889
    %v6642 = vmul.bf16 %v6521, %v2900
    %v6643 = vmul.bf16 %v6522, %v2911
    %v6644 = vmul.bf16 %v6523, %v2922
    %v6645 = vmul.bf16 %v6524, %v2933
    %v6646 = vmul.bf16 %v6525, %v2944
    %v6647 = vmul.bf16 %v6526, %v2955
    %v6648 = vmul.bf16 %v6527, %v2966
    %v6649 = vmul.bf16 %v6528, %v2977
    %v6650 = vmul.bf16 %v6529, %v2988
    %v6651 = vmul.bf16 %v6582, %v2999
    %v6652 = vmul.bf16 %v6619, %v3010
    %v6653 = vld [vmem:[#allocation3 + $0xc] sm:$0xf]
    %v6654 = vld [vmem:[#allocation3 + $0x10] sm:$0xf]
    %v6655 = vld [vmem:[#allocation3 + $0x14] sm:$0xf]
    %v6656 = vld [vmem:[#allocation3 + $0x18] sm:$0xf]
    %v6657 = vld [vmem:[#allocation3 + $0x1c] sm:$0xf]
    %v6658 = vld [vmem:[#allocation3 + $0x20] sm:$0xf]
    %v6659 = vld [vmem:[#allocation3 + $0x24] sm:$0xf]
    %v6660 = vld [vmem:[#allocation3 + $0x28] sm:$0xf]
    %v6661 = vld [vmem:[#allocation3 + $0x2c] sm:$0xf]
    %v6662 = vld [vmem:[#allocation3 + $0x30] sm:$0xf]
    %v6663 = vld [vmem:[#allocation3 + $0x34] sm:$0xf]
    %v6664 = vld [vmem:[#allocation3 + $0x38] sm:$0xf]
    %v6665 = vld [vmem:[#allocation3 + $0x3c] sm:$0xf]
    %v6666 = vld [vmem:[#allocation3 + $0x40] sm:$0xf]
    %v6667 = vld [vmem:[#allocation3 + $0x44] sm:$0xf]
    %v6668 = vld [vmem:[#allocation3 + $0x48] sm:$0xf]
    %v6669 = vld [vmem:[#allocation3 + $0x4c] sm:$0x1]
    %v6670 = vmul.bf16 %v6653, %v3226
    %v6671 = vmul.bf16 %v6654, %v3235
    %v6672 = vmul.bf16 %v6655, %v3244
    %v6673 = vmul.bf16 %v6656, %v3253
    %v6674 = vmul.bf16 %v6657, %v3262
    %v6675 = vmul.bf16 %v6658, %v3271
    %v6676 = vmul.bf16 %v6659, %v3280
    %v6677 = vmul.bf16 %v6660, %v3289
    %v6678 = vmul.bf16 %v6661, %v3298
    %v6679 = vmul.bf16 %v6662, %v3307
    %v6680 = vmul.bf16 %v6663, %v3316
    %v6681 = vmul.bf16 %v6664, %v3325
    %v6682 = vmul.bf16 %v6665, %v3334
    %v6683 = vmul.bf16 %v6666, %v3343
    %v6684 = vmul.bf16 %v6667, %v3352
    %v6685 = vmul.bf16 %v6668, %v3361
    %v6686 = vmul.bf16 %v6669, %v3362
    %v6704 = vunpack.c.l.b16 %v6530
    %v6705 = vunpack.c.l.b16 %v6531
    %v6706 = vunpack.c.l.b16 %v6532
    %v6707 = vunpack.c.l.b16 %v6533
    %v6708 = vunpack.c.l.b16 %v6534
    %v6709 = vunpack.c.l.b16 %v6535
    %v6710 = vunpack.c.l.b16 %v6536
    %v6711 = vunpack.c.l.b16 %v6537
    %v6712 = vunpack.c.l.b16 %v6538
    %v6713 = vunpack.c.l.b16 %v6539
    %v6714 = vunpack.c.l.b16 %v6540
    %v6715 = vunpack.c.l.b16 %v6541
    %v6716 = vunpack.c.l.b16 %v6542
    %v6717 = vunpack.c.l.b16 %v6543
    %v6718 = vunpack.c.l.b16 %v6544
    %v6719 = vunpack.c.l.b16 %v6545
    %v6720 = vunpack.c.l.b16 %v6546
    %v6721 = vpack.c.b16 %v6705, %v6704
    %v6722 = vpack.c.b16 %v6707, %v6706
    %v6723 = vpack.c.b16 %v6709, %v6708
    %v6724 = vpack.c.b16 %v6711, %v6710
    %v6725 = vpack.c.b16 %v6713, %v6712
    %v6726 = vpack.c.b16 %v6715, %v6714
    %v6727 = vpack.c.b16 %v6717, %v6716
    %v6728 = vpack.c.b16 %v6719, %v6718
    %v6729 = vpack.c.b16 %v6720, %v6720
    %v6746 = vunpack.c.l.b16 %v6547
    %v6747 = vunpack.c.l.b16 %v6548
    %v6748 = vunpack.c.l.b16 %v6549
    %v6749 = vunpack.c.l.b16 %v6550
    %v6750 = vunpack.c.l.b16 %v6551
    %v6751 = vunpack.c.l.b16 %v6552
    %v6752 = vunpack.c.l.b16 %v6553
    %v6753 = vunpack.c.l.b16 %v6554
    %v6754 = vunpack.c.l.b16 %v6555
    %v6755 = vunpack.c.l.b16 %v6556
    %v6756 = vunpack.c.l.b16 %v6557
    %v6757 = vunpack.c.l.b16 %v6558
    %v6758 = vunpack.c.l.b16 %v6559
    %v6759 = vunpack.c.l.b16 %v6560
    %v6760 = vunpack.c.l.b16 %v6561
    %v6761 = vunpack.c.l.b16 %v6562
    %v6762 = vpack.c.b16 %v6747, %v6746
    %v6763 = vpack.c.b16 %v6749, %v6748
    %v6764 = vpack.c.b16 %v6751, %v6750
    %v6765 = vpack.c.b16 %v6753, %v6752
    %v6766 = vpack.c.b16 %v6755, %v6754
    %v6767 = vpack.c.b16 %v6757, %v6756
    %v6768 = vpack.c.b16 %v6759, %v6758
    %v6769 = vpack.c.b16 %v6761, %v6760
    %v6771 = vshrl.u32 %v6762, 16
    %v6773 = vrot.slane %v6771, 4
    %v6774 = vshll.u32 %v6762, 16
    %v6776 = vrot.slane %v6774, 5
    %v6777 = vor.u32 %v6773, %v6776
    %v6779 = vshrl.u32 %v6763, 16
    %v6781 = vrot.slane %v6779, 4
    %v6782 = vshll.u32 %v6763, 16
    %v6784 = vrot.slane %v6782, 5
    %v6785 = vor.u32 %v6781, %v6784
    %v6786 = vsel %vm962, %v6777, %v6785
    %v6788 = vshrl.u32 %v6764, 16
    %v6790 = vrot.slane %v6788, 4
    %v6791 = vshll.u32 %v6764, 16
    %v6793 = vrot.slane %v6791, 5
    %v6794 = vor.u32 %v6790, %v6793
    %v6795 = vsel %vm962, %v6785, %v6794
    %v6797 = vshrl.u32 %v6765, 16
    %v6799 = vrot.slane %v6797, 4
    %v6800 = vshll.u32 %v6765, 16
    %v6802 = vrot.slane %v6800, 5
    %v6803 = vor.u32 %v6799, %v6802
    %v6804 = vsel %vm962, %v6794, %v6803
    %v6806 = vshrl.u32 %v6766, 16
    %v6808 = vrot.slane %v6806, 4
    %v6809 = vshll.u32 %v6766, 16
    %v6811 = vrot.slane %v6809, 5
    %v6812 = vor.u32 %v6808, %v6811
    %v6813 = vsel %vm962, %v6803, %v6812
    %v6815 = vshrl.u32 %v6767, 16
    %v6817 = vrot.slane %v6815, 4
    %v6818 = vshll.u32 %v6767, 16
    %v6820 = vrot.slane %v6818, 5
    %v6821 = vor.u32 %v6817, %v6820
    %v6822 = vsel %vm962, %v6812, %v6821
    %v6824 = vshrl.u32 %v6768, 16
    %v6826 = vrot.slane %v6824, 4
    %v6827 = vshll.u32 %v6768, 16
    %v6829 = vrot.slane %v6827, 5
    %v6830 = vor.u32 %v6826, %v6829
    %v6831 = vsel %vm962, %v6821, %v6830
    %v6833 = vshrl.u32 %v6769, 16
    %v6835 = vrot.slane %v6833, 4
    %v6836 = vshll.u32 %v6769, 16
    %v6838 = vrot.slane %v6836, 5
    %v6839 = vor.u32 %v6835, %v6838
    %v6840 = vsel %vm962, %v6830, %v6839
    %v6858 = vunpack.c.l.b16 %v6564
    %v6859 = vunpack.c.l.b16 %v6565
    %v6860 = vunpack.c.l.b16 %v6566
    %v6861 = vunpack.c.l.b16 %v6567
    %v6862 = vunpack.c.l.b16 %v6568
    %v6863 = vunpack.c.l.b16 %v6569
    %v6864 = vunpack.c.l.b16 %v6570
    %v6865 = vunpack.c.l.b16 %v6571
    %v6866 = vunpack.c.l.b16 %v6572
    %v6867 = vunpack.c.l.b16 %v6573
    %v6868 = vunpack.c.l.b16 %v6574
    %v6869 = vunpack.c.l.b16 %v6575
    %v6870 = vunpack.c.l.b16 %v6576
    %v6871 = vunpack.c.l.b16 %v6577
    %v6872 = vunpack.c.l.b16 %v6578
    %v6873 = vunpack.c.l.b16 %v6579
    %v6874 = vunpack.c.l.b16 %v6580
    %v6875 = vpack.c.b16 %v6859, %v6858
    %v6876 = vpack.c.b16 %v6861, %v6860
    %v6877 = vpack.c.b16 %v6863, %v6862
    %v6878 = vpack.c.b16 %v6865, %v6864
    %v6879 = vpack.c.b16 %v6867, %v6866
    %v6880 = vpack.c.b16 %v6869, %v6868
    %v6881 = vpack.c.b16 %v6871, %v6870
    %v6882 = vpack.c.b16 %v6873, %v6872
    %v6883 = vpack.c.b16 %v6874, %v6874
    %v6884 = vrot.slane %v6875, 5
    %v6885 = vrot.slane %v6876, 5
    %v6886 = vsel %vm3594, %v6884, %v6885
    %v6887 = vrot.slane %v6877, 5
    %v6888 = vsel %vm3594, %v6885, %v6887
    %v6889 = vrot.slane %v6878, 5
    %v6890 = vsel %vm3594, %v6887, %v6889
    %v6891 = vrot.slane %v6879, 5
    %v6892 = vsel %vm3594, %v6889, %v6891
    %v6893 = vrot.slane %v6880, 5
    %v6894 = vsel %vm3594, %v6891, %v6893
    %v6895 = vrot.slane %v6881, 5
    %v6896 = vsel %vm3594, %v6893, %v6895
    %v6897 = vrot.slane %v6882, 5
    %v6898 = vsel %vm3594, %v6895, %v6897
    %v6899 = vrot.slane %v6883, 5
    %v6900 = vsel %vm3594, %v6897, %v6899
    %v6918 = vunpack.c.l.b16 %v6583
    %v6919 = vunpack.c.l.b16 %v6584
    %v6920 = vunpack.c.l.b16 %v6585
    %v6921 = vunpack.c.l.b16 %v6586
    %v6922 = vunpack.c.l.b16 %v6587
    %v6923 = vunpack.c.l.b16 %v6588
    %v6924 = vunpack.c.l.b16 %v6589
    %v6925 = vunpack.c.l.b16 %v6590
    %v6926 = vunpack.c.l.b16 %v6591
    %v6927 = vunpack.c.l.b16 %v6592
    %v6928 = vunpack.c.l.b16 %v6593
    %v6929 = vunpack.c.l.b16 %v6594
    %v6930 = vunpack.c.l.b16 %v6595
    %v6931 = vunpack.c.l.b16 %v6596
    %v6932 = vunpack.c.l.b16 %v6597
    %v6933 = vunpack.c.l.b16 %v6598
    %v6934 = vunpack.c.l.b16 %v6599
    %v6935 = vpack.c.b16 %v6919, %v6918
    %v6936 = vpack.c.b16 %v6921, %v6920
    %v6937 = vpack.c.b16 %v6923, %v6922
    %v6938 = vpack.c.b16 %v6925, %v6924
    %v6939 = vpack.c.b16 %v6927, %v6926
    %v6940 = vpack.c.b16 %v6929, %v6928
    %v6941 = vpack.c.b16 %v6931, %v6930
    %v6942 = vpack.c.b16 %v6933, %v6932
    %v6943 = vpack.c.b16 %v6934, %v6934
    %v6960 = vunpack.c.l.b16 %v6515
    %v6961 = vunpack.c.l.b16 %v6516
    %v6962 = vunpack.c.l.b16 %v6517
    %v6963 = vunpack.c.l.b16 %v6518
    %v6964 = vunpack.c.l.b16 %v6519
    %v6965 = vunpack.c.l.b16 %v6520
    %v6966 = vunpack.c.l.b16 %v6521
    %v6967 = vunpack.c.l.b16 %v6522
    %v6968 = vunpack.c.l.b16 %v6523
    %v6969 = vunpack.c.l.b16 %v6524
    %v6970 = vunpack.c.l.b16 %v6525
    %v6971 = vunpack.c.l.b16 %v6526
    %v6972 = vunpack.c.l.b16 %v6527
    %v6973 = vunpack.c.l.b16 %v6528
    %v6974 = vunpack.c.l.b16 %v6529
    %v6975 = vunpack.c.l.b16 %v6582
    %v6976 = vpack.c.b16 %v6961, %v6960
    %v6977 = vpack.c.b16 %v6963, %v6962
    %v6978 = vpack.c.b16 %v6965, %v6964
    %v6979 = vpack.c.b16 %v6967, %v6966
    %v6980 = vpack.c.b16 %v6969, %v6968
    %v6981 = vpack.c.b16 %v6971, %v6970
    %v6982 = vpack.c.b16 %v6973, %v6972
    %v6983 = vpack.c.b16 %v6975, %v6974
    %v6985 = vshrl.u32 %v6976, 16
    %v6987 = vrot.slane %v6985, 4
    %v6988 = vshll.u32 %v6976, 16
    %v6990 = vrot.slane %v6988, 5
    %v6991 = vor.u32 %v6987, %v6990
    %v6993 = vshrl.u32 %v6977, 16
    %v6995 = vrot.slane %v6993, 4
    %v6996 = vshll.u32 %v6977, 16
    %v6998 = vrot.slane %v6996, 5
    %v6999 = vor.u32 %v6995, %v6998
    %v7000 = vsel %vm962, %v6991, %v6999
    %v7002 = vshrl.u32 %v6978, 16
    %v7004 = vrot.slane %v7002, 4
    %v7005 = vshll.u32 %v6978, 16
    %v7007 = vrot.slane %v7005, 5
    %v7008 = vor.u32 %v7004, %v7007
    %v7009 = vsel %vm962, %v6999, %v7008
    %v7011 = vshrl.u32 %v6979, 16
    %v7013 = vrot.slane %v7011, 4
    %v7014 = vshll.u32 %v6979, 16
    %v7016 = vrot.slane %v7014, 5
    %v7017 = vor.u32 %v7013, %v7016
    %v7018 = vsel %vm962, %v7008, %v7017
    %v7020 = vshrl.u32 %v6980, 16
    %v7022 = vrot.slane %v7020, 4
    %v7023 = vshll.u32 %v6980, 16
    %v7025 = vrot.slane %v7023, 5
    %v7026 = vor.u32 %v7022, %v7025
    %v7027 = vsel %vm962, %v7017, %v7026
    %v7029 = vshrl.u32 %v6981, 16
    %v7031 = vrot.slane %v7029, 4
    %v7032 = vshll.u32 %v6981, 16
    %v7034 = vrot.slane %v7032, 5
    %v7035 = vor.u32 %v7031, %v7034
    %v7036 = vsel %vm962, %v7026, %v7035
    %v7038 = vshrl.u32 %v6982, 16
    %v7040 = vrot.slane %v7038, 4
    %v7041 = vshll.u32 %v6982, 16
    %v7043 = vrot.slane %v7041, 5
    %v7044 = vor.u32 %v7040, %v7043
    %v7045 = vsel %vm962, %v7035, %v7044
    %v7047 = vshrl.u32 %v6983, 16
    %v7049 = vrot.slane %v7047, 4
    %v7050 = vshll.u32 %v6983, 16
    %v7052 = vrot.slane %v7050, 5
    %v7053 = vor.u32 %v7049, %v7052
    %v7054 = vsel %vm962, %v7044, %v7053
    %v7072 = vunpack.c.l.b16 %v6601
    %v7073 = vunpack.c.l.b16 %v6602
    %v7074 = vunpack.c.l.b16 %v6603
    %v7075 = vunpack.c.l.b16 %v6604
    %v7076 = vunpack.c.l.b16 %v6605
    %v7077 = vunpack.c.l.b16 %v6606
    %v7078 = vunpack.c.l.b16 %v6607
    %v7079 = vunpack.c.l.b16 %v6608
    %v7080 = vunpack.c.l.b16 %v6609
    %v7081 = vunpack.c.l.b16 %v6610
    %v7082 = vunpack.c.l.b16 %v6611
    %v7083 = vunpack.c.l.b16 %v6612
    %v7084 = vunpack.c.l.b16 %v6613
    %v7085 = vunpack.c.l.b16 %v6614
    %v7086 = vunpack.c.l.b16 %v6615
    %v7087 = vunpack.c.l.b16 %v6616
    %v7088 = vunpack.c.l.b16 %v6617
    %v7089 = vpack.c.b16 %v7073, %v7072
    %v7090 = vpack.c.b16 %v7075, %v7074
    %v7091 = vpack.c.b16 %v7077, %v7076
    %v7092 = vpack.c.b16 %v7079, %v7078
    %v7093 = vpack.c.b16 %v7081, %v7080
    %v7094 = vpack.c.b16 %v7083, %v7082
    %v7095 = vpack.c.b16 %v7085, %v7084
    %v7096 = vpack.c.b16 %v7087, %v7086
    %v7097 = vpack.c.b16 %v7088, %v7088
    %v7098 = vrot.slane %v7089, 5
    %v7099 = vrot.slane %v7090, 5
    %v7100 = vsel %vm3594, %v7098, %v7099
    %v7101 = vrot.slane %v7091, 5
    %v7102 = vsel %vm3594, %v7099, %v7101
    %v7103 = vrot.slane %v7092, 5
    %v7104 = vsel %vm3594, %v7101, %v7103
    %v7105 = vrot.slane %v7093, 5
    %v7106 = vsel %vm3594, %v7103, %v7105
    %v7107 = vrot.slane %v7094, 5
    %v7108 = vsel %vm3594, %v7105, %v7107
    %v7109 = vrot.slane %v7095, 5
    %v7110 = vsel %vm3594, %v7107, %v7109
    %v7111 = vrot.slane %v7096, 5
    %v7112 = vsel %vm3594, %v7109, %v7111
    %v7113 = vrot.slane %v7097, 5
    %v7114 = vsel %vm3594, %v7111, %v7113
    %v7132 = vunpack.c.l.b16 %v6620
    %v7133 = vunpack.c.l.b16 %v6621
    %v7134 = vunpack.c.l.b16 %v6622
    %v7135 = vunpack.c.l.b16 %v6623
    %v7136 = vunpack.c.l.b16 %v6624
    %v7137 = vunpack.c.l.b16 %v6625
    %v7138 = vunpack.c.l.b16 %v6626
    %v7139 = vunpack.c.l.b16 %v6627
    %v7140 = vunpack.c.l.b16 %v6628
    %v7141 = vunpack.c.l.b16 %v6629
    %v7142 = vunpack.c.l.b16 %v6630
    %v7143 = vunpack.c.l.b16 %v6631
    %v7144 = vunpack.c.l.b16 %v6632
    %v7145 = vunpack.c.l.b16 %v6633
    %v7146 = vunpack.c.l.b16 %v6634
    %v7147 = vunpack.c.l.b16 %v6635
    %v7148 = vunpack.c.l.b16 %v6636
    %v7149 = vpack.c.b16 %v7133, %v7132
    %v7150 = vpack.c.b16 %v7135, %v7134
    %v7151 = vpack.c.b16 %v7137, %v7136
    %v7152 = vpack.c.b16 %v7139, %v7138
    %v7153 = vpack.c.b16 %v7141, %v7140
    %v7154 = vpack.c.b16 %v7143, %v7142
    %v7155 = vpack.c.b16 %v7145, %v7144
    %v7156 = vpack.c.b16 %v7147, %v7146
    %v7157 = vpack.c.b16 %v7148, %v7148
    %v7174 = vunpack.c.l.b16 %v6637
    %v7175 = vunpack.c.l.b16 %v6638
    %v7176 = vunpack.c.l.b16 %v6639
    %v7177 = vunpack.c.l.b16 %v6640
    %v7178 = vunpack.c.l.b16 %v6641
    %v7179 = vunpack.c.l.b16 %v6642
    %v7180 = vunpack.c.l.b16 %v6643
    %v7181 = vunpack.c.l.b16 %v6644
    %v7182 = vunpack.c.l.b16 %v6645
    %v7183 = vunpack.c.l.b16 %v6646
    %v7184 = vunpack.c.l.b16 %v6647
    %v7185 = vunpack.c.l.b16 %v6648
    %v7186 = vunpack.c.l.b16 %v6649
    %v7187 = vunpack.c.l.b16 %v6650
    %v7188 = vunpack.c.l.b16 %v6651
    %v7189 = vunpack.c.l.b16 %v6652
    %v7190 = vpack.c.b16 %v7175, %v7174
    %v7191 = vpack.c.b16 %v7177, %v7176
    %v7192 = vpack.c.b16 %v7179, %v7178
    %v7193 = vpack.c.b16 %v7181, %v7180
    %v7194 = vpack.c.b16 %v7183, %v7182
    %v7195 = vpack.c.b16 %v7185, %v7184
    %v7196 = vpack.c.b16 %v7187, %v7186
    %v7197 = vpack.c.b16 %v7189, %v7188
    %v7199 = vshrl.u32 %v7190, 16
    %v7201 = vrot.slane %v7199, 4
    %v7202 = vshll.u32 %v7190, 16
    %v7204 = vrot.slane %v7202, 5
    %v7205 = vor.u32 %v7201, %v7204
    %v7207 = vshrl.u32 %v7191, 16
    %v7209 = vrot.slane %v7207, 4
    %v7210 = vshll.u32 %v7191, 16
    %v7212 = vrot.slane %v7210, 5
    %v7213 = vor.u32 %v7209, %v7212
    %v7214 = vsel %vm962, %v7205, %v7213
    %v7216 = vshrl.u32 %v7192, 16
    %v7218 = vrot.slane %v7216, 4
    %v7219 = vshll.u32 %v7192, 16
    %v7221 = vrot.slane %v7219, 5
    %v7222 = vor.u32 %v7218, %v7221
    %v7223 = vsel %vm962, %v7213, %v7222
    %v7225 = vshrl.u32 %v7193, 16
    %v7227 = vrot.slane %v7225, 4
    %v7228 = vshll.u32 %v7193, 16
    %v7230 = vrot.slane %v7228, 5
    %v7231 = vor.u32 %v7227, %v7230
    %v7232 = vsel %vm962, %v7222, %v7231
    %v7234 = vshrl.u32 %v7194, 16
    %v7236 = vrot.slane %v7234, 4
    %v7237 = vshll.u32 %v7194, 16
    %v7239 = vrot.slane %v7237, 5
    %v7240 = vor.u32 %v7236, %v7239
    %v7241 = vsel %vm962, %v7231, %v7240
    %v7243 = vshrl.u32 %v7195, 16
    %v7245 = vrot.slane %v7243, 4
    %v7246 = vshll.u32 %v7195, 16
    %v7248 = vrot.slane %v7246, 5
    %v7249 = vor.u32 %v7245, %v7248
    %v7250 = vsel %vm962, %v7240, %v7249
    %v7252 = vshrl.u32 %v7196, 16
    %v7254 = vrot.slane %v7252, 4
    %v7255 = vshll.u32 %v7196, 16
    %v7257 = vrot.slane %v7255, 5
    %v7258 = vor.u32 %v7254, %v7257
    %v7259 = vsel %vm962, %v7249, %v7258
    %v7261 = vshrl.u32 %v7197, 16
    %v7263 = vrot.slane %v7261, 4
    %v7264 = vshll.u32 %v7197, 16
    %v7266 = vrot.slane %v7264, 5
    %v7267 = vor.u32 %v7263, %v7266
    %v7268 = vsel %vm962, %v7258, %v7267
    %v7286 = vunpack.c.l.b16 %v6670
    %v7287 = vunpack.c.l.b16 %v6671
    %v7288 = vunpack.c.l.b16 %v6672
    %v7289 = vunpack.c.l.b16 %v6673
    %v7290 = vunpack.c.l.b16 %v6674
    %v7291 = vunpack.c.l.b16 %v6675
    %v7292 = vunpack.c.l.b16 %v6676
    %v7293 = vunpack.c.l.b16 %v6677
    %v7294 = vunpack.c.l.b16 %v6678
    %v7295 = vunpack.c.l.b16 %v6679
    %v7296 = vunpack.c.l.b16 %v6680
    %v7297 = vunpack.c.l.b16 %v6681
    %v7298 = vunpack.c.l.b16 %v6682
    %v7299 = vunpack.c.l.b16 %v6683
    %v7300 = vunpack.c.l.b16 %v6684
    %v7301 = vunpack.c.l.b16 %v6685
    %v7302 = vunpack.c.l.b16 %v6686
    %v7303 = vpack.c.b16 %v7287, %v7286
    %v7304 = vpack.c.b16 %v7289, %v7288
    %v7305 = vpack.c.b16 %v7291, %v7290
    %v7306 = vpack.c.b16 %v7293, %v7292
    %v7307 = vpack.c.b16 %v7295, %v7294
    %v7308 = vpack.c.b16 %v7297, %v7296
    %v7309 = vpack.c.b16 %v7299, %v7298
    %v7310 = vpack.c.b16 %v7301, %v7300
    %v7311 = vpack.c.b16 %v7302, %v7302
    %v7312 = vrot.slane %v7303, 5
    %v7313 = vrot.slane %v7304, 5
    %v7314 = vsel %vm3594, %v7312, %v7313
    %v7315 = vrot.slane %v7305, 5
    %v7316 = vsel %vm3594, %v7313, %v7315
    %v7317 = vrot.slane %v7306, 5
    %v7318 = vsel %vm3594, %v7315, %v7317
    %v7319 = vrot.slane %v7307, 5
    %v7320 = vsel %vm3594, %v7317, %v7319
    %v7321 = vrot.slane %v7308, 5
    %v7322 = vsel %vm3594, %v7319, %v7321
    %v7323 = vrot.slane %v7309, 5
    %v7324 = vsel %vm3594, %v7321, %v7323
    %v7325 = vrot.slane %v7310, 5
    %v7326 = vsel %vm3594, %v7323, %v7325
    %v7327 = vrot.slane %v7311, 5
    %v7328 = vsel %vm3594, %v7325, %v7327
    %v7329 = vld [vmem:[#allocation7] sm:$0xf]
    %v7330 = vld [vmem:[#allocation7 + $0x4] sm:$0xf]
    %v7331 = vld [vmem:[#allocation7 + $0x8] sm:$0xf]
    %v7332 = vld [vmem:[#allocation7 + $0xc] sm:$0xf]
    %v7333 = vld [vmem:[#allocation7 + $0x10] sm:$0xf]
    %v7334 = vld [vmem:[#allocation7 + $0x14] sm:$0xf]
    %v7335 = vld [vmem:[#allocation7 + $0x18] sm:$0xf]
    %v7336 = vld [vmem:[#allocation7 + $0x1c] sm:$0xf]
    %v7337 = vld [vmem:[#allocation7 + $0x20] sm:$0xf]
    %v7338 = vld [vmem:[#allocation7 + $0x24] sm:$0xf]
    %v7339 = vld [vmem:[#allocation7 + $0x28] sm:$0xf]
    %v7340 = vld [vmem:[#allocation7 + $0x2c] sm:$0xf]
    %v7341 = vld [vmem:[#allocation7 + $0x30] sm:$0xf]
    %v7342 = vld [vmem:[#allocation7 + $0x34] sm:$0xf]
    %v7343 = vld [vmem:[#allocation7 + $0x38] sm:$0xf]
    %v7344 = vld [vmem:[#allocation7 + $0x3c] sm:$0xf]
    %v7345 = vld [vmem:[#allocation7 + $0x40] sm:$0xf]
    %v7346 = vld [vmem:[#allocation7 + $0x44] sm:$0xf]
    %v7347 = vld [vmem:[#allocation7 + $0x48] sm:$0xf]
    %v7348 = vld [vmem:[#allocation7 + $0x4c] sm:$0xf]
    %v7349 = vld [vmem:[#allocation7 + $0x50] sm:$0xf]
    %v7350 = vld [vmem:[#allocation7 + $0x54] sm:$0xf]
    %v7351 = vld [vmem:[#allocation7 + $0x58] sm:$0xf]
    %v7352 = vld [vmem:[#allocation7 + $0x5c] sm:$0xf]
    %v7353 = vld [vmem:[#allocation7 + $0x60] sm:$0xf]
    %v7354 = vld [vmem:[#allocation7 + $0x64] sm:$0xf]
    %v7355 = vld [vmem:[#allocation7 + $0x68] sm:$0xf]
    %v7356 = vld [vmem:[#allocation7 + $0x6c] sm:$0xf]
    %v7357 = vld [vmem:[#allocation7 + $0x70] sm:$0xf]
    %v7358 = vld [vmem:[#allocation7 + $0x74] sm:$0xf]
    %v7359 = vld [vmem:[#allocation7 + $0x78] sm:$0xf]
    %v7360 = vld [vmem:[#allocation7 + $0x7c] sm:$0xf]
    %v7361 = vld [vmem:[#allocation7 + $0x80] sm:$0xf]
    %v7362 = vld [vmem:[#allocation7 + $0x84] sm:$0xf]
    %v7363 = vld [vmem:[#allocation7 + $0x88] sm:$0xf]
    %v7364 = vld [vmem:[#allocation7 + $0x8c] sm:$0xf]
    %v7365 = vld [vmem:[#allocation7 + $0x90] sm:$0xf]
    %v7366 = vld [vmem:[#allocation7 + $0x94] sm:$0xf]
    %v7367 = vld [vmem:[#allocation7 + $0x98] sm:$0xf]
    %v7368 = vld [vmem:[#allocation7 + $0x9c] sm:$0xf]
    %v7369 = vld [vmem:[#allocation7 + $0xa0] sm:$0xf]
    %v7370 = vld [vmem:[#allocation7 + $0xa4] sm:$0xf]
    %v7371 = vld [vmem:[#allocation7 + $0xa8] sm:$0xf]
    %v7372 = vld [vmem:[#allocation7 + $0xac] sm:$0xf]
    %v7373 = vld [vmem:[#allocation7 + $0xb0] sm:$0xf]
    %v7374 = vld [vmem:[#allocation7 + $0xb4] sm:$0xf]
    %v7375 = vld [vmem:[#allocation7 + $0xb8] sm:$0xf]
    %v7376 = vld [vmem:[#allocation7 + $0xbc] sm:$0xf]
    %v7377 = vld [vmem:[#allocation7 + $0xc0] sm:$0xf]
    %v7378 = vld [vmem:[#allocation7 + $0xc4] sm:$0xf]
    %v7379 = vld [vmem:[#allocation7 + $0xc8] sm:$0xf]
    %v7380 = vld [vmem:[#allocation7 + $0xcc] sm:$0xf]
    %v7381 = vld [vmem:[#allocation7 + $0xd0] sm:$0xf]
    %v7382 = vld [vmem:[#allocation7 + $0xd4] sm:$0xf]
    %v7383 = vld [vmem:[#allocation7 + $0xd8] sm:$0xf]
    %v7384 = vld [vmem:[#allocation7 + $0xdc] sm:$0xf]
    %v7385 = vld [vmem:[#allocation7 + $0xe0] sm:$0xf]
    %v7386 = vld [vmem:[#allocation7 + $0xe4] sm:$0xf]
    %v7387 = vld [vmem:[#allocation7 + $0xe8] sm:$0xf]
    %v7388 = vld [vmem:[#allocation7 + $0xec] sm:$0xf]
    %v7389 = vld [vmem:[#allocation7 + $0xf0] sm:$0xf]
    %v7390 = vld [vmem:[#allocation7 + $0xf4] sm:$0xf]
    %v7391 = vld [vmem:[#allocation7 + $0xf8] sm:$0xf]
    %v7392 = vld [vmem:[#allocation7 + $0xfc] sm:$0xf]
    %v7393 = vld [vmem:[#allocation7 + $0x100] sm:$0xf]
    %v7394 = vld [vmem:[#allocation7 + $0x104] sm:$0xf]
    %v7395 = vld [vmem:[#allocation7 + $0x108] sm:$0xf]
    %v7396 = vld [vmem:[#allocation7 + $0x10c] sm:$0xf]
    %v7397 = vld [vmem:[#allocation7 + $0x110] sm:$0xf]
    %v7398 = vld [vmem:[#allocation7 + $0x114] sm:$0xf]
    %v7399 = vld [vmem:[#allocation7 + $0x118] sm:$0xf]
    %v7400 = vld [vmem:[#allocation7 + $0x11c] sm:$0xf]
    %v7401 = vld [vmem:[#allocation7 + $0x120] sm:$0xf]
    %v7402 = vld [vmem:[#allocation7 + $0x124] sm:$0xf]
    %v7403 = vld [vmem:[#allocation7 + $0x128] sm:$0xf]
    %v7404 = vld [vmem:[#allocation7 + $0x12c] sm:$0xf]
    %v7405 = vld [vmem:[#allocation7 + $0x130] sm:$0xf]
    %v7406 = vld [vmem:[#allocation7 + $0x134] sm:$0xf]
    %v7407 = vld [vmem:[#allocation7 + $0x138] sm:$0xf]
    %v7408 = vld [vmem:[#allocation7 + $0x13c] sm:$0xf]
    %v7409 = vld [vmem:[#allocation7 + $0x140] sm:$0xf]
    %v7410 = vld [vmem:[#allocation7 + $0x144] sm:$0xf]
    %v7411 = vld [vmem:[#allocation7 + $0x148] sm:$0xf]
    %v7412 = vld [vmem:[#allocation7 + $0x14c] sm:$0xf]
    %v7413 = vld [vmem:[#allocation7 + $0x150] sm:$0xf]
    %v7414 = vld [vmem:[#allocation7 + $0x154] sm:$0xf]
    %v7415 = vld [vmem:[#allocation7 + $0x158] sm:$0xf]
    %v7416 = vld [vmem:[#allocation7 + $0x15c] sm:$0xf]
    %v7417 = vld [vmem:[#allocation7 + $0x160] sm:$0xf]
    %v7418 = vld [vmem:[#allocation7 + $0x164] sm:$0xf]
    %v7419 = vld [vmem:[#allocation7 + $0x168] sm:$0xf]
    %v7420 = vld [vmem:[#allocation7 + $0x16c] sm:$0xf]
    %v7421 = vld [vmem:[#allocation7 + $0x170] sm:$0xf]
    %v7422 = vld [vmem:[#allocation7 + $0x174] sm:$0xf]
    %v7423 = vld [vmem:[#allocation7 + $0x178] sm:$0xf]
    %v7424 = vld [vmem:[#allocation7 + $0x17c] sm:$0xf]
    %v7425 = vld [vmem:[#allocation7 + $0x180] sm:$0xf]
    %v7426 = vld [vmem:[#allocation7 + $0x184] sm:$0xf]
    %v7427 = vld [vmem:[#allocation7 + $0x188] sm:$0xf]
    %v7428 = vld [vmem:[#allocation7 + $0x18c] sm:$0xf]
    %v7429 = vld [vmem:[#allocation7 + $0x190] sm:$0xf]
    %v7430 = vld [vmem:[#allocation7 + $0x194] sm:$0xf]
    %v7431 = vld [vmem:[#allocation7 + $0x198] sm:$0xf]
    %v7432 = vld [vmem:[#allocation7 + $0x19c] sm:$0xf]
    %v7433 = vld [vmem:[#allocation7 + $0x1a0] sm:$0xf]
    %v7434 = vld [vmem:[#allocation7 + $0x1a4] sm:$0xf]
    %v7435 = vld [vmem:[#allocation7 + $0x1a8] sm:$0xf]
    %v7436 = vld [vmem:[#allocation7 + $0x1ac] sm:$0xf]
    %v7437 = vld [vmem:[#allocation7 + $0x1b0] sm:$0xf]
    %v7438 = vld [vmem:[#allocation7 + $0x1b4] sm:$0xf]
    %v7439 = vld [vmem:[#allocation7 + $0x1b8] sm:$0xf]
    %v7440 = vld [vmem:[#allocation7 + $0x1bc] sm:$0xf]
    %v7441 = vld [vmem:[#allocation7 + $0x1c0] sm:$0xf]
    %v7442 = vld [vmem:[#allocation7 + $0x1c4] sm:$0xf]
    %v7443 = vld [vmem:[#allocation7 + $0x1c8] sm:$0xf]
    %v7444 = vld [vmem:[#allocation7 + $0x1cc] sm:$0xf]
    %v7445 = vld [vmem:[#allocation7 + $0x1d0] sm:$0xf]
    %v7446 = vld [vmem:[#allocation7 + $0x1d4] sm:$0xf]
    %v7447 = vld [vmem:[#allocation7 + $0x1d8] sm:$0xf]
    %v7448 = vld [vmem:[#allocation7 + $0x1dc] sm:$0xf]
    %v7449 = vld [vmem:[#allocation7 + $0x1e0] sm:$0xf]
    %v7450 = vld [vmem:[#allocation7 + $0x1e4] sm:$0xf]
    %v7451 = vld [vmem:[#allocation7 + $0x1e8] sm:$0xf]
    %v7452 = vld [vmem:[#allocation7 + $0x1ec] sm:$0xf]
    %v7453 = vld [vmem:[#allocation7 + $0x1f0] sm:$0xf]
    %v7454 = vld [vmem:[#allocation7 + $0x1f4] sm:$0xf]
    %v7455 = vld [vmem:[#allocation7 + $0x1f8] sm:$0xf]
    %v7456 = vld [vmem:[#allocation7 + $0x1fc] sm:$0xf]
    %v7457 = vld [vmem:[#allocation7 + $0x200] sm:$0xf]
    %v7458 = vld [vmem:[#allocation7 + $0x204] sm:$0xf]
    %v7459 = vld [vmem:[#allocation7 + $0x208] sm:$0xf]
    %v7460 = vld [vmem:[#allocation7 + $0x20c] sm:$0xf]
    %v7461 = vld [vmem:[#allocation7 + $0x210] sm:$0xf]
    %v7462 = vld [vmem:[#allocation7 + $0x214] sm:$0xf]
    %v7463 = vld [vmem:[#allocation7 + $0x218] sm:$0xf]
    %v7464 = vld [vmem:[#allocation7 + $0x21c] sm:$0xf]
    %v7465 = vld [vmem:[#allocation7 + $0x220] sm:$0xf]
    %v7466 = vld [vmem:[#allocation7 + $0x224] sm:$0xf]
    %v7467 = vld [vmem:[#allocation7 + $0x228] sm:$0xf]
    %v7468 = vld [vmem:[#allocation7 + $0x22c] sm:$0xf]
    %v7469 = vld [vmem:[#allocation7 + $0x230] sm:$0xf]
    %v7470 = vld [vmem:[#allocation7 + $0x234] sm:$0xf]
    %v7471 = vld [vmem:[#allocation7 + $0x238] sm:$0xf]
    %v7472 = vld [vmem:[#allocation7 + $0x23c] sm:$0xf]
    %v7473 = vld [vmem:[%s4] sm:$0x1]
    %v7475 = vlaneseq
    %v7476 = vshrl.u32 %v7475, 7
    %v7477 = vsub.s32 0, %v7476
    %v7478 = vrot.slane %v7473, %v7477
    %v7481 = vshrl.u32 %v6721, 16
    %v7483 = vrot.slane %v7481, 3
    %v7484 = vshll.u32 %v6721, 16
    %v7486 = vrot.slane %v7484, 4
    %v7487 = vor.u32 %v7483, %v7486
    %v7489 = vshrl.u32 %v6722, 16
    %v7491 = vrot.slane %v7489, 3
    %v7492 = vshll.u32 %v6722, 16
    %v7494 = vrot.slane %v7492, 4
    %v7495 = vor.u32 %v7491, %v7494
    %v7496 = vsel %vm4191, %v7487, %v7495
    %v7498 = vshrl.u32 %v6777, 16
    %v7500 = vrot.slane %v7498, 3
    %v7501 = vshll.u32 %v6777, 16
    %v7503 = vrot.slane %v7501, 4
    %v7504 = vor.u32 %v7500, %v7503
    %v7506 = vshrl.u32 %v6786, 16
    %v7508 = vrot.slane %v7506, 3
    %v7509 = vshll.u32 %v6786, 16
    %v7511 = vrot.slane %v7509, 4
    %v7512 = vor.u32 %v7508, %v7511
    %v7513 = vsel %vm4191, %v7504, %v7512
    %v7515 = vshrl.u32 %v6884, 16
    %v7517 = vrot.slane %v7515, 3
    %v7518 = vshll.u32 %v6884, 16
    %v7520 = vrot.slane %v7518, 4
    %v7521 = vor.u32 %v7517, %v7520
    %v7523 = vshrl.u32 %v6886, 16
    %v7525 = vrot.slane %v7523, 3
    %v7526 = vshll.u32 %v6886, 16
    %v7528 = vrot.slane %v7526, 4
    %v7529 = vor.u32 %v7525, %v7528
    %v7530 = vsel %vm4191, %v7521, %v7529
    %v7532 = vshrl.u32 %v6935, 16
    %v7534 = vrot.slane %v7532, 3
    %v7535 = vshll.u32 %v6935, 16
    %v7537 = vrot.slane %v7535, 4
    %v7538 = vor.u32 %v7534, %v7537
    %v7540 = vshrl.u32 %v6936, 16
    %v7542 = vrot.slane %v7540, 3
    %v7543 = vshll.u32 %v6936, 16
    %v7545 = vrot.slane %v7543, 4
    %v7546 = vor.u32 %v7542, %v7545
    %v7547 = vsel %vm4191, %v7538, %v7546
    %v7549 = vshrl.u32 %v6991, 16
    %v7551 = vrot.slane %v7549, 3
    %v7552 = vshll.u32 %v6991, 16
    %v7554 = vrot.slane %v7552, 4
    %v7555 = vor.u32 %v7551, %v7554
    %v7557 = vshrl.u32 %v7000, 16
    %v7559 = vrot.slane %v7557, 3
    %v7560 = vshll.u32 %v7000, 16
    %v7562 = vrot.slane %v7560, 4
    %v7563 = vor.u32 %v7559, %v7562
    %v7564 = vsel %vm4191, %v7555, %v7563
    %v7566 = vshrl.u32 %v7098, 16
    %v7568 = vrot.slane %v7566, 3
    %v7569 = vshll.u32 %v7098, 16
    %v7571 = vrot.slane %v7569, 4
    %v7572 = vor.u32 %v7568, %v7571
    %v7574 = vshrl.u32 %v7100, 16
    %v7576 = vrot.slane %v7574, 3
    %v7577 = vshll.u32 %v7100, 16
    %v7579 = vrot.slane %v7577, 4
    %v7580 = vor.u32 %v7576, %v7579
    %v7581 = vsel %vm4191, %v7572, %v7580
    %v7583 = vshrl.u32 %v7149, 16
    %v7585 = vrot.slane %v7583, 3
    %v7586 = vshll.u32 %v7149, 16
    %v7588 = vrot.slane %v7586, 4
    %v7589 = vor.u32 %v7585, %v7588
    %v7591 = vshrl.u32 %v7150, 16
    %v7593 = vrot.slane %v7591, 3
    %v7594 = vshll.u32 %v7150, 16
    %v7596 = vrot.slane %v7594, 4
    %v7597 = vor.u32 %v7593, %v7596
    %v7598 = vsel %vm4191, %v7589, %v7597
    %v7600 = vshrl.u32 %v7205, 16
    %v7602 = vrot.slane %v7600, 3
    %v7603 = vshll.u32 %v7205, 16
    %v7605 = vrot.slane %v7603, 4
    %v7606 = vor.u32 %v7602, %v7605
    %v7608 = vshrl.u32 %v7214, 16
    %v7610 = vrot.slane %v7608, 3
    %v7611 = vshll.u32 %v7214, 16
    %v7613 = vrot.slane %v7611, 4
    %v7614 = vor.u32 %v7610, %v7613
    %v7615 = vsel %vm4191, %v7606, %v7614
    %v7617 = vshrl.u32 %v7312, 16
    %v7619 = vrot.slane %v7617, 3
    %v7620 = vshll.u32 %v7312, 16
    %v7622 = vrot.slane %v7620, 4
    %v7623 = vor.u32 %v7619, %v7622
    %v7625 = vshrl.u32 %v7314, 16
    %v7627 = vrot.slane %v7625, 3
    %v7628 = vshll.u32 %v7314, 16
    %v7630 = vrot.slane %v7628, 4
    %v7631 = vor.u32 %v7627, %v7630
    %v7632 = vsel %vm4191, %v7623, %v7631
    %v7634 = vshrl.u32 %v6723, 16
    %v7636 = vrot.slane %v7634, 3
    %v7637 = vshll.u32 %v6723, 16
    %v7639 = vrot.slane %v7637, 4
    %v7640 = vor.u32 %v7636, %v7639
    %v7641 = vsel %vm4191, %v7495, %v7640
    %v7643 = vshrl.u32 %v6795, 16
    %v7645 = vrot.slane %v7643, 3
    %v7646 = vshll.u32 %v6795, 16
    %v7648 = vrot.slane %v7646, 4
    %v7649 = vor.u32 %v7645, %v7648
    %v7650 = vsel %vm4191, %v7512, %v7649
    %v7652 = vshrl.u32 %v6888, 16
    %v7654 = vrot.slane %v7652, 3
    %v7655 = vshll.u32 %v6888, 16
    %v7657 = vrot.slane %v7655, 4
    %v7658 = vor.u32 %v7654, %v7657
    %v7659 = vsel %vm4191, %v7529, %v7658
    %v7661 = vshrl.u32 %v6937, 16
    %v7663 = vrot.slane %v7661, 3
    %v7664 = vshll.u32 %v6937, 16
    %v7666 = vrot.slane %v7664, 4
    %v7667 = vor.u32 %v7663, %v7666
    %v7668 = vsel %vm4191, %v7546, %v7667
    %v7670 = vshrl.u32 %v7009, 16
    %v7672 = vrot.slane %v7670, 3
    %v7673 = vshll.u32 %v7009, 16
    %v7675 = vrot.slane %v7673, 4
    %v7676 = vor.u32 %v7672, %v7675
    %v7677 = vsel %vm4191, %v7563, %v7676
    %v7679 = vshrl.u32 %v7102, 16
    %v7681 = vrot.slane %v7679, 3
    %v7682 = vshll.u32 %v7102, 16
    %v7684 = vrot.slane %v7682, 4
    %v7685 = vor.u32 %v7681, %v7684
    %v7686 = vsel %vm4191, %v7580, %v7685
    %v7688 = vshrl.u32 %v7151, 16
    %v7690 = vrot.slane %v7688, 3
    %v7691 = vshll.u32 %v7151, 16
    %v7693 = vrot.slane %v7691, 4
    %v7694 = vor.u32 %v7690, %v7693
    %v7695 = vsel %vm4191, %v7597, %v7694
    %v7697 = vshrl.u32 %v7223, 16
    %v7699 = vrot.slane %v7697, 3
    %v7700 = vshll.u32 %v7223, 16
    %v7702 = vrot.slane %v7700, 4
    %v7703 = vor.u32 %v7699, %v7702
    %v7704 = vsel %vm4191, %v7614, %v7703
    %v7706 = vshrl.u32 %v7316, 16
    %v7708 = vrot.slane %v7706, 3
    %v7709 = vshll.u32 %v7316, 16
    %v7711 = vrot.slane %v7709, 4
    %v7712 = vor.u32 %v7708, %v7711
    %v7713 = vsel %vm4191, %v7631, %v7712
    %v7715 = vshrl.u32 %v6724, 16
    %v7717 = vrot.slane %v7715, 3
    %v7718 = vshll.u32 %v6724, 16
    %v7720 = vrot.slane %v7718, 4
    %v7721 = vor.u32 %v7717, %v7720
    %v7722 = vsel %vm4191, %v7640, %v7721
    %v7724 = vshrl.u32 %v6804, 16
    %v7726 = vrot.slane %v7724, 3
    %v7727 = vshll.u32 %v6804, 16
    %v7729 = vrot.slane %v7727, 4
    %v7730 = vor.u32 %v7726, %v7729
    %v7731 = vsel %vm4191, %v7649, %v7730
    %v7733 = vshrl.u32 %v6890, 16
    %v7735 = vrot.slane %v7733, 3
    %v7736 = vshll.u32 %v6890, 16
    %v7738 = vrot.slane %v7736, 4
    %v7739 = vor.u32 %v7735, %v7738
    %v7740 = vsel %vm4191, %v7658, %v7739
    %v7742 = vshrl.u32 %v6938, 16
    %v7744 = vrot.slane %v7742, 3
    %v7745 = vshll.u32 %v6938, 16
    %v7747 = vrot.slane %v7745, 4
    %v7748 = vor.u32 %v7744, %v7747
    %v7749 = vsel %vm4191, %v7667, %v7748
    %v7751 = vshrl.u32 %v7018, 16
    %v7753 = vrot.slane %v7751, 3
    %v7754 = vshll.u32 %v7018, 16
    %v7756 = vrot.slane %v7754, 4
    %v7757 = vor.u32 %v7753, %v7756
    %v7758 = vsel %vm4191, %v7676, %v7757
    %v7760 = vshrl.u32 %v7104, 16
    %v7762 = vrot.slane %v7760, 3
    %v7763 = vshll.u32 %v7104, 16
    %v7765 = vrot.slane %v7763, 4
    %v7766 = vor.u32 %v7762, %v7765
    %v7767 = vsel %vm4191, %v7685, %v7766
    %v7769 = vshrl.u32 %v7152, 16
    %v7771 = vrot.slane %v7769, 3
    %v7772 = vshll.u32 %v7152, 16
    %v7774 = vrot.slane %v7772, 4
    %v7775 = vor.u32 %v7771, %v7774
    %v7776 = vsel %vm4191, %v7694, %v7775
    %v7778 = vshrl.u32 %v7232, 16
    %v7780 = vrot.slane %v7778, 3
    %v7781 = vshll.u32 %v7232, 16
    %v7783 = vrot.slane %v7781, 4
    %v7784 = vor.u32 %v7780, %v7783
    %v7785 = vsel %vm4191, %v7703, %v7784
    %v7787 = vshrl.u32 %v7318, 16
    %v7789 = vrot.slane %v7787, 3
    %v7790 = vshll.u32 %v7318, 16
    %v7792 = vrot.slane %v7790, 4
    %v7793 = vor.u32 %v7789, %v7792
    %v7794 = vsel %vm4191, %v7712, %v7793
    %v7796 = vshrl.u32 %v6725, 16
    %v7798 = vrot.slane %v7796, 3
    %v7799 = vshll.u32 %v6725, 16
    %v7801 = vrot.slane %v7799, 4
    %v7802 = vor.u32 %v7798, %v7801
    %v7803 = vsel %vm4191, %v7721, %v7802
    %v7805 = vshrl.u32 %v6813, 16
    %v7807 = vrot.slane %v7805, 3
    %v7808 = vshll.u32 %v6813, 16
    %v7810 = vrot.slane %v7808, 4
    %v7811 = vor.u32 %v7807, %v7810
    %v7812 = vsel %vm4191, %v7730, %v7811
    %v7814 = vshrl.u32 %v6892, 16
    %v7816 = vrot.slane %v7814, 3
    %v7817 = vshll.u32 %v6892, 16
    %v7819 = vrot.slane %v7817, 4
    %v7820 = vor.u32 %v7816, %v7819
    %v7821 = vsel %vm4191, %v7739, %v7820
    %v7823 = vshrl.u32 %v6939, 16
    %v7825 = vrot.slane %v7823, 3
    %v7826 = vshll.u32 %v6939, 16
    %v7828 = vrot.slane %v7826, 4
    %v7829 = vor.u32 %v7825, %v7828
    %v7830 = vsel %vm4191, %v7748, %v7829
    %v7832 = vshrl.u32 %v7027, 16
    %v7834 = vrot.slane %v7832, 3
    %v7835 = vshll.u32 %v7027, 16
    %v7837 = vrot.slane %v7835, 4
    %v7838 = vor.u32 %v7834, %v7837
    %v7839 = vsel %vm4191, %v7757, %v7838
    %v7841 = vshrl.u32 %v7106, 16
    %v7843 = vrot.slane %v7841, 3
    %v7844 = vshll.u32 %v7106, 16
    %v7846 = vrot.slane %v7844, 4
    %v7847 = vor.u32 %v7843, %v7846
    %v7848 = vsel %vm4191, %v7766, %v7847
    %v7850 = vshrl.u32 %v7153, 16
    %v7852 = vrot.slane %v7850, 3
    %v7853 = vshll.u32 %v7153, 16
    %v7855 = vrot.slane %v7853, 4
    %v7856 = vor.u32 %v7852, %v7855
    %v7857 = vsel %vm4191, %v7775, %v7856
    %v7859 = vshrl.u32 %v7241, 16
    %v7861 = vrot.slane %v7859, 3
    %v7862 = vshll.u32 %v7241, 16
    %v7864 = vrot.slane %v7862, 4
    %v7865 = vor.u32 %v7861, %v7864
    %v7866 = vsel %vm4191, %v7784, %v7865
    %v7868 = vshrl.u32 %v7320, 16
    %v7870 = vrot.slane %v7868, 3
    %v7871 = vshll.u32 %v7320, 16
    %v7873 = vrot.slane %v7871, 4
    %v7874 = vor.u32 %v7870, %v7873
    %v7875 = vsel %vm4191, %v7793, %v7874
    %v7877 = vshrl.u32 %v6726, 16
    %v7879 = vrot.slane %v7877, 3
    %v7880 = vshll.u32 %v6726, 16
    %v7882 = vrot.slane %v7880, 4
    %v7883 = vor.u32 %v7879, %v7882
    %v7884 = vsel %vm4191, %v7802, %v7883
    %v7886 = vshrl.u32 %v6822, 16
    %v7888 = vrot.slane %v7886, 3
    %v7889 = vshll.u32 %v6822, 16
    %v7891 = vrot.slane %v7889, 4
    %v7892 = vor.u32 %v7888, %v7891
    %v7893 = vsel %vm4191, %v7811, %v7892
    %v7895 = vshrl.u32 %v6894, 16
    %v7897 = vrot.slane %v7895, 3
    %v7898 = vshll.u32 %v6894, 16
    %v7900 = vrot.slane %v7898, 4
    %v7901 = vor.u32 %v7897, %v7900
    %v7902 = vsel %vm4191, %v7820, %v7901
    %v7904 = vshrl.u32 %v6940, 16
    %v7906 = vrot.slane %v7904, 3
    %v7907 = vshll.u32 %v6940, 16
    %v7909 = vrot.slane %v7907, 4
    %v7910 = vor.u32 %v7906, %v7909
    %v7911 = vsel %vm4191, %v7829, %v7910
    %v7913 = vshrl.u32 %v7036, 16
    %v7915 = vrot.slane %v7913, 3
    %v7916 = vshll.u32 %v7036, 16
    %v7918 = vrot.slane %v7916, 4
    %v7919 = vor.u32 %v7915, %v7918
    %v7920 = vsel %vm4191, %v7838, %v7919
    %v7922 = vshrl.u32 %v7108, 16
    %v7924 = vrot.slane %v7922, 3
    %v7925 = vshll.u32 %v7108, 16
    %v7927 = vrot.slane %v7925, 4
    %v7928 = vor.u32 %v7924, %v7927
    %v7929 = vsel %vm4191, %v7847, %v7928
    %v7931 = vshrl.u32 %v7154, 16
    %v7933 = vrot.slane %v7931, 3
    %v7934 = vshll.u32 %v7154, 16
    %v7936 = vrot.slane %v7934, 4
    %v7937 = vor.u32 %v7933, %v7936
    %v7938 = vsel %vm4191, %v7856, %v7937
    %v7940 = vshrl.u32 %v7250, 16
    %v7942 = vrot.slane %v7940, 3
    %v7943 = vshll.u32 %v7250, 16
    %v7945 = vrot.slane %v7943, 4
    %v7946 = vor.u32 %v7942, %v7945
    %v7947 = vsel %vm4191, %v7865, %v7946
    %v7949 = vshrl.u32 %v7322, 16
    %v7951 = vrot.slane %v7949, 3
    %v7952 = vshll.u32 %v7322, 16
    %v7954 = vrot.slane %v7952, 4
    %v7955 = vor.u32 %v7951, %v7954
    %v7956 = vsel %vm4191, %v7874, %v7955
    %v7958 = vshrl.u32 %v6727, 16
    %v7960 = vrot.slane %v7958, 3
    %v7961 = vshll.u32 %v6727, 16
    %v7963 = vrot.slane %v7961, 4
    %v7964 = vor.u32 %v7960, %v7963
    %v7965 = vsel %vm4191, %v7883, %v7964
    %v7967 = vshrl.u32 %v6831, 16
    %v7969 = vrot.slane %v7967, 3
    %v7970 = vshll.u32 %v6831, 16
    %v7972 = vrot.slane %v7970, 4
    %v7973 = vor.u32 %v7969, %v7972
    %v7974 = vsel %vm4191, %v7892, %v7973
    %v7976 = vshrl.u32 %v6896, 16
    %v7978 = vrot.slane %v7976, 3
    %v7979 = vshll.u32 %v6896, 16
    %v7981 = vrot.slane %v7979, 4
    %v7982 = vor.u32 %v7978, %v7981
    %v7983 = vsel %vm4191, %v7901, %v7982
    %v7985 = vshrl.u32 %v6941, 16
    %v7987 = vrot.slane %v7985, 3
    %v7988 = vshll.u32 %v6941, 16
    %v7990 = vrot.slane %v7988, 4
    %v7991 = vor.u32 %v7987, %v7990
    %v7992 = vsel %vm4191, %v7910, %v7991
    %v7994 = vshrl.u32 %v7045, 16
    %v7996 = vrot.slane %v7994, 3
    %v7997 = vshll.u32 %v7045, 16
    %v7999 = vrot.slane %v7997, 4
    %v8000 = vor.u32 %v7996, %v7999
    %v8001 = vsel %vm4191, %v7919, %v8000
    %v8003 = vshrl.u32 %v7110, 16
    %v8005 = vrot.slane %v8003, 3
    %v8006 = vshll.u32 %v7110, 16
    %v8008 = vrot.slane %v8006, 4
    %v8009 = vor.u32 %v8005, %v8008
    %v8010 = vsel %vm4191, %v7928, %v8009
    %v8012 = vshrl.u32 %v7155, 16
    %v8014 = vrot.slane %v8012, 3
    %v8015 = vshll.u32 %v7155, 16
    %v8017 = vrot.slane %v8015, 4
    %v8018 = vor.u32 %v8014, %v8017
    %v8019 = vsel %vm4191, %v7937, %v8018
    %v8021 = vshrl.u32 %v7259, 16
    %v8023 = vrot.slane %v8021, 3
    %v8024 = vshll.u32 %v7259, 16
    %v8026 = vrot.slane %v8024, 4
    %v8027 = vor.u32 %v8023, %v8026
    %v8028 = vsel %vm4191, %v7946, %v8027
    %v8030 = vshrl.u32 %v7324, 16
    %v8032 = vrot.slane %v8030, 3
    %v8033 = vshll.u32 %v7324, 16
    %v8035 = vrot.slane %v8033, 4
    %v8036 = vor.u32 %v8032, %v8035
    %v8037 = vsel %vm4191, %v7955, %v8036
    %v8039 = vshrl.u32 %v6728, 16
    %v8041 = vrot.slane %v8039, 3
    %v8042 = vshll.u32 %v6728, 16
    %v8044 = vrot.slane %v8042, 4
    %v8045 = vor.u32 %v8041, %v8044
    %v8046 = vsel %vm4191, %v7964, %v8045
    %v8048 = vshrl.u32 %v6840, 16
    %v8050 = vrot.slane %v8048, 3
    %v8051 = vshll.u32 %v6840, 16
    %v8053 = vrot.slane %v8051, 4
    %v8054 = vor.u32 %v8050, %v8053
    %v8055 = vsel %vm4191, %v7973, %v8054
    %v8057 = vshrl.u32 %v6898, 16
    %v8059 = vrot.slane %v8057, 3
    %v8060 = vshll.u32 %v6898, 16
    %v8062 = vrot.slane %v8060, 4
    %v8063 = vor.u32 %v8059, %v8062
    %v8064 = vsel %vm4191, %v7982, %v8063
    %v8066 = vshrl.u32 %v6942, 16
    %v8068 = vrot.slane %v8066, 3
    %v8069 = vshll.u32 %v6942, 16
    %v8071 = vrot.slane %v8069, 4
    %v8072 = vor.u32 %v8068, %v8071
    %v8073 = vsel %vm4191, %v7991, %v8072
    %v8075 = vshrl.u32 %v7054, 16
    %v8077 = vrot.slane %v8075, 3
    %v8078 = vshll.u32 %v7054, 16
    %v8080 = vrot.slane %v8078, 4
    %v8081 = vor.u32 %v8077, %v8080
    %v8082 = vsel %vm4191, %v8000, %v8081
    %v8084 = vshrl.u32 %v7112, 16
    %v8086 = vrot.slane %v8084, 3
    %v8087 = vshll.u32 %v7112, 16
    %v8089 = vrot.slane %v8087, 4
    %v8090 = vor.u32 %v8086, %v8089
    %v8091 = vsel %vm4191, %v8009, %v8090
    %v8093 = vshrl.u32 %v7156, 16
    %v8095 = vrot.slane %v8093, 3
    %v8096 = vshll.u32 %v7156, 16
    %v8098 = vrot.slane %v8096, 4
    %v8099 = vor.u32 %v8095, %v8098
    %v8100 = vsel %vm4191, %v8018, %v8099
    %v8102 = vshrl.u32 %v7268, 16
    %v8104 = vrot.slane %v8102, 3
    %v8105 = vshll.u32 %v7268, 16
    %v8107 = vrot.slane %v8105, 4
    %v8108 = vor.u32 %v8104, %v8107
    %v8109 = vsel %vm4191, %v8027, %v8108
    %v8111 = vshrl.u32 %v7326, 16
    %v8113 = vrot.slane %v8111, 3
    %v8114 = vshll.u32 %v7326, 16
    %v8116 = vrot.slane %v8114, 4
    %v8117 = vor.u32 %v8113, %v8116
    %v8118 = vsel %vm4191, %v8036, %v8117
    %v8120 = vshrl.u32 %v6729, 16
    %v8122 = vrot.slane %v8120, 3
    %v8123 = vshll.u32 %v6729, 16
    %v8125 = vrot.slane %v8123, 4
    %v8126 = vor.u32 %v8122, %v8125
    %v8127 = vsel %vm4191, %v8045, %v8126
    %v8129 = vshrl.u32 %v6839, 16
    %v8131 = vrot.slane %v8129, 3
    %v8132 = vshll.u32 %v6839, 16
    %v8134 = vrot.slane %v8132, 4
    %v8135 = vor.u32 %v8131, %v8134
    %v8136 = vsel %vm4191, %v8054, %v8135
    %v8138 = vshrl.u32 %v6900, 16
    %v8140 = vrot.slane %v8138, 3
    %v8141 = vshll.u32 %v6900, 16
    %v8143 = vrot.slane %v8141, 4
    %v8144 = vor.u32 %v8140, %v8143
    %v8145 = vsel %vm4191, %v8063, %v8144
    %v8147 = vshrl.u32 %v6943, 16
    %v8149 = vrot.slane %v8147, 3
    %v8150 = vshll.u32 %v6943, 16
    %v8152 = vrot.slane %v8150, 4
    %v8153 = vor.u32 %v8149, %v8152
    %v8154 = vsel %vm4191, %v8072, %v8153
    %v8156 = vshrl.u32 %v7053, 16
    %v8158 = vrot.slane %v8156, 3
    %v8159 = vshll.u32 %v7053, 16
    %v8161 = vrot.slane %v8159, 4
    %v8162 = vor.u32 %v8158, %v8161
    %v8163 = vsel %vm4191, %v8081, %v8162
    %v8165 = vshrl.u32 %v7114, 16
    %v8167 = vrot.slane %v8165, 3
    %v8168 = vshll.u32 %v7114, 16
    %v8170 = vrot.slane %v8168, 4
    %v8171 = vor.u32 %v8167, %v8170
    %v8172 = vsel %vm4191, %v8090, %v8171
    %v8174 = vshrl.u32 %v7157, 16
    %v8176 = vrot.slane %v8174, 3
    %v8177 = vshll.u32 %v7157, 16
    %v8179 = vrot.slane %v8177, 4
    %v8180 = vor.u32 %v8176, %v8179
    %v8181 = vsel %vm4191, %v8099, %v8180
    %v8183 = vshrl.u32 %v7267, 16
    %v8185 = vrot.slane %v8183, 3
    %v8186 = vshll.u32 %v7267, 16
    %v8188 = vrot.slane %v8186, 4
    %v8189 = vor.u32 %v8185, %v8188
    %v8190 = vsel %vm4191, %v8108, %v8189
    %v8192 = vshrl.u32 %v7328, 16
    %v8194 = vrot.slane %v8192, 3
    %v8195 = vshll.u32 %v7328, 16
    %v8197 = vrot.slane %v8195, 4
    %v8198 = vor.u32 %v8194, %v8197
    %v8199 = vsel %vm4191, %v8117, %v8198
    %v8416 = vunpack.c.l.b16 %v7329
    %v8417 = vunpack.c.l.b16 %v7330
    %v8418 = vunpack.c.l.b16 %v7331
    %v8419 = vunpack.c.l.b16 %v7332
    %v8420 = vunpack.c.l.b16 %v7333
    %v8421 = vunpack.c.l.b16 %v7334
    %v8422 = vunpack.c.l.b16 %v7335
    %v8423 = vunpack.c.l.b16 %v7336
    %v8424 = vunpack.c.l.b16 %v7337
    %v8425 = vunpack.c.l.b16 %v7338
    %v8426 = vunpack.c.l.b16 %v7339
    %v8427 = vunpack.c.l.b16 %v7340
    %v8428 = vunpack.c.l.b16 %v7341
    %v8429 = vunpack.c.l.b16 %v7342
    %v8430 = vunpack.c.l.b16 %v7343
    %v8431 = vunpack.c.l.b16 %v7344
    %v8432 = vunpack.c.l.b16 %v7345
    %v8433 = vunpack.c.l.b16 %v7346
    %v8434 = vunpack.c.l.b16 %v7347
    %v8435 = vunpack.c.l.b16 %v7348
    %v8436 = vunpack.c.l.b16 %v7349
    %v8437 = vunpack.c.l.b16 %v7350
    %v8438 = vunpack.c.l.b16 %v7351
    %v8439 = vunpack.c.l.b16 %v7352
    %v8440 = vunpack.c.l.b16 %v7353
    %v8441 = vunpack.c.l.b16 %v7354
    %v8442 = vunpack.c.l.b16 %v7355
    %v8443 = vunpack.c.l.b16 %v7356
    %v8444 = vunpack.c.l.b16 %v7357
    %v8445 = vunpack.c.l.b16 %v7358
    %v8446 = vunpack.c.l.b16 %v7359
    %v8447 = vunpack.c.l.b16 %v7360
    %v8448 = vunpack.c.l.b16 %v7361
    %v8449 = vunpack.c.l.b16 %v7362
    %v8450 = vunpack.c.l.b16 %v7363
    %v8451 = vunpack.c.l.b16 %v7364
    %v8452 = vunpack.c.l.b16 %v7365
    %v8453 = vunpack.c.l.b16 %v7366
    %v8454 = vunpack.c.l.b16 %v7367
    %v8455 = vunpack.c.l.b16 %v7368
    %v8456 = vunpack.c.l.b16 %v7369
    %v8457 = vunpack.c.l.b16 %v7370
    %v8458 = vunpack.c.l.b16 %v7371
    %v8459 = vunpack.c.l.b16 %v7372
    %v8460 = vunpack.c.l.b16 %v7373
    %v8461 = vunpack.c.l.b16 %v7374
    %v8462 = vunpack.c.l.b16 %v7375
    %v8463 = vunpack.c.l.b16 %v7376
    %v8464 = vunpack.c.l.b16 %v7377
    %v8465 = vunpack.c.l.b16 %v7378
    %v8466 = vunpack.c.l.b16 %v7379
    %v8467 = vunpack.c.l.b16 %v7380
    %v8468 = vunpack.c.l.b16 %v7381
    %v8469 = vunpack.c.l.b16 %v7382
    %v8470 = vunpack.c.l.b16 %v7383
    %v8471 = vunpack.c.l.b16 %v7384
    %v8472 = vunpack.c.l.b16 %v7385
    %v8473 = vunpack.c.l.b16 %v7386
    %v8474 = vunpack.c.l.b16 %v7387
    %v8475 = vunpack.c.l.b16 %v7388
    %v8476 = vunpack.c.l.b16 %v7389
    %v8477 = vunpack.c.l.b16 %v7390
    %v8478 = vunpack.c.l.b16 %v7391
    %v8479 = vunpack.c.l.b16 %v7392
    %v8480 = vunpack.c.l.b16 %v7393
    %v8481 = vunpack.c.l.b16 %v7394
    %v8482 = vunpack.c.l.b16 %v7395
    %v8483 = vunpack.c.l.b16 %v7396
    %v8484 = vunpack.c.l.b16 %v7397
    %v8485 = vunpack.c.l.b16 %v7398
    %v8486 = vunpack.c.l.b16 %v7399
    %v8487 = vunpack.c.l.b16 %v7400
    %v8488 = vunpack.c.l.b16 %v7401
    %v8489 = vunpack.c.l.b16 %v7402
    %v8490 = vunpack.c.l.b16 %v7403
    %v8491 = vunpack.c.l.b16 %v7404
    %v8492 = vunpack.c.l.b16 %v7405
    %v8493 = vunpack.c.l.b16 %v7406
    %v8494 = vunpack.c.l.b16 %v7407
    %v8495 = vunpack.c.l.b16 %v7408
    %v8496 = vunpack.c.l.b16 %v7409
    %v8497 = vunpack.c.l.b16 %v7410
    %v8498 = vunpack.c.l.b16 %v7411
    %v8499 = vunpack.c.l.b16 %v7412
    %v8500 = vunpack.c.l.b16 %v7413
    %v8501 = vunpack.c.l.b16 %v7414
    %v8502 = vunpack.c.l.b16 %v7415
    %v8503 = vunpack.c.l.b16 %v7416
    %v8504 = vunpack.c.l.b16 %v7417
    %v8505 = vunpack.c.l.b16 %v7418
    %v8506 = vunpack.c.l.b16 %v7419
    %v8507 = vunpack.c.l.b16 %v7420
    %v8508 = vunpack.c.l.b16 %v7421
    %v8509 = vunpack.c.l.b16 %v7422
    %v8510 = vunpack.c.l.b16 %v7423
    %v8511 = vunpack.c.l.b16 %v7424
    %v8512 = vunpack.c.l.b16 %v7425
    %v8513 = vunpack.c.l.b16 %v7426
    %v8514 = vunpack.c.l.b16 %v7427
    %v8515 = vunpack.c.l.b16 %v7428
    %v8516 = vunpack.c.l.b16 %v7429
    %v8517 = vunpack.c.l.b16 %v7430
    %v8518 = vunpack.c.l.b16 %v7431
    %v8519 = vunpack.c.l.b16 %v7432
    %v8520 = vunpack.c.l.b16 %v7433
    %v8521 = vunpack.c.l.b16 %v7434
    %v8522 = vunpack.c.l.b16 %v7435
    %v8523 = vunpack.c.l.b16 %v7436
    %v8524 = vunpack.c.l.b16 %v7437
    %v8525 = vunpack.c.l.b16 %v7438
    %v8526 = vunpack.c.l.b16 %v7439
    %v8527 = vunpack.c.l.b16 %v7440
    %v8528 = vunpack.c.l.b16 %v7441
    %v8529 = vunpack.c.l.b16 %v7442
    %v8530 = vunpack.c.l.b16 %v7443
    %v8531 = vunpack.c.l.b16 %v7444
    %v8532 = vunpack.c.l.b16 %v7445
    %v8533 = vunpack.c.l.b16 %v7446
    %v8534 = vunpack.c.l.b16 %v7447
    %v8535 = vunpack.c.l.b16 %v7448
    %v8536 = vunpack.c.l.b16 %v7449
    %v8537 = vunpack.c.l.b16 %v7450
    %v8538 = vunpack.c.l.b16 %v7451
    %v8539 = vunpack.c.l.b16 %v7452
    %v8540 = vunpack.c.l.b16 %v7453
    %v8541 = vunpack.c.l.b16 %v7454
    %v8542 = vunpack.c.l.b16 %v7455
    %v8543 = vunpack.c.l.b16 %v7456
    %v8544 = vunpack.c.l.b16 %v7457
    %v8545 = vunpack.c.l.b16 %v7458
    %v8546 = vunpack.c.l.b16 %v7459
    %v8547 = vunpack.c.l.b16 %v7460
    %v8548 = vunpack.c.l.b16 %v7461
    %v8549 = vunpack.c.l.b16 %v7462
    %v8550 = vunpack.c.l.b16 %v7463
    %v8551 = vunpack.c.l.b16 %v7464
    %v8552 = vunpack.c.l.b16 %v7465
    %v8553 = vunpack.c.l.b16 %v7466
    %v8554 = vunpack.c.l.b16 %v7467
    %v8555 = vunpack.c.l.b16 %v7468
    %v8556 = vunpack.c.l.b16 %v7469
    %v8557 = vunpack.c.l.b16 %v7470
    %v8558 = vunpack.c.l.b16 %v7471
    %v8559 = vunpack.c.l.b16 %v7472
    %v8560 = vpack.c.b16 %v8417, %v8416
    %v8561 = vpack.c.b16 %v8419, %v8418
    %v8562 = vpack.c.b16 %v8421, %v8420
    %v8563 = vpack.c.b16 %v8423, %v8422
    %v8564 = vpack.c.b16 %v8425, %v8424
    %v8565 = vpack.c.b16 %v8427, %v8426
    %v8566 = vpack.c.b16 %v8429, %v8428
    %v8567 = vpack.c.b16 %v8431, %v8430
    %v8568 = vpack.c.b16 %v8433, %v8432
    %v8569 = vpack.c.b16 %v8435, %v8434
    %v8570 = vpack.c.b16 %v8437, %v8436
    %v8571 = vpack.c.b16 %v8439, %v8438
    %v8572 = vpack.c.b16 %v8441, %v8440
    %v8573 = vpack.c.b16 %v8443, %v8442
    %v8574 = vpack.c.b16 %v8445, %v8444
    %v8575 = vpack.c.b16 %v8447, %v8446
    %v8576 = vpack.c.b16 %v8449, %v8448
    %v8577 = vpack.c.b16 %v8451, %v8450
    %v8578 = vpack.c.b16 %v8453, %v8452
    %v8579 = vpack.c.b16 %v8455, %v8454
    %v8580 = vpack.c.b16 %v8457, %v8456
    %v8581 = vpack.c.b16 %v8459, %v8458
    %v8582 = vpack.c.b16 %v8461, %v8460
    %v8583 = vpack.c.b16 %v8463, %v8462
    %v8584 = vpack.c.b16 %v8465, %v8464
    %v8585 = vpack.c.b16 %v8467, %v8466
    %v8586 = vpack.c.b16 %v8469, %v8468
    %v8587 = vpack.c.b16 %v8471, %v8470
    %v8588 = vpack.c.b16 %v8473, %v8472
    %v8589 = vpack.c.b16 %v8475, %v8474
    %v8590 = vpack.c.b16 %v8477, %v8476
    %v8591 = vpack.c.b16 %v8479, %v8478
    %v8592 = vpack.c.b16 %v8481, %v8480
    %v8593 = vpack.c.b16 %v8483, %v8482
    %v8594 = vpack.c.b16 %v8485, %v8484
    %v8595 = vpack.c.b16 %v8487, %v8486
    %v8596 = vpack.c.b16 %v8489, %v8488
    %v8597 = vpack.c.b16 %v8491, %v8490
    %v8598 = vpack.c.b16 %v8493, %v8492
    %v8599 = vpack.c.b16 %v8495, %v8494
    %v8600 = vpack.c.b16 %v8497, %v8496
    %v8601 = vpack.c.b16 %v8499, %v8498
    %v8602 = vpack.c.b16 %v8501, %v8500
    %v8603 = vpack.c.b16 %v8503, %v8502
    %v8604 = vpack.c.b16 %v8505, %v8504
    %v8605 = vpack.c.b16 %v8507, %v8506
    %v8606 = vpack.c.b16 %v8509, %v8508
    %v8607 = vpack.c.b16 %v8511, %v8510
    %v8608 = vpack.c.b16 %v8513, %v8512
    %v8609 = vpack.c.b16 %v8515, %v8514
    %v8610 = vpack.c.b16 %v8517, %v8516
    %v8611 = vpack.c.b16 %v8519, %v8518
    %v8612 = vpack.c.b16 %v8521, %v8520
    %v8613 = vpack.c.b16 %v8523, %v8522
    %v8614 = vpack.c.b16 %v8525, %v8524
    %v8615 = vpack.c.b16 %v8527, %v8526
    %v8616 = vpack.c.b16 %v8529, %v8528
    %v8617 = vpack.c.b16 %v8531, %v8530
    %v8618 = vpack.c.b16 %v8533, %v8532
    %v8619 = vpack.c.b16 %v8535, %v8534
    %v8620 = vpack.c.b16 %v8537, %v8536
    %v8621 = vpack.c.b16 %v8539, %v8538
    %v8622 = vpack.c.b16 %v8541, %v8540
    %v8623 = vpack.c.b16 %v8543, %v8542
    %v8624 = vpack.c.b16 %v8545, %v8544
    %v8625 = vpack.c.b16 %v8547, %v8546
    %v8626 = vpack.c.b16 %v8549, %v8548
    %v8627 = vpack.c.b16 %v8551, %v8550
    %v8628 = vpack.c.b16 %v8553, %v8552
    %v8629 = vpack.c.b16 %v8555, %v8554
    %v8630 = vpack.c.b16 %v8557, %v8556
    %v8631 = vpack.c.b16 %v8559, %v8558
    %8704 = vmatprep.subr.bf16.mxu0 0
    %8705 = vmatpush1.bf16.msra.mxu0 %v8567
    %8706 = vmatprep.subr.bf16.mxu0 0
    %8707 = vmatpush1.bf16.msra.mxu0 %v8566
    %8708 = vmatprep.subr.bf16.mxu0 0
    %8709 = vmatpush1.bf16.msra.mxu0 %v8565
    %8710 = vmatprep.subr.bf16.mxu0 0
    %8711 = vmatpush1.bf16.msra.mxu0 %v8564
    %8712 = vmatprep.subr.bf16.mxu0 0
    %8713 = vmatpush1.bf16.msra.mxu0 %v8563
    %8714 = vmatprep.subr.bf16.mxu0 0
    %8715 = vmatpush1.bf16.msra.mxu0 %v8562
    %8716 = vmatprep.subr.bf16.mxu0 0
    %8717 = vmatpush1.bf16.msra.mxu0 %v8561
    %8718 = vmatprep.subr.bf16.mxu0 0
    %8719 = vmatpush1.bf16.msra.mxu0 %v8560
    %8720 = vmatprep.subr.bf16.mxu0 0
    %8721 = vmatpush2.bf16.msra.mxu0 %v8575
    %8722 = vmatprep.subr.bf16.mxu0 0
    %8723 = vmatpush2.bf16.msra.mxu0 %v8574
    %8724 = vmatprep.subr.bf16.mxu0 0
    %8725 = vmatpush2.bf16.msra.mxu0 %v8573
    %8726 = vmatprep.subr.bf16.mxu0 0
    %8727 = vmatpush2.bf16.msra.mxu0 %v8572
    %8728 = vmatprep.subr.bf16.mxu0 0
    %8729 = vmatpush2.bf16.msra.mxu0 %v8571
    %8730 = vmatprep.subr.bf16.mxu0 0
    %8731 = vmatpush2.bf16.msra.mxu0 %v8570
    %8732 = vmatprep.subr.bf16.mxu0 0
    %8733 = vmatpush2.bf16.msra.mxu0 %v8569
    %8734 = vmatprep.subr.bf16.mxu0 0
    %8735 = vmatpush2.bf16.msra.mxu0 %v8568
    %8736 = vmatprep.mubr.bf16.mxu0 %v7513
    %8737 = vmatmul.mubr.bf16.gmra.mxu0 %v7496
    %v8738 = vpop.f32.mrf.mxu0
    %v8739 = vadd.f32 %v7478, %v8738
    %v8740 = vpop.f32.mrf.mxu0
    %v8741 = vpop.f32.mrf.mxu0
    %v8742 = vadd.f32 %v7478, %v8741
    %v8743 = vpop.f32.mrf.mxu0
    %8744 = vmatprep.mubr.bf16.mxu0 %v7650
    %8745 = vmatmul.mubr.bf16.gmra.mxu0 %v7641
    %v8746 = vpop.f32.mrf.mxu0
    %v8747 = vadd.f32 %v7478, %v8746
    %v8748 = vpop.f32.mrf.mxu0
    %v8749 = vpop.f32.mrf.mxu0
    %v8750 = vadd.f32 %v7478, %v8749
    %v8751 = vpop.f32.mrf.mxu0
    %8752 = vmatprep.mubr.bf16.mxu0 %v7731
    %8753 = vmatmul.mubr.bf16.gmra.mxu0 %v7722
    %v8754 = vpop.f32.mrf.mxu0
    %v8755 = vadd.f32 %v7478, %v8754
    %v8756 = vpop.f32.mrf.mxu0
    %v8757 = vpop.f32.mrf.mxu0
    %v8758 = vadd.f32 %v7478, %v8757
    %v8759 = vpop.f32.mrf.mxu0
    %8760 = vmatprep.mubr.bf16.mxu0 %v7812
    %8761 = vmatmul.mubr.bf16.gmra.mxu0 %v7803
    %v8762 = vpop.f32.mrf.mxu0
    %v8763 = vadd.f32 %v7478, %v8762
    %v8764 = vpop.f32.mrf.mxu0
    %v8765 = vpop.f32.mrf.mxu0
    %v8766 = vadd.f32 %v7478, %v8765
    %v8767 = vpop.f32.mrf.mxu0
    %8768 = vmatprep.mubr.bf16.mxu0 %v7893
    %8769 = vmatmul.mubr.bf16.gmra.mxu0 %v7884
    %v8770 = vpop.f32.mrf.mxu0
    %v8771 = vadd.f32 %v7478, %v8770
    %v8772 = vpop.f32.mrf.mxu0
    %v8773 = vpop.f32.mrf.mxu0
    %v8774 = vadd.f32 %v7478, %v8773
    %v8775 = vpop.f32.mrf.mxu0
    %8776 = vmatprep.mubr.bf16.mxu0 %v7974
    %8777 = vmatmul.mubr.bf16.gmra.mxu0 %v7965
    %v8778 = vpop.f32.mrf.mxu0
    %v8779 = vadd.f32 %v7478, %v8778
    %v8780 = vpop.f32.mrf.mxu0
    %v8781 = vpop.f32.mrf.mxu0
    %v8782 = vadd.f32 %v7478, %v8781
    %v8783 = vpop.f32.mrf.mxu0
    %8784 = vmatprep.mubr.bf16.mxu0 %v8055
    %8785 = vmatmul.mubr.bf16.gmra.mxu0 %v8046
    %v8786 = vpop.f32.mrf.mxu0
    %v8787 = vadd.f32 %v7478, %v8786
    %v8788 = vpop.f32.mrf.mxu0
    %v8789 = vpop.f32.mrf.mxu0
    %v8790 = vadd.f32 %v7478, %v8789
    %v8791 = vpop.f32.mrf.mxu0
    %8792 = vmatprep.mubr.bf16.mxu0 %v8136
    %8793 = vmatmul.mubr.bf16.gmra.mxu0 %v8127
    %v8794 = vpop.f32.mrf.mxu0
    %v8795 = vadd.f32 %v7478, %v8794
    %v8796 = vpop.f32.mrf.mxu0
    %v8797 = vpop.f32.mrf.mxu0
    %v8798 = vadd.f32 %v7478, %v8797
    %v8799 = vpop.f32.mrf.mxu0
    %8800 = vdwg.mxu0
    %8801 = vmatprep.subr.bf16.mxu0 0
    %8802 = vmatpush1.bf16.msra.mxu0 %v8583
    %8803 = vmatprep.subr.bf16.mxu0 0
    %8804 = vmatpush1.bf16.msra.mxu0 %v8582
    %8805 = vmatprep.subr.bf16.mxu0 0
    %8806 = vmatpush1.bf16.msra.mxu0 %v8581
    %8807 = vmatprep.subr.bf16.mxu0 0
    %8808 = vmatpush1.bf16.msra.mxu0 %v8580
    %8809 = vmatprep.subr.bf16.mxu0 0
    %8810 = vmatpush1.bf16.msra.mxu0 %v8579
    %8811 = vmatprep.subr.bf16.mxu0 0
    %8812 = vmatpush1.bf16.msra.mxu0 %v8578
    %8813 = vmatprep.subr.bf16.mxu0 0
    %8814 = vmatpush1.bf16.msra.mxu0 %v8577
    %8815 = vmatprep.subr.bf16.mxu0 0
    %8816 = vmatpush1.bf16.msra.mxu0 %v8576
    %8817 = vmatprep.subr.bf16.mxu0 0
    %8818 = vmatpush2.bf16.msra.mxu0 %v8591
    %8819 = vmatprep.subr.bf16.mxu0 0
    %8820 = vmatpush2.bf16.msra.mxu0 %v8590
    %8821 = vmatprep.subr.bf16.mxu0 0
    %8822 = vmatpush2.bf16.msra.mxu0 %v8589
    %8823 = vmatprep.subr.bf16.mxu0 0
    %8824 = vmatpush2.bf16.msra.mxu0 %v8588
    %8825 = vmatprep.subr.bf16.mxu0 0
    %8826 = vmatpush2.bf16.msra.mxu0 %v8587
    %8827 = vmatprep.subr.bf16.mxu0 0
    %8828 = vmatpush2.bf16.msra.mxu0 %v8586
    %8829 = vmatprep.subr.bf16.mxu0 0
    %8830 = vmatpush2.bf16.msra.mxu0 %v8585
    %8831 = vmatprep.subr.bf16.mxu0 0
    %8832 = vmatpush2.bf16.msra.mxu0 %v8584
    %8833 = vmatprep.mubr.bf16.mxu0 %v7547
    %8834 = vmatmul.mubr.bf16.gmra.mxu0 %v7530
    %v8835 = vpop.f32.mrf.mxu0
    %v8836 = vadd.f32 %v8739, %v8835
    %v8837 = vpop.f32.mrf.mxu0
    %v8838 = vpop.f32.mrf.mxu0
    %v8839 = vadd.f32 %v8742, %v8838
    %v8840 = vpop.f32.mrf.mxu0
    %8841 = vmatprep.mubr.bf16.mxu0 %v7668
    %8842 = vmatmul.mubr.bf16.gmra.mxu0 %v7659
    %v8843 = vpop.f32.mrf.mxu0
    %v8844 = vadd.f32 %v8747, %v8843
    %v8845 = vpop.f32.mrf.mxu0
    %v8846 = vpop.f32.mrf.mxu0
    %v8847 = vadd.f32 %v8750, %v8846
    %v8848 = vpop.f32.mrf.mxu0
    %8849 = vmatprep.mubr.bf16.mxu0 %v7749
    %8850 = vmatmul.mubr.bf16.gmra.mxu0 %v7740
    %v8851 = vpop.f32.mrf.mxu0
    %v8852 = vadd.f32 %v8755, %v8851
    %v8853 = vpop.f32.mrf.mxu0
    %v8854 = vpop.f32.mrf.mxu0
    %v8855 = vadd.f32 %v8758, %v8854
    %v8856 = vpop.f32.mrf.mxu0
    %8857 = vmatprep.mubr.bf16.mxu0 %v7830
    %8858 = vmatmul.mubr.bf16.gmra.mxu0 %v7821
    %v8859 = vpop.f32.mrf.mxu0
    %v8860 = vadd.f32 %v8763, %v8859
    %v8861 = vpop.f32.mrf.mxu0
    %v8862 = vpop.f32.mrf.mxu0
    %v8863 = vadd.f32 %v8766, %v8862
    %v8864 = vpop.f32.mrf.mxu0
    %8865 = vmatprep.mubr.bf16.mxu0 %v7911
    %8866 = vmatmul.mubr.bf16.gmra.mxu0 %v7902
    %v8867 = vpop.f32.mrf.mxu0
    %v8868 = vadd.f32 %v8771, %v8867
    %v8869 = vpop.f32.mrf.mxu0
    %v8870 = vpop.f32.mrf.mxu0
    %v8871 = vadd.f32 %v8774, %v8870
    %v8872 = vpop.f32.mrf.mxu0
    %8873 = vmatprep.mubr.bf16.mxu0 %v7992
    %8874 = vmatmul.mubr.bf16.gmra.mxu0 %v7983
    %v8875 = vpop.f32.mrf.mxu0
    %v8876 = vadd.f32 %v8779, %v8875
    %v8877 = vpop.f32.mrf.mxu0
    %v8878 = vpop.f32.mrf.mxu0
    %v8879 = vadd.f32 %v8782, %v8878
    %v8880 = vpop.f32.mrf.mxu0
    %8881 = vmatprep.mubr.bf16.mxu0 %v8073
    %8882 = vmatmul.mubr.bf16.gmra.mxu0 %v8064
    %v8883 = vpop.f32.mrf.mxu0
    %v8884 = vadd.f32 %v8787, %v8883
    %v8885 = vpop.f32.mrf.mxu0
    %v8886 = vpop.f32.mrf.mxu0
    %v8887 = vadd.f32 %v8790, %v8886
    %v8888 = vpop.f32.mrf.mxu0
    %8889 = vmatprep.mubr.bf16.mxu0 %v8154
    %8890 = vmatmul.mubr.bf16.gmra.mxu0 %v8145
    %v8891 = vpop.f32.mrf.mxu0
    %v8892 = vadd.f32 %v8795, %v8891
    %v8893 = vpop.f32.mrf.mxu0
    %v8894 = vpop.f32.mrf.mxu0
    %v8895 = vadd.f32 %v8798, %v8894
    %v8896 = vpop.f32.mrf.mxu0
    %8897 = vdwg.mxu0
    %8898 = vmatprep.subr.bf16.mxu0 0
    %8899 = vmatpush1.bf16.msra.mxu0 %v8599
    %8900 = vmatprep.subr.bf16.mxu0 0
    %8901 = vmatpush1.bf16.msra.mxu0 %v8598
    %8902 = vmatprep.subr.bf16.mxu0 0
    %8903 = vmatpush1.bf16.msra.mxu0 %v8597
    %8904 = vmatprep.subr.bf16.mxu0 0
    %8905 = vmatpush1.bf16.msra.mxu0 %v8596
    %8906 = vmatprep.subr.bf16.mxu0 0
    %8907 = vmatpush1.bf16.msra.mxu0 %v8595
    %8908 = vmatprep.subr.bf16.mxu0 0
    %8909 = vmatpush1.bf16.msra.mxu0 %v8594
    %8910 = vmatprep.subr.bf16.mxu0 0
    %8911 = vmatpush1.bf16.msra.mxu0 %v8593
    %8912 = vmatprep.subr.bf16.mxu0 0
    %8913 = vmatpush1.bf16.msra.mxu0 %v8592
    %8914 = vmatprep.subr.bf16.mxu0 0
    %8915 = vmatpush2.bf16.msra.mxu0 %v8607
    %8916 = vmatprep.subr.bf16.mxu0 0
    %8917 = vmatpush2.bf16.msra.mxu0 %v8606
    %8918 = vmatprep.subr.bf16.mxu0 0
    %8919 = vmatpush2.bf16.msra.mxu0 %v8605
    %8920 = vmatprep.subr.bf16.mxu0 0
    %8921 = vmatpush2.bf16.msra.mxu0 %v8604
    %8922 = vmatprep.subr.bf16.mxu0 0
    %8923 = vmatpush2.bf16.msra.mxu0 %v8603
    %8924 = vmatprep.subr.bf16.mxu0 0
    %8925 = vmatpush2.bf16.msra.mxu0 %v8602
    %8926 = vmatprep.subr.bf16.mxu0 0
    %8927 = vmatpush2.bf16.msra.mxu0 %v8601
    %8928 = vmatprep.subr.bf16.mxu0 0
    %8929 = vmatpush2.bf16.msra.mxu0 %v8600
    %8930 = vmatprep.mubr.bf16.mxu0 %v7581
    %8931 = vmatmul.mubr.bf16.gmra.mxu0 %v7564
    %v8932 = vpop.f32.mrf.mxu0
    %v8933 = vadd.f32 %v8836, %v8932
    %v8934 = vpop.f32.mrf.mxu0
    %v8935 = vpop.f32.mrf.mxu0
    %v8936 = vadd.f32 %v8839, %v8935
    %v8937 = vpop.f32.mrf.mxu0
    %8938 = vmatprep.mubr.bf16.mxu0 %v7686
    %8939 = vmatmul.mubr.bf16.gmra.mxu0 %v7677
    %v8940 = vpop.f32.mrf.mxu0
    %v8941 = vadd.f32 %v8844, %v8940
    %v8942 = vpop.f32.mrf.mxu0
    %v8943 = vpop.f32.mrf.mxu0
    %v8944 = vadd.f32 %v8847, %v8943
    %v8945 = vpop.f32.mrf.mxu0
    %8946 = vmatprep.mubr.bf16.mxu0 %v7767
    %8947 = vmatmul.mubr.bf16.gmra.mxu0 %v7758
    %v8948 = vpop.f32.mrf.mxu0
    %v8949 = vadd.f32 %v8852, %v8948
    %v8950 = vpop.f32.mrf.mxu0
    %v8951 = vpop.f32.mrf.mxu0
    %v8952 = vadd.f32 %v8855, %v8951
    %v8953 = vpop.f32.mrf.mxu0
    %8954 = vmatprep.mubr.bf16.mxu0 %v7848
    %8955 = vmatmul.mubr.bf16.gmra.mxu0 %v7839
    %v8956 = vpop.f32.mrf.mxu0
    %v8957 = vadd.f32 %v8860, %v8956
    %v8958 = vpop.f32.mrf.mxu0
    %v8959 = vpop.f32.mrf.mxu0
    %v8960 = vadd.f32 %v8863, %v8959
    %v8961 = vpop.f32.mrf.mxu0
    %8962 = vmatprep.mubr.bf16.mxu0 %v7929
    %8963 = vmatmul.mubr.bf16.gmra.mxu0 %v7920
    %v8964 = vpop.f32.mrf.mxu0
    %v8965 = vadd.f32 %v8868, %v8964
    %v8966 = vpop.f32.mrf.mxu0
    %v8967 = vpop.f32.mrf.mxu0
    %v8968 = vadd.f32 %v8871, %v8967
    %v8969 = vpop.f32.mrf.mxu0
    %8970 = vmatprep.mubr.bf16.mxu0 %v8010
    %8971 = vmatmul.mubr.bf16.gmra.mxu0 %v8001
    %v8972 = vpop.f32.mrf.mxu0
    %v8973 = vadd.f32 %v8876, %v8972
    %v8974 = vpop.f32.mrf.mxu0
    %v8975 = vpop.f32.mrf.mxu0
    %v8976 = vadd.f32 %v8879, %v8975
    %v8977 = vpop.f32.mrf.mxu0
    %8978 = vmatprep.mubr.bf16.mxu0 %v8091
    %8979 = vmatmul.mubr.bf16.gmra.mxu0 %v8082
    %v8980 = vpop.f32.mrf.mxu0
    %v8981 = vadd.f32 %v8884, %v8980
    %v8982 = vpop.f32.mrf.mxu0
    %v8983 = vpop.f32.mrf.mxu0
    %v8984 = vadd.f32 %v8887, %v8983
    %v8985 = vpop.f32.mrf.mxu0
    %8986 = vmatprep.mubr.bf16.mxu0 %v8172
    %8987 = vmatmul.mubr.bf16.gmra.mxu0 %v8163
    %v8988 = vpop.f32.mrf.mxu0
    %v8989 = vadd.f32 %v8892, %v8988
    %v8990 = vpop.f32.mrf.mxu0
    %v8991 = vpop.f32.mrf.mxu0
    %v8992 = vadd.f32 %v8895, %v8991
    %v8993 = vpop.f32.mrf.mxu0
    %8994 = vdwg.mxu0
    %8995 = vmatprep.subr.bf16.mxu0 0
    %8996 = vmatpush1.bf16.msra.mxu0 %v8615
    %8997 = vmatprep.subr.bf16.mxu0 0
    %8998 = vmatpush1.bf16.msra.mxu0 %v8614
    %8999 = vmatprep.subr.bf16.mxu0 0
    %9000 = vmatpush1.bf16.msra.mxu0 %v8613
    %9001 = vmatprep.subr.bf16.mxu0 0
    %9002 = vmatpush1.bf16.msra.mxu0 %v8612
    %9003 = vmatprep.subr.bf16.mxu0 0
    %9004 = vmatpush1.bf16.msra.mxu0 %v8611
    %9005 = vmatprep.subr.bf16.mxu0 0
    %9006 = vmatpush1.bf16.msra.mxu0 %v8610
    %9007 = vmatprep.subr.bf16.mxu0 0
    %9008 = vmatpush1.bf16.msra.mxu0 %v8609
    %9009 = vmatprep.subr.bf16.mxu0 0
    %9010 = vmatpush1.bf16.msra.mxu0 %v8608
    %9011 = vmatprep.subr.bf16.mxu0 0
    %9012 = vmatpush2.bf16.msra.mxu0 %v8623
    %9013 = vmatprep.subr.bf16.mxu0 0
    %9014 = vmatpush2.bf16.msra.mxu0 %v8622
    %9015 = vmatprep.subr.bf16.mxu0 0
    %9016 = vmatpush2.bf16.msra.mxu0 %v8621
    %9017 = vmatprep.subr.bf16.mxu0 0
    %9018 = vmatpush2.bf16.msra.mxu0 %v8620
    %9019 = vmatprep.subr.bf16.mxu0 0
    %9020 = vmatpush2.bf16.msra.mxu0 %v8619
    %9021 = vmatprep.subr.bf16.mxu0 0
    %9022 = vmatpush2.bf16.msra.mxu0 %v8618
    %9023 = vmatprep.subr.bf16.mxu0 0
    %9024 = vmatpush2.bf16.msra.mxu0 %v8617
    %9025 = vmatprep.subr.bf16.mxu0 0
    %9026 = vmatpush2.bf16.msra.mxu0 %v8616
    %9027 = vmatprep.mubr.bf16.mxu0 %v7615
    %9028 = vmatmul.mubr.bf16.gmra.mxu0 %v7598
    %v9029 = vpop.f32.mrf.mxu0
    %v9030 = vadd.f32 %v8933, %v9029
    %v9031 = vpop.f32.mrf.mxu0
    %v9032 = vpop.f32.mrf.mxu0
    %v9033 = vadd.f32 %v8936, %v9032
    %v9034 = vpop.f32.mrf.mxu0
    %9035 = vmatprep.mubr.bf16.mxu0 %v7704
    %9036 = vmatmul.mubr.bf16.gmra.mxu0 %v7695
    %v9037 = vpop.f32.mrf.mxu0
    %v9038 = vadd.f32 %v8941, %v9037
    %v9039 = vpop.f32.mrf.mxu0
    %v9040 = vpop.f32.mrf.mxu0
    %v9041 = vadd.f32 %v8944, %v9040
    %v9042 = vpop.f32.mrf.mxu0
    %9043 = vmatprep.mubr.bf16.mxu0 %v7785
    %9044 = vmatmul.mubr.bf16.gmra.mxu0 %v7776
    %v9045 = vpop.f32.mrf.mxu0
    %v9046 = vadd.f32 %v8949, %v9045
    %v9047 = vpop.f32.mrf.mxu0
    %v9048 = vpop.f32.mrf.mxu0
    %v9049 = vadd.f32 %v8952, %v9048
    %v9050 = vpop.f32.mrf.mxu0
    %9051 = vmatprep.mubr.bf16.mxu0 %v7866
    %9052 = vmatmul.mubr.bf16.gmra.mxu0 %v7857
    %v9053 = vpop.f32.mrf.mxu0
    %v9054 = vadd.f32 %v8957, %v9053
    %v9055 = vpop.f32.mrf.mxu0
    %v9056 = vpop.f32.mrf.mxu0
    %v9057 = vadd.f32 %v8960, %v9056
    %v9058 = vpop.f32.mrf.mxu0
    %9059 = vmatprep.mubr.bf16.mxu0 %v7947
    %9060 = vmatmul.mubr.bf16.gmra.mxu0 %v7938
    %v9061 = vpop.f32.mrf.mxu0
    %v9062 = vadd.f32 %v8965, %v9061
    %v9063 = vpop.f32.mrf.mxu0
    %v9064 = vpop.f32.mrf.mxu0
    %v9065 = vadd.f32 %v8968, %v9064
    %v9066 = vpop.f32.mrf.mxu0
    %9067 = vmatprep.mubr.bf16.mxu0 %v8028
    %9068 = vmatmul.mubr.bf16.gmra.mxu0 %v8019
    %v9069 = vpop.f32.mrf.mxu0
    %v9070 = vadd.f32 %v8973, %v9069
    %v9071 = vpop.f32.mrf.mxu0
    %v9072 = vpop.f32.mrf.mxu0
    %v9073 = vadd.f32 %v8976, %v9072
    %v9074 = vpop.f32.mrf.mxu0
    %9075 = vmatprep.mubr.bf16.mxu0 %v8109
    %9076 = vmatmul.mubr.bf16.gmra.mxu0 %v8100
    %v9077 = vpop.f32.mrf.mxu0
    %v9078 = vadd.f32 %v8981, %v9077
    %v9079 = vpop.f32.mrf.mxu0
    %v9080 = vpop.f32.mrf.mxu0
    %v9081 = vadd.f32 %v8984, %v9080
    %v9082 = vpop.f32.mrf.mxu0
    %9083 = vmatprep.mubr.bf16.mxu0 %v8190
    %9084 = vmatmul.mubr.bf16.gmra.mxu0 %v8181
    %v9085 = vpop.f32.mrf.mxu0
    %v9086 = vadd.f32 %v8989, %v9085
    %v9087 = vpop.f32.mrf.mxu0
    %v9088 = vpop.f32.mrf.mxu0
    %v9089 = vadd.f32 %v8992, %v9088
    %v9090 = vpop.f32.mrf.mxu0
    %9091 = vdwg.mxu0
    %9092 = vmatprep.subr.bf16.mxu0 0
    %9093 = vmatpush1.bf16.msra.mxu0 %v8631
    %9094 = vmatprep.subr.bf16.mxu0 0
    %9095 = vmatpush1.bf16.msra.mxu0 %v8630
    %9096 = vmatprep.subr.bf16.mxu0 0
    %9097 = vmatpush1.bf16.msra.mxu0 %v8629
    %9098 = vmatprep.subr.bf16.mxu0 0
    %9099 = vmatpush1.bf16.msra.mxu0 %v8628
    %9100 = vmatprep.subr.bf16.mxu0 0
    %9101 = vmatpush1.bf16.msra.mxu0 %v8627
    %9102 = vmatprep.subr.bf16.mxu0 0
    %9103 = vmatpush1.bf16.msra.mxu0 %v8626
    %9104 = vmatprep.subr.bf16.mxu0 0
    %9105 = vmatpush1.bf16.msra.mxu0 %v8625
    %9106 = vmatprep.subr.bf16.mxu0 0
    %9107 = vmatpush1.bf16.msra.mxu0 %v8624
    %9108 = vmatprep.subr.bf16.mxu0 0
    %9109 = vmatpush2.bf16.msra.mxu0 0
    %9110 = vmatprep.subr.bf16.mxu0 0
    %9111 = vmatpush2.bf16.msra.mxu0 0
    %9112 = vmatprep.subr.bf16.mxu0 0
    %9113 = vmatpush2.bf16.msra.mxu0 0
    %9114 = vmatprep.subr.bf16.mxu0 0
    %9115 = vmatpush2.bf16.msra.mxu0 0
    %9116 = vmatprep.subr.bf16.mxu0 0
    %9117 = vmatpush2.bf16.msra.mxu0 0
    %9118 = vmatprep.subr.bf16.mxu0 0
    %9119 = vmatpush2.bf16.msra.mxu0 0
    %9120 = vmatprep.subr.bf16.mxu0 0
    %9121 = vmatpush2.bf16.msra.mxu0 0
    %9122 = vmatprep.subr.bf16.mxu0 0
    %9123 = vmatpush2.bf16.msra.mxu0 0
    %9124 = vmatprep.mubr.bf16.mxu0 0
    %9125 = vmatmul.mubr.bf16.gmra.mxu0 %v7632
    %v9126 = vpop.f32.mrf.mxu0
    %v9127 = vadd.f32 %v9030, %v9126
    %v9128 = vpop.f32.mrf.mxu0
    %v9129 = vpop.f32.mrf.mxu0
    %v9130 = vadd.f32 %v9033, %v9129
    %v9131 = vpop.f32.mrf.mxu0
    %9132 = vmatprep.mubr.bf16.mxu0 0
    %9133 = vmatmul.mubr.bf16.gmra.mxu0 %v7713
    %v9134 = vpop.f32.mrf.mxu0
    %v9135 = vadd.f32 %v9038, %v9134
    %v9136 = vpop.f32.mrf.mxu0
    %v9137 = vpop.f32.mrf.mxu0
    %v9138 = vadd.f32 %v9041, %v9137
    %v9139 = vpop.f32.mrf.mxu0
    %9140 = vmatprep.mubr.bf16.mxu0 0
    %9141 = vmatmul.mubr.bf16.gmra.mxu0 %v7794
    %v9142 = vpop.f32.mrf.mxu0
    %v9143 = vadd.f32 %v9046, %v9142
    %v9144 = vpop.f32.mrf.mxu0
    %v9145 = vpop.f32.mrf.mxu0
    %v9146 = vadd.f32 %v9049, %v9145
    %v9147 = vpop.f32.mrf.mxu0
    %9148 = vmatprep.mubr.bf16.mxu0 0
    %9149 = vmatmul.mubr.bf16.gmra.mxu0 %v7875
    %v9150 = vpop.f32.mrf.mxu0
    %v9151 = vadd.f32 %v9054, %v9150
    %v9152 = vpop.f32.mrf.mxu0
    %v9153 = vpop.f32.mrf.mxu0
    %v9154 = vadd.f32 %v9057, %v9153
    %v9155 = vpop.f32.mrf.mxu0
    %9156 = vmatprep.mubr.bf16.mxu0 0
    %9157 = vmatmul.mubr.bf16.gmra.mxu0 %v7956
    %v9158 = vpop.f32.mrf.mxu0
    %v9159 = vadd.f32 %v9062, %v9158
    %v9160 = vpop.f32.mrf.mxu0
    %v9161 = vpop.f32.mrf.mxu0
    %v9162 = vadd.f32 %v9065, %v9161
    %v9163 = vpop.f32.mrf.mxu0
    %9164 = vmatprep.mubr.bf16.mxu0 0
    %9165 = vmatmul.mubr.bf16.gmra.mxu0 %v8037
    %v9166 = vpop.f32.mrf.mxu0
    %v9167 = vadd.f32 %v9070, %v9166
    %v9168 = vpop.f32.mrf.mxu0
    %v9169 = vpop.f32.mrf.mxu0
    %v9170 = vadd.f32 %v9073, %v9169
    %v9171 = vpop.f32.mrf.mxu0
    %9172 = vmatprep.mubr.bf16.mxu0 0
    %9173 = vmatmul.mubr.bf16.gmra.mxu0 %v8118
    %v9174 = vpop.f32.mrf.mxu0
    %v9175 = vadd.f32 %v9078, %v9174
    %v9176 = vpop.f32.mrf.mxu0
    %v9177 = vpop.f32.mrf.mxu0
    %v9178 = vadd.f32 %v9081, %v9177
    %v9179 = vpop.f32.mrf.mxu0
    %9180 = vmatprep.mubr.bf16.mxu0 0
    %9181 = vmatmul.mubr.bf16.gmra.mxu0 %v8199
    %v9182 = vpop.f32.mrf.mxu0
    %v9183 = vadd.f32 %v9086, %v9182
    %v9184 = vpop.f32.mrf.mxu0
    %v9185 = vpop.f32.mrf.mxu0
    %v9186 = vadd.f32 %v9089, %v9185
    %v9187 = vpop.f32.mrf.mxu0
    %9188 = vdwg.mxu0
    %v9189 = vld [vmem:[#allocation10] sm:$0xff]
    %v9190 = vld [vmem:[#allocation10 + $0x8] sm:$0xff]
    %v9191 = vld [vmem:[#allocation10 + $0x10] sm:$0xff]
    %v9192 = vld [vmem:[#allocation10 + $0x18] sm:$0xff]
    %v9193 = vld [vmem:[#allocation10 + $0x20] sm:$0xff]
    %v9194 = vld [vmem:[#allocation10 + $0x28] sm:$0xff]
    %v9195 = vld [vmem:[#allocation10 + $0x30] sm:$0xff]
    %v9196 = vld [vmem:[#allocation10 + $0x38] sm:$0xff]
    %v9197 = vld [vmem:[#allocation10 + $0x40] sm:$0xff]
    %v9198 = vld [vmem:[#allocation10 + $0x48] sm:$0xff]
    %v9199 = vld [vmem:[#allocation10 + $0x50] sm:$0xff]
    %v9200 = vld [vmem:[#allocation10 + $0x58] sm:$0xff]
    %v9201 = vld [vmem:[#allocation10 + $0x60] sm:$0xff]
    %v9202 = vld [vmem:[#allocation10 + $0x68] sm:$0xff]
    %v9203 = vld [vmem:[#allocation10 + $0x70] sm:$0xff]
    %v9204 = vld [vmem:[#allocation10 + $0x78] sm:$0xff]
    %v9205 = vld [vmem:[%s5] sm:$0xff]
    %v9206 = vld [vmem:[%s5 + $0x8] sm:$0xff]
    %v9207 = vld [vmem:[%s5 + $0x10] sm:$0xff]
    %v9208 = vld [vmem:[%s5 + $0x18] sm:$0xff]
    %v9209 = vld [vmem:[%s5 + $0x20] sm:$0xff]
    %v9210 = vld [vmem:[%s5 + $0x28] sm:$0xff]
    %v9211 = vld [vmem:[%s5 + $0x30] sm:$0xff]
    %v9212 = vld [vmem:[%s5 + $0x38] sm:$0xff]
    %v9213 = vld [vmem:[%s5 + $0x40] sm:$0xff]
    %v9214 = vld [vmem:[%s5 + $0x48] sm:$0xff]
    %v9215 = vld [vmem:[%s5 + $0x50] sm:$0xff]
    %v9216 = vld [vmem:[%s5 + $0x58] sm:$0xff]
    %v9217 = vld [vmem:[%s5 + $0x60] sm:$0xff]
    %v9218 = vld [vmem:[%s5 + $0x68] sm:$0xff]
    %v9219 = vld [vmem:[%s5 + $0x70] sm:$0xff]
    %v9220 = vld [vmem:[%s5 + $0x78] sm:$0xff]
    %v9221 = vld [vmem:[%s6] sm:$0x1]
    %v9222 = vld [vmem:[%s7] sm:$0xf]
    %v9223 = vld [vmem:[%s8] sm:$0x1]
    %v9224 = vadd.f32 %v9127, %v9130
    %v9225 = vadd.f32 %v9224, %v9135
    %v9226 = vadd.f32 %v9225, %v9138
    %v9227 = vadd.f32 %v9226, %v9143
    %v9228 = vadd.f32 %v9227, %v9146
    %v9229 = vadd.f32 %v9228, %v9151
    %v9230 = vadd.f32 %v9229, %v9154
    %v9231 = vrot.slane %v9230, 4
    %v9232 = vadd.f32 %v9230, %v9231
    %v9233 = vrot.slane %v9232, 2
    %v9234 = vadd.f32 %v9232, %v9233
    %v9235 = vrot.slane %v9234, 1
    %v9236 = vadd.f32 %v9234, %v9235
    %9237 = vmatprep.subr.mxu0 0.0
    %9238 = vmatpush1.msra.mxu0 %v9204
    %9239 = vmatprep.subr.mxu0 0.0
    %9240 = vmatpush1.msra.mxu0 %v9203
    %9241 = vmatprep.subr.mxu0 0.0
    %9242 = vmatpush1.msra.mxu0 %v9202
    %9243 = vmatprep.subr.mxu0 0.0
    %9244 = vmatpush1.msra.mxu0 %v9201
    %9245 = vmatprep.subr.mxu0 0.0
    %9246 = vmatpush1.msra.mxu0 %v9200
    %9247 = vmatprep.subr.mxu0 0.0
    %9248 = vmatpush1.msra.mxu0 %v9199
    %9249 = vmatprep.subr.mxu0 0.0
    %9250 = vmatpush1.msra.mxu0 %v9198
    %9251 = vmatprep.subr.mxu0 0.0
    %9252 = vmatpush1.msra.mxu0 %v9197
    %9253 = vmatprep.subr.mxu0 0.0
    %9254 = vmatpush1.msra.mxu0 %v9196
    %9255 = vmatprep.subr.mxu0 0.0
    %9256 = vmatpush1.msra.mxu0 %v9195
    %9257 = vmatprep.subr.mxu0 0.0
    %9258 = vmatpush1.msra.mxu0 %v9194
    %9259 = vmatprep.subr.mxu0 0.0
    %9260 = vmatpush1.msra.mxu0 %v9193
    %9261 = vmatprep.subr.mxu0 0.0
    %9262 = vmatpush1.msra.mxu0 %v9192
    %9263 = vmatprep.subr.mxu0 0.0
    %9264 = vmatpush1.msra.mxu0 %v9191
    %9265 = vmatprep.subr.mxu0 0.0
    %9266 = vmatpush1.msra.mxu0 %v9190
    %9267 = vmatprep.subr.mxu0 0.0
    %9268 = vmatpush1.msra.mxu0 %v9189
    %9269 = vmatprep.subr.mxu0 0.0
    %9270 = vmatpush2.msra.mxu0 0.0
    %9271 = vmatprep.subr.mxu0 0.0
    %9272 = vmatpush2.msra.mxu0 0.0
    %9273 = vmatprep.subr.mxu0 0.0
    %9274 = vmatpush2.msra.mxu0 0.0
    %9275 = vmatprep.subr.mxu0 0.0
    %9276 = vmatpush2.msra.mxu0 0.0
    %9277 = vmatprep.subr.mxu0 0.0
    %9278 = vmatpush2.msra.mxu0 0.0
    %9279 = vmatprep.subr.mxu0 0.0
    %9280 = vmatpush2.msra.mxu0 0.0
    %9281 = vmatprep.subr.mxu0 0.0
    %9282 = vmatpush2.msra.mxu0 0.0
    %9283 = vmatprep.subr.mxu0 0.0
    %9284 = vmatpush2.msra.mxu0 0.0
    %9285 = vmatprep.subr.mxu0 0.0
    %9286 = vmatpush2.msra.mxu0 0.0
    %9287 = vmatprep.subr.mxu0 0.0
    %9288 = vmatpush2.msra.mxu0 0.0
    %9289 = vmatprep.subr.mxu0 0.0
    %9290 = vmatpush2.msra.mxu0 0.0
    %9291 = vmatprep.subr.mxu0 0.0
    %9292 = vmatpush2.msra.mxu0 0.0
    %9293 = vmatprep.subr.mxu0 0.0
    %9294 = vmatpush2.msra.mxu0 0.0
    %9295 = vmatprep.subr.mxu0 0.0
    %9296 = vmatpush2.msra.mxu0 0.0
    %9297 = vmatprep.subr.mxu0 0.0
    %9298 = vmatpush2.msra.mxu0 0.0
    %9299 = vmatprep.subr.mxu0 0.0
    %9300 = vmatpush2.msra.mxu0 0.0
    %9301 = vmatprep.mubr.f32.mxu0 0.0
    %9302 = vmatmul.mubr.f32.gmra.mxu0 %v9236
    %v9303 = vpop.f32.mrf.mxu0
    %v9304 = vadd.f32 0.0, %v9303
    %v9305 = vpop.f32.mrf.mxu0
    %9306 = vdwg.mxu0
    %9307 = vmatprep.subr.mxu0 0.0
    %9308 = vmatpush1.msra.mxu0 %v9220
    %9309 = vmatprep.subr.mxu0 0.0
    %9310 = vmatpush1.msra.mxu0 %v9219
    %9311 = vmatprep.subr.mxu0 0.0
    %9312 = vmatpush1.msra.mxu0 %v9218
    %9313 = vmatprep.subr.mxu0 0.0
    %9314 = vmatpush1.msra.mxu0 %v9217
    %9315 = vmatprep.subr.mxu0 0.0
    %9316 = vmatpush1.msra.mxu0 %v9216
    %9317 = vmatprep.subr.mxu0 0.0
    %9318 = vmatpush1.msra.mxu0 %v9215
    %9319 = vmatprep.subr.mxu0 0.0
    %9320 = vmatpush1.msra.mxu0 %v9214
    %9321 = vmatprep.subr.mxu0 0.0
    %9322 = vmatpush1.msra.mxu0 %v9213
    %9323 = vmatprep.subr.mxu0 0.0
    %9324 = vmatpush1.msra.mxu0 %v9212
    %9325 = vmatprep.subr.mxu0 0.0
    %9326 = vmatpush1.msra.mxu0 %v9211
    %9327 = vmatprep.subr.mxu0 0.0
    %9328 = vmatpush1.msra.mxu0 %v9210
    %9329 = vmatprep.subr.mxu0 0.0
    %9330 = vmatpush1.msra.mxu0 %v9209
    %9331 = vmatprep.subr.mxu0 0.0
    %9332 = vmatpush1.msra.mxu0 %v9208
    %9333 = vmatprep.subr.mxu0 0.0
    %9334 = vmatpush1.msra.mxu0 %v9207
    %9335 = vmatprep.subr.mxu0 0.0
    %9336 = vmatpush1.msra.mxu0 %v9206
    %9337 = vmatprep.subr.mxu0 0.0
    %9338 = vmatpush1.msra.mxu0 %v9205
    %9339 = vmatprep.subr.mxu0 0.0
    %9340 = vmatpush2.msra.mxu0 0.0
    %9341 = vmatprep.subr.mxu0 0.0
    %9342 = vmatpush2.msra.mxu0 0.0
    %9343 = vmatprep.subr.mxu0 0.0
    %9344 = vmatpush2.msra.mxu0 0.0
    %9345 = vmatprep.subr.mxu0 0.0
    %9346 = vmatpush2.msra.mxu0 0.0
    %9347 = vmatprep.subr.mxu0 0.0
    %9348 = vmatpush2.msra.mxu0 0.0
    %9349 = vmatprep.subr.mxu0 0.0
    %9350 = vmatpush2.msra.mxu0 0.0
    %9351 = vmatprep.subr.mxu0 0.0
    %9352 = vmatpush2.msra.mxu0 0.0
    %9353 = vmatprep.subr.mxu0 0.0
    %9354 = vmatpush2.msra.mxu0 0.0
    %9355 = vmatprep.subr.mxu0 0.0
    %9356 = vmatpush2.msra.mxu0 0.0
    %9357 = vmatprep.subr.mxu0 0.0
    %9358 = vmatpush2.msra.mxu0 0.0
    %9359 = vmatprep.subr.mxu0 0.0
    %9360 = vmatpush2.msra.mxu0 0.0
    %9361 = vmatprep.subr.mxu0 0.0
    %9362 = vmatpush2.msra.mxu0 0.0
    %9363 = vmatprep.subr.mxu0 0.0
    %9364 = vmatpush2.msra.mxu0 0.0
    %9365 = vmatprep.subr.mxu0 0.0
    %9366 = vmatpush2.msra.mxu0 0.0
    %9367 = vmatprep.subr.mxu0 0.0
    %9368 = vmatpush2.msra.mxu0 0.0
    %9369 = vmatprep.subr.mxu0 0.0
    %9370 = vmatpush2.msra.mxu0 0.0
    %9371 = vmatprep.mubr.f32.mxu0 0.0
    %9372 = vmatmul.mubr.f32.gmra.mxu0 %v9304
    %v9373 = vpop.f32.mrf.mxu0
    %v9374 = vadd.f32 %v9221, %v9373
    %v9375 = vpop.f32.mrf.mxu0
    %9376 = vdwg.mxu0
    %v9377 = vmax.f32 %v9374, 0.0
    %vm9378 = vcmask 31744
    %v9380 = vsel %vm9378, %v9377, 0
    %vm9382 = vcmask 1043456
    %v9384 = vsel %vm9382, %v9222, 0
    %9386 = vmatprep.subr.mxu0 0.0
    %9387 = vmatpush1.msra.mxu0 0.0
    %9388 = vmatprep.subr.mxu0 0.0
    %9389 = vmatpush1.msra.mxu0 0.0
    %9390 = vmatprep.subr.mxu0 0.0
    %9391 = vmatpush1.msra.mxu0 0.0
    %9392 = vmatprep.subr.mxu0 0.0
    %9393 = vmatpush1.msra.mxu0 0.0
    %9394 = vmatprep.subr.mxu0 0.0
    %9395 = vmatpush1.msra.mxu0 0.0
    %9396 = vmatprep.subr.mxu0 0.0
    %9397 = vmatpush1.msra.mxu0 0.0
    %9398 = vmatprep.subr.mxu0 0.0
    %9399 = vmatpush1.msra.mxu0 0.0
    %9400 = vmatprep.subr.mxu0 0.0
    %9401 = vmatpush1.msra.mxu0 0.0
    %9402 = vmatprep.subr.mxu0 0.0
    %9403 = vmatpush1.msra.mxu0 0.0
    %9404 = vmatprep.subr.mxu0 0.0
    %9405 = vmatpush1.msra.mxu0 0.0
    %9406 = vmatprep.subr.mxu0 0.0
    %9407 = vmatpush1.msra.mxu0 0.0
    %9408 = vmatprep.subr.mxu0 0.0
    %9409 = vmatpush1.msra.mxu0 0.0
    %9410 = vmatprep.subr.mxu0 0.0
    %9411 = vmatpush1.msra.mxu0 0.0
    %9412 = vmatprep.subr.mxu0 0.0
    %9413 = vmatpush1.msra.mxu0 0.0
    %9414 = vmatprep.subr.mxu0 0.0
    %9415 = vmatpush1.msra.mxu0 0.0
    %9416 = vmatprep.subr.mxu0 0.0
    %9417 = vmatpush1.msra.mxu0 %v9384
    %9418 = vmatprep.subr.mxu0 0.0
    %9419 = vmatpush2.msra.mxu0 0.0
    %9420 = vmatprep.subr.mxu0 0.0
    %9421 = vmatpush2.msra.mxu0 0.0
    %9422 = vmatprep.subr.mxu0 0.0
    %9423 = vmatpush2.msra.mxu0 0.0
    %9424 = vmatprep.subr.mxu0 0.0
    %9425 = vmatpush2.msra.mxu0 0.0
    %9426 = vmatprep.subr.mxu0 0.0
    %9427 = vmatpush2.msra.mxu0 0.0
    %9428 = vmatprep.subr.mxu0 0.0
    %9429 = vmatpush2.msra.mxu0 0.0
    %9430 = vmatprep.subr.mxu0 0.0
    %9431 = vmatpush2.msra.mxu0 0.0
    %9432 = vmatprep.subr.mxu0 0.0
    %9433 = vmatpush2.msra.mxu0 0.0
    %9434 = vmatprep.subr.mxu0 0.0
    %9435 = vmatpush2.msra.mxu0 0.0
    %9436 = vmatprep.subr.mxu0 0.0
    %9437 = vmatpush2.msra.mxu0 0.0
    %9438 = vmatprep.subr.mxu0 0.0
    %9439 = vmatpush2.msra.mxu0 0.0
    %9440 = vmatprep.subr.mxu0 0.0
    %9441 = vmatpush2.msra.mxu0 0.0
    %9442 = vmatprep.subr.mxu0 0.0
    %9443 = vmatpush2.msra.mxu0 0.0
    %9444 = vmatprep.subr.mxu0 0.0
    %9445 = vmatpush2.msra.mxu0 0.0
    %9446 = vmatprep.subr.mxu0 0.0
    %9447 = vmatpush2.msra.mxu0 0.0
    %9448 = vmatprep.subr.mxu0 0.0
    %9449 = vmatpush2.msra.mxu0 0.0
    %9450 = vmatprep.mubr.f32.mxu0 0.0
    %9451 = vmatmul.mubr.f32.gmra.mxu0 %v9380
    %v9452 = vpop.f32.mrf.mxu0
    %v9453 = vadd.f32 %v9223, %v9452
    %v9454 = vpop.f32.mrf.mxu0
    %9455 = vdwg.mxu0
    %v9456 = vxor.u32 %v9453, 2147483648
    %v9457 = vmul.f32 %v9456, 1.442695
    %v9458 = vpow.pop %v9457
    %v9459 = vadd.f32 %v9458, 1.0
    %v9460 = vrcp.pop %v9459
    %v9461 = vmul.f32 1.0, %v9460
    %v9462 = vlaneseq
    %v9463 = vshrl.u32 %v9462, 7
    %v9464 = vsub.s32 0, %v9463
    %v9465 = vrot.slane %v9461, %v9464
    %v9466 = vadd.f32 %v9159, %v9162
    %v9467 = vadd.f32 %v9466, %v9167
    %v9468 = vadd.f32 %v9467, %v9170
    %v9469 = vadd.f32 %v9468, %v9175
    %v9470 = vadd.f32 %v9469, %v9178
    %v9471 = vadd.f32 %v9470, %v9183
    %v9472 = vadd.f32 %v9471, %v9186
    %v9473 = vrot.slane %v9472, 4
    %v9474 = vadd.f32 %v9472, %v9473
    %v9475 = vrot.slane %v9474, 2
    %v9476 = vadd.f32 %v9474, %v9475
    %v9477 = vrot.slane %v9476, 1
    %v9478 = vadd.f32 %v9476, %v9477
    %9479 = vmatprep.subr.mxu0 0.0
    %9480 = vmatpush1.msra.mxu0 %v9204
    %9481 = vmatprep.subr.mxu0 0.0
    %9482 = vmatpush1.msra.mxu0 %v9203
    %9483 = vmatprep.subr.mxu0 0.0
    %9484 = vmatpush1.msra.mxu0 %v9202
    %9485 = vmatprep.subr.mxu0 0.0
    %9486 = vmatpush1.msra.mxu0 %v9201
    %9487 = vmatprep.subr.mxu0 0.0
    %9488 = vmatpush1.msra.mxu0 %v9200
    %9489 = vmatprep.subr.mxu0 0.0
    %9490 = vmatpush1.msra.mxu0 %v9199
    %9491 = vmatprep.subr.mxu0 0.0
    %9492 = vmatpush1.msra.mxu0 %v9198
    %9493 = vmatprep.subr.mxu0 0.0
    %9494 = vmatpush1.msra.mxu0 %v9197
    %9495 = vmatprep.subr.mxu0 0.0
    %9496 = vmatpush1.msra.mxu0 %v9196
    %9497 = vmatprep.subr.mxu0 0.0
    %9498 = vmatpush1.msra.mxu0 %v9195
    %9499 = vmatprep.subr.mxu0 0.0
    %9500 = vmatpush1.msra.mxu0 %v9194
    %9501 = vmatprep.subr.mxu0 0.0
    %9502 = vmatpush1.msra.mxu0 %v9193
    %9503 = vmatprep.subr.mxu0 0.0
    %9504 = vmatpush1.msra.mxu0 %v9192
    %9505 = vmatprep.subr.mxu0 0.0
    %9506 = vmatpush1.msra.mxu0 %v9191
    %9507 = vmatprep.subr.mxu0 0.0
    %9508 = vmatpush1.msra.mxu0 %v9190
    %9509 = vmatprep.subr.mxu0 0.0
    %9510 = vmatpush1.msra.mxu0 %v9189
    %9511 = vmatprep.subr.mxu0 0.0
    %9512 = vmatpush2.msra.mxu0 0.0
    %9513 = vmatprep.subr.mxu0 0.0
    %9514 = vmatpush2.msra.mxu0 0.0
    %9515 = vmatprep.subr.mxu0 0.0
    %9516 = vmatpush2.msra.mxu0 0.0
    %9517 = vmatprep.subr.mxu0 0.0
    %9518 = vmatpush2.msra.mxu0 0.0
    %9519 = vmatprep.subr.mxu0 0.0
    %9520 = vmatpush2.msra.mxu0 0.0
    %9521 = vmatprep.subr.mxu0 0.0
    %9522 = vmatpush2.msra.mxu0 0.0
    %9523 = vmatprep.subr.mxu0 0.0
    %9524 = vmatpush2.msra.mxu0 0.0
    %9525 = vmatprep.subr.mxu0 0.0
    %9526 = vmatpush2.msra.mxu0 0.0
    %9527 = vmatprep.subr.mxu0 0.0
    %9528 = vmatpush2.msra.mxu0 0.0
    %9529 = vmatprep.subr.mxu0 0.0
    %9530 = vmatpush2.msra.mxu0 0.0
    %9531 = vmatprep.subr.mxu0 0.0
    %9532 = vmatpush2.msra.mxu0 0.0
    %9533 = vmatprep.subr.mxu0 0.0
    %9534 = vmatpush2.msra.mxu0 0.0
    %9535 = vmatprep.subr.mxu0 0.0
    %9536 = vmatpush2.msra.mxu0 0.0
    %9537 = vmatprep.subr.mxu0 0.0
    %9538 = vmatpush2.msra.mxu0 0.0
    %9539 = vmatprep.subr.mxu0 0.0
    %9540 = vmatpush2.msra.mxu0 0.0
    %9541 = vmatprep.subr.mxu0 0.0
    %9542 = vmatpush2.msra.mxu0 0.0
    %9543 = vmatprep.mubr.f32.mxu0 0.0
    %9544 = vmatmul.mubr.f32.gmra.mxu0 %v9478
    %v9545 = vpop.f32.mrf.mxu0
    %v9546 = vadd.f32 0.0, %v9545
    %v9547 = vpop.f32.mrf.mxu0
    %9548 = vdwg.mxu0
    %9549 = vmatprep.subr.mxu0 0.0
    %9550 = vmatpush1.msra.mxu0 %v9220
    %9551 = vmatprep.subr.mxu0 0.0
    %9552 = vmatpush1.msra.mxu0 %v9219
    %9553 = vmatprep.subr.mxu0 0.0
    %9554 = vmatpush1.msra.mxu0 %v9218
    %9555 = vmatprep.subr.mxu0 0.0
    %9556 = vmatpush1.msra.mxu0 %v9217
    %9557 = vmatprep.subr.mxu0 0.0
    %9558 = vmatpush1.msra.mxu0 %v9216
    %9559 = vmatprep.subr.mxu0 0.0
    %9560 = vmatpush1.msra.mxu0 %v9215
    %9561 = vmatprep.subr.mxu0 0.0
    %9562 = vmatpush1.msra.mxu0 %v9214
    %9563 = vmatprep.subr.mxu0 0.0
    %9564 = vmatpush1.msra.mxu0 %v9213
    %9565 = vmatprep.subr.mxu0 0.0
    %9566 = vmatpush1.msra.mxu0 %v9212
    %9567 = vmatprep.subr.mxu0 0.0
    %9568 = vmatpush1.msra.mxu0 %v9211
    %9569 = vmatprep.subr.mxu0 0.0
    %9570 = vmatpush1.msra.mxu0 %v9210
    %9571 = vmatprep.subr.mxu0 0.0
    %9572 = vmatpush1.msra.mxu0 %v9209
    %9573 = vmatprep.subr.mxu0 0.0
    %9574 = vmatpush1.msra.mxu0 %v9208
    %9575 = vmatprep.subr.mxu0 0.0
    %9576 = vmatpush1.msra.mxu0 %v9207
    %9577 = vmatprep.subr.mxu0 0.0
    %9578 = vmatpush1.msra.mxu0 %v9206
    %9579 = vmatprep.subr.mxu0 0.0
    %9580 = vmatpush1.msra.mxu0 %v9205
    %9581 = vmatprep.subr.mxu0 0.0
    %9582 = vmatpush2.msra.mxu0 0.0
    %9583 = vmatprep.subr.mxu0 0.0
    %9584 = vmatpush2.msra.mxu0 0.0
    %9585 = vmatprep.subr.mxu0 0.0
    %9586 = vmatpush2.msra.mxu0 0.0
    %9587 = vmatprep.subr.mxu0 0.0
    %9588 = vmatpush2.msra.mxu0 0.0
    %9589 = vmatprep.subr.mxu0 0.0
    %9590 = vmatpush2.msra.mxu0 0.0
    %9591 = vmatprep.subr.mxu0 0.0
    %9592 = vmatpush2.msra.mxu0 0.0
    %9593 = vmatprep.subr.mxu0 0.0
    %9594 = vmatpush2.msra.mxu0 0.0
    %9595 = vmatprep.subr.mxu0 0.0
    %9596 = vmatpush2.msra.mxu0 0.0
    %9597 = vmatprep.subr.mxu0 0.0
    %9598 = vmatpush2.msra.mxu0 0.0
    %9599 = vmatprep.subr.mxu0 0.0
    %9600 = vmatpush2.msra.mxu0 0.0
    %9601 = vmatprep.subr.mxu0 0.0
    %9602 = vmatpush2.msra.mxu0 0.0
    %9603 = vmatprep.subr.mxu0 0.0
    %9604 = vmatpush2.msra.mxu0 0.0
    %9605 = vmatprep.subr.mxu0 0.0
    %9606 = vmatpush2.msra.mxu0 0.0
    %9607 = vmatprep.subr.mxu0 0.0
    %9608 = vmatpush2.msra.mxu0 0.0
    %9609 = vmatprep.subr.mxu0 0.0
    %9610 = vmatpush2.msra.mxu0 0.0
    %9611 = vmatprep.subr.mxu0 0.0
    %9612 = vmatpush2.msra.mxu0 0.0
    %9613 = vmatprep.mubr.f32.mxu0 0.0
    %9614 = vmatmul.mubr.f32.gmra.mxu0 %v9546
    %v9615 = vpop.f32.mrf.mxu0
    %v9616 = vadd.f32 %v9221, %v9615
    %v9617 = vpop.f32.mrf.mxu0
    %9618 = vdwg.mxu0
    %v9619 = vmax.f32 %v9616, 0.0
    %v9621 = vsel %vm9378, %v9619, 0
    %9623 = vmatprep.subr.mxu0 0.0
    %9624 = vmatpush1.msra.mxu0 0.0
    %9625 = vmatprep.subr.mxu0 0.0
    %9626 = vmatpush1.msra.mxu0 0.0
    %9627 = vmatprep.subr.mxu0 0.0
    %9628 = vmatpush1.msra.mxu0 0.0
    %9629 = vmatprep.subr.mxu0 0.0
    %9630 = vmatpush1.msra.mxu0 0.0
    %9631 = vmatprep.subr.mxu0 0.0
    %9632 = vmatpush1.msra.mxu0 0.0
    %9633 = vmatprep.subr.mxu0 0.0
    %9634 = vmatpush1.msra.mxu0 0.0
    %9635 = vmatprep.subr.mxu0 0.0
    %9636 = vmatpush1.msra.mxu0 0.0
    %9637 = vmatprep.subr.mxu0 0.0
    %9638 = vmatpush1.msra.mxu0 0.0
    %9639 = vmatprep.subr.mxu0 0.0
    %9640 = vmatpush1.msra.mxu0 0.0
    %9641 = vmatprep.subr.mxu0 0.0
    %9642 = vmatpush1.msra.mxu0 0.0
    %9643 = vmatprep.subr.mxu0 0.0
    %9644 = vmatpush1.msra.mxu0 0.0
    %9645 = vmatprep.subr.mxu0 0.0
    %9646 = vmatpush1.msra.mxu0 0.0
    %9647 = vmatprep.subr.mxu0 0.0
    %9648 = vmatpush1.msra.mxu0 0.0
    %9649 = vmatprep.subr.mxu0 0.0
    %9650 = vmatpush1.msra.mxu0 0.0
    %9651 = vmatprep.subr.mxu0 0.0
    %9652 = vmatpush1.msra.mxu0 0.0
    %9653 = vmatprep.subr.mxu0 0.0
    %9654 = vmatpush1.msra.mxu0 %v9384
    %9655 = vmatprep.subr.mxu0 0.0
    %9656 = vmatpush2.msra.mxu0 0.0
    %9657 = vmatprep.subr.mxu0 0.0
    %9658 = vmatpush2.msra.mxu0 0.0
    %9659 = vmatprep.subr.mxu0 0.0
    %9660 = vmatpush2.msra.mxu0 0.0
    %9661 = vmatprep.subr.mxu0 0.0
    %9662 = vmatpush2.msra.mxu0 0.0
    %9663 = vmatprep.subr.mxu0 0.0
    %9664 = vmatpush2.msra.mxu0 0.0
    %9665 = vmatprep.subr.mxu0 0.0
    %9666 = vmatpush2.msra.mxu0 0.0
    %9667 = vmatprep.subr.mxu0 0.0
    %9668 = vmatpush2.msra.mxu0 0.0
    %9669 = vmatprep.subr.mxu0 0.0
    %9670 = vmatpush2.msra.mxu0 0.0
    %9671 = vmatprep.subr.mxu0 0.0
    %9672 = vmatpush2.msra.mxu0 0.0
    %9673 = vmatprep.subr.mxu0 0.0
    %9674 = vmatpush2.msra.mxu0 0.0
    %9675 = vmatprep.subr.mxu0 0.0
    %9676 = vmatpush2.msra.mxu0 0.0
    %9677 = vmatprep.subr.mxu0 0.0
    %9678 = vmatpush2.msra.mxu0 0.0
    %9679 = vmatprep.subr.mxu0 0.0
    %9680 = vmatpush2.msra.mxu0 0.0
    %9681 = vmatprep.subr.mxu0 0.0
    %9682 = vmatpush2.msra.mxu0 0.0
    %9683 = vmatprep.subr.mxu0 0.0
    %9684 = vmatpush2.msra.mxu0 0.0
    %9685 = vmatprep.subr.mxu0 0.0
    %9686 = vmatpush2.msra.mxu0 0.0
    %9687 = vmatprep.mubr.f32.mxu0 0.0
    %9688 = vmatmul.mubr.f32.gmra.mxu0 %v9621
    %v9689 = vpop.f32.mrf.mxu0
    %v9690 = vadd.f32 %v9223, %v9689
    %v9691 = vpop.f32.mrf.mxu0
    %9692 = vdwg.mxu0
    %v9693 = vxor.u32 %v9690, 2147483648
    %v9694 = vmul.f32 %v9693, 1.442695
    %v9695 = vpow.pop %v9694
    %v9696 = vadd.f32 %v9695, 1.0
    %v9697 = vrcp.pop %v9696
    %v9698 = vmul.f32 1.0, %v9697
    %v9699 = vlaneseq
    %v9700 = vshrl.u32 %v9699, 7
    %v9701 = vsub.s32 0, %v9700
    %v9702 = vrot.slane %v9698, %v9701
    %v9703 = vmul.f32 %v9127, %v9465
    %v9704 = vmul.f32 %v9130, %v9465
    %v9705 = vmul.f32 %v9135, %v9465
    %v9706 = vmul.f32 %v9138, %v9465
    %v9707 = vmul.f32 %v9143, %v9465
    %v9708 = vmul.f32 %v9146, %v9465
    %v9709 = vmul.f32 %v9151, %v9465
    %v9710 = vmul.f32 %v9154, %v9465
    %v9711 = vmul.f32 %v9159, %v9702
    %v9712 = vmul.f32 %v9162, %v9702
    %v9713 = vmul.f32 %v9167, %v9702
    %v9714 = vmul.f32 %v9170, %v9702
    %v9715 = vmul.f32 %v9175, %v9702
    %v9716 = vmul.f32 %v9178, %v9702
    %v9717 = vmul.f32 %v9183, %v9702
    %v9718 = vmul.f32 %v9186, %v9702
    %v9719 = vpack.c.bf16 %v9704, %v9703
    %v9720 = vpack.c.bf16 %v9706, %v9705
    %v9721 = vpack.c.bf16 %v9708, %v9707
    %v9722 = vpack.c.bf16 %v9710, %v9709
    %v9723 = vpack.c.bf16 %v9712, %v9711
    %v9724 = vpack.c.bf16 %v9714, %v9713
    %v9725 = vpack.c.bf16 %v9716, %v9715
    %v9726 = vpack.c.bf16 %v9718, %v9717
    %v9727 = vld [vmem:[%s9] sm:$0xf]
    %v9728 = vld [vmem:[%s9 + $0x4] sm:$0xf]
    %v9729 = vld [vmem:[%s9 + $0x8] sm:$0xf]
    %v9730 = vld [vmem:[%s9 + $0xc] sm:$0xf]
    %v9731 = vld [vmem:[%s9 + $0x10] sm:$0xf]
    %v9732 = vld [vmem:[%s9 + $0x14] sm:$0xf]
    %v9733 = vld [vmem:[%s9 + $0x18] sm:$0xf]
    %v9734 = vld [vmem:[%s9 + $0x1c] sm:$0xf]
    %v9735 = vld [vmem:[%s9 + $0x20] sm:$0xf]
    %v9736 = vld [vmem:[%s9 + $0x24] sm:$0xf]
    %v9737 = vld [vmem:[%s9 + $0x28] sm:$0xf]
    %v9738 = vld [vmem:[%s9 + $0x2c] sm:$0xf]
    %v9739 = vld [vmem:[%s9 + $0x30] sm:$0xf]
    %v9740 = vld [vmem:[%s9 + $0x34] sm:$0xf]
    %v9741 = vld [vmem:[%s9 + $0x38] sm:$0xf]
    %v9742 = vld [vmem:[%s9 + $0x3c] sm:$0xf]
    %v9759 = vunpack.c.l.b16 %v9727
    %v9760 = vunpack.c.l.b16 %v9728
    %v9761 = vunpack.c.l.b16 %v9729
    %v9762 = vunpack.c.l.b16 %v9730
    %v9763 = vunpack.c.l.b16 %v9731
    %v9764 = vunpack.c.l.b16 %v9732
    %v9765 = vunpack.c.l.b16 %v9733
    %v9766 = vunpack.c.l.b16 %v9734
    %v9767 = vunpack.c.l.b16 %v9735
    %v9768 = vunpack.c.l.b16 %v9736
    %v9769 = vunpack.c.l.b16 %v9737
    %v9770 = vunpack.c.l.b16 %v9738
    %v9771 = vunpack.c.l.b16 %v9739
    %v9772 = vunpack.c.l.b16 %v9740
    %v9773 = vunpack.c.l.b16 %v9741
    %v9774 = vunpack.c.l.b16 %v9742
    %v9775 = vpack.c.b16 %v9760, %v9759
    %v9776 = vpack.c.b16 %v9762, %v9761
    %v9777 = vpack.c.b16 %v9764, %v9763
    %v9778 = vpack.c.b16 %v9766, %v9765
    %v9779 = vpack.c.b16 %v9768, %v9767
    %v9780 = vpack.c.b16 %v9770, %v9769
    %v9781 = vpack.c.b16 %v9772, %v9771
    %v9782 = vpack.c.b16 %v9774, %v9773
    %9791 = vmatprep.subr.bf16.mxu0 0
    %9792 = vmatpush1.bf16.msra.mxu0 %v9782
    %9793 = vmatprep.subr.bf16.mxu0 0
    %9794 = vmatpush1.bf16.msra.mxu0 %v9781
    %9795 = vmatprep.subr.bf16.mxu0 0
    %9796 = vmatpush1.bf16.msra.mxu0 %v9780
    %9797 = vmatprep.subr.bf16.mxu0 0
    %9798 = vmatpush1.bf16.msra.mxu0 %v9779
    %9799 = vmatprep.subr.bf16.mxu0 0
    %9800 = vmatpush1.bf16.msra.mxu0 %v9778
    %9801 = vmatprep.subr.bf16.mxu0 0
    %9802 = vmatpush1.bf16.msra.mxu0 %v9777
    %9803 = vmatprep.subr.bf16.mxu0 0
    %9804 = vmatpush1.bf16.msra.mxu0 %v9776
    %9805 = vmatprep.subr.bf16.mxu0 0
    %9806 = vmatpush1.bf16.msra.mxu0 %v9775
    %9807 = vmatprep.subr.bf16.mxu0 0
    %9808 = vmatpush2.bf16.msra.mxu0 0
    %9809 = vmatprep.subr.bf16.mxu0 0
    %9810 = vmatpush2.bf16.msra.mxu0 0
    %9811 = vmatprep.subr.bf16.mxu0 0
    %9812 = vmatpush2.bf16.msra.mxu0 0
    %9813 = vmatprep.subr.bf16.mxu0 0
    %9814 = vmatpush2.bf16.msra.mxu0 0
    %9815 = vmatprep.subr.bf16.mxu0 0
    %9816 = vmatpush2.bf16.msra.mxu0 0
    %9817 = vmatprep.subr.bf16.mxu0 0
    %9818 = vmatpush2.bf16.msra.mxu0 0
    %9819 = vmatprep.subr.bf16.mxu0 0
    %9820 = vmatpush2.bf16.msra.mxu0 0
    %9821 = vmatprep.subr.bf16.mxu0 0
    %9822 = vmatpush2.bf16.msra.mxu0 0
    %9823 = vmatprep.mubr.bf16.mxu0 0
    %9824 = vmatmul.mubr.bf16.gmra.mxu0 %v9719
    %v9825 = vpop.f32.mrf.mxu0
    %v9826 = vadd.f32 0.0, %v9825
    %v9827 = vpop.f32.mrf.mxu0
    %v9828 = vpop.f32.mrf.mxu0
    %v9829 = vadd.f32 0.0, %v9828
    %v9830 = vpop.f32.mrf.mxu0
    %9831 = vmatprep.mubr.bf16.mxu0 0
    %9832 = vmatmul.mubr.bf16.gmra.mxu0 %v9720
    %v9833 = vpop.f32.mrf.mxu0
    %v9834 = vadd.f32 0.0, %v9833
    %v9835 = vpop.f32.mrf.mxu0
    %v9836 = vpop.f32.mrf.mxu0
    %v9837 = vadd.f32 0.0, %v9836
    %v9838 = vpop.f32.mrf.mxu0
    %9839 = vmatprep.mubr.bf16.mxu0 0
    %9840 = vmatmul.mubr.bf16.gmra.mxu0 %v9721
    %v9841 = vpop.f32.mrf.mxu0
    %v9842 = vadd.f32 0.0, %v9841
    %v9843 = vpop.f32.mrf.mxu0
    %v9844 = vpop.f32.mrf.mxu0
    %v9845 = vadd.f32 0.0, %v9844
    %v9846 = vpop.f32.mrf.mxu0
    %9847 = vmatprep.mubr.bf16.mxu0 0
    %9848 = vmatmul.mubr.bf16.gmra.mxu0 %v9722
    %v9849 = vpop.f32.mrf.mxu0
    %v9850 = vadd.f32 0.0, %v9849
    %v9851 = vpop.f32.mrf.mxu0
    %v9852 = vpop.f32.mrf.mxu0
    %v9853 = vadd.f32 0.0, %v9852
    %v9854 = vpop.f32.mrf.mxu0
    %9855 = vmatprep.mubr.bf16.mxu0 0
    %9856 = vmatmul.mubr.bf16.gmra.mxu0 %v9723
    %v9857 = vpop.f32.mrf.mxu0
    %v9858 = vadd.f32 0.0, %v9857
    %v9859 = vpop.f32.mrf.mxu0
    %v9860 = vpop.f32.mrf.mxu0
    %v9861 = vadd.f32 0.0, %v9860
    %v9862 = vpop.f32.mrf.mxu0
    %9863 = vmatprep.mubr.bf16.mxu0 0
    %9864 = vmatmul.mubr.bf16.gmra.mxu0 %v9724
    %v9865 = vpop.f32.mrf.mxu0
    %v9866 = vadd.f32 0.0, %v9865
    %v9867 = vpop.f32.mrf.mxu0
    %v9868 = vpop.f32.mrf.mxu0
    %v9869 = vadd.f32 0.0, %v9868
    %v9870 = vpop.f32.mrf.mxu0
    %9871 = vmatprep.mubr.bf16.mxu0 0
    %9872 = vmatmul.mubr.bf16.gmra.mxu0 %v9725
    %v9873 = vpop.f32.mrf.mxu0
    %v9874 = vadd.f32 0.0, %v9873
    %v9875 = vpop.f32.mrf.mxu0
    %v9876 = vpop.f32.mrf.mxu0
    %v9877 = vadd.f32 0.0, %v9876
    %v9878 = vpop.f32.mrf.mxu0
    %9879 = vmatprep.mubr.bf16.mxu0 0
    %9880 = vmatmul.mubr.bf16.gmra.mxu0 %v9726
    %v9881 = vpop.f32.mrf.mxu0
    %v9882 = vadd.f32 0.0, %v9881
    %v9883 = vpop.f32.mrf.mxu0
    %v9884 = vpop.f32.mrf.mxu0
    %v9885 = vadd.f32 0.0, %v9884
    %v9886 = vpop.f32.mrf.mxu0
    %9887 = vdwg.mxu0
    %9888 = vst [vmem:[#allocation12] sm:$0xff] %v9826
    %9889 = vst [vmem:[#allocation12 + $0x8] sm:$0xff] %v9829
    %9890 = vst [vmem:[#allocation12 + $0x10] sm:$0xff] %v9834
    %9891 = vst [vmem:[#allocation12 + $0x18] sm:$0xff] %v9837
    %9892 = vst [vmem:[#allocation12 + $0x20] sm:$0xff] %v9842
    %9893 = vst [vmem:[#allocation12 + $0x28] sm:$0xff] %v9845
    %9894 = vst [vmem:[#allocation12 + $0x30] sm:$0xff] %v9850
    %9895 = vst [vmem:[#allocation12 + $0x38] sm:$0xff] %v9853
    %9896 = vst [vmem:[#allocation12 + $0x40] sm:$0xff] %v9858
    %9897 = vst [vmem:[#allocation12 + $0x48] sm:$0xff] %v9861
    %9898 = vst [vmem:[#allocation12 + $0x50] sm:$0xff] %v9866
    %9899 = vst [vmem:[#allocation12 + $0x58] sm:$0xff] %v9869
    %9900 = vst [vmem:[#allocation12 + $0x60] sm:$0xff] %v9874
    %9901 = vst [vmem:[#allocation12 + $0x68] sm:$0xff] %v9877
    %9902 = vst [vmem:[#allocation12 + $0x70] sm:$0xff] %v9882
    %9903 = vst [vmem:[#allocation12 + $0x78] sm:$0xff] %v9885
    // Predicated region
    $region70: #{tpu_custom_call.1} parent=1 // pred_check
      _
    $region71: #{tpu_custom_call.1} parent=1 // pred_check_branch
      %9905 = sbr.rel (0) target = $region73
    $region72: #{tpu_custom_call.1} parent=1 // pred_region
      %s9907 = ssub.s32 2048, 2048
      %9908 = vsyncadd [#allocation6], %s9907
      %s9909 = sshll.u32 [#allocation12], 4
      %s9910 = int_to_ptr.vmem [resolvable:$true] %s9909
      %9915 = dma.vmem_to_hbm [thread:$0]  %s9910, 2048, %s13, [#allocation6], 128, 128, 8
    $region73: #{tpu_custom_call.1} parent=1 // pred_fallthru
      _
    // Predicated region
    $region74: #{tpu_custom_call.1} parent=1 // pred_check
      _
    $region75: #{tpu_custom_call.1} parent=1 // pred_check_branch
      %9917 = sbr.rel (0) target = $region77
    $region76: #{tpu_custom_call.1} parent=1 // pred_region
      %9918 = dma.done [#allocation6], 2048
    $region77: #{tpu_custom_call.1} parent=1 // pred_fallthru
      _
    %9919 = vsyncpa [#allocation5], 1
    %9920 = vsyncpa [#allocation8], 1
    %9921 = vsyncpa [#allocation11], 1
    %9922 = vsyncpa [#allocation6], 1

</llo_original>
